<compile_context>
chip_gen: v7x
topology: tpu7x:2x2x1
jax: 0.10.0
libtpu: 0.0.40
codegen_flags: <defaults>
</compile_context>

<pallas_src>
import jax
import jax.numpy as jnp
from jax.experimental import pallas as pl
from jax.experimental.pallas import tpu as pltpu

S_TILE = 512          # lane-dense flattened-spatial tile (>=512, multiple of 256)
NEG_SLOPE = 0.2
EPS = 1e-8


def _round_up(x, m):
    return ((x + m - 1) // m) * m


def _tap_offsets(k, hw, w):
    """Flat (full-stride) column offset of each conv tap: kd*H*W + kh*W + kw."""
    return tuple(kd * hw + kh * w + kw
                 for kd in range(k) for kh in range(k) for kw in range(k))


# ---------------------------------------------------------------------------
# Kernels.
#   Grid = (batch, spatial_tile).  Per step the kernel assembles a
#   (Cin, 2*S_TILE) window from two consecutive lane tiles of the flat input
#   (the halo never exceeds one tile here), then accumulates K^3 shifted-view
#   matmuls on the MXU.  Style scale folded into the LHS taps, demod + bias +
#   LeakyReLU fused in the epilogue.
# ---------------------------------------------------------------------------
def _make_conv_kernel(offsets, cout):
    n_taps = len(offsets)

    def kernel(xa_ref, xb_ref, w_ref, smod_ref, demod_ref, b_ref, o_ref, win_ref):
        win_ref[:, :S_TILE] = xa_ref[0]          # tile j
        win_ref[:, S_TILE:] = xb_ref[0]          # tile j+1 (halo)
        smod = smod_ref[0]                       # (1, Cin) bf16 style scale
        acc = jnp.zeros((cout, S_TILE), jnp.float32)
        for t in range(n_taps):
            lhs = w_ref[t] * smod                # (Cout, Cin), style folded in
            rhs = win_ref[:, offsets[t]:offsets[t] + S_TILE]   # shifted view
            acc = acc + jnp.dot(lhs, rhs, preferred_element_type=jnp.float32)
        acc = acc * demod_ref[0] + b_ref[...]    # demod row scale + bias
        acc = jnp.where(acc >= 0, acc, NEG_SLOPE * acc)
        o_ref[0] = acc.astype(o_ref.dtype)

    return kernel


def _make_conv_proj_kernel(offsets, cout, has_residual):
    n_taps = len(offsets)

    def kernel(*refs):
        if has_residual:
            (xa_ref, xb_ref, w_ref, smod_ref, demod_ref, b_ref,
             wp_ref, smodp_ref, demodp_ref, bp_ref, r_ref,
             ox_ref, oy_ref, win_ref) = refs
        else:
            (xa_ref, xb_ref, w_ref, smod_ref, demod_ref, b_ref,
             wp_ref, smodp_ref, demodp_ref, bp_ref,
             ox_ref, oy_ref, win_ref) = refs
            r_ref = None

        win_ref[:, :S_TILE] = xa_ref[0]
        win_ref[:, S_TILE:] = xb_ref[0]
        smod = smod_ref[0]
        acc = jnp.zeros((cout, S_TILE), jnp.float32)
        for t in range(n_taps):
            lhs = w_ref[t] * smod
            rhs = win_ref[:, offsets[t]:offsets[t] + S_TILE]
            acc = acc + jnp.dot(lhs, rhs, preferred_element_type=jnp.float32)
        x_act = acc * demod_ref[0] + b_ref[...]
        x_act = jnp.where(x_act >= 0, x_act, NEG_SLOPE * x_act)
        ox_ref[0] = x_act.astype(ox_ref.dtype)

        # Fused 1x1 projection (pure channel mix) as epilogue filler.
        lhsp = wp_ref[...] * smodp_ref[0]                       # (Pout, Cout)
        accp = jnp.dot(lhsp, x_act.astype(jnp.bfloat16),
                       preferred_element_type=jnp.float32)
        yv = accp * demodp_ref[0] + bp_ref[...]
        yv = jnp.where(yv >= 0, yv, NEG_SLOPE * yv)
        if has_residual:
            yv = yv + r_ref[0]
        oy_ref[0] = yv.astype(oy_ref.dtype)

    return kernel


# ---------------------------------------------------------------------------
# pallas_call wrappers.
# ---------------------------------------------------------------------------
def _conv_call(x_flat, w_taps, smod, demod, bias, *, n_out_cols, out_dtype, offsets):
    """Styled conv (K taps) on the flat full-stride layout -> (N, Cout, n_out_cols)."""
    n, cin, in_cols = x_flat.shape
    ktaps, cout, _ = w_taps.shape
    n_tiles = n_out_cols // S_TILE
    assert in_cols == n_out_cols + S_TILE          # one extra tile for the halo block

    w_b = w_taps.astype(jnp.bfloat16)
    smod_b = smod[:, None, :].astype(jnp.bfloat16)          # (N, 1, Cin)
    demod_c = demod[:, :, None].astype(jnp.float32)         # (N, Cout, 1)
    bias_c = bias.reshape(cout, 1).astype(jnp.float32)

    cost = pl.CostEstimate(
        flops=2 * n * cout * cin * ktaps * n_out_cols + 4 * n * cout * n_out_cols,
        transcendentals=0,
        bytes_accessed=(2 * x_flat.size * x_flat.dtype.itemsize
                        + 2 * w_b.size
                        + n * cout * n_out_cols * jnp.dtype(out_dtype).itemsize))

    return pl.pallas_call(
        _make_conv_kernel(offsets, cout),
        out_shape=jax.ShapeDtypeStruct((n, cout, n_out_cols), out_dtype),
        grid=(n, n_tiles),
        in_specs=[
            pl.BlockSpec((1, cin, S_TILE), lambda i, j: (i, 0, j)),      # x tile j
            pl.BlockSpec((1, cin, S_TILE), lambda i, j: (i, 0, j + 1)),  # halo tile
            pl.BlockSpec((ktaps, cout, cin), lambda i, j: (0, 0, 0)),    # resident weights
            pl.BlockSpec((1, 1, cin), lambda i, j: (i, 0, 0)),           # style scale
            pl.BlockSpec((1, cout, 1), lambda i, j: (i, 0, 0)),          # demod
            pl.BlockSpec((cout, 1), lambda i, j: (0, 0)),                # bias
        ],
        out_specs=pl.BlockSpec((1, cout, S_TILE), lambda i, j: (i, 0, j)),
        scratch_shapes=[pltpu.VMEM((cin, 2 * S_TILE), jnp.bfloat16)],
        compiler_params=pltpu.CompilerParams(
            dimension_semantics=("parallel", "parallel"),
            vmem_limit_bytes=48 * 1024 * 1024),
        cost_estimate=cost,
    )(x_flat, x_flat, w_b, smod_b, demod_c, bias_c)


def _conv_proj_call(x_flat, w_taps, smod, demod, bias,
                    wp, smodp, demodp, biasp, residual_flat, *,
                    n_out_cols, offsets):
    """Fused conv1 + 1x1 proj (+ residual).  Returns (x_out_flat, y_out_flat), f32."""
    n, cin, in_cols = x_flat.shape
    ktaps, cout, _ = w_taps.shape
    pout = wp.shape[0]
    n_tiles = n_out_cols // S_TILE
    assert in_cols == n_out_cols + S_TILE
    has_res = residual_flat is not None

    args = [x_flat, x_flat,
            w_taps.astype(jnp.bfloat16),
            smod[:, None, :].astype(jnp.bfloat16),
            demod[:, :, None].astype(jnp.float32),
            bias.reshape(cout, 1).astype(jnp.float32),
            wp.astype(jnp.bfloat16),
            smodp[:, None, :].astype(jnp.bfloat16),
            demodp[:, :, None].astype(jnp.float32),
            biasp.reshape(pout, 1).astype(jnp.float32)]
    in_specs = [
        pl.BlockSpec((1, cin, S_TILE), lambda i, j: (i, 0, j)),
        pl.BlockSpec((1, cin, S_TILE), lambda i, j: (i, 0, j + 1)),
        pl.BlockSpec((ktaps, cout, cin), lambda i, j: (0, 0, 0)),
        pl.BlockSpec((1, 1, cin), lambda i, j: (i, 0, 0)),
        pl.BlockSpec((1, cout, 1), lambda i, j: (i, 0, 0)),
        pl.BlockSpec((cout, 1), lambda i, j: (0, 0)),
        pl.BlockSpec((pout, cout), lambda i, j: (0, 0)),
        pl.BlockSpec((1, 1, cout), lambda i, j: (i, 0, 0)),
        pl.BlockSpec((1, pout, 1), lambda i, j: (i, 0, 0)),
        pl.BlockSpec((pout, 1), lambda i, j: (0, 0)),
    ]
    io_alias = {}
    if has_res:
        args.append(residual_flat.astype(jnp.float32))
        in_specs.append(pl.BlockSpec((1, pout, S_TILE), lambda i, j: (i, 0, j)))
        io_alias = {10: 1}   # residual buffer doubles as the y output buffer

    cost = pl.CostEstimate(
        flops=2 * n * n_out_cols * (cout * cin * ktaps + pout * cout)
        + 6 * n * (cout + pout) * n_out_cols,
        transcendentals=0,
        bytes_accessed=(2 * x_flat.size * x_flat.dtype.itemsize
                        + 4 * n * (cout + 2 * pout) * n_out_cols))

    return pl.pallas_call(
        _make_conv_proj_kernel(offsets, cout, has_res),
        out_shape=(jax.ShapeDtypeStruct((n, cout, n_out_cols), jnp.float32),
                   jax.ShapeDtypeStruct((n, pout, n_out_cols), jnp.float32)),
        grid=(n, n_tiles),
        in_specs=in_specs,
        out_specs=(pl.BlockSpec((1, cout, S_TILE), lambda i, j: (i, 0, j)),
                   pl.BlockSpec((1, pout, S_TILE), lambda i, j: (i, 0, j))),
        scratch_shapes=[pltpu.VMEM((cin, 2 * S_TILE), jnp.bfloat16)],
        input_output_aliases=io_alias,
        compiler_params=pltpu.CompilerParams(
            dimension_semantics=("parallel", "parallel"),
            vmem_limit_bytes=48 * 1024 * 1024),
        cost_estimate=cost,
    )(*args)


# ---------------------------------------------------------------------------
# Plain-JAX glue: separable style scales, upsample, narrow.
# ---------------------------------------------------------------------------
def style_scales(p, s):
    """Separable StyleGAN2 modulation: per-input-channel scale + per-output demod.

    demod[n,o] = rsqrt(sum_i smod[n,i]^2 * sum_k w[o,i,k]^2 + eps) -- identical to
    demodulating the per-sample modulated weight, without materializing it.
    """
    smod = s @ p["style_weight"].T + p["style_bias"]                   # (N, Cin)
    wsq = jnp.sum(jnp.square(p["weight"]), axis=(2, 3, 4))             # (Cout, Cin)
    demod = jax.lax.rsqrt(jnp.square(smod) @ wsq.T + EPS)              # (N, Cout)
    return smod, demod


def _weight_taps(weight):
    """(Cout, Cin, K, K, K) -> (K^3, Cout, Cin), tap order kd, kh, kw."""
    cout, cin, k = weight.shape[0], weight.shape[1], weight.shape[2]
    return jnp.transpose(weight, (2, 3, 4, 0, 1)).reshape(k ** 3, cout, cin)


# TODO(synk): fuse the trilinear x2 upsample (two-tap 0.75/0.25 weights) into the
# first conv's in-kernel window assembly to remove this HBM pass entirely.
def _up2_axis(x, axis):
    n = x.shape[axis]
    a = jax.lax.slice_in_dim(x, 0, n - 1, axis=axis)
    b = jax.lax.slice_in_dim(x, 1, n, axis=axis)
    even = 0.75 * a + 0.25 * b
    odd = 0.25 * a + 0.75 * b
    out = jnp.stack([even, odd], axis=axis + 1)
    shp = list(x.shape)
    shp[axis] = 2 * (n - 1)
    return out.reshape(shp)


def upsample2x_trilinear_narrow1(x):
    """== F.interpolate(x, scale_factor=2, mode='trilinear') then narrow_by(1)."""
    for axis in (2, 3, 4):
        x = _up2_axis(x, axis)
    return x


def narrow_by(x, c):
    return x[:, :, c:-c, c:-c, c:-c]


# ---------------------------------------------------------------------------
# HBlock forward (cat_noise=False)
# ---------------------------------------------------------------------------
def hblock_forward(params, x, y, s):
    n = x.shape[0]
    # noise_upsample: AddNoise(cat=False) is identity, then trilinear x2 + narrow.
    x_up = upsample2x_trilinear_narrow1(x)                  # (N, Cin0, D, H, W)
    _, cin0, d, h, w = x_up.shape
    l0 = d * h * w
    offsets = _tap_offsets(3, h * w, w)
    # TODO(synk): at production sizes the K=3 halo ((K-1)*(H*W+W+1)) exceeds one
    # lane tile; switch to a (dz,dy)-row x W-lane layout or halo'd manual DMA.
    assert offsets[-1] <= S_TILE, "halo exceeds one spatial tile"

    lp_out = _round_up(l0, S_TILE)       # flat length of x_n / y_n (full-stride)
    l_mid = lp_out + S_TILE              # conv output length (halo tile for conv1)
    l_in = l_mid + S_TILE                # conv input length

    cout1 = params["conv1"]["weight"].shape[0]
    pout = params["proj"]["weight"].shape[0]

    # --- conv (K=3) on the upsampled grid, flat full-stride layout, bf16 ---
    x_flat = jnp.pad(x_up.reshape(n, cin0, l0), ((0, 0), (0, 0), (0, l_in - l0)))
    smod0, demod0 = style_scales(params["conv"], s)
    x1 = _conv_call(x_flat.astype(jnp.bfloat16),
                    _weight_taps(params["conv"]["weight"]),
                    smod0, demod0, params["conv"]["bias"],
                    n_out_cols=l_mid, out_dtype=jnp.bfloat16, offsets=offsets)

    # addnoise (cat=False): identity in forward.

    # --- conv1 (K=3) + proj (K=1) + residual, fused; consumes x1's padded flat
    #     layout directly (no un-pad pass between stages) ---
    smod1, demod1 = style_scales(params["conv1"], s)
    smodp, demodp = style_scales(params["proj"], s)
    wp = params["proj"]["weight"].reshape(pout, cout1)

    if y is not None:
        y_up = narrow_by(upsample2x_trilinear_narrow1(y), 2)   # (N, Pout, d-4, ...)
        pad = ((0, 0), (0, 0),
               (0, d - y_up.shape[2]), (0, h - y_up.shape[3]), (0, w - y_up.shape[4]))
        res_flat = jnp.pad(y_up.astype(jnp.float32), pad).reshape(n, pout, l0)
        res_flat = jnp.pad(res_flat, ((0, 0), (0, 0), (0, lp_out - l0)))
    else:
        res_flat = None

    x_out_flat, y_out_flat = _conv_proj_call(
        x1, _weight_taps(params["conv1"]["weight"]),
        smod1, demod1, params["conv1"]["bias"],
        wp, smodp, demodp, params["proj"]["bias"], res_flat,
        n_out_cols=lp_out, offsets=offsets)

    # TODO(synk): this final un-pad/extraction pass disappears when a following
    # fused stage consumes the padded flat layout directly.
    dv, hv, wv = d - 4, h - 4, w - 4
    x_out = x_out_flat[:, :, :l0].reshape(n, cout1, d, h, w)[:, :, :dv, :hv, :wv]
    y_out = y_out_flat[:, :, :l0].reshape(n, pout, d, h, w)[:, :, :dv, :hv, :wv]
    return x_out, y_out, s


# ---------------------------------------------------------------------------
# Pure-JAX references.
#   bf16_mirror=False: original per-sample modulate/demodulate formulation in
#   f32 (fidelity reference).  bf16_mirror=True: same formulation but with the
#   kernel's bf16 operand roundings inserted (tight structural check).
# ---------------------------------------------------------------------------
def modulate_demodulate(p, s):
    smod = s @ p["style_weight"].T + p["style_bias"]
    w = p["weight"][None] * smod[:, None, :, None, None, None]
    demod = jax.lax.rsqrt(jnp.sum(w * w, axis=(2, 3, 4, 5), keepdims=True) + EPS)
    return w * demod


def _conv3d_per_sample(x, w_per_sample):
    def one(xn, wn):
        return jax.lax.conv_general_dilated(
            xn[None], wn, window_strides=(1, 1, 1), padding="VALID",
            dimension_numbers=("NCDHW", "OIDHW", "NCDHW"),
            precision=jax.lax.Precision.HIGHEST)[0]
    return jax.vmap(one)(x, w_per_sample)


def _ref_styled_conv3d(x, p, s, *, bf16_mirror):
    if bf16_mirror:
        smod, demod = style_scales(p, s)
        w_b = p["weight"].astype(jnp.bfloat16).astype(jnp.float32)
        sm_b = smod.astype(jnp.bfloat16).astype(jnp.float32)
        w_mod = (w_b[None] * sm_b[:, None, :, None, None, None]
                 ).astype(jnp.bfloat16).astype(jnp.float32)
        x = x.astype(jnp.bfloat16).astype(jnp.float32)
        out = _conv3d_per_sample(x, w_mod) * demod[:, :, None, None, None]
    else:
        out = _conv3d_per_sample(x, modulate_demodulate(p, s))
    out = out + p["bias"][None, :, None, None, None]
    return jnp.where(out >= 0, out, NEG_SLOPE * out)


def hblock_forward_ref(params, x, y, s, *, bf16_mirror=False):
    x = upsample2x_trilinear_narrow1(x)
    x = _ref_styled_conv3d(x, params["conv"], s, bf16_mirror=bf16_mirror)
    x = _ref_styled_conv3d(x, params["conv1"], s, bf16_mirror=bf16_mirror)
    yp = _ref_styled_conv3d(x, params["proj"], s, bf16_mirror=bf16_mirror)
    if y is None:
        y = yp
    else:
        y = narrow_by(upsample2x_trilinear_narrow1(y), 2) + yp
    return x, y, s


# ---------------------------------------------------------------------------
# Deterministic parameter init (shapes from ConvStyled3d.__init__)
# ---------------------------------------------------------------------------
def init_styled_conv_params(key, in_chan, out_chan, style_size, k):
    kw, ks, kb = jax.random.split(key, 3)
    return dict(
        weight=0.2 * jax.random.normal(kw, (out_chan, in_chan, k, k, k), jnp.float32),
        style_weight=0.2 * jax.random.normal(ks, (in_chan, style_size), jnp.float32),
        style_bias=jnp.ones((in_chan,), jnp.float32),   # map2map inits style bias to 1
        bias=0.1 * jax.random.normal(kb, (out_chan,), jnp.float32),
    )


if __name__ == "__main__":
    prev_chan, next_chan, out_chan = 4, 4, 2
    style_size, batch, size = 8, 2, 8          # next_size = 2*size - 6 = 10

    key = jax.random.PRNGKey(0)
    k_conv, k_conv1, k_proj, kx, ky, ks_ = jax.random.split(key, 6)
    params = dict(
        conv=init_styled_conv_params(k_conv, prev_chan, next_chan, style_size, 3),
        conv1=init_styled_conv_params(k_conv1, next_chan, next_chan, style_size, 3),
        proj=init_styled_conv_params(k_proj, next_chan, out_chan, style_size, 1),
    )

    x = jax.random.normal(kx, (batch, prev_chan, size, size, size), jnp.float32)
    y = jax.random.normal(ky, (batch, out_chan, size, size, size), jnp.float32)
    s = jax.random.normal(ks_, (batch, style_size), jnp.float32)

    fwd = jax.jit(hblock_forward)
    x_out, y_out, s_out = jax.block_until_ready(fwd(params, x, y, s))

    nsz = 2 * size - 6
    assert x_out.shape == (batch, next_chan, nsz, nsz, nsz), x_out.shape
    assert y_out.shape == (batch, out_chan, nsz, nsz, nsz), y_out.shape

    # Tight structural check vs a reference that mirrors the kernel's bf16
    # operand roundings (validates the shift-matmul conv, separable style
    # modulation, tiling, and fused proj/residual).
    x_m, y_m, _ = hblock_forward_ref(params, x, y, s, bf16_mirror=True)
    assert jnp.allclose(x_out, x_m, atol=5e-3, rtol=5e-3)
    assert jnp.allclose(y_out, y_m, atol=5e-3, rtol=5e-3)

    # Loose fidelity guard vs the full-f32 original modulate/demodulate
    # formulation (bf16-operand MXU path vs f32 reference).
    x_f, y_f, _ = hblock_forward_ref(params, x, y, s, bf16_mirror=False)
    assert jnp.allclose(x_out, x_f, atol=1e-1, rtol=1e-1)
    assert jnp.allclose(y_out, y_f, atol=1e-1, rtol=1e-1)

    print("KERNEL_OK")
</pallas_src>

<mosaic_0001>
module attributes {stable_mosaic.version = 11 : i64} {
  func.func @kernel(%arg0: i32, %arg1: i32, %arg2: memref<1x4x512xbf16, #tpu.memory_space<vmem>>, %arg3: memref<1x4x512xbf16, #tpu.memory_space<vmem>>, %arg4: memref<27x4x4xbf16, #tpu.memory_space<vmem>>, %arg5: memref<1x1x4xbf16, #tpu.memory_space<vmem>>, %arg6: memref<1x4x1xf32, #tpu.memory_space<vmem>>, %arg7: memref<4x1xf32, #tpu.memory_space<vmem>>, %arg8: memref<1x4x512xbf16, #tpu.memory_space<vmem>>, %arg9: memref<4x1024xbf16, #tpu.memory_space<vmem>>) attributes {dimension_semantics = [#tpu.dimension_semantics<parallel>, #tpu.dimension_semantics<parallel>], iteration_bounds = array<i64: 2, 7>, scalar_prefetch = 0 : i64, scratch_operands = 1 : i64, tpu.core_type = #tpu.core_type<tc>, window_params = [{transform_indices = @transform_0, window_bounds = array<i64: 1, 4, 512>}, {transform_indices = @transform_1, window_bounds = array<i64: 1, 4, 512>}, {pipeline_mode = #tpu.pipeline_mode<synchronous>, transform_indices = @transform_2, window_bounds = array<i64: 27, 4, 4>}, {transform_indices = @transform_3, window_bounds = array<i64: 1, 1, 4>}, {transform_indices = @transform_4, window_bounds = array<i64: 1, 4, 1>}, {pipeline_mode = #tpu.pipeline_mode<synchronous>, transform_indices = @transform_5, window_bounds = array<i64: 4, 1>}, {transform_indices = @transform_6, window_bounds = array<i64: 1, 4, 512>}]} {
    %c0 = arith.constant 0 : index
    %c0_0 = arith.constant 0 : index
    %c0_1 = arith.constant 0 : index
    %0 = vector.load %arg2[%c0, %c0_0, %c0_1] : memref<1x4x512xbf16, #tpu.memory_space<vmem>>, vector<1x4x512xbf16>
    %1 = vector.shape_cast %0 : vector<1x4x512xbf16> to vector<4x512xbf16>
    %c0_2 = arith.constant 0 : index
    %c0_3 = arith.constant 0 : index
    %2 = vector.load %arg9[%c0_2, %c0_3] : memref<4x1024xbf16, #tpu.memory_space<vmem>>, vector<4x512xbf16>
    tpu.vector_store %arg9[%c0_2, %c0_3], %1 {strides = array<i32>} : memref<4x1024xbf16, #tpu.memory_space<vmem>>, vector<4x512xbf16>,
    %c0_4 = arith.constant 0 : index
    %c0_5 = arith.constant 0 : index
    %c0_6 = arith.constant 0 : index
    %3 = vector.load %arg3[%c0_4, %c0_5, %c0_6] : memref<1x4x512xbf16, #tpu.memory_space<vmem>>, vector<1x4x512xbf16>
    %4 = vector.shape_cast %3 : vector<1x4x512xbf16> to vector<4x512xbf16>
    %c0_7 = arith.constant 0 : index
    %c512 = arith.constant 512 : index
    %5 = vector.load %arg9[%c0_7, %c512] : memref<4x1024xbf16, #tpu.memory_space<vmem>>, vector<4x512xbf16>
    tpu.vector_store %arg9[%c0_7, %c512], %4 {strides = array<i32>} : memref<4x1024xbf16, #tpu.memory_space<vmem>>, vector<4x512xbf16>,
    %c0_8 = arith.constant 0 : index
    %c0_9 = arith.constant 0 : index
    %c0_10 = arith.constant 0 : index
    %6 = vector.load %arg5[%c0_8, %c0_9, %c0_10] : memref<1x1x4xbf16, #tpu.memory_space<vmem>>, vector<1x1x4xbf16>
    %7 = vector.shape_cast %6 : vector<1x1x4xbf16> to vector<1x4xbf16>
    %cst = arith.constant 0.000000e+00 : f32
    %8 = vector.broadcast %cst : f32 to vector<4x512xf32>
    %c0_11 = arith.constant 0 : index
    %c0_12 = arith.constant 0 : index
    %c0_13 = arith.constant 0 : index
    %9 = vector.load %arg4[%c0_11, %c0_12, %c0_13] : memref<27x4x4xbf16, #tpu.memory_space<vmem>>, vector<1x4x4xbf16>
    %10 = vector.shape_cast %9 : vector<1x4x4xbf16> to vector<4x4xbf16>
    %11 = vector.broadcast %7 : vector<1x4xbf16> to vector<4x4xbf16>
    %12 = arith.mulf %10, %11 : vector<4x4xbf16>
    %c0_14 = arith.constant 0 : index
    %c0_15 = arith.constant 0 : index
    %13 = vector.load %arg9[%c0_14, %c0_15] : memref<4x1024xbf16, #tpu.memory_space<vmem>>, vector<4x512xbf16>
    %cst_16 = arith.constant dense<0.000000e+00> : vector<4x512xf32>
    %14 = tpu.matmul %12, %13, %cst_16 {dimension_numbers = #tpu.dot_dimension_numbers<[1], [0], [0], [1], [0, 0, 1, 1], [], []>} : vector<4x4xbf16>, vector<4x512xbf16>, vector<4x512xf32> -> vector<4x512xf32>
    %15 = arith.addf %8, %14 : vector<4x512xf32>
    %c1 = arith.constant 1 : index
    %c0_17 = arith.constant 0 : index
    %c0_18 = arith.constant 0 : index
    %16 = vector.load %arg4[%c1, %c0_17, %c0_18] : memref<27x4x4xbf16, #tpu.memory_space<vmem>>, vector<1x4x4xbf16>
    %17 = vector.shape_cast %16 : vector<1x4x4xbf16> to vector<4x4xbf16>
    %18 = vector.broadcast %7 : vector<1x4xbf16> to vector<4x4xbf16>
    %19 = arith.mulf %17, %18 : vector<4x4xbf16>
    %c0_19 = arith.constant 0 : index
    %c1_20 = arith.constant 1 : index
    %20 = vector.load %arg9[%c0_19, %c1_20] : memref<4x1024xbf16, #tpu.memory_space<vmem>>, vector<4x512xbf16>
    %cst_21 = arith.constant dense<0.000000e+00> : vector<4x512xf32>
    %21 = tpu.matmul %19, %20, %cst_21 {dimension_numbers = #tpu.dot_dimension_numbers<[1], [0], [0], [1], [0, 0, 1, 1], [], []>} : vector<4x4xbf16>, vector<4x512xbf16>, vector<4x512xf32> -> vector<4x512xf32>
    %22 = arith.addf %15, %21 : vector<4x512xf32>
    %c2 = arith.constant 2 : index
    %c0_22 = arith.constant 0 : index
    %c0_23 = arith.constant 0 : index
    %23 = vector.load %arg4[%c2, %c0_22, %c0_23] : memref<27x4x4xbf16, #tpu.memory_space<vmem>>, vector<1x4x4xbf16>
    %24 = vector.shape_cast %23 : vector<1x4x4xbf16> to vector<4x4xbf16>
    %25 = vector.broadcast %7 : vector<1x4xbf16> to vector<4x4xbf16>
    %26 = arith.mulf %24, %25 : vector<4x4xbf16>
    %c0_24 = arith.constant 0 : index
    %c2_25 = arith.constant 2 : index
    %27 = vector.load %arg9[%c0_24, %c2_25] : memref<4x1024xbf16, #tpu.memory_space<vmem>>, vector<4x512xbf16>
    %cst_26 = arith.constant dense<0.000000e+00> : vector<4x512xf32>
    %28 = tpu.matmul %26, %27, %cst_26 {dimension_numbers = #tpu.dot_dimension_numbers<[1], [0], [0], [1], [0, 0, 1, 1], [], []>} : vector<4x4xbf16>, vector<4x512xbf16>, vector<4x512xf32> -> vector<4x512xf32>
    %29 = arith.addf %22, %28 : vector<4x512xf32>
    %c3 = arith.constant 3 : index
    %c0_27 = arith.constant 0 : index
    %c0_28 = arith.constant 0 : index
    %30 = vector.load %arg4[%c3, %c0_27, %c0_28] : memref<27x4x4xbf16, #tpu.memory_space<vmem>>, vector<1x4x4xbf16>
    %31 = vector.shape_cast %30 : vector<1x4x4xbf16> to vector<4x4xbf16>
    %32 = vector.broadcast %7 : vector<1x4xbf16> to vector<4x4xbf16>
    %33 = arith.mulf %31, %32 : vector<4x4xbf16>
    %c0_29 = arith.constant 0 : index
    %c14 = arith.constant 14 : index
    %34 = vector.load %arg9[%c0_29, %c14] : memref<4x1024xbf16, #tpu.memory_space<vmem>>, vector<4x512xbf16>
    %cst_30 = arith.constant dense<0.000000e+00> : vector<4x512xf32>
    %35 = tpu.matmul %33, %34, %cst_30 {dimension_numbers = #tpu.dot_dimension_numbers<[1], [0], [0], [1], [0, 0, 1, 1], [], []>} : vector<4x4xbf16>, vector<4x512xbf16>, vector<4x512xf32> -> vector<4x512xf32>
    %36 = arith.addf %29, %35 : vector<4x512xf32>
    %c4 = arith.constant 4 : index
    %c0_31 = arith.constant 0 : index
    %c0_32 = arith.constant 0 : index
    %37 = vector.load %arg4[%c4, %c0_31, %c0_32] : memref<27x4x4xbf16, #tpu.memory_space<vmem>>, vector<1x4x4xbf16>
    %38 = vector.shape_cast %37 : vector<1x4x4xbf16> to vector<4x4xbf16>
    %39 = vector.broadcast %7 : vector<1x4xbf16> to vector<4x4xbf16>
    %40 = arith.mulf %38, %39 : vector<4x4xbf16>
    %c0_33 = arith.constant 0 : index
    %c15 = arith.constant 15 : index
    %41 = vector.load %arg9[%c0_33, %c15] : memref<4x1024xbf16, #tpu.memory_space<vmem>>, vector<4x512xbf16>
    %cst_34 = arith.constant dense<0.000000e+00> : vector<4x512xf32>
    %42 = tpu.matmul %40, %41, %cst_34 {dimension_numbers = #tpu.dot_dimension_numbers<[1], [0], [0], [1], [0, 0, 1, 1], [], []>} : vector<4x4xbf16>, vector<4x512xbf16>, vector<4x512xf32> -> vector<4x512xf32>
    %43 = arith.addf %36, %42 : vector<4x512xf32>
    %c5 = arith.constant 5 : index
    %c0_35 = arith.constant 0 : index
    %c0_36 = arith.constant 0 : index
    %44 = vector.load %arg4[%c5, %c0_35, %c0_36] : memref<27x4x4xbf16, #tpu.memory_space<vmem>>, vector<1x4x4xbf16>
    %45 = vector.shape_cast %44 : vector<1x4x4xbf16> to vector<4x4xbf16>
    %46 = vector.broadcast %7 : vector<1x4xbf16> to vector<4x4xbf16>
    %47 = arith.mulf %45, %46 : vector<4x4xbf16>
    %c0_37 = arith.constant 0 : index
    %c16 = arith.constant 16 : index
    %48 = vector.load %arg9[%c0_37, %c16] : memref<4x1024xbf16, #tpu.memory_space<vmem>>, vector<4x512xbf16>
    %cst_38 = arith.constant dense<0.000000e+00> : vector<4x512xf32>
    %49 = tpu.matmul %47, %48, %cst_38 {dimension_numbers = #tpu.dot_dimension_numbers<[1], [0], [0], [1], [0, 0, 1, 1], [], []>} : vector<4x4xbf16>, vector<4x512xbf16>, vector<4x512xf32> -> vector<4x512xf32>
    %50 = arith.addf %43, %49 : vector<4x512xf32>
    %c6 = arith.constant 6 : index
    %c0_39 = arith.constant 0 : index
    %c0_40 = arith.constant 0 : index
    %51 = vector.load %arg4[%c6, %c0_39, %c0_40] : memref<27x4x4xbf16, #tpu.memory_space<vmem>>, vector<1x4x4xbf16>
    %52 = vector.shape_cast %51 : vector<1x4x4xbf16> to vector<4x4xbf16>
    %53 = vector.broadcast %7 : vector<1x4xbf16> to vector<4x4xbf16>
    %54 = arith.mulf %52, %53 : vector<4x4xbf16>
    %c0_41 = arith.constant 0 : index
    %c28 = arith.constant 28 : index
    %55 = vector.load %arg9[%c0_41, %c28] : memref<4x1024xbf16, #tpu.memory_space<vmem>>, vector<4x512xbf16>
    %cst_42 = arith.constant dense<0.000000e+00> : vector<4x512xf32>
    %56 = tpu.matmul %54, %55, %cst_42 {dimension_numbers = #tpu.dot_dimension_numbers<[1], [0], [0], [1], [0, 0, 1, 1], [], []>} : vector<4x4xbf16>, vector<4x512xbf16>, vector<4x512xf32> -> vector<4x512xf32>
    %57 = arith.addf %50, %56 : vector<4x512xf32>
    %c7 = arith.constant 7 : index
    %c0_43 = arith.constant 0 : index
    %c0_44 = arith.constant 0 : index
    %58 = vector.load %arg4[%c7, %c0_43, %c0_44] : memref<27x4x4xbf16, #tpu.memory_space<vmem>>, vector<1x4x4xbf16>
    %59 = vector.shape_cast %58 : vector<1x4x4xbf16> to vector<4x4xbf16>
    %60 = vector.broadcast %7 : vector<1x4xbf16> to vector<4x4xbf16>
    %61 = arith.mulf %59, %60 : vector<4x4xbf16>
    %c0_45 = arith.constant 0 : index
    %c29 = arith.constant 29 : index
    %62 = vector.load %arg9[%c0_45, %c29] : memref<4x1024xbf16, #tpu.memory_space<vmem>>, vector<4x512xbf16>
    %cst_46 = arith.constant dense<0.000000e+00> : vector<4x512xf32>
    %63 = tpu.matmul %61, %62, %cst_46 {dimension_numbers = #tpu.dot_dimension_numbers<[1], [0], [0], [1], [0, 0, 1, 1], [], []>} : vector<4x4xbf16>, vector<4x512xbf16>, vector<4x512xf32> -> vector<4x512xf32>
    %64 = arith.addf %57, %63 : vector<4x512xf32>
    %c8 = arith.constant 8 : index
    %c0_47 = arith.constant 0 : index
    %c0_48 = arith.constant 0 : index
    %65 = vector.load %arg4[%c8, %c0_47, %c0_48] : memref<27x4x4xbf16, #tpu.memory_space<vmem>>, vector<1x4x4xbf16>
    %66 = vector.shape_cast %65 : vector<1x4x4xbf16> to vector<4x4xbf16>
    %67 = vector.broadcast %7 : vector<1x4xbf16> to vector<4x4xbf16>
    %68 = arith.mulf %66, %67 : vector<4x4xbf16>
    %c0_49 = arith.constant 0 : index
    %c30 = arith.constant 30 : index
    %69 = vector.load %arg9[%c0_49, %c30] : memref<4x1024xbf16, #tpu.memory_space<vmem>>, vector<4x512xbf16>
    %cst_50 = arith.constant dense<0.000000e+00> : vector<4x512xf32>
    %70 = tpu.matmul %68, %69, %cst_50 {dimension_numbers = #tpu.dot_dimension_numbers<[1], [0], [0], [1], [0, 0, 1, 1], [], []>} : vector<4x4xbf16>, vector<4x512xbf16>, vector<4x512xf32> -> vector<4x512xf32>
    %71 = arith.addf %64, %70 : vector<4x512xf32>
    %c9 = arith.constant 9 : index
    %c0_51 = arith.constant 0 : index
    %c0_52 = arith.constant 0 : index
    %72 = vector.load %arg4[%c9, %c0_51, %c0_52] : memref<27x4x4xbf16, #tpu.memory_space<vmem>>, vector<1x4x4xbf16>
    %73 = vector.shape_cast %72 : vector<1x4x4xbf16> to vector<4x4xbf16>
    %74 = vector.broadcast %7 : vector<1x4xbf16> to vector<4x4xbf16>
    %75 = arith.mulf %73, %74 : vector<4x4xbf16>
    %c0_53 = arith.constant 0 : index
    %c196 = arith.constant 196 : index
    %76 = vector.load %arg9[%c0_53, %c196] : memref<4x1024xbf16, #tpu.memory_space<vmem>>, vector<4x512xbf16>
    %cst_54 = arith.constant dense<0.000000e+00> : vector<4x512xf32>
    %77 = tpu.matmul %75, %76, %cst_54 {dimension_numbers = #tpu.dot_dimension_numbers<[1], [0], [0], [1], [0, 0, 1, 1], [], []>} : vector<4x4xbf16>, vector<4x512xbf16>, vector<4x512xf32> -> vector<4x512xf32>
    %78 = arith.addf %71, %77 : vector<4x512xf32>
    %c10 = arith.constant 10 : index
    %c0_55 = arith.constant 0 : index
    %c0_56 = arith.constant 0 : index
    %79 = vector.load %arg4[%c10, %c0_55, %c0_56] : memref<27x4x4xbf16, #tpu.memory_space<vmem>>, vector<1x4x4xbf16>
    %80 = vector.shape_cast %79 : vector<1x4x4xbf16> to vector<4x4xbf16>
    %81 = vector.broadcast %7 : vector<1x4xbf16> to vector<4x4xbf16>
    %82 = arith.mulf %80, %81 : vector<4x4xbf16>
    %c0_57 = arith.constant 0 : index
    %c197 = arith.constant 197 : index
    %83 = vector.load %arg9[%c0_57, %c197] : memref<4x1024xbf16, #tpu.memory_space<vmem>>, vector<4x512xbf16>
    %cst_58 = arith.constant dense<0.000000e+00> : vector<4x512xf32>
    %84 = tpu.matmul %82, %83, %cst_58 {dimension_numbers = #tpu.dot_dimension_numbers<[1], [0], [0], [1], [0, 0, 1, 1], [], []>} : vector<4x4xbf16>, vector<4x512xbf16>, vector<4x512xf32> -> vector<4x512xf32>
    %85 = arith.addf %78, %84 : vector<4x512xf32>
    %c11 = arith.constant 11 : index
    %c0_59 = arith.constant 0 : index
    %c0_60 = arith.constant 0 : index
    %86 = vector.load %arg4[%c11, %c0_59, %c0_60] : memref<27x4x4xbf16, #tpu.memory_space<vmem>>, vector<1x4x4xbf16>
    %87 = vector.shape_cast %86 : vector<1x4x4xbf16> to vector<4x4xbf16>
    %88 = vector.broadcast %7 : vector<1x4xbf16> to vector<4x4xbf16>
    %89 = arith.mulf %87, %88 : vector<4x4xbf16>
    %c0_61 = arith.constant 0 : index
    %c198 = arith.constant 198 : index
    %90 = vector.load %arg9[%c0_61, %c198] : memref<4x1024xbf16, #tpu.memory_space<vmem>>, vector<4x512xbf16>
    %cst_62 = arith.constant dense<0.000000e+00> : vector<4x512xf32>
    %91 = tpu.matmul %89, %90, %cst_62 {dimension_numbers = #tpu.dot_dimension_numbers<[1], [0], [0], [1], [0, 0, 1, 1], [], []>} : vector<4x4xbf16>, vector<4x512xbf16>, vector<4x512xf32> -> vector<4x512xf32>
    %92 = arith.addf %85, %91 : vector<4x512xf32>
    %c12 = arith.constant 12 : index
    %c0_63 = arith.constant 0 : index
    %c0_64 = arith.constant 0 : index
    %93 = vector.load %arg4[%c12, %c0_63, %c0_64] : memref<27x4x4xbf16, #tpu.memory_space<vmem>>, vector<1x4x4xbf16>
    %94 = vector.shape_cast %93 : vector<1x4x4xbf16> to vector<4x4xbf16>
    %95 = vector.broadcast %7 : vector<1x4xbf16> to vector<4x4xbf16>
    %96 = arith.mulf %94, %95 : vector<4x4xbf16>
    %c0_65 = arith.constant 0 : index
    %c210 = arith.constant 210 : index
    %97 = vector.load %arg9[%c0_65, %c210] : memref<4x1024xbf16, #tpu.memory_space<vmem>>, vector<4x512xbf16>
    %cst_66 = arith.constant dense<0.000000e+00> : vector<4x512xf32>
    %98 = tpu.matmul %96, %97, %cst_66 {dimension_numbers = #tpu.dot_dimension_numbers<[1], [0], [0], [1], [0, 0, 1, 1], [], []>} : vector<4x4xbf16>, vector<4x512xbf16>, vector<4x512xf32> -> vector<4x512xf32>
    %99 = arith.addf %92, %98 : vector<4x512xf32>
    %c13 = arith.constant 13 : index
    %c0_67 = arith.constant 0 : index
    %c0_68 = arith.constant 0 : index
    %100 = vector.load %arg4[%c13, %c0_67, %c0_68] : memref<27x4x4xbf16, #tpu.memory_space<vmem>>, vector<1x4x4xbf16>
    %101 = vector.shape_cast %100 : vector<1x4x4xbf16> to vector<4x4xbf16>
    %102 = vector.broadcast %7 : vector<1x4xbf16> to vector<4x4xbf16>
    %103 = arith.mulf %101, %102 : vector<4x4xbf16>
    %c0_69 = arith.constant 0 : index
    %c211 = arith.constant 211 : index
    %104 = vector.load %arg9[%c0_69, %c211] : memref<4x1024xbf16, #tpu.memory_space<vmem>>, vector<4x512xbf16>
    %cst_70 = arith.constant dense<0.000000e+00> : vector<4x512xf32>
    %105 = tpu.matmul %103, %104, %cst_70 {dimension_numbers = #tpu.dot_dimension_numbers<[1], [0], [0], [1], [0, 0, 1, 1], [], []>} : vector<4x4xbf16>, vector<4x512xbf16>, vector<4x512xf32> -> vector<4x512xf32>
    %106 = arith.addf %99, %105 : vector<4x512xf32>
    %c14_71 = arith.constant 14 : index
    %c0_72 = arith.constant 0 : index
    %c0_73 = arith.constant 0 : index
    %107 = vector.load %arg4[%c14_71, %c0_72, %c0_73] : memref<27x4x4xbf16, #tpu.memory_space<vmem>>, vector<1x4x4xbf16>
    %108 = vector.shape_cast %107 : vector<1x4x4xbf16> to vector<4x4xbf16>
    %109 = vector.broadcast %7 : vector<1x4xbf16> to vector<4x4xbf16>
    %110 = arith.mulf %108, %109 : vector<4x4xbf16>
    %c0_74 = arith.constant 0 : index
    %c212 = arith.constant 212 : index
    %111 = vector.load %arg9[%c0_74, %c212] : memref<4x1024xbf16, #tpu.memory_space<vmem>>, vector<4x512xbf16>
    %cst_75 = arith.constant dense<0.000000e+00> : vector<4x512xf32>
    %112 = tpu.matmul %110, %111, %cst_75 {dimension_numbers = #tpu.dot_dimension_numbers<[1], [0], [0], [1], [0, 0, 1, 1], [], []>} : vector<4x4xbf16>, vector<4x512xbf16>, vector<4x512xf32> -> vector<4x512xf32>
    %113 = arith.addf %106, %112 : vector<4x512xf32>
    %c15_76 = arith.constant 15 : index
    %c0_77 = arith.constant 0 : index
    %c0_78 = arith.constant 0 : index
    %114 = vector.load %arg4[%c15_76, %c0_77, %c0_78] : memref<27x4x4xbf16, #tpu.memory_space<vmem>>, vector<1x4x4xbf16>
    %115 = vector.shape_cast %114 : vector<1x4x4xbf16> to vector<4x4xbf16>
    %116 = vector.broadcast %7 : vector<1x4xbf16> to vector<4x4xbf16>
    %117 = arith.mulf %115, %116 : vector<4x4xbf16>
    %c0_79 = arith.constant 0 : index
    %c224 = arith.constant 224 : index
    %118 = vector.load %arg9[%c0_79, %c224] : memref<4x1024xbf16, #tpu.memory_space<vmem>>, vector<4x512xbf16>
    %cst_80 = arith.constant dense<0.000000e+00> : vector<4x512xf32>
    %119 = tpu.matmul %117, %118, %cst_80 {dimension_numbers = #tpu.dot_dimension_numbers<[1], [0], [0], [1], [0, 0, 1, 1], [], []>} : vector<4x4xbf16>, vector<4x512xbf16>, vector<4x512xf32> -> vector<4x512xf32>
    %120 = arith.addf %113, %119 : vector<4x512xf32>
    %c16_81 = arith.constant 16 : index
    %c0_82 = arith.constant 0 : index
    %c0_83 = arith.constant 0 : index
    %121 = vector.load %arg4[%c16_81, %c0_82, %c0_83] : memref<27x4x4xbf16, #tpu.memory_space<vmem>>, vector<1x4x4xbf16>
    %122 = vector.shape_cast %121 : vector<1x4x4xbf16> to vector<4x4xbf16>
    %123 = vector.broadcast %7 : vector<1x4xbf16> to vector<4x4xbf16>
    %124 = arith.mulf %122, %123 : vector<4x4xbf16>
    %c0_84 = arith.constant 0 : index
    %c225 = arith.constant 225 : index
    %125 = vector.load %arg9[%c0_84, %c225] : memref<4x1024xbf16, #tpu.memory_space<vmem>>, vector<4x512xbf16>
    %cst_85 = arith.constant dense<0.000000e+00> : vector<4x512xf32>
    %126 = tpu.matmul %124, %125, %cst_85 {dimension_numbers = #tpu.dot_dimension_numbers<[1], [0], [0], [1], [0, 0, 1, 1], [], []>} : vector<4x4xbf16>, vector<4x512xbf16>, vector<4x512xf32> -> vector<4x512xf32>
    %127 = arith.addf %120, %126 : vector<4x512xf32>
    %c17 = arith.constant 17 : index
    %c0_86 = arith.constant 0 : index
    %c0_87 = arith.constant 0 : index
    %128 = vector.load %arg4[%c17, %c0_86, %c0_87] : memref<27x4x4xbf16, #tpu.memory_space<vmem>>, vector<1x4x4xbf16>
    %129 = vector.shape_cast %128 : vector<1x4x4xbf16> to vector<4x4xbf16>
    %130 = vector.broadcast %7 : vector<1x4xbf16> to vector<4x4xbf16>
    %131 = arith.mulf %129, %130 : vector<4x4xbf16>
    %c0_88 = arith.constant 0 : index
    %c226 = arith.constant 226 : index
    %132 = vector.load %arg9[%c0_88, %c226] : memref<4x1024xbf16, #tpu.memory_space<vmem>>, vector<4x512xbf16>
    %cst_89 = arith.constant dense<0.000000e+00> : vector<4x512xf32>
    %133 = tpu.matmul %131, %132, %cst_89 {dimension_numbers = #tpu.dot_dimension_numbers<[1], [0], [0], [1], [0, 0, 1, 1], [], []>} : vector<4x4xbf16>, vector<4x512xbf16>, vector<4x512xf32> -> vector<4x512xf32>
    %134 = arith.addf %127, %133 : vector<4x512xf32>
    %c18 = arith.constant 18 : index
    %c0_90 = arith.constant 0 : index
    %c0_91 = arith.constant 0 : index
    %135 = vector.load %arg4[%c18, %c0_90, %c0_91] : memref<27x4x4xbf16, #tpu.memory_space<vmem>>, vector<1x4x4xbf16>
    %136 = vector.shape_cast %135 : vector<1x4x4xbf16> to vector<4x4xbf16>
    %137 = vector.broadcast %7 : vector<1x4xbf16> to vector<4x4xbf16>
    %138 = arith.mulf %136, %137 : vector<4x4xbf16>
    %c0_92 = arith.constant 0 : index
    %c392 = arith.constant 392 : index
    %139 = vector.load %arg9[%c0_92, %c392] : memref<4x1024xbf16, #tpu.memory_space<vmem>>, vector<4x512xbf16>
    %cst_93 = arith.constant dense<0.000000e+00> : vector<4x512xf32>
    %140 = tpu.matmul %138, %139, %cst_93 {dimension_numbers = #tpu.dot_dimension_numbers<[1], [0], [0], [1], [0, 0, 1, 1], [], []>} : vector<4x4xbf16>, vector<4x512xbf16>, vector<4x512xf32> -> vector<4x512xf32>
    %141 = arith.addf %134, %140 : vector<4x512xf32>
    %c19 = arith.constant 19 : index
    %c0_94 = arith.constant 0 : index
    %c0_95 = arith.constant 0 : index
    %142 = vector.load %arg4[%c19, %c0_94, %c0_95] : memref<27x4x4xbf16, #tpu.memory_space<vmem>>, vector<1x4x4xbf16>
    %143 = vector.shape_cast %142 : vector<1x4x4xbf16> to vector<4x4xbf16>
    %144 = vector.broadcast %7 : vector<1x4xbf16> to vector<4x4xbf16>
    %145 = arith.mulf %143, %144 : vector<4x4xbf16>
    %c0_96 = arith.constant 0 : index
    %c393 = arith.constant 393 : index
    %146 = vector.load %arg9[%c0_96, %c393] : memref<4x1024xbf16, #tpu.memory_space<vmem>>, vector<4x512xbf16>
    %cst_97 = arith.constant dense<0.000000e+00> : vector<4x512xf32>
    %147 = tpu.matmul %145, %146, %cst_97 {dimension_numbers = #tpu.dot_dimension_numbers<[1], [0], [0], [1], [0, 0, 1, 1], [], []>} : vector<4x4xbf16>, vector<4x512xbf16>, vector<4x512xf32> -> vector<4x512xf32>
    %148 = arith.addf %141, %147 : vector<4x512xf32>
    %c20 = arith.constant 20 : index
    %c0_98 = arith.constant 0 : index
    %c0_99 = arith.constant 0 : index
    %149 = vector.load %arg4[%c20, %c0_98, %c0_99] : memref<27x4x4xbf16, #tpu.memory_space<vmem>>, vector<1x4x4xbf16>
    %150 = vector.shape_cast %149 : vector<1x4x4xbf16> to vector<4x4xbf16>
    %151 = vector.broadcast %7 : vector<1x4xbf16> to vector<4x4xbf16>
    %152 = arith.mulf %150, %151 : vector<4x4xbf16>
    %c0_100 = arith.constant 0 : index
    %c394 = arith.constant 394 : index
    %153 = vector.load %arg9[%c0_100, %c394] : memref<4x1024xbf16, #tpu.memory_space<vmem>>, vector<4x512xbf16>
    %cst_101 = arith.constant dense<0.000000e+00> : vector<4x512xf32>
    %154 = tpu.matmul %152, %153, %cst_101 {dimension_numbers = #tpu.dot_dimension_numbers<[1], [0], [0], [1], [0, 0, 1, 1], [], []>} : vector<4x4xbf16>, vector<4x512xbf16>, vector<4x512xf32> -> vector<4x512xf32>
    %155 = arith.addf %148, %154 : vector<4x512xf32>
    %c21 = arith.constant 21 : index
    %c0_102 = arith.constant 0 : index
    %c0_103 = arith.constant 0 : index
    %156 = vector.load %arg4[%c21, %c0_102, %c0_103] : memref<27x4x4xbf16, #tpu.memory_space<vmem>>, vector<1x4x4xbf16>
    %157 = vector.shape_cast %156 : vector<1x4x4xbf16> to vector<4x4xbf16>
    %158 = vector.broadcast %7 : vector<1x4xbf16> to vector<4x4xbf16>
    %159 = arith.mulf %157, %158 : vector<4x4xbf16>
    %c0_104 = arith.constant 0 : index
    %c406 = arith.constant 406 : index
    %160 = vector.load %arg9[%c0_104, %c406] : memref<4x1024xbf16, #tpu.memory_space<vmem>>, vector<4x512xbf16>
    %cst_105 = arith.constant dense<0.000000e+00> : vector<4x512xf32>
    %161 = tpu.matmul %159, %160, %cst_105 {dimension_numbers = #tpu.dot_dimension_numbers<[1], [0], [0], [1], [0, 0, 1, 1], [], []>} : vector<4x4xbf16>, vector<4x512xbf16>, vector<4x512xf32> -> vector<4x512xf32>
    %162 = arith.addf %155, %161 : vector<4x512xf32>
    %c22 = arith.constant 22 : index
    %c0_106 = arith.constant 0 : index
    %c0_107 = arith.constant 0 : index
    %163 = vector.load %arg4[%c22, %c0_106, %c0_107] : memref<27x4x4xbf16, #tpu.memory_space<vmem>>, vector<1x4x4xbf16>
    %164 = vector.shape_cast %163 : vector<1x4x4xbf16> to vector<4x4xbf16>
    %165 = vector.broadcast %7 : vector<1x4xbf16> to vector<4x4xbf16>
    %166 = arith.mulf %164, %165 : vector<4x4xbf16>
    %c0_108 = arith.constant 0 : index
    %c407 = arith.constant 407 : index
    %167 = vector.load %arg9[%c0_108, %c407] : memref<4x1024xbf16, #tpu.memory_space<vmem>>, vector<4x512xbf16>
    %cst_109 = arith.constant dense<0.000000e+00> : vector<4x512xf32>
    %168 = tpu.matmul %166, %167, %cst_109 {dimension_numbers = #tpu.dot_dimension_numbers<[1], [0], [0], [1], [0, 0, 1, 1], [], []>} : vector<4x4xbf16>, vector<4x512xbf16>, vector<4x512xf32> -> vector<4x512xf32>
    %169 = arith.addf %162, %168 : vector<4x512xf32>
    %c23 = arith.constant 23 : index
    %c0_110 = arith.constant 0 : index
    %c0_111 = arith.constant 0 : index
    %170 = vector.load %arg4[%c23, %c0_110, %c0_111] : memref<27x4x4xbf16, #tpu.memory_space<vmem>>, vector<1x4x4xbf16>
    %171 = vector.shape_cast %170 : vector<1x4x4xbf16> to vector<4x4xbf16>
    %172 = vector.broadcast %7 : vector<1x4xbf16> to vector<4x4xbf16>
    %173 = arith.mulf %171, %172 : vector<4x4xbf16>
    %c0_112 = arith.constant 0 : index
    %c408 = arith.constant 408 : index
    %174 = vector.load %arg9[%c0_112, %c408] : memref<4x1024xbf16, #tpu.memory_space<vmem>>, vector<4x512xbf16>
    %cst_113 = arith.constant dense<0.000000e+00> : vector<4x512xf32>
    %175 = tpu.matmul %173, %174, %cst_113 {dimension_numbers = #tpu.dot_dimension_numbers<[1], [0], [0], [1], [0, 0, 1, 1], [], []>} : vector<4x4xbf16>, vector<4x512xbf16>, vector<4x512xf32> -> vector<4x512xf32>
    %176 = arith.addf %169, %175 : vector<4x512xf32>
    %c24 = arith.constant 24 : index
    %c0_114 = arith.constant 0 : index
    %c0_115 = arith.constant 0 : index
    %177 = vector.load %arg4[%c24, %c0_114, %c0_115] : memref<27x4x4xbf16, #tpu.memory_space<vmem>>, vector<1x4x4xbf16>
    %178 = vector.shape_cast %177 : vector<1x4x4xbf16> to vector<4x4xbf16>
    %179 = vector.broadcast %7 : vector<1x4xbf16> to vector<4x4xbf16>
    %180 = arith.mulf %178, %179 : vector<4x4xbf16>
    %c0_116 = arith.constant 0 : index
    %c420 = arith.constant 420 : index
    %181 = vector.load %arg9[%c0_116, %c420] : memref<4x1024xbf16, #tpu.memory_space<vmem>>, vector<4x512xbf16>
    %cst_117 = arith.constant dense<0.000000e+00> : vector<4x512xf32>
    %182 = tpu.matmul %180, %181, %cst_117 {dimension_numbers = #tpu.dot_dimension_numbers<[1], [0], [0], [1], [0, 0, 1, 1], [], []>} : vector<4x4xbf16>, vector<4x512xbf16>, vector<4x512xf32> -> vector<4x512xf32>
    %183 = arith.addf %176, %182 : vector<4x512xf32>
    %c25 = arith.constant 25 : index
    %c0_118 = arith.constant 0 : index
    %c0_119 = arith.constant 0 : index
    %184 = vector.load %arg4[%c25, %c0_118, %c0_119] : memref<27x4x4xbf16, #tpu.memory_space<vmem>>, vector<1x4x4xbf16>
    %185 = vector.shape_cast %184 : vector<1x4x4xbf16> to vector<4x4xbf16>
    %186 = vector.broadcast %7 : vector<1x4xbf16> to vector<4x4xbf16>
    %187 = arith.mulf %185, %186 : vector<4x4xbf16>
    %c0_120 = arith.constant 0 : index
    %c421 = arith.constant 421 : index
    %188 = vector.load %arg9[%c0_120, %c421] : memref<4x1024xbf16, #tpu.memory_space<vmem>>, vector<4x512xbf16>
    %cst_121 = arith.constant dense<0.000000e+00> : vector<4x512xf32>
    %189 = tpu.matmul %187, %188, %cst_121 {dimension_numbers = #tpu.dot_dimension_numbers<[1], [0], [0], [1], [0, 0, 1, 1], [], []>} : vector<4x4xbf16>, vector<4x512xbf16>, vector<4x512xf32> -> vector<4x512xf32>
    %190 = arith.addf %183, %189 : vector<4x512xf32>
    %c26 = arith.constant 26 : index
    %c0_122 = arith.constant 0 : index
    %c0_123 = arith.constant 0 : index
    %191 = vector.load %arg4[%c26, %c0_122, %c0_123] : memref<27x4x4xbf16, #tpu.memory_space<vmem>>, vector<1x4x4xbf16>
    %192 = vector.shape_cast %191 : vector<1x4x4xbf16> to vector<4x4xbf16>
    %193 = vector.broadcast %7 : vector<1x4xbf16> to vector<4x4xbf16>
    %194 = arith.mulf %192, %193 : vector<4x4xbf16>
    %c0_124 = arith.constant 0 : index
    %c422 = arith.constant 422 : index
    %195 = vector.load %arg9[%c0_124, %c422] : memref<4x1024xbf16, #tpu.memory_space<vmem>>, vector<4x512xbf16>
    %cst_125 = arith.constant dense<0.000000e+00> : vector<4x512xf32>
    %196 = tpu.matmul %194, %195, %cst_125 {dimension_numbers = #tpu.dot_dimension_numbers<[1], [0], [0], [1], [0, 0, 1, 1], [], []>} : vector<4x4xbf16>, vector<4x512xbf16>, vector<4x512xf32> -> vector<4x512xf32>
    %197 = arith.addf %190, %196 : vector<4x512xf32>
    %c0_126 = arith.constant 0 : index
    %c0_127 = arith.constant 0 : index
    %c0_128 = arith.constant 0 : index
    %198 = vector.load %arg6[%c0_126, %c0_127, %c0_128] : memref<1x4x1xf32, #tpu.memory_space<vmem>>, vector<1x4x1xf32>
    %199 = vector.shape_cast %198 : vector<1x4x1xf32> to vector<4x1xf32>
    %200 = vector.broadcast %199 : vector<4x1xf32> to vector<4x512xf32>
    %201 = arith.mulf %197, %200 : vector<4x512xf32>
    %c0_129 = arith.constant 0 : index
    %c0_130 = arith.constant 0 : index
    %202 = vector.load %arg7[%c0_129, %c0_130] : memref<4x1xf32, #tpu.memory_space<vmem>>, vector<4x1xf32>
    %203 = vector.broadcast %202 : vector<4x1xf32> to vector<4x512xf32>
    %204 = arith.addf %201, %203 : vector<4x512xf32>
    %cst_131 = arith.constant 0.000000e+00 : f32
    %205 = vector.broadcast %cst_131 : f32 to vector<4x512xf32>
    %206 = arith.cmpf oge, %204, %205 : vector<4x512xf32>
    %cst_132 = arith.constant 2.000000e-01 : f32
    %207 = vector.broadcast %cst_132 : f32 to vector<4x512xf32>
    %208 = arith.mulf %207, %204 : vector<4x512xf32>
    %209 = arith.select %206, %204, %208 : vector<4x512xi1>, vector<4x512xf32>
    %210 = arith.truncf %209 : vector<4x512xf32> to vector<4x512xbf16>
    %c0_133 = arith.constant 0 : index
    %c0_134 = arith.constant 0 : index
    %c0_135 = arith.constant 0 : index
    %211 = vector.load %arg8[%c0_133, %c0_134, %c0_135] : memref<1x4x512xbf16, #tpu.memory_space<vmem>>, vector<1x4x512xbf16>
    %212 = vector.shape_cast %211 : vector<1x4x512xbf16> to vector<4x512xbf16>
    %213 = vector.shape_cast %210 : vector<4x512xbf16> to vector<1x4x512xbf16>
    tpu.vector_store %arg8[%c0_133, %c0_134, %c0_135], %213 {strides = array<i32>} : memref<1x4x512xbf16, #tpu.memory_space<vmem>>, vector<1x4x512xbf16>,
    return
  }
  func.func @transform_0(%arg0: i32, %arg1: i32) -> (i32, i32, i32) {
    %c0_i32 = arith.constant 0 : i32
    %c0_i32_0 = arith.constant 0 : i32
    return %arg0, %c0_i32, %arg1 : i32, i32, i32
  }
  func.func @transform_1(%arg0: i32, %arg1: i32) -> (i32, i32, i32) {
    %c1_i32 = arith.constant 1 : i32
    %0 = arith.addi %arg1, %c1_i32 : i32
    %c0_i32 = arith.constant 0 : i32
    %c0_i32_0 = arith.constant 0 : i32
    return %arg0, %c0_i32, %0 : i32, i32, i32
  }
  func.func @transform_2(%arg0: i32, %arg1: i32) -> (i32, i32, i32) {
    %c0_i32 = arith.constant 0 : i32
    %c0_i32_0 = arith.constant 0 : i32
    %c0_i32_1 = arith.constant 0 : i32
    %c0_i32_2 = arith.constant 0 : i32
    return %c0_i32, %c0_i32_0, %c0_i32_1 : i32, i32, i32
  }
  func.func @transform_3(%arg0: i32, %arg1: i32) -> (i32, i32, i32) {
    %c0_i32 = arith.constant 0 : i32
    %c0_i32_0 = arith.constant 0 : i32
    %c0_i32_1 = arith.constant 0 : i32
    return %arg0, %c0_i32, %c0_i32_0 : i32, i32, i32
  }
  func.func @transform_4(%arg0: i32, %arg1: i32) -> (i32, i32, i32) {
    %c0_i32 = arith.constant 0 : i32
    %c0_i32_0 = arith.constant 0 : i32
    %c0_i32_1 = arith.constant 0 : i32
    return %arg0, %c0_i32, %c0_i32_0 : i32, i32, i32
  }
  func.func @transform_5(%arg0: i32, %arg1: i32) -> (i32, i32) {
    %c0_i32 = arith.constant 0 : i32
    %c0_i32_0 = arith.constant 0 : i32
    %c0_i32_1 = arith.constant 0 : i32
    return %c0_i32, %c0_i32_0 : i32, i32
  }
  func.func @transform_6(%arg0: i32, %arg1: i32) -> (i32, i32, i32) {
    %c0_i32 = arith.constant 0 : i32
    %c0_i32_0 = arith.constant 0 : i32
    return %arg0, %c0_i32, %arg1 : i32, i32, i32
  }
}

module attributes {stable_mosaic.version = 11 : i64} {
  func.func @kernel(%arg0: i32, %arg1: i32, %arg2: memref<1x4x512xbf16, #tpu.memory_space<vmem>>, %arg3: memref<1x4x512xbf16, #tpu.memory_space<vmem>>, %arg4: memref<27x4x4xbf16, #tpu.memory_space<vmem>>, %arg5: memref<1x1x4xbf16, #tpu.memory_space<vmem>>, %arg6: memref<1x4x1xf32, #tpu.memory_space<vmem>>, %arg7: memref<4x1xf32, #tpu.memory_space<vmem>>, %arg8: memref<2x4xbf16, #tpu.memory_space<vmem>>, %arg9: memref<1x1x4xbf16, #tpu.memory_space<vmem>>, %arg10: memref<1x2x1xf32, #tpu.memory_space<vmem>>, %arg11: memref<2x1xf32, #tpu.memory_space<vmem>>, %arg12: memref<1x2x512xf32, #tpu.memory_space<vmem>>, %arg13: memref<1x4x512xf32, #tpu.memory_space<vmem>>, %arg14: memref<1x2x512xf32, #tpu.memory_space<vmem>>, %arg15: memref<4x1024xbf16, #tpu.memory_space<vmem>>) attributes {dimension_semantics = [#tpu.dimension_semantics<parallel>, #tpu.dimension_semantics<parallel>], iteration_bounds = array<i64: 2, 6>, scalar_prefetch = 0 : i64, scratch_operands = 1 : i64, tpu.core_type = #tpu.core_type<tc>, window_params = [{transform_indices = @transform_0, window_bounds = array<i64: 1, 4, 512>}, {transform_indices = @transform_1, window_bounds = array<i64: 1, 4, 512>}, {pipeline_mode = #tpu.pipeline_mode<synchronous>, transform_indices = @transform_2, window_bounds = array<i64: 27, 4, 4>}, {transform_indices = @transform_3, window_bounds = array<i64: 1, 1, 4>}, {transform_indices = @transform_4, window_bounds = array<i64: 1, 4, 1>}, {pipeline_mode = #tpu.pipeline_mode<synchronous>, transform_indices = @transform_5, window_bounds = array<i64: 4, 1>}, {pipeline_mode = #tpu.pipeline_mode<synchronous>, transform_indices = @transform_6, window_bounds = array<i64: 2, 4>}, {transform_indices = @transform_7, window_bounds = array<i64: 1, 1, 4>}, {transform_indices = @transform_8, window_bounds = array<i64: 1, 2, 1>}, {pipeline_mode = #tpu.pipeline_mode<synchronous>, transform_indices = @transform_9, window_bounds = array<i64: 2, 1>}, {transform_indices = @transform_10, window_bounds = array<i64: 1, 2, 512>}, {transform_indices = @transform_11, window_bounds = array<i64: 1, 4, 512>}, {transform_indices = @transform_12, window_bounds = array<i64: 1, 2, 512>}]} {
    %c0 = arith.constant 0 : index
    %c0_0 = arith.constant 0 : index
    %c0_1 = arith.constant 0 : index
    %0 = vector.load %arg2[%c0, %c0_0, %c0_1] : memref<1x4x512xbf16, #tpu.memory_space<vmem>>, vector<1x4x512xbf16>
    %1 = vector.shape_cast %0 : vector<1x4x512xbf16> to vector<4x512xbf16>
    %c0_2 = arith.constant 0 : index
    %c0_3 = arith.constant 0 : index
    %2 = vector.load %arg15[%c0_2, %c0_3] : memref<4x1024xbf16, #tpu.memory_space<vmem>>, vector<4x512xbf16>
    tpu.vector_store %arg15[%c0_2, %c0_3], %1 {strides = array<i32>} : memref<4x1024xbf16, #tpu.memory_space<vmem>>, vector<4x512xbf16>,
    %c0_4 = arith.constant 0 : index
    %c0_5 = arith.constant 0 : index
    %c0_6 = arith.constant 0 : index
    %3 = vector.load %arg3[%c0_4, %c0_5, %c0_6] : memref<1x4x512xbf16, #tpu.memory_space<vmem>>, vector<1x4x512xbf16>
    %4 = vector.shape_cast %3 : vector<1x4x512xbf16> to vector<4x512xbf16>
    %c0_7 = arith.constant 0 : index
    %c512 = arith.constant 512 : index
    %5 = vector.load %arg15[%c0_7, %c512] : memref<4x1024xbf16, #tpu.memory_space<vmem>>, vector<4x512xbf16>
    tpu.vector_store %arg15[%c0_7, %c512], %4 {strides = array<i32>} : memref<4x1024xbf16, #tpu.memory_space<vmem>>, vector<4x512xbf16>,
    %c0_8 = arith.constant 0 : index
    %c0_9 = arith.constant 0 : index
    %c0_10 = arith.constant 0 : index
    %6 = vector.load %arg5[%c0_8, %c0_9, %c0_10] : memref<1x1x4xbf16, #tpu.memory_space<vmem>>, vector<1x1x4xbf16>
    %7 = vector.shape_cast %6 : vector<1x1x4xbf16> to vector<1x4xbf16>
    %cst = arith.constant 0.000000e+00 : f32
    %8 = vector.broadcast %cst : f32 to vector<4x512xf32>
    %c0_11 = arith.constant 0 : index
    %c0_12 = arith.constant 0 : index
    %c0_13 = arith.constant 0 : index
    %9 = vector.load %arg4[%c0_11, %c0_12, %c0_13] : memref<27x4x4xbf16, #tpu.memory_space<vmem>>, vector<1x4x4xbf16>
    %10 = vector.shape_cast %9 : vector<1x4x4xbf16> to vector<4x4xbf16>
    %11 = vector.broadcast %7 : vector<1x4xbf16> to vector<4x4xbf16>
    %12 = arith.mulf %10, %11 : vector<4x4xbf16>
    %c0_14 = arith.constant 0 : index
    %c0_15 = arith.constant 0 : index
    %13 = vector.load %arg15[%c0_14, %c0_15] : memref<4x1024xbf16, #tpu.memory_space<vmem>>, vector<4x512xbf16>
    %cst_16 = arith.constant dense<0.000000e+00> : vector<4x512xf32>
    %14 = tpu.matmul %12, %13, %cst_16 {dimension_numbers = #tpu.dot_dimension_numbers<[1], [0], [0], [1], [0, 0, 1, 1], [], []>} : vector<4x4xbf16>, vector<4x512xbf16>, vector<4x512xf32> -> vector<4x512xf32>
    %15 = arith.addf %8, %14 : vector<4x512xf32>
    %c1 = arith.constant 1 : index
    %c0_17 = arith.constant 0 : index
    %c0_18 = arith.constant 0 : index
    %16 = vector.load %arg4[%c1, %c0_17, %c0_18] : memref<27x4x4xbf16, #tpu.memory_space<vmem>>, vector<1x4x4xbf16>
    %17 = vector.shape_cast %16 : vector<1x4x4xbf16> to vector<4x4xbf16>
    %18 = vector.broadcast %7 : vector<1x4xbf16> to vector<4x4xbf16>
    %19 = arith.mulf %17, %18 : vector<4x4xbf16>
    %c0_19 = arith.constant 0 : index
    %c1_20 = arith.constant 1 : index
    %20 = vector.load %arg15[%c0_19, %c1_20] : memref<4x1024xbf16, #tpu.memory_space<vmem>>, vector<4x512xbf16>
    %cst_21 = arith.constant dense<0.000000e+00> : vector<4x512xf32>
    %21 = tpu.matmul %19, %20, %cst_21 {dimension_numbers = #tpu.dot_dimension_numbers<[1], [0], [0], [1], [0, 0, 1, 1], [], []>} : vector<4x4xbf16>, vector<4x512xbf16>, vector<4x512xf32> -> vector<4x512xf32>
    %22 = arith.addf %15, %21 : vector<4x512xf32>
    %c2 = arith.constant 2 : index
    %c0_22 = arith.constant 0 : index
    %c0_23 = arith.constant 0 : index
    %23 = vector.load %arg4[%c2, %c0_22, %c0_23] : memref<27x4x4xbf16, #tpu.memory_space<vmem>>, vector<1x4x4xbf16>
    %24 = vector.shape_cast %23 : vector<1x4x4xbf16> to vector<4x4xbf16>
    %25 = vector.broadcast %7 : vector<1x4xbf16> to vector<4x4xbf16>
    %26 = arith.mulf %24, %25 : vector<4x4xbf16>
    %c0_24 = arith.constant 0 : index
    %c2_25 = arith.constant 2 : index
    %27 = vector.load %arg15[%c0_24, %c2_25] : memref<4x1024xbf16, #tpu.memory_space<vmem>>, vector<4x512xbf16>
    %cst_26 = arith.constant dense<0.000000e+00> : vector<4x512xf32>
    %28 = tpu.matmul %26, %27, %cst_26 {dimension_numbers = #tpu.dot_dimension_numbers<[1], [0], [0], [1], [0, 0, 1, 1], [], []>} : vector<4x4xbf16>, vector<4x512xbf16>, vector<4x512xf32> -> vector<4x512xf32>
    %29 = arith.addf %22, %28 : vector<4x512xf32>
    %c3 = arith.constant 3 : index
    %c0_27 = arith.constant 0 : index
    %c0_28 = arith.constant 0 : index
    %30 = vector.load %arg4[%c3, %c0_27, %c0_28] : memref<27x4x4xbf16, #tpu.memory_space<vmem>>, vector<1x4x4xbf16>
    %31 = vector.shape_cast %30 : vector<1x4x4xbf16> to vector<4x4xbf16>
    %32 = vector.broadcast %7 : vector<1x4xbf16> to vector<4x4xbf16>
    %33 = arith.mulf %31, %32 : vector<4x4xbf16>
    %c0_29 = arith.constant 0 : index
    %c14 = arith.constant 14 : index
    %34 = vector.load %arg15[%c0_29, %c14] : memref<4x1024xbf16, #tpu.memory_space<vmem>>, vector<4x512xbf16>
    %cst_30 = arith.constant dense<0.000000e+00> : vector<4x512xf32>
    %35 = tpu.matmul %33, %34, %cst_30 {dimension_numbers = #tpu.dot_dimension_numbers<[1], [0], [0], [1], [0, 0, 1, 1], [], []>} : vector<4x4xbf16>, vector<4x512xbf16>, vector<4x512xf32> -> vector<4x512xf32>
    %36 = arith.addf %29, %35 : vector<4x512xf32>
    %c4 = arith.constant 4 : index
    %c0_31 = arith.constant 0 : index
    %c0_32 = arith.constant 0 : index
    %37 = vector.load %arg4[%c4, %c0_31, %c0_32] : memref<27x4x4xbf16, #tpu.memory_space<vmem>>, vector<1x4x4xbf16>
    %38 = vector.shape_cast %37 : vector<1x4x4xbf16> to vector<4x4xbf16>
    %39 = vector.broadcast %7 : vector<1x4xbf16> to vector<4x4xbf16>
    %40 = arith.mulf %38, %39 : vector<4x4xbf16>
    %c0_33 = arith.constant 0 : index
    %c15 = arith.constant 15 : index
    %41 = vector.load %arg15[%c0_33, %c15] : memref<4x1024xbf16, #tpu.memory_space<vmem>>, vector<4x512xbf16>
    %cst_34 = arith.constant dense<0.000000e+00> : vector<4x512xf32>
    %42 = tpu.matmul %40, %41, %cst_34 {dimension_numbers = #tpu.dot_dimension_numbers<[1], [0], [0], [1], [0, 0, 1, 1], [], []>} : vector<4x4xbf16>, vector<4x512xbf16>, vector<4x512xf32> -> vector<4x512xf32>
    %43 = arith.addf %36, %42 : vector<4x512xf32>
    %c5 = arith.constant 5 : index
    %c0_35 = arith.constant 0 : index
    %c0_36 = arith.constant 0 : index
    %44 = vector.load %arg4[%c5, %c0_35, %c0_36] : memref<27x4x4xbf16, #tpu.memory_space<vmem>>, vector<1x4x4xbf16>
    %45 = vector.shape_cast %44 : vector<1x4x4xbf16> to vector<4x4xbf16>
    %46 = vector.broadcast %7 : vector<1x4xbf16> to vector<4x4xbf16>
    %47 = arith.mulf %45, %46 : vector<4x4xbf16>
    %c0_37 = arith.constant 0 : index
    %c16 = arith.constant 16 : index
    %48 = vector.load %arg15[%c0_37, %c16] : memref<4x1024xbf16, #tpu.memory_space<vmem>>, vector<4x512xbf16>
    %cst_38 = arith.constant dense<0.000000e+00> : vector<4x512xf32>
    %49 = tpu.matmul %47, %48, %cst_38 {dimension_numbers = #tpu.dot_dimension_numbers<[1], [0], [0], [1], [0, 0, 1, 1], [], []>} : vector<4x4xbf16>, vector<4x512xbf16>, vector<4x512xf32> -> vector<4x512xf32>
    %50 = arith.addf %43, %49 : vector<4x512xf32>
    %c6 = arith.constant 6 : index
    %c0_39 = arith.constant 0 : index
    %c0_40 = arith.constant 0 : index
    %51 = vector.load %arg4[%c6, %c0_39, %c0_40] : memref<27x4x4xbf16, #tpu.memory_space<vmem>>, vector<1x4x4xbf16>
    %52 = vector.shape_cast %51 : vector<1x4x4xbf16> to vector<4x4xbf16>
    %53 = vector.broadcast %7 : vector<1x4xbf16> to vector<4x4xbf16>
    %54 = arith.mulf %52, %53 : vector<4x4xbf16>
    %c0_41 = arith.constant 0 : index
    %c28 = arith.constant 28 : index
    %55 = vector.load %arg15[%c0_41, %c28] : memref<4x1024xbf16, #tpu.memory_space<vmem>>, vector<4x512xbf16>
    %cst_42 = arith.constant dense<0.000000e+00> : vector<4x512xf32>
    %56 = tpu.matmul %54, %55, %cst_42 {dimension_numbers = #tpu.dot_dimension_numbers<[1], [0], [0], [1], [0, 0, 1, 1], [], []>} : vector<4x4xbf16>, vector<4x512xbf16>, vector<4x512xf32> -> vector<4x512xf32>
    %57 = arith.addf %50, %56 : vector<4x512xf32>
    %c7 = arith.constant 7 : index
    %c0_43 = arith.constant 0 : index
    %c0_44 = arith.constant 0 : index
    %58 = vector.load %arg4[%c7, %c0_43, %c0_44] : memref<27x4x4xbf16, #tpu.memory_space<vmem>>, vector<1x4x4xbf16>
    %59 = vector.shape_cast %58 : vector<1x4x4xbf16> to vector<4x4xbf16>
    %60 = vector.broadcast %7 : vector<1x4xbf16> to vector<4x4xbf16>
    %61 = arith.mulf %59, %60 : vector<4x4xbf16>
    %c0_45 = arith.constant 0 : index
    %c29 = arith.constant 29 : index
    %62 = vector.load %arg15[%c0_45, %c29] : memref<4x1024xbf16, #tpu.memory_space<vmem>>, vector<4x512xbf16>
    %cst_46 = arith.constant dense<0.000000e+00> : vector<4x512xf32>
    %63 = tpu.matmul %61, %62, %cst_46 {dimension_numbers = #tpu.dot_dimension_numbers<[1], [0], [0], [1], [0, 0, 1, 1], [], []>} : vector<4x4xbf16>, vector<4x512xbf16>, vector<4x512xf32> -> vector<4x512xf32>
    %64 = arith.addf %57, %63 : vector<4x512xf32>
    %c8 = arith.constant 8 : index
    %c0_47 = arith.constant 0 : index
    %c0_48 = arith.constant 0 : index
    %65 = vector.load %arg4[%c8, %c0_47, %c0_48] : memref<27x4x4xbf16, #tpu.memory_space<vmem>>, vector<1x4x4xbf16>
    %66 = vector.shape_cast %65 : vector<1x4x4xbf16> to vector<4x4xbf16>
    %67 = vector.broadcast %7 : vector<1x4xbf16> to vector<4x4xbf16>
    %68 = arith.mulf %66, %67 : vector<4x4xbf16>
    %c0_49 = arith.constant 0 : index
    %c30 = arith.constant 30 : index
    %69 = vector.load %arg15[%c0_49, %c30] : memref<4x1024xbf16, #tpu.memory_space<vmem>>, vector<4x512xbf16>
    %cst_50 = arith.constant dense<0.000000e+00> : vector<4x512xf32>
    %70 = tpu.matmul %68, %69, %cst_50 {dimension_numbers = #tpu.dot_dimension_numbers<[1], [0], [0], [1], [0, 0, 1, 1], [], []>} : vector<4x4xbf16>, vector<4x512xbf16>, vector<4x512xf32> -> vector<4x512xf32>
    %71 = arith.addf %64, %70 : vector<4x512xf32>
    %c9 = arith.constant 9 : index
    %c0_51 = arith.constant 0 : index
    %c0_52 = arith.constant 0 : index
    %72 = vector.load %arg4[%c9, %c0_51, %c0_52] : memref<27x4x4xbf16, #tpu.memory_space<vmem>>, vector<1x4x4xbf16>
    %73 = vector.shape_cast %72 : vector<1x4x4xbf16> to vector<4x4xbf16>
    %74 = vector.broadcast %7 : vector<1x4xbf16> to vector<4x4xbf16>
    %75 = arith.mulf %73, %74 : vector<4x4xbf16>
    %c0_53 = arith.constant 0 : index
    %c196 = arith.constant 196 : index
    %76 = vector.load %arg15[%c0_53, %c196] : memref<4x1024xbf16, #tpu.memory_space<vmem>>, vector<4x512xbf16>
    %cst_54 = arith.constant dense<0.000000e+00> : vector<4x512xf32>
    %77 = tpu.matmul %75, %76, %cst_54 {dimension_numbers = #tpu.dot_dimension_numbers<[1], [0], [0], [1], [0, 0, 1, 1], [], []>} : vector<4x4xbf16>, vector<4x512xbf16>, vector<4x512xf32> -> vector<4x512xf32>
    %78 = arith.addf %71, %77 : vector<4x512xf32>
    %c10 = arith.constant 10 : index
    %c0_55 = arith.constant 0 : index
    %c0_56 = arith.constant 0 : index
    %79 = vector.load %arg4[%c10, %c0_55, %c0_56] : memref<27x4x4xbf16, #tpu.memory_space<vmem>>, vector<1x4x4xbf16>
    %80 = vector.shape_cast %79 : vector<1x4x4xbf16> to vector<4x4xbf16>
    %81 = vector.broadcast %7 : vector<1x4xbf16> to vector<4x4xbf16>
    %82 = arith.mulf %80, %81 : vector<4x4xbf16>
    %c0_57 = arith.constant 0 : index
    %c197 = arith.constant 197 : index
    %83 = vector.load %arg15[%c0_57, %c197] : memref<4x1024xbf16, #tpu.memory_space<vmem>>, vector<4x512xbf16>
    %cst_58 = arith.constant dense<0.000000e+00> : vector<4x512xf32>
    %84 = tpu.matmul %82, %83, %cst_58 {dimension_numbers = #tpu.dot_dimension_numbers<[1], [0], [0], [1], [0, 0, 1, 1], [], []>} : vector<4x4xbf16>, vector<4x512xbf16>, vector<4x512xf32> -> vector<4x512xf32>
    %85 = arith.addf %78, %84 : vector<4x512xf32>
    %c11 = arith.constant 11 : index
    %c0_59 = arith.constant 0 : index
    %c0_60 = arith.constant 0 : index
    %86 = vector.load %arg4[%c11, %c0_59, %c0_60] : memref<27x4x4xbf16, #tpu.memory_space<vmem>>, vector<1x4x4xbf16>
    %87 = vector.shape_cast %86 : vector<1x4x4xbf16> to vector<4x4xbf16>
    %88 = vector.broadcast %7 : vector<1x4xbf16> to vector<4x4xbf16>
    %89 = arith.mulf %87, %88 : vector<4x4xbf16>
    %c0_61 = arith.constant 0 : index
    %c198 = arith.constant 198 : index
    %90 = vector.load %arg15[%c0_61, %c198] : memref<4x1024xbf16, #tpu.memory_space<vmem>>, vector<4x512xbf16>
    %cst_62 = arith.constant dense<0.000000e+00> : vector<4x512xf32>
    %91 = tpu.matmul %89, %90, %cst_62 {dimension_numbers = #tpu.dot_dimension_numbers<[1], [0], [0], [1], [0, 0, 1, 1], [], []>} : vector<4x4xbf16>, vector<4x512xbf16>, vector<4x512xf32> -> vector<4x512xf32>
    %92 = arith.addf %85, %91 : vector<4x512xf32>
    %c12 = arith.constant 12 : index
    %c0_63 = arith.constant 0 : index
    %c0_64 = arith.constant 0 : index
    %93 = vector.load %arg4[%c12, %c0_63, %c0_64] : memref<27x4x4xbf16, #tpu.memory_space<vmem>>, vector<1x4x4xbf16>
    %94 = vector.shape_cast %93 : vector<1x4x4xbf16> to vector<4x4xbf16>
    %95 = vector.broadcast %7 : vector<1x4xbf16> to vector<4x4xbf16>
    %96 = arith.mulf %94, %95 : vector<4x4xbf16>
    %c0_65 = arith.constant 0 : index
    %c210 = arith.constant 210 : index
    %97 = vector.load %arg15[%c0_65, %c210] : memref<4x1024xbf16, #tpu.memory_space<vmem>>, vector<4x512xbf16>
    %cst_66 = arith.constant dense<0.000000e+00> : vector<4x512xf32>
    %98 = tpu.matmul %96, %97, %cst_66 {dimension_numbers = #tpu.dot_dimension_numbers<[1], [0], [0], [1], [0, 0, 1, 1], [], []>} : vector<4x4xbf16>, vector<4x512xbf16>, vector<4x512xf32> -> vector<4x512xf32>
    %99 = arith.addf %92, %98 : vector<4x512xf32>
    %c13 = arith.constant 13 : index
    %c0_67 = arith.constant 0 : index
    %c0_68 = arith.constant 0 : index
    %100 = vector.load %arg4[%c13, %c0_67, %c0_68] : memref<27x4x4xbf16, #tpu.memory_space<vmem>>, vector<1x4x4xbf16>
    %101 = vector.shape_cast %100 : vector<1x4x4xbf16> to vector<4x4xbf16>
    %102 = vector.broadcast %7 : vector<1x4xbf16> to vector<4x4xbf16>
    %103 = arith.mulf %101, %102 : vector<4x4xbf16>
    %c0_69 = arith.constant 0 : index
    %c211 = arith.constant 211 : index
    %104 = vector.load %arg15[%c0_69, %c211] : memref<4x1024xbf16, #tpu.memory_space<vmem>>, vector<4x512xbf16>
    %cst_70 = arith.constant dense<0.000000e+00> : vector<4x512xf32>
    %105 = tpu.matmul %103, %104, %cst_70 {dimension_numbers = #tpu.dot_dimension_numbers<[1], [0], [0], [1], [0, 0, 1, 1], [], []>} : vector<4x4xbf16>, vector<4x512xbf16>, vector<4x512xf32> -> vector<4x512xf32>
    %106 = arith.addf %99, %105 : vector<4x512xf32>
    %c14_71 = arith.constant 14 : index
    %c0_72 = arith.constant 0 : index
    %c0_73 = arith.constant 0 : index
    %107 = vector.load %arg4[%c14_71, %c0_72, %c0_73] : memref<27x4x4xbf16, #tpu.memory_space<vmem>>, vector<1x4x4xbf16>
    %108 = vector.shape_cast %107 : vector<1x4x4xbf16> to vector<4x4xbf16>
    %109 = vector.broadcast %7 : vector<1x4xbf16> to vector<4x4xbf16>
    %110 = arith.mulf %108, %109 : vector<4x4xbf16>
    %c0_74 = arith.constant 0 : index
    %c212 = arith.constant 212 : index
    %111 = vector.load %arg15[%c0_74, %c212] : memref<4x1024xbf16, #tpu.memory_space<vmem>>, vector<4x512xbf16>
    %cst_75 = arith.constant dense<0.000000e+00> : vector<4x512xf32>
    %112 = tpu.matmul %110, %111, %cst_75 {dimension_numbers = #tpu.dot_dimension_numbers<[1], [0], [0], [1], [0, 0, 1, 1], [], []>} : vector<4x4xbf16>, vector<4x512xbf16>, vector<4x512xf32> -> vector<4x512xf32>
    %113 = arith.addf %106, %112 : vector<4x512xf32>
    %c15_76 = arith.constant 15 : index
    %c0_77 = arith.constant 0 : index
    %c0_78 = arith.constant 0 : index
    %114 = vector.load %arg4[%c15_76, %c0_77, %c0_78] : memref<27x4x4xbf16, #tpu.memory_space<vmem>>, vector<1x4x4xbf16>
    %115 = vector.shape_cast %114 : vector<1x4x4xbf16> to vector<4x4xbf16>
    %116 = vector.broadcast %7 : vector<1x4xbf16> to vector<4x4xbf16>
    %117 = arith.mulf %115, %116 : vector<4x4xbf16>
    %c0_79 = arith.constant 0 : index
    %c224 = arith.constant 224 : index
    %118 = vector.load %arg15[%c0_79, %c224] : memref<4x1024xbf16, #tpu.memory_space<vmem>>, vector<4x512xbf16>
    %cst_80 = arith.constant dense<0.000000e+00> : vector<4x512xf32>
    %119 = tpu.matmul %117, %118, %cst_80 {dimension_numbers = #tpu.dot_dimension_numbers<[1], [0], [0], [1], [0, 0, 1, 1], [], []>} : vector<4x4xbf16>, vector<4x512xbf16>, vector<4x512xf32> -> vector<4x512xf32>
    %120 = arith.addf %113, %119 : vector<4x512xf32>
    %c16_81 = arith.constant 16 : index
    %c0_82 = arith.constant 0 : index
    %c0_83 = arith.constant 0 : index
    %121 = vector.load %arg4[%c16_81, %c0_82, %c0_83] : memref<27x4x4xbf16, #tpu.memory_space<vmem>>, vector<1x4x4xbf16>
    %122 = vector.shape_cast %121 : vector<1x4x4xbf16> to vector<4x4xbf16>
    %123 = vector.broadcast %7 : vector<1x4xbf16> to vector<4x4xbf16>
    %124 = arith.mulf %122, %123 : vector<4x4xbf16>
    %c0_84 = arith.constant 0 : index
    %c225 = arith.constant 225 : index
    %125 = vector.load %arg15[%c0_84, %c225] : memref<4x1024xbf16, #tpu.memory_space<vmem>>, vector<4x512xbf16>
    %cst_85 = arith.constant dense<0.000000e+00> : vector<4x512xf32>
    %126 = tpu.matmul %124, %125, %cst_85 {dimension_numbers = #tpu.dot_dimension_numbers<[1], [0], [0], [1], [0, 0, 1, 1], [], []>} : vector<4x4xbf16>, vector<4x512xbf16>, vector<4x512xf32> -> vector<4x512xf32>
    %127 = arith.addf %120, %126 : vector<4x512xf32>
    %c17 = arith.constant 17 : index
    %c0_86 = arith.constant 0 : index
    %c0_87 = arith.constant 0 : index
    %128 = vector.load %arg4[%c17, %c0_86, %c0_87] : memref<27x4x4xbf16, #tpu.memory_space<vmem>>, vector<1x4x4xbf16>
    %129 = vector.shape_cast %128 : vector<1x4x4xbf16> to vector<4x4xbf16>
    %130 = vector.broadcast %7 : vector<1x4xbf16> to vector<4x4xbf16>
    %131 = arith.mulf %129, %130 : vector<4x4xbf16>
    %c0_88 = arith.constant 0 : index
    %c226 = arith.constant 226 : index
    %132 = vector.load %arg15[%c0_88, %c226] : memref<4x1024xbf16, #tpu.memory_space<vmem>>, vector<4x512xbf16>
    %cst_89 = arith.constant dense<0.000000e+00> : vector<4x512xf32>
    %133 = tpu.matmul %131, %132, %cst_89 {dimension_numbers = #tpu.dot_dimension_numbers<[1], [0], [0], [1], [0, 0, 1, 1], [], []>} : vector<4x4xbf16>, vector<4x512xbf16>, vector<4x512xf32> -> vector<4x512xf32>
    %134 = arith.addf %127, %133 : vector<4x512xf32>
    %c18 = arith.constant 18 : index
    %c0_90 = arith.constant 0 : index
    %c0_91 = arith.constant 0 : index
    %135 = vector.load %arg4[%c18, %c0_90, %c0_91] : memref<27x4x4xbf16, #tpu.memory_space<vmem>>, vector<1x4x4xbf16>
    %136 = vector.shape_cast %135 : vector<1x4x4xbf16> to vector<4x4xbf16>
    %137 = vector.broadcast %7 : vector<1x4xbf16> to vector<4x4xbf16>
    %138 = arith.mulf %136, %137 : vector<4x4xbf16>
    %c0_92 = arith.constant 0 : index
    %c392 = arith.constant 392 : index
    %139 = vector.load %arg15[%c0_92, %c392] : memref<4x1024xbf16, #tpu.memory_space<vmem>>, vector<4x512xbf16>
    %cst_93 = arith.constant dense<0.000000e+00> : vector<4x512xf32>
    %140 = tpu.matmul %138, %139, %cst_93 {dimension_numbers = #tpu.dot_dimension_numbers<[1], [0], [0], [1], [0, 0, 1, 1], [], []>} : vector<4x4xbf16>, vector<4x512xbf16>, vector<4x512xf32> -> vector<4x512xf32>
    %141 = arith.addf %134, %140 : vector<4x512xf32>
    %c19 = arith.constant 19 : index
    %c0_94 = arith.constant 0 : index
    %c0_95 = arith.constant 0 : index
    %142 = vector.load %arg4[%c19, %c0_94, %c0_95] : memref<27x4x4xbf16, #tpu.memory_space<vmem>>, vector<1x4x4xbf16>
    %143 = vector.shape_cast %142 : vector<1x4x4xbf16> to vector<4x4xbf16>
    %144 = vector.broadcast %7 : vector<1x4xbf16> to vector<4x4xbf16>
    %145 = arith.mulf %143, %144 : vector<4x4xbf16>
    %c0_96 = arith.constant 0 : index
    %c393 = arith.constant 393 : index
    %146 = vector.load %arg15[%c0_96, %c393] : memref<4x1024xbf16, #tpu.memory_space<vmem>>, vector<4x512xbf16>
    %cst_97 = arith.constant dense<0.000000e+00> : vector<4x512xf32>
    %147 = tpu.matmul %145, %146, %cst_97 {dimension_numbers = #tpu.dot_dimension_numbers<[1], [0], [0], [1], [0, 0, 1, 1], [], []>} : vector<4x4xbf16>, vector<4x512xbf16>, vector<4x512xf32> -> vector<4x512xf32>
    %148 = arith.addf %141, %147 : vector<4x512xf32>
    %c20 = arith.constant 20 : index
    %c0_98 = arith.constant 0 : index
    %c0_99 = arith.constant 0 : index
    %149 = vector.load %arg4[%c20, %c0_98, %c0_99] : memref<27x4x4xbf16, #tpu.memory_space<vmem>>, vector<1x4x4xbf16>
    %150 = vector.shape_cast %149 : vector<1x4x4xbf16> to vector<4x4xbf16>
    %151 = vector.broadcast %7 : vector<1x4xbf16> to vector<4x4xbf16>
    %152 = arith.mulf %150, %151 : vector<4x4xbf16>
    %c0_100 = arith.constant 0 : index
    %c394 = arith.constant 394 : index
    %153 = vector.load %arg15[%c0_100, %c394] : memref<4x1024xbf16, #tpu.memory_space<vmem>>, vector<4x512xbf16>
    %cst_101 = arith.constant dense<0.000000e+00> : vector<4x512xf32>
    %154 = tpu.matmul %152, %153, %cst_101 {dimension_numbers = #tpu.dot_dimension_numbers<[1], [0], [0], [1], [0, 0, 1, 1], [], []>} : vector<4x4xbf16>, vector<4x512xbf16>, vector<4x512xf32> -> vector<4x512xf32>
    %155 = arith.addf %148, %154 : vector<4x512xf32>
    %c21 = arith.constant 21 : index
    %c0_102 = arith.constant 0 : index
    %c0_103 = arith.constant 0 : index
    %156 = vector.load %arg4[%c21, %c0_102, %c0_103] : memref<27x4x4xbf16, #tpu.memory_space<vmem>>, vector<1x4x4xbf16>
    %157 = vector.shape_cast %156 : vector<1x4x4xbf16> to vector<4x4xbf16>
    %158 = vector.broadcast %7 : vector<1x4xbf16> to vector<4x4xbf16>
    %159 = arith.mulf %157, %158 : vector<4x4xbf16>
    %c0_104 = arith.constant 0 : index
    %c406 = arith.constant 406 : index
    %160 = vector.load %arg15[%c0_104, %c406] : memref<4x1024xbf16, #tpu.memory_space<vmem>>, vector<4x512xbf16>
    %cst_105 = arith.constant dense<0.000000e+00> : vector<4x512xf32>
    %161 = tpu.matmul %159, %160, %cst_105 {dimension_numbers = #tpu.dot_dimension_numbers<[1], [0], [0], [1], [0, 0, 1, 1], [], []>} : vector<4x4xbf16>, vector<4x512xbf16>, vector<4x512xf32> -> vector<4x512xf32>
    %162 = arith.addf %155, %161 : vector<4x512xf32>
    %c22 = arith.constant 22 : index
    %c0_106 = arith.constant 0 : index
    %c0_107 = arith.constant 0 : index
    %163 = vector.load %arg4[%c22, %c0_106, %c0_107] : memref<27x4x4xbf16, #tpu.memory_space<vmem>>, vector<1x4x4xbf16>
    %164 = vector.shape_cast %163 : vector<1x4x4xbf16> to vector<4x4xbf16>
    %165 = vector.broadcast %7 : vector<1x4xbf16> to vector<4x4xbf16>
    %166 = arith.mulf %164, %165 : vector<4x4xbf16>
    %c0_108 = arith.constant 0 : index
    %c407 = arith.constant 407 : index
    %167 = vector.load %arg15[%c0_108, %c407] : memref<4x1024xbf16, #tpu.memory_space<vmem>>, vector<4x512xbf16>
    %cst_109 = arith.constant dense<0.000000e+00> : vector<4x512xf32>
    %168 = tpu.matmul %166, %167, %cst_109 {dimension_numbers = #tpu.dot_dimension_numbers<[1], [0], [0], [1], [0, 0, 1, 1], [], []>} : vector<4x4xbf16>, vector<4x512xbf16>, vector<4x512xf32> -> vector<4x512xf32>
    %169 = arith.addf %162, %168 : vector<4x512xf32>
    %c23 = arith.constant 23 : index
    %c0_110 = arith.constant 0 : index
    %c0_111 = arith.constant 0 : index
    %170 = vector.load %arg4[%c23, %c0_110, %c0_111] : memref<27x4x4xbf16, #tpu.memory_space<vmem>>, vector<1x4x4xbf16>
    %171 = vector.shape_cast %170 : vector<1x4x4xbf16> to vector<4x4xbf16>
    %172 = vector.broadcast %7 : vector<1x4xbf16> to vector<4x4xbf16>
    %173 = arith.mulf %171, %172 : vector<4x4xbf16>
    %c0_112 = arith.constant 0 : index
    %c408 = arith.constant 408 : index
    %174 = vector.load %arg15[%c0_112, %c408] : memref<4x1024xbf16, #tpu.memory_space<vmem>>, vector<4x512xbf16>
    %cst_113 = arith.constant dense<0.000000e+00> : vector<4x512xf32>
    %175 = tpu.matmul %173, %174, %cst_113 {dimension_numbers = #tpu.dot_dimension_numbers<[1], [0], [0], [1], [0, 0, 1, 1], [], []>} : vector<4x4xbf16>, vector<4x512xbf16>, vector<4x512xf32> -> vector<4x512xf32>
    %176 = arith.addf %169, %175 : vector<4x512xf32>
    %c24 = arith.constant 24 : index
    %c0_114 = arith.constant 0 : index
    %c0_115 = arith.constant 0 : index
    %177 = vector.load %arg4[%c24, %c0_114, %c0_115] : memref<27x4x4xbf16, #tpu.memory_space<vmem>>, vector<1x4x4xbf16>
    %178 = vector.shape_cast %177 : vector<1x4x4xbf16> to vector<4x4xbf16>
    %179 = vector.broadcast %7 : vector<1x4xbf16> to vector<4x4xbf16>
    %180 = arith.mulf %178, %179 : vector<4x4xbf16>
    %c0_116 = arith.constant 0 : index
    %c420 = arith.constant 420 : index
    %181 = vector.load %arg15[%c0_116, %c420] : memref<4x1024xbf16, #tpu.memory_space<vmem>>, vector<4x512xbf16>
    %cst_117 = arith.constant dense<0.000000e+00> : vector<4x512xf32>
    %182 = tpu.matmul %180, %181, %cst_117 {dimension_numbers = #tpu.dot_dimension_numbers<[1], [0], [0], [1], [0, 0, 1, 1], [], []>} : vector<4x4xbf16>, vector<4x512xbf16>, vector<4x512xf32> -> vector<4x512xf32>
    %183 = arith.addf %176, %182 : vector<4x512xf32>
    %c25 = arith.constant 25 : index
    %c0_118 = arith.constant 0 : index
    %c0_119 = arith.constant 0 : index
    %184 = vector.load %arg4[%c25, %c0_118, %c0_119] : memref<27x4x4xbf16, #tpu.memory_space<vmem>>, vector<1x4x4xbf16>
    %185 = vector.shape_cast %184 : vector<1x4x4xbf16> to vector<4x4xbf16>
    %186 = vector.broadcast %7 : vector<1x4xbf16> to vector<4x4xbf16>
    %187 = arith.mulf %185, %186 : vector<4x4xbf16>
    %c0_120 = arith.constant 0 : index
    %c421 = arith.constant 421 : index
    %188 = vector.load %arg15[%c0_120, %c421] : memref<4x1024xbf16, #tpu.memory_space<vmem>>, vector<4x512xbf16>
    %cst_121 = arith.constant dense<0.000000e+00> : vector<4x512xf32>
    %189 = tpu.matmul %187, %188, %cst_121 {dimension_numbers = #tpu.dot_dimension_numbers<[1], [0], [0], [1], [0, 0, 1, 1], [], []>} : vector<4x4xbf16>, vector<4x512xbf16>, vector<4x512xf32> -> vector<4x512xf32>
    %190 = arith.addf %183, %189 : vector<4x512xf32>
    %c26 = arith.constant 26 : index
    %c0_122 = arith.constant 0 : index
    %c0_123 = arith.constant 0 : index
    %191 = vector.load %arg4[%c26, %c0_122, %c0_123] : memref<27x4x4xbf16, #tpu.memory_space<vmem>>, vector<1x4x4xbf16>
    %192 = vector.shape_cast %191 : vector<1x4x4xbf16> to vector<4x4xbf16>
    %193 = vector.broadcast %7 : vector<1x4xbf16> to vector<4x4xbf16>
    %194 = arith.mulf %192, %193 : vector<4x4xbf16>
    %c0_124 = arith.constant 0 : index
    %c422 = arith.constant 422 : index
    %195 = vector.load %arg15[%c0_124, %c422] : memref<4x1024xbf16, #tpu.memory_space<vmem>>, vector<4x512xbf16>
    %cst_125 = arith.constant dense<0.000000e+00> : vector<4x512xf32>
    %196 = tpu.matmul %194, %195, %cst_125 {dimension_numbers = #tpu.dot_dimension_numbers<[1], [0], [0], [1], [0, 0, 1, 1], [], []>} : vector<4x4xbf16>, vector<4x512xbf16>, vector<4x512xf32> -> vector<4x512xf32>
    %197 = arith.addf %190, %196 : vector<4x512xf32>
    %c0_126 = arith.constant 0 : index
    %c0_127 = arith.constant 0 : index
    %c0_128 = arith.constant 0 : index
    %198 = vector.load %arg6[%c0_126, %c0_127, %c0_128] : memref<1x4x1xf32, #tpu.memory_space<vmem>>, vector<1x4x1xf32>
    %199 = vector.shape_cast %198 : vector<1x4x1xf32> to vector<4x1xf32>
    %200 = vector.broadcast %199 : vector<4x1xf32> to vector<4x512xf32>
    %201 = arith.mulf %197, %200 : vector<4x512xf32>
    %c0_129 = arith.constant 0 : index
    %c0_130 = arith.constant 0 : index
    %202 = vector.load %arg7[%c0_129, %c0_130] : memref<4x1xf32, #tpu.memory_space<vmem>>, vector<4x1xf32>
    %203 = vector.broadcast %202 : vector<4x1xf32> to vector<4x512xf32>
    %204 = arith.addf %201, %203 : vector<4x512xf32>
    %cst_131 = arith.constant 0.000000e+00 : f32
    %205 = vector.broadcast %cst_131 : f32 to vector<4x512xf32>
    %206 = arith.cmpf oge, %204, %205 : vector<4x512xf32>
    %cst_132 = arith.constant 2.000000e-01 : f32
    %207 = vector.broadcast %cst_132 : f32 to vector<4x512xf32>
    %208 = arith.mulf %207, %204 : vector<4x512xf32>
    %209 = arith.select %206, %204, %208 : vector<4x512xi1>, vector<4x512xf32>
    %c0_133 = arith.constant 0 : index
    %c0_134 = arith.constant 0 : index
    %c0_135 = arith.constant 0 : index
    %210 = vector.load %arg13[%c0_133, %c0_134, %c0_135] : memref<1x4x512xf32, #tpu.memory_space<vmem>>, vector<1x4x512xf32>
    %211 = vector.shape_cast %210 : vector<1x4x512xf32> to vector<4x512xf32>
    %212 = vector.shape_cast %209 : vector<4x512xf32> to vector<1x4x512xf32>
    tpu.vector_store %arg13[%c0_133, %c0_134, %c0_135], %212 {strides = array<i32>} : memref<1x4x512xf32, #tpu.memory_space<vmem>>, vector<1x4x512xf32>,
    %c0_136 = arith.constant 0 : index
    %c0_137 = arith.constant 0 : index
    %213 = vector.load %arg8[%c0_136, %c0_137] : memref<2x4xbf16, #tpu.memory_space<vmem>>, vector<2x4xbf16>
    %c0_138 = arith.constant 0 : index
    %c0_139 = arith.constant 0 : index
    %c0_140 = arith.constant 0 : index
    %214 = vector.load %arg9[%c0_138, %c0_139, %c0_140] : memref<1x1x4xbf16, #tpu.memory_space<vmem>>, vector<1x1x4xbf16>
    %215 = vector.shape_cast %214 : vector<1x1x4xbf16> to vector<1x4xbf16>
    %216 = vector.broadcast %215 : vector<1x4xbf16> to vector<2x4xbf16>
    %217 = arith.mulf %213, %216 : vector<2x4xbf16>
    %218 = arith.truncf %209 : vector<4x512xf32> to vector<4x512xbf16>
    %cst_141 = arith.constant dense<0.000000e+00> : vector<2x512xf32>
    %219 = tpu.matmul %217, %218, %cst_141 {dimension_numbers = #tpu.dot_dimension_numbers<[1], [0], [0], [1], [0, 0, 1, 1], [], []>} : vector<2x4xbf16>, vector<4x512xbf16>, vector<2x512xf32> -> vector<2x512xf32>
    %c0_142 = arith.constant 0 : index
    %c0_143 = arith.constant 0 : index
    %c0_144 = arith.constant 0 : index
    %220 = vector.load %arg10[%c0_142, %c0_143, %c0_144] : memref<1x2x1xf32, #tpu.memory_space<vmem>>, vector<1x2x1xf32>
    %221 = vector.shape_cast %220 : vector<1x2x1xf32> to vector<2x1xf32>
    %222 = vector.broadcast %221 : vector<2x1xf32> to vector<2x512xf32>
    %223 = arith.mulf %219, %222 : vector<2x512xf32>
    %c0_145 = arith.constant 0 : index
    %c0_146 = arith.constant 0 : index
    %224 = vector.load %arg11[%c0_145, %c0_146] : memref<2x1xf32, #tpu.memory_space<vmem>>, vector<2x1xf32>
    %225 = vector.broadcast %224 : vector<2x1xf32> to vector<2x512xf32>
    %226 = arith.addf %223, %225 : vector<2x512xf32>
    %cst_147 = arith.constant 0.000000e+00 : f32
    %227 = vector.broadcast %cst_147 : f32 to vector<2x512xf32>
    %228 = arith.cmpf oge, %226, %227 : vector<2x512xf32>
    %cst_148 = arith.constant 2.000000e-01 : f32
    %229 = vector.broadcast %cst_148 : f32 to vector<2x512xf32>
    %230 = arith.mulf %229, %226 : vector<2x512xf32>
    %231 = arith.select %228, %226, %230 : vector<2x512xi1>, vector<2x512xf32>
    %c0_149 = arith.constant 0 : index
    %c0_150 = arith.constant 0 : index
    %c0_151 = arith.constant 0 : index
    %232 = vector.load %arg12[%c0_149, %c0_150, %c0_151] : memref<1x2x512xf32, #tpu.memory_space<vmem>>, vector<1x2x512xf32>
    %233 = vector.shape_cast %232 : vector<1x2x512xf32> to vector<2x512xf32>
    %234 = arith.addf %231, %233 : vector<2x512xf32>
    %c0_152 = arith.constant 0 : index
    %c0_153 = arith.constant 0 : index
    %c0_154 = arith.constant 0 : index
    %235 = vector.load %arg14[%c0_152, %c0_153, %c0_154] : memref<1x2x512xf32, #tpu.memory_space<vmem>>, vector<1x2x512xf32>
    %236 = vector.shape_cast %235 : vector<1x2x512xf32> to vector<2x512xf32>
    %237 = vector.shape_cast %234 : vector<2x512xf32> to vector<1x2x512xf32>
    tpu.vector_store %arg14[%c0_152, %c0_153, %c0_154], %237 {strides = array<i32>} : memref<1x2x512xf32, #tpu.memory_space<vmem>>, vector<1x2x512xf32>,
    return
  }
  func.func @transform_0(%arg0: i32, %arg1: i32) -> (i32, i32, i32) {
    %c0_i32 = arith.constant 0 : i32
    %c0_i32_0 = arith.constant 0 : i32
    return %arg0, %c0_i32, %arg1 : i32, i32, i32
  }
  func.func @transform_1(%arg0: i32, %arg1: i32) -> (i32, i32, i32) {
    %c1_i32 = arith.constant 1 : i32
    %0 = arith.addi %arg1, %c1_i32 : i32
    %c0_i32 = arith.constant 0 : i32
    %c0_i32_0 = arith.constant 0 : i32
    return %arg0, %c0_i32, %0 : i32, i32, i32
  }
  func.func @transform_2(%arg0: i32, %arg1: i32) -> (i32, i32, i32) {
    %c0_i32 = arith.constant 0 : i32
    %c0_i32_0 = arith.constant 0 : i32
    %c0_i32_1 = arith.constant 0 : i32
    %c0_i32_2 = arith.constant 0 : i32
    return %c0_i32, %c0_i32_0, %c0_i32_1 : i32, i32, i32
  }
  func.func @transform_3(%arg0: i32, %arg1: i32) -> (i32, i32, i32) {
    %c0_i32 = arith.constant 0 : i32
    %c0_i32_0 = arith.constant 0 : i32
    %c0_i32_1 = arith.constant 0 : i32
    return %arg0, %c0_i32, %c0_i32_0 : i32, i32, i32
  }
  func.func @transform_4(%arg0: i32, %arg1: i32) -> (i32, i32, i32) {
    %c0_i32 = arith.constant 0 : i32
    %c0_i32_0 = arith.constant 0 : i32
    %c0_i32_1 = arith.constant 0 : i32
    return %arg0, %c0_i32, %c0_i32_0 : i32, i32, i32
  }
  func.func @transform_5(%arg0: i32, %arg1: i32) -> (i32, i32) {
    %c0_i32 = arith.constant 0 : i32
    %c0_i32_0 = arith.constant 0 : i32
    %c0_i32_1 = arith.constant 0 : i32
    return %c0_i32, %c0_i32_0 : i32, i32
  }
  func.func @transform_6(%arg0: i32, %arg1: i32) -> (i32, i32) {
    %c0_i32 = arith.constant 0 : i32
    %c0_i32_0 = arith.constant 0 : i32
    %c0_i32_1 = arith.constant 0 : i32
    return %c0_i32, %c0_i32_0 : i32, i32
  }
  func.func @transform_7(%arg0: i32, %arg1: i32) -> (i32, i32, i32) {
    %c0_i32 = arith.constant 0 : i32
    %c0_i32_0 = arith.constant 0 : i32
    %c0_i32_1 = arith.constant 0 : i32
    return %arg0, %c0_i32, %c0_i32_0 : i32, i32, i32
  }
  func.func @transform_8(%arg0: i32, %arg1: i32) -> (i32, i32, i32) {
    %c0_i32 = arith.constant 0 : i32
    %c0_i32_0 = arith.constant 0 : i32
    %c0_i32_1 = arith.constant 0 : i32
    return %arg0, %c0_i32, %c0_i32_0 : i32, i32, i32
  }
  func.func @transform_9(%arg0: i32, %arg1: i32) -> (i32, i32) {
    %c0_i32 = arith.constant 0 : i32
    %c0_i32_0 = arith.constant 0 : i32
    %c0_i32_1 = arith.constant 0 : i32
    return %c0_i32, %c0_i32_0 : i32, i32
  }
  func.func @transform_10(%arg0: i32, %arg1: i32) -> (i32, i32, i32) {
    %c0_i32 = arith.constant 0 : i32
    %c0_i32_0 = arith.constant 0 : i32
    return %arg0, %c0_i32, %arg1 : i32, i32, i32
  }
  func.func @transform_11(%arg0: i32, %arg1: i32) -> (i32, i32, i32) {
    %c0_i32 = arith.constant 0 : i32
    %c0_i32_0 = arith.constant 0 : i32
    return %arg0, %c0_i32, %arg1 : i32, i32, i32
  }
  func.func @transform_12(%arg0: i32, %arg1: i32) -> (i32, i32, i32) {
    %c0_i32 = arith.constant 0 : i32
    %c0_i32_0 = arith.constant 0 : i32
    return %arg0, %c0_i32, %arg1 : i32, i32, i32
  }
}

</mosaic_0001>

<llo_original>
// kernel: hblock_forward.2
$region0: #{hblock_forward.2}
  #allocation0 [shape = 'u32[]', space=smem, size = 0x4, offset = 0x4, fixed_abs, tag = 'smem constant byte address 0x4 - core index']
  #allocation1 [shape = 'u32[144,128]{1,0:T(1,128)}', space=vmem, size = 0x12000, scoped, tag = 'internal scratch']
  #allocation2 [shape = 'bf16[4,1024]{1,0:T(4,128)(2,1)}', space=vmem, size = 0x2000, scoped, tag = 'scratch operand']
  %s0 = inlined_call_operand.vmem [shape: bf16[2,4,4096], index: 0, kind: input, shape index: {}, may-alias: {0,1}]
  %s1 = inlined_call_operand.vmem [shape: bf16[2,4,4096], index: 1, kind: input, shape index: {}, may-alias: {0,1}]
  %s2 = inlined_call_operand.vmem [shape: bf16[27,4,4], index: 2, kind: input, shape index: {}]
  %s3 = inlined_call_operand.vmem [shape: bf16[2,1,4], index: 3, kind: input, shape index: {}]
  %s4 = inlined_call_operand.vmem [shape: f32[2,4,1], index: 4, kind: input, shape index: {}]
  %s5 = inlined_call_operand.vmem [shape: f32[4,1], index: 5, kind: input, shape index: {}]
  %s6 = inlined_call_operand.vmem [shape: bf16[2,4,3584], index: 6, kind: output, shape index: {}]
  %s7 = sld [smem:[#allocation0]]
  $region57: #{hblock_forward.2} parent=0
    _
  %s9 = ssub.s32 1, %s7
  %s10 = scalar_select 0, %s9, %s7
  loop: start=0, step=1, limit=16
  $region2: #{hblock_forward.2} parent=0 // loop_pre_header
    _
  $region3: #{hblock_forward.2} parent=0 // loop_header
    %s12 = sphi 0, %s16
    %p13 = scmp.ge.s32.totalorder %s12, 16
    %s19 = sphi 0, %s31
    %s20 = sphi 0, %s27
    %s21 = sphi 0, %s19
    %s22 = sphi 0, %s20
    %s23 = sphi 0, %s21
    %s24 = sphi 0, %s22
    %s36 = sphi 0, %s38
    %s39 = sphi 0, %s36
    %s40 = sphi 0, %s39
    %s56 = sphi 0, %s40
    %s66 = sphi 0, %s68
    %s69 = sphi 0, %s66
    %s70 = sphi 0, %s69
    %s86 = sphi 0, %s70
    %s90 = sphi 0, %s90
    %s92 = sphi 0, %s90
    %s93 = sphi 0, %s92
    %s107 = sphi 0, %s93
    %s113 = sphi 0, %s115
    %s116 = sphi 0, %s113
    %s117 = sphi 0, %s116
    %s133 = sphi 0, %s117
    %s139 = sphi 0, %s141
    %s142 = sphi 0, %s139
    %s143 = sphi 0, %s142
    %s159 = sphi 0, %s143
    %s163 = sphi 0, %s163
    %s165 = sphi 0, %s163
    %s166 = sphi 0, %s165
    %s180 = sphi 0, %s166
    %s188 = sphi 0, %s190
    %s191 = sphi 0, %s188
    %s192 = sphi 0, %s191
    %s208 = sphi 0, %s192
  $region4: #{hblock_forward.2} parent=0 // loop_header_branch
    %15 = sbr.rel (%p13) target = $region8
  $region5: #{hblock_forward.2} parent=0 // loop_body
    %s17 = ssub.s32 %s12, 1
    %s18 = ssub.s32 %s12, 2
    %s25 = sadd.s32 1, %s20
    %p26 = scmp.ge.s32.totalorder %s25, 7
    %s27 = scalar_select %p26, 0, %s25
    %s28 = sadd.s32 1, %s19
    %s29 = scalar_select %p26, %s28, %s19
    %p30 = scmp.ge.s32.totalorder %s29, 2
    %s31 = scalar_select %p30, 0, %s29
    %s32 = ssub.s32 %s19, %s31
    %s33 = ssub.s32 %s20, %s27
    %s34 = sor.u32 %s32, %s33
    %p35 = scmp.eq.s32.totalorder %s34, 0
    %s37 = sadd.s32 %s36, 1
    %s38 = scalar_select %p35, %s36, %s37
    %p41 = pneg %p35
    %p42 = scmp.eq.s32.totalorder %s12, 13
    %p43 = por %p41, %p42
    %p44 = scmp.ne.s32.totalorder %s36, %s39
    %p45 = scmp.eq.s32.totalorder %s12, 0
    %p46 = por %p44, %p45
    %p47 = scmp.ne.s32.totalorder %s36, %s39
    %p48 = scmp.eq.s32.totalorder %s17, 13
    %p49 = por %p47, %p48
    %p50 = scmp.ne.s32.totalorder %s39, %s40
    %p51 = scmp.eq.s32.totalorder %s17, 0
    %p52 = por %p50, %p51
    %p53 = scmp.ne.s32.totalorder %s39, %s40
    %p54 = scmp.eq.s32.totalorder %s18, 13
    %p55 = por %p53, %p54
    %p57 = scmp.ne.s32.totalorder %s40, %s56
    %p58 = scmp.eq.s32.totalorder %s18, 0
    %p59 = por %p57, %p58
    %s60 = sadd.s32 %s20, 1
    %s61 = sadd.s32 %s27, 1
    %s62 = ssub.s32 %s19, %s31
    %s63 = ssub.s32 %s60, %s61
    %s64 = sor.u32 %s62, %s63
    %p65 = scmp.eq.s32.totalorder %s64, 0
    %s67 = sadd.s32 %s66, 1
    %s68 = scalar_select %p65, %s66, %s67
    %p71 = pneg %p65
    %p72 = scmp.eq.s32.totalorder %s12, 13
    %p73 = por %p71, %p72
    %p74 = scmp.ne.s32.totalorder %s66, %s69
    %p75 = scmp.eq.s32.totalorder %s12, 0
    %p76 = por %p74, %p75
    %p77 = scmp.ne.s32.totalorder %s66, %s69
    %p78 = scmp.eq.s32.totalorder %s17, 13
    %p79 = por %p77, %p78
    %p80 = scmp.ne.s32.totalorder %s69, %s70
    %p81 = scmp.eq.s32.totalorder %s17, 0
    %p82 = por %p80, %p81
    %p83 = scmp.ne.s32.totalorder %s69, %s70
    %p84 = scmp.eq.s32.totalorder %s18, 13
    %p85 = por %p83, %p84
    %p87 = scmp.ne.s32.totalorder %s70, %s86
    %p88 = scmp.eq.s32.totalorder %s18, 0
    %p89 = por %p87, %p88
    %s91 = sadd.s32 %s90, 1
    %p94 = scmp.eq.s32.totalorder %s12, 13
    %p95 = scmp.ne.s32.totalorder %s90, %s92
    %p96 = scmp.eq.s32.totalorder %s12, 0
    %p97 = por %p95, %p96
    %p98 = scmp.ne.s32.totalorder %s90, %s92
    %p99 = scmp.eq.s32.totalorder %s17, 13
    %p100 = por %p98, %p99
    %p101 = scmp.ne.s32.totalorder %s92, %s93
    %p102 = scmp.eq.s32.totalorder %s17, 0
    %p103 = por %p101, %p102
    %p104 = scmp.ne.s32.totalorder %s92, %s93
    %p105 = scmp.eq.s32.totalorder %s18, 13
    %p106 = por %p104, %p105
    %p108 = scmp.ne.s32.totalorder %s93, %s107
    %p109 = scmp.eq.s32.totalorder %s18, 0
    %p110 = por %p108, %p109
    %s111 = ssub.s32 %s19, %s31
    %p112 = scmp.eq.s32.totalorder %s111, 0
    %s114 = sadd.s32 %s113, 1
    %s115 = scalar_select %p112, %s113, %s114
    %p118 = pneg %p112
    %p119 = scmp.eq.s32.totalorder %s12, 13
    %p120 = por %p118, %p119
    %p121 = scmp.ne.s32.totalorder %s113, %s116
    %p122 = scmp.eq.s32.totalorder %s12, 0
    %p123 = por %p121, %p122
    %p124 = scmp.ne.s32.totalorder %s113, %s116
    %p125 = scmp.eq.s32.totalorder %s17, 13
    %p126 = por %p124, %p125
    %p127 = scmp.ne.s32.totalorder %s116, %s117
    %p128 = scmp.eq.s32.totalorder %s17, 0
    %p129 = por %p127, %p128
    %p130 = scmp.ne.s32.totalorder %s116, %s117
    %p131 = scmp.eq.s32.totalorder %s18, 13
    %p132 = por %p130, %p131
    %p134 = scmp.ne.s32.totalorder %s117, %s133
    %p135 = scmp.eq.s32.totalorder %s18, 0
    %p136 = por %p134, %p135
    %s137 = ssub.s32 %s19, %s31
    %p138 = scmp.eq.s32.totalorder %s137, 0
    %s140 = sadd.s32 %s139, 1
    %s141 = scalar_select %p138, %s139, %s140
    %p144 = pneg %p138
    %p145 = scmp.eq.s32.totalorder %s12, 13
    %p146 = por %p144, %p145
    %p147 = scmp.ne.s32.totalorder %s139, %s142
    %p148 = scmp.eq.s32.totalorder %s12, 0
    %p149 = por %p147, %p148
    %p150 = scmp.ne.s32.totalorder %s139, %s142
    %p151 = scmp.eq.s32.totalorder %s17, 13
    %p152 = por %p150, %p151
    %p153 = scmp.ne.s32.totalorder %s142, %s143
    %p154 = scmp.eq.s32.totalorder %s17, 0
    %p155 = por %p153, %p154
    %p156 = scmp.ne.s32.totalorder %s142, %s143
    %p157 = scmp.eq.s32.totalorder %s18, 13
    %p158 = por %p156, %p157
    %p160 = scmp.ne.s32.totalorder %s143, %s159
    %p161 = scmp.eq.s32.totalorder %s18, 0
    %p162 = por %p160, %p161
    %s164 = sadd.s32 %s163, 1
    %p167 = scmp.eq.s32.totalorder %s12, 13
    %p168 = scmp.ne.s32.totalorder %s163, %s165
    %p169 = scmp.eq.s32.totalorder %s12, 0
    %p170 = por %p168, %p169
    %p171 = scmp.ne.s32.totalorder %s163, %s165
    %p172 = scmp.eq.s32.totalorder %s17, 13
    %p173 = por %p171, %p172
    %p174 = scmp.ne.s32.totalorder %s165, %s166
    %p175 = scmp.eq.s32.totalorder %s17, 0
    %p176 = por %p174, %p175
    %p177 = scmp.ne.s32.totalorder %s165, %s166
    %p178 = scmp.eq.s32.totalorder %s18, 13
    %p179 = por %p177, %p178
    %p181 = scmp.ne.s32.totalorder %s166, %s180
    %p182 = scmp.eq.s32.totalorder %s18, 0
    %p183 = por %p181, %p182
    %s184 = ssub.s32 %s19, %s31
    %s185 = ssub.s32 %s20, %s27
    %s186 = sor.u32 %s184, %s185
    %p187 = scmp.eq.s32.totalorder %s186, 0
    %s189 = sadd.s32 %s188, 1
    %s190 = scalar_select %p187, %s188, %s189
    %p193 = pneg %p187
    %p194 = scmp.eq.s32.totalorder %s12, 13
    %p195 = por %p193, %p194
    %p196 = scmp.ne.s32.totalorder %s188, %s191
    %p197 = scmp.eq.s32.totalorder %s12, 0
    %p198 = por %p196, %p197
    %p199 = scmp.ne.s32.totalorder %s188, %s191
    %p200 = scmp.eq.s32.totalorder %s17, 13
    %p201 = por %p199, %p200
    %p202 = scmp.ne.s32.totalorder %s191, %s192
    %p203 = scmp.eq.s32.totalorder %s17, 0
    %p204 = por %p202, %p203
    %p205 = scmp.ne.s32.totalorder %s191, %s192
    %p206 = scmp.eq.s32.totalorder %s18, 13
    %p207 = por %p205, %p206
    %p209 = scmp.ne.s32.totalorder %s192, %s208
    %p210 = scmp.eq.s32.totalorder %s18, 0
    %p211 = por %p209, %p210
    %p212 = scmp.le.s32.totalorder 1, %s12
    %p213 = scmp.lt.s32.totalorder %s12, 15
    %p214 = pnand %p212, %p213
    %p215 = pneg %p214
    // Predicated region
    $region9: #{hblock_forward.2} parent=5 // pred_check
      _
    $region10: #{hblock_forward.2} parent=5 // pred_check_branch
      %217 = sbr.rel (%p214) target = $region12
    $region11: #{hblock_forward.2} parent=5 // pred_region
      %s218 = ssub.s32 %s12, 1
      // Predicated region
      $region13: #{hblock_forward.2} parent=11 // pred_check
        %p219 = pneg %p103
      $region14: #{hblock_forward.2} parent=11 // pred_check_branch
        %221 = sbr.rel (%p219) target = $region16
      $region15: #{hblock_forward.2} parent=11 // pred_region
        _
      $region16: #{hblock_forward.2} parent=11 // pred_fallthru
        _
      // Predicated region
      $region17: #{hblock_forward.2} parent=11 // pred_check
        %p222 = pneg %p176
      $region18: #{hblock_forward.2} parent=11 // pred_check_branch
        %224 = sbr.rel (%p222) target = $region20
      $region19: #{hblock_forward.2} parent=11 // pred_region
        _
      $region20: #{hblock_forward.2} parent=11 // pred_fallthru
        _
    $region12: #{hblock_forward.2} parent=5 // pred_fallthru
      _
    %p225 = scmp.lt.s32.totalorder %s12, 14
    // Predicated region
    $region21: #{hblock_forward.2} parent=5 // pred_check
      %p226 = pneg %p225
    $region22: #{hblock_forward.2} parent=5 // pred_check_branch
      %228 = sbr.rel (%p226) target = $region24
    $region23: #{hblock_forward.2} parent=5 // pred_region
      // Predicated region
      $region25: #{hblock_forward.2} parent=23 // pred_check
        %p229 = pneg %p46
      $region26: #{hblock_forward.2} parent=23 // pred_check_branch
        %231 = sbr.rel (%p229) target = $region28
      $region27: #{hblock_forward.2} parent=23 // pred_region
        %s232 = smul.u32 4, %s20
        %p233 = scmp.lt.s32.totalorder %s19, 1
        %s234 = scalar_select %p233, %s19, 1
        %p235 = scmp.lt.s32.totalorder %s232, 31
        %s236 = scalar_select %p235, %s232, 31
        %s237 = smul.addr %s234, 32
        %s238 = sadd.s32 %s236, %s237
        %s239 = smul.addr %s238, 2
        %s240 = scalar_lea.vmem %s0, %s239
        %s241 = smul.u32 4, %s20
      $region28: #{hblock_forward.2} parent=23 // pred_fallthru
        _
      // Predicated region
      $region29: #{hblock_forward.2} parent=23 // pred_check
        %p242 = pneg %p76
      $region30: #{hblock_forward.2} parent=23 // pred_check_branch
        %244 = sbr.rel (%p242) target = $region32
      $region31: #{hblock_forward.2} parent=23 // pred_region
        %s245 = sadd.s32 %s20, 1
        %s246 = smul.u32 4, %s245
        %p247 = scmp.lt.s32.totalorder %s19, 1
        %s248 = scalar_select %p247, %s19, 1
        %p249 = scmp.lt.s32.totalorder %s246, 31
        %s250 = scalar_select %p249, %s246, 31
        %s251 = smul.addr %s248, 32
        %s252 = sadd.s32 %s250, %s251
        %s253 = smul.addr %s252, 2
        %s254 = scalar_lea.vmem %s1, %s253
        %s255 = sadd.s32 %s20, 1
        %s256 = smul.u32 4, %s255
      $region32: #{hblock_forward.2} parent=23 // pred_fallthru
        _
      // Predicated region
      $region33: #{hblock_forward.2} parent=23 // pred_check
        %p257 = pneg %p123
      $region34: #{hblock_forward.2} parent=23 // pred_check_branch
        %259 = sbr.rel (%p257) target = $region36
      $region35: #{hblock_forward.2} parent=23 // pred_region
        %p260 = scmp.lt.s32.totalorder %s19, 1
        %s261 = scalar_select %p260, %s19, 1
        %s262 = scalar_lea.vmem %s3, %s261
      $region36: #{hblock_forward.2} parent=23 // pred_fallthru
        _
      // Predicated region
      $region37: #{hblock_forward.2} parent=23 // pred_check
        %p263 = pneg %p149
      $region38: #{hblock_forward.2} parent=23 // pred_check_branch
        %265 = sbr.rel (%p263) target = $region40
      $region39: #{hblock_forward.2} parent=23 // pred_region
        %p266 = scmp.lt.s32.totalorder %s19, 1
        %s267 = scalar_select %p266, %s19, 1
        %s268 = smul.addr %s267, 4
        %s269 = scalar_lea.vmem %s4, %s268
      $region40: #{hblock_forward.2} parent=23 // pred_fallthru
        _
    $region24: #{hblock_forward.2} parent=5 // pred_fallthru
      _
    %p270 = scmp.le.s32.totalorder 1, %s12
    %p271 = scmp.lt.s32.totalorder %s12, 15
    %p272 = pnand %p270, %p271
    %p273 = pneg %p272
    // Predicated region
    $region41: #{hblock_forward.2} parent=5 // pred_check
      _
    $region42: #{hblock_forward.2} parent=5 // pred_check_branch
      %275 = sbr.rel (%p272) target = $region44
    $region43: #{hblock_forward.2} parent=5 // pred_region
      %s276 = ssub.s32 %s12, 1
      %s277 = smul.u32 4, %s22
      %p278 = scmp.lt.s32.totalorder %s21, 1
      %s279 = scalar_select %p278, %s21, 1
      %p280 = scmp.lt.s32.totalorder %s277, 31
      %s281 = scalar_select %p280, %s277, 31
      %s282 = smul.addr %s279, 32
      %s283 = sadd.s32 %s281, %s282
      %s284 = smul.addr %s283, 2
      %s285 = scalar_lea.vmem %s0, %s284
      %p286 = pneg %p52
      %p287 = pneg %p49
      %s288 = sadd.s32 %s22, 1
      %s289 = smul.u32 4, %s288
      %p290 = scmp.lt.s32.totalorder %s21, 1
      %s291 = scalar_select %p290, %s21, 1
      %p292 = scmp.lt.s32.totalorder %s289, 31
      %s293 = scalar_select %p292, %s289, 31
      %s294 = smul.addr %s291, 32
      %s295 = sadd.s32 %s293, %s294
      %s296 = smul.addr %s295, 2
      %s297 = scalar_lea.vmem %s1, %s296
      %p298 = pneg %p82
      %p299 = pneg %p79
      %p300 = pneg %p103
      %p301 = pneg %p100
      %p302 = scmp.lt.s32.totalorder %s21, 1
      %s303 = scalar_select %p302, %s21, 1
      %s304 = scalar_lea.vmem %s3, %s303
      %p305 = pneg %p129
      %p306 = pneg %p126
      %p307 = scmp.lt.s32.totalorder %s21, 1
      %s308 = scalar_select %p307, %s21, 1
      %s309 = smul.addr %s308, 4
      %s310 = scalar_lea.vmem %s4, %s309
      %p311 = pneg %p155
      %p312 = pneg %p152
      %p313 = pneg %p176
      %p314 = pneg %p173
      %p315 = pneg %p204
      %p316 = pneg %p201
      %s317 = smul.u32 4, %s22
      %p318 = scmp.lt.s32.totalorder %s21, 1
      %s319 = scalar_select %p318, %s21, 1
      %p320 = scmp.lt.s32.totalorder %s317, 27
      %s321 = scalar_select %p320, %s317, 27
      %s322 = smul.addr %s319, 28
      %s323 = sadd.s32 %s321, %s322
      %s324 = smul.addr %s323, 2
      %s325 = scalar_lea.vmem %s6, %s324
      %s326 = smul.u32 4, %s22
      %p327 = scmp.lt.s32.totalorder %s21, 1
      %s328 = scalar_select %p327, %s21, 1
      %p329 = scmp.lt.s32.totalorder %s326, 31
      %s330 = scalar_select %p329, %s326, 31
      %s331 = smul.addr %s328, 32
      %s332 = sadd.s32 %s330, %s331
      %s333 = smul.addr %s332, 2
      %s334 = scalar_lea.vmem %s0, %s333
      %s335 = smul.u32 4, %s22
      %s336 = sadd.s32 %s22, 1
      %s337 = smul.u32 4, %s336
      %p338 = scmp.lt.s32.totalorder %s21, 1
      %s339 = scalar_select %p338, %s21, 1
      %p340 = scmp.lt.s32.totalorder %s337, 31
      %s341 = scalar_select %p340, %s337, 31
      %s342 = smul.addr %s339, 32
      %s343 = sadd.s32 %s341, %s342
      %s344 = smul.addr %s343, 2
      %s345 = scalar_lea.vmem %s1, %s344
      %s346 = sadd.s32 %s22, 1
      %s347 = smul.u32 4, %s346
      %p348 = scmp.lt.s32.totalorder %s21, 1
      %s349 = scalar_select %p348, %s21, 1
      %s350 = scalar_lea.vmem %s3, %s349
      %p351 = scmp.lt.s32.totalorder %s21, 1
      %s352 = scalar_select %p351, %s21, 1
      %s353 = smul.addr %s352, 4
      %s354 = scalar_lea.vmem %s4, %s353
      %s355 = smul.u32 4, %s22
      %p356 = scmp.lt.s32.totalorder %s21, 1
      %s357 = scalar_select %p356, %s21, 1
      %p358 = scmp.lt.s32.totalorder %s355, 27
      %s359 = scalar_select %p358, %s355, 27
      %s360 = smul.addr %s357, 28
      %s361 = sadd.s32 %s359, %s360
      %s362 = smul.addr %s361, 2
      %s363 = scalar_lea.vmem %s6, %s362
      %s364 = smul.u32 4, %s22
      %v366 = vld [vmem:[%s334] sm:$0xff]
      %367 = vst [vmem:[#allocation2] sm:$0xff] %v366
      %v368 = vld [vmem:[%s345] sm:$0xff]
      %369 = vst [vmem:[#allocation2 + $0x8] sm:$0xff] %v368
      %v370 = vld [vmem:[%s350] sm:$0x1]
      %v371 = vld [vmem:[%s2] sm:$0x3]
      %v373 = vpack.i.b16 %v370, %v370
      %v375 = vlaneseq
      %v376 = vshrl.u32 %v375, 7
      %v377 = vsub.s32 0, %v376
      %v378 = vrot.slane %v373, %v377
      %v379 = vmul.bf16 %v371, %v378
      %v380 = vld [vmem:[#allocation2] sm:$0xff]
      %s381 = scalar_lea.vmem %s2, 2
      %v382 = vld [vmem:[%s381] sm:$0x3]
      %v383 = vmul.bf16 %v382, %v378
      %v384 = vld [vmem:[#allocation2 + $0x8] sm:$0x3]
      %v387 = vcombine.high %v380, %v380
      %v389 = vunpack.c.l.s4 1983009808
      %v390 = vunpack.c.0.s8 %v389
      %v391 = vlaneseq
      %v392 = vshrl.u32 %v391, 7
      %v393 = vsub.s32 %v390, %v392
      %v394 = vrot.slane %v380, %v393
      %v396 = vunpack.c.l.s4 1983009808
      %v397 = vunpack.c.0.s8 %v396
      %v398 = vlaneseq
      %v399 = vshrl.u32 %v398, 7
      %v400 = vsub.s32 %v397, %v399
      %v401 = vrot.slane %v387, %v400
      %v402 = vcombine.high %v394, %v394
      %v403 = vcombine.high %v401, %v401
      %v405 = vunpack.c.l.s4 1983009808
      %v406 = vunpack.c.0.s8 %v405
      %v407 = vlaneseq
      %v408 = vshrl.u32 %v407, 7
      %v409 = vsub.s32 %v406, %v408
      %v410 = vrot.slane %v384, %v409
      %411 = vrot.lane.b32.xlu0 %v394, 127
      %v412 = vpop.permute.xlu0 %411
      %413 = vrot.lane.b32.xlu0 %v402, 127
      %v414 = vpop.permute.xlu0 %413
      %415 = vrot.lane.b32.xlu0 %v401, 127
      %v416 = vpop.permute.xlu0 %415
      %417 = vrot.lane.b32.xlu0 %v403, 127
      %v418 = vpop.permute.xlu0 %417
      %419 = vrot.lane.b32.xlu0 %v410, 127
      %v420 = vpop.permute.xlu0 %419
      %vm421 = vcmask 1039360
      %v422 = vsel %vm421, %v412, %v414
      %v423 = vsel %vm421, %v414, %v416
      %v424 = vsel %vm421, %v416, %v418
      %v425 = vsel %vm421, %v418, %v420
      %vm426 = vcmask 31744
      %v428 = vsel %vm426, %v383, 0
      %vm430 = vcmask 1041408
      %v432 = vsel %vm430, %v422, 0
      %v435 = vsel %vm430, %v423, 0
      %v438 = vsel %vm430, %v424, 0
      %v441 = vsel %vm430, %v425, 0
      %443 = vmatprep.subr.bf16.mxu0 %v435
      %444 = vmatpush1.bf16.msra.mxu0 %v432
      %445 = vmatprep.subr.bf16.mxu0 0
      %446 = vmatpush1.bf16.msra.mxu0 0
      %447 = vmatprep.subr.bf16.mxu0 0
      %448 = vmatpush1.bf16.msra.mxu0 0
      %449 = vmatprep.subr.bf16.mxu0 0
      %450 = vmatpush1.bf16.msra.mxu0 0
      %451 = vmatprep.subr.bf16.mxu0 0
      %452 = vmatpush1.bf16.msra.mxu0 0
      %453 = vmatprep.subr.bf16.mxu0 0
      %454 = vmatpush1.bf16.msra.mxu0 0
      %455 = vmatprep.subr.bf16.mxu0 0
      %456 = vmatpush1.bf16.msra.mxu0 0
      %457 = vmatprep.subr.bf16.mxu0 0
      %458 = vmatpush1.bf16.msra.mxu0 0
      %459 = vmatprep.subr.bf16.mxu0 0
      %460 = vmatpush1.bf16.msra.mxu0 0
      %461 = vmatprep.subr.bf16.mxu0 0
      %462 = vmatpush1.bf16.msra.mxu0 0
      %463 = vmatprep.subr.bf16.mxu0 0
      %464 = vmatpush1.bf16.msra.mxu0 0
      %465 = vmatprep.subr.bf16.mxu0 0
      %466 = vmatpush1.bf16.msra.mxu0 0
      %467 = vmatprep.subr.bf16.mxu0 0
      %468 = vmatpush1.bf16.msra.mxu0 0
      %469 = vmatprep.subr.bf16.mxu0 0
      %470 = vmatpush1.bf16.msra.mxu0 0
      %471 = vmatprep.subr.bf16.mxu0 0
      %472 = vmatpush1.bf16.msra.mxu0 0
      %473 = vmatprep.subr.bf16.mxu0 0
      %474 = vmatpush1.bf16.msra.mxu0 0
      %475 = vmatprep.mubr.bf16.mxu0 0
      %476 = vmatmul.mubr.bf16.gmra.mrb[0].mxu0 %v428
      %v477 = vpop.f32.mrb[0].mxu0
      %v478 = vadd.f32 0.0, %v477
      %v479 = vpop.f32.mrb[0].mxu0
      %v480 = vadd.f32 0.0, %v479
      %v481 = vpop.f32.mrb[0].mxu0
      %v482 = vpop.f32.mrb[0].mxu0
      %483 = vdwg.mxu0
      %484 = vmatprep.subr.bf16.mxu0 %v441
      %485 = vmatpush1.bf16.msra.mxu0 %v438
      %486 = vmatprep.subr.bf16.mxu0 0
      %487 = vmatpush1.bf16.msra.mxu0 0
      %488 = vmatprep.subr.bf16.mxu0 0
      %489 = vmatpush1.bf16.msra.mxu0 0
      %490 = vmatprep.subr.bf16.mxu0 0
      %491 = vmatpush1.bf16.msra.mxu0 0
      %492 = vmatprep.subr.bf16.mxu0 0
      %493 = vmatpush1.bf16.msra.mxu0 0
      %494 = vmatprep.subr.bf16.mxu0 0
      %495 = vmatpush1.bf16.msra.mxu0 0
      %496 = vmatprep.subr.bf16.mxu0 0
      %497 = vmatpush1.bf16.msra.mxu0 0
      %498 = vmatprep.subr.bf16.mxu0 0
      %499 = vmatpush1.bf16.msra.mxu0 0
      %500 = vmatprep.subr.bf16.mxu0 0
      %501 = vmatpush1.bf16.msra.mxu0 0
      %502 = vmatprep.subr.bf16.mxu0 0
      %503 = vmatpush1.bf16.msra.mxu0 0
      %504 = vmatprep.subr.bf16.mxu0 0
      %505 = vmatpush1.bf16.msra.mxu0 0
      %506 = vmatprep.subr.bf16.mxu0 0
      %507 = vmatpush1.bf16.msra.mxu0 0
      %508 = vmatprep.subr.bf16.mxu0 0
      %509 = vmatpush1.bf16.msra.mxu0 0
      %510 = vmatprep.subr.bf16.mxu0 0
      %511 = vmatpush1.bf16.msra.mxu0 0
      %512 = vmatprep.subr.bf16.mxu0 0
      %513 = vmatpush1.bf16.msra.mxu0 0
      %514 = vmatprep.subr.bf16.mxu0 0
      %515 = vmatpush1.bf16.msra.mxu0 0
      %516 = vmatprep.mubr.bf16.mxu0 0
      %517 = vmatmul.mubr.bf16.gmra.mrb[0].mxu0 %v428
      %v518 = vpop.f32.mrb[0].mxu0
      %v519 = vadd.f32 0.0, %v518
      %v520 = vpop.f32.mrb[0].mxu0
      %v521 = vadd.f32 0.0, %v520
      %v522 = vpop.f32.mrb[0].mxu0
      %v523 = vpop.f32.mrb[0].mxu0
      %524 = vdwg.mxu0
      %v526 = vsel %vm426, %v379, 0
      %v529 = vsel %vm430, %v394, 0
      %v532 = vsel %vm430, %v402, 0
      %v535 = vsel %vm430, %v401, 0
      %v538 = vsel %vm430, %v403, 0
      %540 = vmatprep.subr.bf16.mxu0 %v532
      %541 = vmatpush1.bf16.msra.mxu0 %v529
      %542 = vmatprep.subr.bf16.mxu0 0
      %543 = vmatpush1.bf16.msra.mxu0 0
      %544 = vmatprep.subr.bf16.mxu0 0
      %545 = vmatpush1.bf16.msra.mxu0 0
      %546 = vmatprep.subr.bf16.mxu0 0
      %547 = vmatpush1.bf16.msra.mxu0 0
      %548 = vmatprep.subr.bf16.mxu0 0
      %549 = vmatpush1.bf16.msra.mxu0 0
      %550 = vmatprep.subr.bf16.mxu0 0
      %551 = vmatpush1.bf16.msra.mxu0 0
      %552 = vmatprep.subr.bf16.mxu0 0
      %553 = vmatpush1.bf16.msra.mxu0 0
      %554 = vmatprep.subr.bf16.mxu0 0
      %555 = vmatpush1.bf16.msra.mxu0 0
      %556 = vmatprep.subr.bf16.mxu0 0
      %557 = vmatpush1.bf16.msra.mxu0 0
      %558 = vmatprep.subr.bf16.mxu0 0
      %559 = vmatpush1.bf16.msra.mxu0 0
      %560 = vmatprep.subr.bf16.mxu0 0
      %561 = vmatpush1.bf16.msra.mxu0 0
      %562 = vmatprep.subr.bf16.mxu0 0
      %563 = vmatpush1.bf16.msra.mxu0 0
      %564 = vmatprep.subr.bf16.mxu0 0
      %565 = vmatpush1.bf16.msra.mxu0 0
      %566 = vmatprep.subr.bf16.mxu0 0
      %567 = vmatpush1.bf16.msra.mxu0 0
      %568 = vmatprep.subr.bf16.mxu0 0
      %569 = vmatpush1.bf16.msra.mxu0 0
      %570 = vmatprep.subr.bf16.mxu0 0
      %571 = vmatpush1.bf16.msra.mxu0 0
      %572 = vmatprep.mubr.bf16.mxu0 0
      %573 = vmatmul.mubr.bf16.gmra.mrb[0].mxu0 %v526
      %v574 = vpop.f32.mrb[0].mxu0
      %v575 = vadd.f32 %v478, %v574
      %v576 = vpop.f32.mrb[0].mxu0
      %v577 = vadd.f32 %v480, %v576
      %v578 = vpop.f32.mrb[0].mxu0
      %v579 = vpop.f32.mrb[0].mxu0
      %580 = vdwg.mxu0
      %581 = vmatprep.subr.bf16.mxu0 %v538
      %582 = vmatpush1.bf16.msra.mxu0 %v535
      %583 = vmatprep.subr.bf16.mxu0 0
      %584 = vmatpush1.bf16.msra.mxu0 0
      %585 = vmatprep.subr.bf16.mxu0 0
      %586 = vmatpush1.bf16.msra.mxu0 0
      %587 = vmatprep.subr.bf16.mxu0 0
      %588 = vmatpush1.bf16.msra.mxu0 0
      %589 = vmatprep.subr.bf16.mxu0 0
      %590 = vmatpush1.bf16.msra.mxu0 0
      %591 = vmatprep.subr.bf16.mxu0 0
      %592 = vmatpush1.bf16.msra.mxu0 0
      %593 = vmatprep.subr.bf16.mxu0 0
      %594 = vmatpush1.bf16.msra.mxu0 0
      %595 = vmatprep.subr.bf16.mxu0 0
      %596 = vmatpush1.bf16.msra.mxu0 0
      %597 = vmatprep.subr.bf16.mxu0 0
      %598 = vmatpush1.bf16.msra.mxu0 0
      %599 = vmatprep.subr.bf16.mxu0 0
      %600 = vmatpush1.bf16.msra.mxu0 0
      %601 = vmatprep.subr.bf16.mxu0 0
      %602 = vmatpush1.bf16.msra.mxu0 0
      %603 = vmatprep.subr.bf16.mxu0 0
      %604 = vmatpush1.bf16.msra.mxu0 0
      %605 = vmatprep.subr.bf16.mxu0 0
      %606 = vmatpush1.bf16.msra.mxu0 0
      %607 = vmatprep.subr.bf16.mxu0 0
      %608 = vmatpush1.bf16.msra.mxu0 0
      %609 = vmatprep.subr.bf16.mxu0 0
      %610 = vmatpush1.bf16.msra.mxu0 0
      %611 = vmatprep.subr.bf16.mxu0 0
      %612 = vmatpush1.bf16.msra.mxu0 0
      %613 = vmatprep.mubr.bf16.mxu0 0
      %614 = vmatmul.mubr.bf16.gmra.mrb[0].mxu0 %v526
      %v615 = vpop.f32.mrb[0].mxu0
      %v616 = vadd.f32 %v519, %v615
      %v617 = vpop.f32.mrb[0].mxu0
      %v618 = vadd.f32 %v521, %v617
      %v619 = vpop.f32.mrb[0].mxu0
      %v620 = vpop.f32.mrb[0].mxu0
      %621 = vdwg.mxu0
      %s622 = scalar_lea.vmem %s2, 4
      %v623 = vld [vmem:[%s622] sm:$0x3]
      %v624 = vmul.bf16 %v623, %v378
      %v625 = vld [vmem:[#allocation2] sm:$0xff]
      %v626 = vld [vmem:[#allocation2 + $0x8] sm:$0x3]
      %v629 = vcombine.high %v625, %v625
      %v631 = vunpack.c.l.s4 1983009808
      %v632 = vunpack.c.0.s8 %v631
      %v633 = vlaneseq
      %v634 = vshrl.u32 %v633, 7
      %v635 = vsub.s32 %v632, %v634
      %v636 = vrot.slane %v625, %v635
      %v638 = vunpack.c.l.s4 1983009808
      %v639 = vunpack.c.0.s8 %v638
      %v640 = vlaneseq
      %v641 = vshrl.u32 %v640, 7
      %v642 = vsub.s32 %v639, %v641
      %v643 = vrot.slane %v629, %v642
      %v644 = vcombine.high %v636, %v636
      %v645 = vcombine.high %v643, %v643
      %v647 = vunpack.c.l.s4 1983009808
      %v648 = vunpack.c.0.s8 %v647
      %v649 = vlaneseq
      %v650 = vshrl.u32 %v649, 7
      %v651 = vsub.s32 %v648, %v650
      %v652 = vrot.slane %v626, %v651
      %653 = vrot.lane.b32.xlu0 %v636, 126
      %v654 = vpop.permute.xlu0 %653
      %655 = vrot.lane.b32.xlu0 %v644, 126
      %v656 = vpop.permute.xlu0 %655
      %657 = vrot.lane.b32.xlu0 %v643, 126
      %v658 = vpop.permute.xlu0 %657
      %659 = vrot.lane.b32.xlu0 %v645, 126
      %v660 = vpop.permute.xlu0 %659
      %661 = vrot.lane.b32.xlu0 %v652, 126
      %v662 = vpop.permute.xlu0 %661
      %vm663 = vcmask 1031168
      %v664 = vsel %vm663, %v654, %v656
      %v665 = vsel %vm663, %v656, %v658
      %v666 = vsel %vm663, %v658, %v660
      %v667 = vsel %vm663, %v660, %v662
      %v669 = vsel %vm426, %v624, 0
      %v672 = vsel %vm430, %v664, 0
      %v675 = vsel %vm430, %v665, 0
      %v678 = vsel %vm430, %v666, 0
      %v681 = vsel %vm430, %v667, 0
      %683 = vmatprep.subr.bf16.mxu0 %v675
      %684 = vmatpush1.bf16.msra.mxu0 %v672
      %685 = vmatprep.subr.bf16.mxu0 0
      %686 = vmatpush1.bf16.msra.mxu0 0
      %687 = vmatprep.subr.bf16.mxu0 0
      %688 = vmatpush1.bf16.msra.mxu0 0
      %689 = vmatprep.subr.bf16.mxu0 0
      %690 = vmatpush1.bf16.msra.mxu0 0
      %691 = vmatprep.subr.bf16.mxu0 0
      %692 = vmatpush1.bf16.msra.mxu0 0
      %693 = vmatprep.subr.bf16.mxu0 0
      %694 = vmatpush1.bf16.msra.mxu0 0
      %695 = vmatprep.subr.bf16.mxu0 0
      %696 = vmatpush1.bf16.msra.mxu0 0
      %697 = vmatprep.subr.bf16.mxu0 0
      %698 = vmatpush1.bf16.msra.mxu0 0
      %699 = vmatprep.subr.bf16.mxu0 0
      %700 = vmatpush1.bf16.msra.mxu0 0
      %701 = vmatprep.subr.bf16.mxu0 0
      %702 = vmatpush1.bf16.msra.mxu0 0
      %703 = vmatprep.subr.bf16.mxu0 0
      %704 = vmatpush1.bf16.msra.mxu0 0
      %705 = vmatprep.subr.bf16.mxu0 0
      %706 = vmatpush1.bf16.msra.mxu0 0
      %707 = vmatprep.subr.bf16.mxu0 0
      %708 = vmatpush1.bf16.msra.mxu0 0
      %709 = vmatprep.subr.bf16.mxu0 0
      %710 = vmatpush1.bf16.msra.mxu0 0
      %711 = vmatprep.subr.bf16.mxu0 0
      %712 = vmatpush1.bf16.msra.mxu0 0
      %713 = vmatprep.subr.bf16.mxu0 0
      %714 = vmatpush1.bf16.msra.mxu0 0
      %715 = vmatprep.mubr.bf16.mxu0 0
      %716 = vmatmul.mubr.bf16.gmra.mrb[0].mxu0 %v669
      %v717 = vpop.f32.mrb[0].mxu0
      %v718 = vadd.f32 0.0, %v717
      %v719 = vpop.f32.mrb[0].mxu0
      %v720 = vadd.f32 0.0, %v719
      %v721 = vpop.f32.mrb[0].mxu0
      %v722 = vpop.f32.mrb[0].mxu0
      %723 = vdwg.mxu0
      %724 = vmatprep.subr.bf16.mxu0 %v681
      %725 = vmatpush1.bf16.msra.mxu0 %v678
      %726 = vmatprep.subr.bf16.mxu0 0
      %727 = vmatpush1.bf16.msra.mxu0 0
      %728 = vmatprep.subr.bf16.mxu0 0
      %729 = vmatpush1.bf16.msra.mxu0 0
      %730 = vmatprep.subr.bf16.mxu0 0
      %731 = vmatpush1.bf16.msra.mxu0 0
      %732 = vmatprep.subr.bf16.mxu0 0
      %733 = vmatpush1.bf16.msra.mxu0 0
      %734 = vmatprep.subr.bf16.mxu0 0
      %735 = vmatpush1.bf16.msra.mxu0 0
      %736 = vmatprep.subr.bf16.mxu0 0
      %737 = vmatpush1.bf16.msra.mxu0 0
      %738 = vmatprep.subr.bf16.mxu0 0
      %739 = vmatpush1.bf16.msra.mxu0 0
      %740 = vmatprep.subr.bf16.mxu0 0
      %741 = vmatpush1.bf16.msra.mxu0 0
      %742 = vmatprep.subr.bf16.mxu0 0
      %743 = vmatpush1.bf16.msra.mxu0 0
      %744 = vmatprep.subr.bf16.mxu0 0
      %745 = vmatpush1.bf16.msra.mxu0 0
      %746 = vmatprep.subr.bf16.mxu0 0
      %747 = vmatpush1.bf16.msra.mxu0 0
      %748 = vmatprep.subr.bf16.mxu0 0
      %749 = vmatpush1.bf16.msra.mxu0 0
      %750 = vmatprep.subr.bf16.mxu0 0
      %751 = vmatpush1.bf16.msra.mxu0 0
      %752 = vmatprep.subr.bf16.mxu0 0
      %753 = vmatpush1.bf16.msra.mxu0 0
      %754 = vmatprep.subr.bf16.mxu0 0
      %755 = vmatpush1.bf16.msra.mxu0 0
      %756 = vmatprep.mubr.bf16.mxu0 0
      %757 = vmatmul.mubr.bf16.gmra.mrb[0].mxu0 %v669
      %v758 = vpop.f32.mrb[0].mxu0
      %v759 = vadd.f32 0.0, %v758
      %v760 = vpop.f32.mrb[0].mxu0
      %v761 = vadd.f32 0.0, %v760
      %v762 = vpop.f32.mrb[0].mxu0
      %v763 = vpop.f32.mrb[0].mxu0
      %764 = vdwg.mxu0
      %v765 = vadd.f32 %v575, %v718
      %v766 = vadd.f32 %v577, %v720
      %v767 = vadd.f32 %v616, %v759
      %v768 = vadd.f32 %v618, %v761
      %s769 = scalar_lea.vmem %s2, 6
      %v770 = vld [vmem:[%s769] sm:$0x3]
      %v771 = vmul.bf16 %v770, %v378
      %v772 = vld [vmem:[#allocation2] sm:$0xff]
      %v773 = vld [vmem:[#allocation2 + $0x8] sm:$0x3]
      %v776 = vcombine.high %v772, %v772
      %v778 = vunpack.c.l.s4 1983009808
      %v779 = vunpack.c.0.s8 %v778
      %v780 = vlaneseq
      %v781 = vshrl.u32 %v780, 7
      %v782 = vsub.s32 %v779, %v781
      %v783 = vrot.slane %v772, %v782
      %v785 = vunpack.c.l.s4 1983009808
      %v786 = vunpack.c.0.s8 %v785
      %v787 = vlaneseq
      %v788 = vshrl.u32 %v787, 7
      %v789 = vsub.s32 %v786, %v788
      %v790 = vrot.slane %v776, %v789
      %v791 = vcombine.high %v783, %v783
      %v792 = vcombine.high %v790, %v790
      %v794 = vunpack.c.l.s4 1983009808
      %v795 = vunpack.c.0.s8 %v794
      %v796 = vlaneseq
      %v797 = vshrl.u32 %v796, 7
      %v798 = vsub.s32 %v795, %v797
      %v799 = vrot.slane %v773, %v798
      %800 = vrot.lane.b32.xlu0 %v783, 114
      %v801 = vpop.permute.xlu0 %800
      %802 = vrot.lane.b32.xlu0 %v791, 114
      %v803 = vpop.permute.xlu0 %802
      %804 = vrot.lane.b32.xlu0 %v790, 114
      %v805 = vpop.permute.xlu0 %804
      %806 = vrot.lane.b32.xlu0 %v792, 114
      %v807 = vpop.permute.xlu0 %806
      %808 = vrot.lane.b32.xlu0 %v799, 114
      %v809 = vpop.permute.xlu0 %808
      %vm810 = vcmask 932864
      %v811 = vsel %vm810, %v801, %v803
      %v812 = vsel %vm810, %v803, %v805
      %v813 = vsel %vm810, %v805, %v807
      %v814 = vsel %vm810, %v807, %v809
      %v816 = vsel %vm426, %v771, 0
      %v819 = vsel %vm430, %v811, 0
      %v822 = vsel %vm430, %v812, 0
      %v825 = vsel %vm430, %v813, 0
      %v828 = vsel %vm430, %v814, 0
      %830 = vmatprep.subr.bf16.mxu0 %v822
      %831 = vmatpush1.bf16.msra.mxu0 %v819
      %832 = vmatprep.subr.bf16.mxu0 0
      %833 = vmatpush1.bf16.msra.mxu0 0
      %834 = vmatprep.subr.bf16.mxu0 0
      %835 = vmatpush1.bf16.msra.mxu0 0
      %836 = vmatprep.subr.bf16.mxu0 0
      %837 = vmatpush1.bf16.msra.mxu0 0
      %838 = vmatprep.subr.bf16.mxu0 0
      %839 = vmatpush1.bf16.msra.mxu0 0
      %840 = vmatprep.subr.bf16.mxu0 0
      %841 = vmatpush1.bf16.msra.mxu0 0
      %842 = vmatprep.subr.bf16.mxu0 0
      %843 = vmatpush1.bf16.msra.mxu0 0
      %844 = vmatprep.subr.bf16.mxu0 0
      %845 = vmatpush1.bf16.msra.mxu0 0
      %846 = vmatprep.subr.bf16.mxu0 0
      %847 = vmatpush1.bf16.msra.mxu0 0
      %848 = vmatprep.subr.bf16.mxu0 0
      %849 = vmatpush1.bf16.msra.mxu0 0
      %850 = vmatprep.subr.bf16.mxu0 0
      %851 = vmatpush1.bf16.msra.mxu0 0
      %852 = vmatprep.subr.bf16.mxu0 0
      %853 = vmatpush1.bf16.msra.mxu0 0
      %854 = vmatprep.subr.bf16.mxu0 0
      %855 = vmatpush1.bf16.msra.mxu0 0
      %856 = vmatprep.subr.bf16.mxu0 0
      %857 = vmatpush1.bf16.msra.mxu0 0
      %858 = vmatprep.subr.bf16.mxu0 0
      %859 = vmatpush1.bf16.msra.mxu0 0
      %860 = vmatprep.subr.bf16.mxu0 0
      %861 = vmatpush1.bf16.msra.mxu0 0
      %862 = vmatprep.mubr.bf16.mxu0 0
      %863 = vmatmul.mubr.bf16.gmra.mrb[0].mxu0 %v816
      %v864 = vpop.f32.mrb[0].mxu0
      %v865 = vadd.f32 0.0, %v864
      %v866 = vpop.f32.mrb[0].mxu0
      %v867 = vadd.f32 0.0, %v866
      %v868 = vpop.f32.mrb[0].mxu0
      %v869 = vpop.f32.mrb[0].mxu0
      %870 = vdwg.mxu0
      %871 = vmatprep.subr.bf16.mxu0 %v828
      %872 = vmatpush1.bf16.msra.mxu0 %v825
      %873 = vmatprep.subr.bf16.mxu0 0
      %874 = vmatpush1.bf16.msra.mxu0 0
      %875 = vmatprep.subr.bf16.mxu0 0
      %876 = vmatpush1.bf16.msra.mxu0 0
      %877 = vmatprep.subr.bf16.mxu0 0
      %878 = vmatpush1.bf16.msra.mxu0 0
      %879 = vmatprep.subr.bf16.mxu0 0
      %880 = vmatpush1.bf16.msra.mxu0 0
      %881 = vmatprep.subr.bf16.mxu0 0
      %882 = vmatpush1.bf16.msra.mxu0 0
      %883 = vmatprep.subr.bf16.mxu0 0
      %884 = vmatpush1.bf16.msra.mxu0 0
      %885 = vmatprep.subr.bf16.mxu0 0
      %886 = vmatpush1.bf16.msra.mxu0 0
      %887 = vmatprep.subr.bf16.mxu0 0
      %888 = vmatpush1.bf16.msra.mxu0 0
      %889 = vmatprep.subr.bf16.mxu0 0
      %890 = vmatpush1.bf16.msra.mxu0 0
      %891 = vmatprep.subr.bf16.mxu0 0
      %892 = vmatpush1.bf16.msra.mxu0 0
      %893 = vmatprep.subr.bf16.mxu0 0
      %894 = vmatpush1.bf16.msra.mxu0 0
      %895 = vmatprep.subr.bf16.mxu0 0
      %896 = vmatpush1.bf16.msra.mxu0 0
      %897 = vmatprep.subr.bf16.mxu0 0
      %898 = vmatpush1.bf16.msra.mxu0 0
      %899 = vmatprep.subr.bf16.mxu0 0
      %900 = vmatpush1.bf16.msra.mxu0 0
      %901 = vmatprep.subr.bf16.mxu0 0
      %902 = vmatpush1.bf16.msra.mxu0 0
      %903 = vmatprep.mubr.bf16.mxu0 0
      %904 = vmatmul.mubr.bf16.gmra.mrb[0].mxu0 %v816
      %v905 = vpop.f32.mrb[0].mxu0
      %v906 = vadd.f32 0.0, %v905
      %v907 = vpop.f32.mrb[0].mxu0
      %v908 = vadd.f32 0.0, %v907
      %v909 = vpop.f32.mrb[0].mxu0
      %v910 = vpop.f32.mrb[0].mxu0
      %911 = vdwg.mxu0
      %v912 = vadd.f32 %v765, %v865
      %v913 = vadd.f32 %v766, %v867
      %v914 = vadd.f32 %v767, %v906
      %v915 = vadd.f32 %v768, %v908
      %s916 = scalar_lea.vmem %s2, 8
      %v917 = vld [vmem:[%s916] sm:$0x3]
      %v918 = vmul.bf16 %v917, %v378
      %v919 = vld [vmem:[#allocation2] sm:$0xff]
      %v920 = vld [vmem:[#allocation2 + $0x8] sm:$0x3]
      %v923 = vcombine.high %v919, %v919
      %v925 = vunpack.c.l.s4 1983009808
      %v926 = vunpack.c.0.s8 %v925
      %v927 = vlaneseq
      %v928 = vshrl.u32 %v927, 7
      %v929 = vsub.s32 %v926, %v928
      %v930 = vrot.slane %v919, %v929
      %v932 = vunpack.c.l.s4 1983009808
      %v933 = vunpack.c.0.s8 %v932
      %v934 = vlaneseq
      %v935 = vshrl.u32 %v934, 7
      %v936 = vsub.s32 %v933, %v935
      %v937 = vrot.slane %v923, %v936
      %v938 = vcombine.high %v930, %v930
      %v939 = vcombine.high %v937, %v937
      %v941 = vunpack.c.l.s4 1983009808
      %v942 = vunpack.c.0.s8 %v941
      %v943 = vlaneseq
      %v944 = vshrl.u32 %v943, 7
      %v945 = vsub.s32 %v942, %v944
      %v946 = vrot.slane %v920, %v945
      %947 = vrot.lane.b32.xlu0 %v930, 113
      %v948 = vpop.permute.xlu0 %947
      %949 = vrot.lane.b32.xlu0 %v938, 113
      %v950 = vpop.permute.xlu0 %949
      %951 = vrot.lane.b32.xlu0 %v937, 113
      %v952 = vpop.permute.xlu0 %951
      %953 = vrot.lane.b32.xlu0 %v939, 113
      %v954 = vpop.permute.xlu0 %953
      %955 = vrot.lane.b32.xlu0 %v946, 113
      %v956 = vpop.permute.xlu0 %955
      %vm957 = vcmask 924672
      %v958 = vsel %vm957, %v948, %v950
      %v959 = vsel %vm957, %v950, %v952
      %v960 = vsel %vm957, %v952, %v954
      %v961 = vsel %vm957, %v954, %v956
      %v963 = vsel %vm426, %v918, 0
      %v966 = vsel %vm430, %v958, 0
      %v969 = vsel %vm430, %v959, 0
      %v972 = vsel %vm430, %v960, 0
      %v975 = vsel %vm430, %v961, 0
      %977 = vmatprep.subr.bf16.mxu0 %v969
      %978 = vmatpush1.bf16.msra.mxu0 %v966
      %979 = vmatprep.subr.bf16.mxu0 0
      %980 = vmatpush1.bf16.msra.mxu0 0
      %981 = vmatprep.subr.bf16.mxu0 0
      %982 = vmatpush1.bf16.msra.mxu0 0
      %983 = vmatprep.subr.bf16.mxu0 0
      %984 = vmatpush1.bf16.msra.mxu0 0
      %985 = vmatprep.subr.bf16.mxu0 0
      %986 = vmatpush1.bf16.msra.mxu0 0
      %987 = vmatprep.subr.bf16.mxu0 0
      %988 = vmatpush1.bf16.msra.mxu0 0
      %989 = vmatprep.subr.bf16.mxu0 0
      %990 = vmatpush1.bf16.msra.mxu0 0
      %991 = vmatprep.subr.bf16.mxu0 0
      %992 = vmatpush1.bf16.msra.mxu0 0
      %993 = vmatprep.subr.bf16.mxu0 0
      %994 = vmatpush1.bf16.msra.mxu0 0
      %995 = vmatprep.subr.bf16.mxu0 0
      %996 = vmatpush1.bf16.msra.mxu0 0
      %997 = vmatprep.subr.bf16.mxu0 0
      %998 = vmatpush1.bf16.msra.mxu0 0
      %999 = vmatprep.subr.bf16.mxu0 0
      %1000 = vmatpush1.bf16.msra.mxu0 0
      %1001 = vmatprep.subr.bf16.mxu0 0
      %1002 = vmatpush1.bf16.msra.mxu0 0
      %1003 = vmatprep.subr.bf16.mxu0 0
      %1004 = vmatpush1.bf16.msra.mxu0 0
      %1005 = vmatprep.subr.bf16.mxu0 0
      %1006 = vmatpush1.bf16.msra.mxu0 0
      %1007 = vmatprep.subr.bf16.mxu0 0
      %1008 = vmatpush1.bf16.msra.mxu0 0
      %1009 = vmatprep.mubr.bf16.mxu0 0
      %1010 = vmatmul.mubr.bf16.gmra.mrb[0].mxu0 %v963
      %v1011 = vpop.f32.mrb[0].mxu0
      %v1012 = vadd.f32 0.0, %v1011
      %v1013 = vpop.f32.mrb[0].mxu0
      %v1014 = vadd.f32 0.0, %v1013
      %v1015 = vpop.f32.mrb[0].mxu0
      %v1016 = vpop.f32.mrb[0].mxu0
      %1017 = vdwg.mxu0
      %1018 = vmatprep.subr.bf16.mxu0 %v975
      %1019 = vmatpush1.bf16.msra.mxu0 %v972
      %1020 = vmatprep.subr.bf16.mxu0 0
      %1021 = vmatpush1.bf16.msra.mxu0 0
      %1022 = vmatprep.subr.bf16.mxu0 0
      %1023 = vmatpush1.bf16.msra.mxu0 0
      %1024 = vmatprep.subr.bf16.mxu0 0
      %1025 = vmatpush1.bf16.msra.mxu0 0
      %1026 = vmatprep.subr.bf16.mxu0 0
      %1027 = vmatpush1.bf16.msra.mxu0 0
      %1028 = vmatprep.subr.bf16.mxu0 0
      %1029 = vmatpush1.bf16.msra.mxu0 0
      %1030 = vmatprep.subr.bf16.mxu0 0
      %1031 = vmatpush1.bf16.msra.mxu0 0
      %1032 = vmatprep.subr.bf16.mxu0 0
      %1033 = vmatpush1.bf16.msra.mxu0 0
      %1034 = vmatprep.subr.bf16.mxu0 0
      %1035 = vmatpush1.bf16.msra.mxu0 0
      %1036 = vmatprep.subr.bf16.mxu0 0
      %1037 = vmatpush1.bf16.msra.mxu0 0
      %1038 = vmatprep.subr.bf16.mxu0 0
      %1039 = vmatpush1.bf16.msra.mxu0 0
      %1040 = vmatprep.subr.bf16.mxu0 0
      %1041 = vmatpush1.bf16.msra.mxu0 0
      %1042 = vmatprep.subr.bf16.mxu0 0
      %1043 = vmatpush1.bf16.msra.mxu0 0
      %1044 = vmatprep.subr.bf16.mxu0 0
      %1045 = vmatpush1.bf16.msra.mxu0 0
      %1046 = vmatprep.subr.bf16.mxu0 0
      %1047 = vmatpush1.bf16.msra.mxu0 0
      %1048 = vmatprep.subr.bf16.mxu0 0
      %1049 = vmatpush1.bf16.msra.mxu0 0
      %1050 = vmatprep.mubr.bf16.mxu0 0
      %1051 = vmatmul.mubr.bf16.gmra.mrb[0].mxu0 %v963
      %v1052 = vpop.f32.mrb[0].mxu0
      %v1053 = vadd.f32 0.0, %v1052
      %v1054 = vpop.f32.mrb[0].mxu0
      %v1055 = vadd.f32 0.0, %v1054
      %v1056 = vpop.f32.mrb[0].mxu0
      %v1057 = vpop.f32.mrb[0].mxu0
      %1058 = vdwg.mxu0
      %v1059 = vadd.f32 %v912, %v1012
      %v1060 = vadd.f32 %v913, %v1014
      %v1061 = vadd.f32 %v914, %v1053
      %v1062 = vadd.f32 %v915, %v1055
      %s1063 = scalar_lea.vmem %s2, 10
      %v1064 = vld [vmem:[%s1063] sm:$0x3]
      %v1065 = vmul.bf16 %v1064, %v378
      %v1066 = vld [vmem:[#allocation2] sm:$0xff]
      %v1067 = vld [vmem:[#allocation2 + $0x8] sm:$0x3]
      %v1070 = vcombine.high %v1066, %v1066
      %v1072 = vunpack.c.l.s4 1983009808
      %v1073 = vunpack.c.0.s8 %v1072
      %v1074 = vlaneseq
      %v1075 = vshrl.u32 %v1074, 7
      %v1076 = vsub.s32 %v1073, %v1075
      %v1077 = vrot.slane %v1066, %v1076
      %v1079 = vunpack.c.l.s4 1983009808
      %v1080 = vunpack.c.0.s8 %v1079
      %v1081 = vlaneseq
      %v1082 = vshrl.u32 %v1081, 7
      %v1083 = vsub.s32 %v1080, %v1082
      %v1084 = vrot.slane %v1070, %v1083
      %v1085 = vcombine.high %v1077, %v1077
      %v1086 = vcombine.high %v1084, %v1084
      %v1088 = vunpack.c.l.s4 1983009808
      %v1089 = vunpack.c.0.s8 %v1088
      %v1090 = vlaneseq
      %v1091 = vshrl.u32 %v1090, 7
      %v1092 = vsub.s32 %v1089, %v1091
      %v1093 = vrot.slane %v1067, %v1092
      %1094 = vrot.lane.b32.xlu0 %v1077, 112
      %v1095 = vpop.permute.xlu0 %1094
      %1096 = vrot.lane.b32.xlu0 %v1085, 112
      %v1097 = vpop.permute.xlu0 %1096
      %1098 = vrot.lane.b32.xlu0 %v1084, 112
      %v1099 = vpop.permute.xlu0 %1098
      %1100 = vrot.lane.b32.xlu0 %v1086, 112
      %v1101 = vpop.permute.xlu0 %1100
      %1102 = vrot.lane.b32.xlu0 %v1093, 112
      %v1103 = vpop.permute.xlu0 %1102
      %vm1104 = vcmask 916480
      %v1105 = vsel %vm1104, %v1095, %v1097
      %v1106 = vsel %vm1104, %v1097, %v1099
      %v1107 = vsel %vm1104, %v1099, %v1101
      %v1108 = vsel %vm1104, %v1101, %v1103
      %v1110 = vsel %vm426, %v1065, 0
      %v1113 = vsel %vm430, %v1105, 0
      %v1116 = vsel %vm430, %v1106, 0
      %v1119 = vsel %vm430, %v1107, 0
      %v1122 = vsel %vm430, %v1108, 0
      %1124 = vmatprep.subr.bf16.mxu0 %v1116
      %1125 = vmatpush1.bf16.msra.mxu0 %v1113
      %1126 = vmatprep.subr.bf16.mxu0 0
      %1127 = vmatpush1.bf16.msra.mxu0 0
      %1128 = vmatprep.subr.bf16.mxu0 0
      %1129 = vmatpush1.bf16.msra.mxu0 0
      %1130 = vmatprep.subr.bf16.mxu0 0
      %1131 = vmatpush1.bf16.msra.mxu0 0
      %1132 = vmatprep.subr.bf16.mxu0 0
      %1133 = vmatpush1.bf16.msra.mxu0 0
      %1134 = vmatprep.subr.bf16.mxu0 0
      %1135 = vmatpush1.bf16.msra.mxu0 0
      %1136 = vmatprep.subr.bf16.mxu0 0
      %1137 = vmatpush1.bf16.msra.mxu0 0
      %1138 = vmatprep.subr.bf16.mxu0 0
      %1139 = vmatpush1.bf16.msra.mxu0 0
      %1140 = vmatprep.subr.bf16.mxu0 0
      %1141 = vmatpush1.bf16.msra.mxu0 0
      %1142 = vmatprep.subr.bf16.mxu0 0
      %1143 = vmatpush1.bf16.msra.mxu0 0
      %1144 = vmatprep.subr.bf16.mxu0 0
      %1145 = vmatpush1.bf16.msra.mxu0 0
      %1146 = vmatprep.subr.bf16.mxu0 0
      %1147 = vmatpush1.bf16.msra.mxu0 0
      %1148 = vmatprep.subr.bf16.mxu0 0
      %1149 = vmatpush1.bf16.msra.mxu0 0
      %1150 = vmatprep.subr.bf16.mxu0 0
      %1151 = vmatpush1.bf16.msra.mxu0 0
      %1152 = vmatprep.subr.bf16.mxu0 0
      %1153 = vmatpush1.bf16.msra.mxu0 0
      %1154 = vmatprep.subr.bf16.mxu0 0
      %1155 = vmatpush1.bf16.msra.mxu0 0
      %1156 = vmatprep.mubr.bf16.mxu0 0
      %1157 = vmatmul.mubr.bf16.gmra.mrb[0].mxu0 %v1110
      %v1158 = vpop.f32.mrb[0].mxu0
      %v1159 = vadd.f32 0.0, %v1158
      %v1160 = vpop.f32.mrb[0].mxu0
      %v1161 = vadd.f32 0.0, %v1160
      %v1162 = vpop.f32.mrb[0].mxu0
      %v1163 = vpop.f32.mrb[0].mxu0
      %1164 = vdwg.mxu0
      %1165 = vmatprep.subr.bf16.mxu0 %v1122
      %1166 = vmatpush1.bf16.msra.mxu0 %v1119
      %1167 = vmatprep.subr.bf16.mxu0 0
      %1168 = vmatpush1.bf16.msra.mxu0 0
      %1169 = vmatprep.subr.bf16.mxu0 0
      %1170 = vmatpush1.bf16.msra.mxu0 0
      %1171 = vmatprep.subr.bf16.mxu0 0
      %1172 = vmatpush1.bf16.msra.mxu0 0
      %1173 = vmatprep.subr.bf16.mxu0 0
      %1174 = vmatpush1.bf16.msra.mxu0 0
      %1175 = vmatprep.subr.bf16.mxu0 0
      %1176 = vmatpush1.bf16.msra.mxu0 0
      %1177 = vmatprep.subr.bf16.mxu0 0
      %1178 = vmatpush1.bf16.msra.mxu0 0
      %1179 = vmatprep.subr.bf16.mxu0 0
      %1180 = vmatpush1.bf16.msra.mxu0 0
      %1181 = vmatprep.subr.bf16.mxu0 0
      %1182 = vmatpush1.bf16.msra.mxu0 0
      %1183 = vmatprep.subr.bf16.mxu0 0
      %1184 = vmatpush1.bf16.msra.mxu0 0
      %1185 = vmatprep.subr.bf16.mxu0 0
      %1186 = vmatpush1.bf16.msra.mxu0 0
      %1187 = vmatprep.subr.bf16.mxu0 0
      %1188 = vmatpush1.bf16.msra.mxu0 0
      %1189 = vmatprep.subr.bf16.mxu0 0
      %1190 = vmatpush1.bf16.msra.mxu0 0
      %1191 = vmatprep.subr.bf16.mxu0 0
      %1192 = vmatpush1.bf16.msra.mxu0 0
      %1193 = vmatprep.subr.bf16.mxu0 0
      %1194 = vmatpush1.bf16.msra.mxu0 0
      %1195 = vmatprep.subr.bf16.mxu0 0
      %1196 = vmatpush1.bf16.msra.mxu0 0
      %1197 = vmatprep.mubr.bf16.mxu0 0
      %1198 = vmatmul.mubr.bf16.gmra.mrb[0].mxu0 %v1110
      %v1199 = vpop.f32.mrb[0].mxu0
      %v1200 = vadd.f32 0.0, %v1199
      %v1201 = vpop.f32.mrb[0].mxu0
      %v1202 = vadd.f32 0.0, %v1201
      %v1203 = vpop.f32.mrb[0].mxu0
      %v1204 = vpop.f32.mrb[0].mxu0
      %1205 = vdwg.mxu0
      %v1206 = vadd.f32 %v1059, %v1159
      %v1207 = vadd.f32 %v1060, %v1161
      %v1208 = vadd.f32 %v1061, %v1200
      %v1209 = vadd.f32 %v1062, %v1202
      %s1210 = scalar_lea.vmem %s2, 12
      %v1211 = vld [vmem:[%s1210] sm:$0x3]
      %v1212 = vmul.bf16 %v1211, %v378
      %v1213 = vld [vmem:[#allocation2] sm:$0xff]
      %v1214 = vld [vmem:[#allocation2 + $0x8] sm:$0x3]
      %v1217 = vcombine.high %v1213, %v1213
      %v1219 = vunpack.c.l.s4 1983009808
      %v1220 = vunpack.c.0.s8 %v1219
      %v1221 = vlaneseq
      %v1222 = vshrl.u32 %v1221, 7
      %v1223 = vsub.s32 %v1220, %v1222
      %v1224 = vrot.slane %v1213, %v1223
      %v1226 = vunpack.c.l.s4 1983009808
      %v1227 = vunpack.c.0.s8 %v1226
      %v1228 = vlaneseq
      %v1229 = vshrl.u32 %v1228, 7
      %v1230 = vsub.s32 %v1227, %v1229
      %v1231 = vrot.slane %v1217, %v1230
      %v1232 = vcombine.high %v1224, %v1224
      %v1233 = vcombine.high %v1231, %v1231
      %v1235 = vunpack.c.l.s4 1983009808
      %v1236 = vunpack.c.0.s8 %v1235
      %v1237 = vlaneseq
      %v1238 = vshrl.u32 %v1237, 7
      %v1239 = vsub.s32 %v1236, %v1238
      %v1240 = vrot.slane %v1214, %v1239
      %1241 = vrot.lane.b32.xlu0 %v1224, 100
      %v1242 = vpop.permute.xlu0 %1241
      %1243 = vrot.lane.b32.xlu0 %v1232, 100
      %v1244 = vpop.permute.xlu0 %1243
      %1245 = vrot.lane.b32.xlu0 %v1231, 100
      %v1246 = vpop.permute.xlu0 %1245
      %1247 = vrot.lane.b32.xlu0 %v1233, 100
      %v1248 = vpop.permute.xlu0 %1247
      %1249 = vrot.lane.b32.xlu0 %v1240, 100
      %v1250 = vpop.permute.xlu0 %1249
      %vm1251 = vcmask 818176
      %v1252 = vsel %vm1251, %v1242, %v1244
      %v1253 = vsel %vm1251, %v1244, %v1246
      %v1254 = vsel %vm1251, %v1246, %v1248
      %v1255 = vsel %vm1251, %v1248, %v1250
      %v1257 = vsel %vm426, %v1212, 0
      %v1260 = vsel %vm430, %v1252, 0
      %v1263 = vsel %vm430, %v1253, 0
      %v1266 = vsel %vm430, %v1254, 0
      %v1269 = vsel %vm430, %v1255, 0
      %1271 = vmatprep.subr.bf16.mxu0 %v1263
      %1272 = vmatpush1.bf16.msra.mxu0 %v1260
      %1273 = vmatprep.subr.bf16.mxu0 0
      %1274 = vmatpush1.bf16.msra.mxu0 0
      %1275 = vmatprep.subr.bf16.mxu0 0
      %1276 = vmatpush1.bf16.msra.mxu0 0
      %1277 = vmatprep.subr.bf16.mxu0 0
      %1278 = vmatpush1.bf16.msra.mxu0 0
      %1279 = vmatprep.subr.bf16.mxu0 0
      %1280 = vmatpush1.bf16.msra.mxu0 0
      %1281 = vmatprep.subr.bf16.mxu0 0
      %1282 = vmatpush1.bf16.msra.mxu0 0
      %1283 = vmatprep.subr.bf16.mxu0 0
      %1284 = vmatpush1.bf16.msra.mxu0 0
      %1285 = vmatprep.subr.bf16.mxu0 0
      %1286 = vmatpush1.bf16.msra.mxu0 0
      %1287 = vmatprep.subr.bf16.mxu0 0
      %1288 = vmatpush1.bf16.msra.mxu0 0
      %1289 = vmatprep.subr.bf16.mxu0 0
      %1290 = vmatpush1.bf16.msra.mxu0 0
      %1291 = vmatprep.subr.bf16.mxu0 0
      %1292 = vmatpush1.bf16.msra.mxu0 0
      %1293 = vmatprep.subr.bf16.mxu0 0
      %1294 = vmatpush1.bf16.msra.mxu0 0
      %1295 = vmatprep.subr.bf16.mxu0 0
      %1296 = vmatpush1.bf16.msra.mxu0 0
      %1297 = vmatprep.subr.bf16.mxu0 0
      %1298 = vmatpush1.bf16.msra.mxu0 0
      %1299 = vmatprep.subr.bf16.mxu0 0
      %1300 = vmatpush1.bf16.msra.mxu0 0
      %1301 = vmatprep.subr.bf16.mxu0 0
      %1302 = vmatpush1.bf16.msra.mxu0 0
      %1303 = vmatprep.mubr.bf16.mxu0 0
      %1304 = vmatmul.mubr.bf16.gmra.mrb[0].mxu0 %v1257
      %v1305 = vpop.f32.mrb[0].mxu0
      %v1306 = vadd.f32 0.0, %v1305
      %v1307 = vpop.f32.mrb[0].mxu0
      %v1308 = vadd.f32 0.0, %v1307
      %v1309 = vpop.f32.mrb[0].mxu0
      %v1310 = vpop.f32.mrb[0].mxu0
      %1311 = vdwg.mxu0
      %1312 = vmatprep.subr.bf16.mxu0 %v1269
      %1313 = vmatpush1.bf16.msra.mxu0 %v1266
      %1314 = vmatprep.subr.bf16.mxu0 0
      %1315 = vmatpush1.bf16.msra.mxu0 0
      %1316 = vmatprep.subr.bf16.mxu0 0
      %1317 = vmatpush1.bf16.msra.mxu0 0
      %1318 = vmatprep.subr.bf16.mxu0 0
      %1319 = vmatpush1.bf16.msra.mxu0 0
      %1320 = vmatprep.subr.bf16.mxu0 0
      %1321 = vmatpush1.bf16.msra.mxu0 0
      %1322 = vmatprep.subr.bf16.mxu0 0
      %1323 = vmatpush1.bf16.msra.mxu0 0
      %1324 = vmatprep.subr.bf16.mxu0 0
      %1325 = vmatpush1.bf16.msra.mxu0 0
      %1326 = vmatprep.subr.bf16.mxu0 0
      %1327 = vmatpush1.bf16.msra.mxu0 0
      %1328 = vmatprep.subr.bf16.mxu0 0
      %1329 = vmatpush1.bf16.msra.mxu0 0
      %1330 = vmatprep.subr.bf16.mxu0 0
      %1331 = vmatpush1.bf16.msra.mxu0 0
      %1332 = vmatprep.subr.bf16.mxu0 0
      %1333 = vmatpush1.bf16.msra.mxu0 0
      %1334 = vmatprep.subr.bf16.mxu0 0
      %1335 = vmatpush1.bf16.msra.mxu0 0
      %1336 = vmatprep.subr.bf16.mxu0 0
      %1337 = vmatpush1.bf16.msra.mxu0 0
      %1338 = vmatprep.subr.bf16.mxu0 0
      %1339 = vmatpush1.bf16.msra.mxu0 0
      %1340 = vmatprep.subr.bf16.mxu0 0
      %1341 = vmatpush1.bf16.msra.mxu0 0
      %1342 = vmatprep.subr.bf16.mxu0 0
      %1343 = vmatpush1.bf16.msra.mxu0 0
      %1344 = vmatprep.mubr.bf16.mxu0 0
      %1345 = vmatmul.mubr.bf16.gmra.mrb[0].mxu0 %v1257
      %v1346 = vpop.f32.mrb[0].mxu0
      %v1347 = vadd.f32 0.0, %v1346
      %v1348 = vpop.f32.mrb[0].mxu0
      %v1349 = vadd.f32 0.0, %v1348
      %v1350 = vpop.f32.mrb[0].mxu0
      %v1351 = vpop.f32.mrb[0].mxu0
      %1352 = vdwg.mxu0
      %v1353 = vadd.f32 %v1206, %v1306
      %v1354 = vadd.f32 %v1207, %v1308
      %v1355 = vadd.f32 %v1208, %v1347
      %v1356 = vadd.f32 %v1209, %v1349
      %s1357 = scalar_lea.vmem %s2, 14
      %v1358 = vld [vmem:[%s1357] sm:$0x3]
      %v1359 = vmul.bf16 %v1358, %v378
      %v1360 = vld [vmem:[#allocation2] sm:$0xff]
      %v1361 = vld [vmem:[#allocation2 + $0x8] sm:$0x3]
      %v1364 = vcombine.high %v1360, %v1360
      %v1366 = vunpack.c.l.s4 1983009808
      %v1367 = vunpack.c.0.s8 %v1366
      %v1368 = vlaneseq
      %v1369 = vshrl.u32 %v1368, 7
      %v1370 = vsub.s32 %v1367, %v1369
      %v1371 = vrot.slane %v1360, %v1370
      %v1373 = vunpack.c.l.s4 1983009808
      %v1374 = vunpack.c.0.s8 %v1373
      %v1375 = vlaneseq
      %v1376 = vshrl.u32 %v1375, 7
      %v1377 = vsub.s32 %v1374, %v1376
      %v1378 = vrot.slane %v1364, %v1377
      %v1379 = vcombine.high %v1371, %v1371
      %v1380 = vcombine.high %v1378, %v1378
      %v1382 = vunpack.c.l.s4 1983009808
      %v1383 = vunpack.c.0.s8 %v1382
      %v1384 = vlaneseq
      %v1385 = vshrl.u32 %v1384, 7
      %v1386 = vsub.s32 %v1383, %v1385
      %v1387 = vrot.slane %v1361, %v1386
      %1388 = vrot.lane.b32.xlu0 %v1371, 99
      %v1389 = vpop.permute.xlu0 %1388
      %1390 = vrot.lane.b32.xlu0 %v1379, 99
      %v1391 = vpop.permute.xlu0 %1390
      %1392 = vrot.lane.b32.xlu0 %v1378, 99
      %v1393 = vpop.permute.xlu0 %1392
      %1394 = vrot.lane.b32.xlu0 %v1380, 99
      %v1395 = vpop.permute.xlu0 %1394
      %1396 = vrot.lane.b32.xlu0 %v1387, 99
      %v1397 = vpop.permute.xlu0 %1396
      %vm1398 = vcmask 809984
      %v1399 = vsel %vm1398, %v1389, %v1391
      %v1400 = vsel %vm1398, %v1391, %v1393
      %v1401 = vsel %vm1398, %v1393, %v1395
      %v1402 = vsel %vm1398, %v1395, %v1397
      %v1404 = vsel %vm426, %v1359, 0
      %v1407 = vsel %vm430, %v1399, 0
      %v1410 = vsel %vm430, %v1400, 0
      %v1413 = vsel %vm430, %v1401, 0
      %v1416 = vsel %vm430, %v1402, 0
      %1418 = vmatprep.subr.bf16.mxu0 %v1410
      %1419 = vmatpush1.bf16.msra.mxu0 %v1407
      %1420 = vmatprep.subr.bf16.mxu0 0
      %1421 = vmatpush1.bf16.msra.mxu0 0
      %1422 = vmatprep.subr.bf16.mxu0 0
      %1423 = vmatpush1.bf16.msra.mxu0 0
      %1424 = vmatprep.subr.bf16.mxu0 0
      %1425 = vmatpush1.bf16.msra.mxu0 0
      %1426 = vmatprep.subr.bf16.mxu0 0
      %1427 = vmatpush1.bf16.msra.mxu0 0
      %1428 = vmatprep.subr.bf16.mxu0 0
      %1429 = vmatpush1.bf16.msra.mxu0 0
      %1430 = vmatprep.subr.bf16.mxu0 0
      %1431 = vmatpush1.bf16.msra.mxu0 0
      %1432 = vmatprep.subr.bf16.mxu0 0
      %1433 = vmatpush1.bf16.msra.mxu0 0
      %1434 = vmatprep.subr.bf16.mxu0 0
      %1435 = vmatpush1.bf16.msra.mxu0 0
      %1436 = vmatprep.subr.bf16.mxu0 0
      %1437 = vmatpush1.bf16.msra.mxu0 0
      %1438 = vmatprep.subr.bf16.mxu0 0
      %1439 = vmatpush1.bf16.msra.mxu0 0
      %1440 = vmatprep.subr.bf16.mxu0 0
      %1441 = vmatpush1.bf16.msra.mxu0 0
      %1442 = vmatprep.subr.bf16.mxu0 0
      %1443 = vmatpush1.bf16.msra.mxu0 0
      %1444 = vmatprep.subr.bf16.mxu0 0
      %1445 = vmatpush1.bf16.msra.mxu0 0
      %1446 = vmatprep.subr.bf16.mxu0 0
      %1447 = vmatpush1.bf16.msra.mxu0 0
      %1448 = vmatprep.subr.bf16.mxu0 0
      %1449 = vmatpush1.bf16.msra.mxu0 0
      %1450 = vmatprep.mubr.bf16.mxu0 0
      %1451 = vmatmul.mubr.bf16.gmra.mrb[0].mxu0 %v1404
      %v1452 = vpop.f32.mrb[0].mxu0
      %v1453 = vadd.f32 0.0, %v1452
      %v1454 = vpop.f32.mrb[0].mxu0
      %v1455 = vadd.f32 0.0, %v1454
      %v1456 = vpop.f32.mrb[0].mxu0
      %v1457 = vpop.f32.mrb[0].mxu0
      %1458 = vdwg.mxu0
      %1459 = vmatprep.subr.bf16.mxu0 %v1416
      %1460 = vmatpush1.bf16.msra.mxu0 %v1413
      %1461 = vmatprep.subr.bf16.mxu0 0
      %1462 = vmatpush1.bf16.msra.mxu0 0
      %1463 = vmatprep.subr.bf16.mxu0 0
      %1464 = vmatpush1.bf16.msra.mxu0 0
      %1465 = vmatprep.subr.bf16.mxu0 0
      %1466 = vmatpush1.bf16.msra.mxu0 0
      %1467 = vmatprep.subr.bf16.mxu0 0
      %1468 = vmatpush1.bf16.msra.mxu0 0
      %1469 = vmatprep.subr.bf16.mxu0 0
      %1470 = vmatpush1.bf16.msra.mxu0 0
      %1471 = vmatprep.subr.bf16.mxu0 0
      %1472 = vmatpush1.bf16.msra.mxu0 0
      %1473 = vmatprep.subr.bf16.mxu0 0
      %1474 = vmatpush1.bf16.msra.mxu0 0
      %1475 = vmatprep.subr.bf16.mxu0 0
      %1476 = vmatpush1.bf16.msra.mxu0 0
      %1477 = vmatprep.subr.bf16.mxu0 0
      %1478 = vmatpush1.bf16.msra.mxu0 0
      %1479 = vmatprep.subr.bf16.mxu0 0
      %1480 = vmatpush1.bf16.msra.mxu0 0
      %1481 = vmatprep.subr.bf16.mxu0 0
      %1482 = vmatpush1.bf16.msra.mxu0 0
      %1483 = vmatprep.subr.bf16.mxu0 0
      %1484 = vmatpush1.bf16.msra.mxu0 0
      %1485 = vmatprep.subr.bf16.mxu0 0
      %1486 = vmatpush1.bf16.msra.mxu0 0
      %1487 = vmatprep.subr.bf16.mxu0 0
      %1488 = vmatpush1.bf16.msra.mxu0 0
      %1489 = vmatprep.subr.bf16.mxu0 0
      %1490 = vmatpush1.bf16.msra.mxu0 0
      %1491 = vmatprep.mubr.bf16.mxu0 0
      %1492 = vmatmul.mubr.bf16.gmra.mrb[0].mxu0 %v1404
      %v1493 = vpop.f32.mrb[0].mxu0
      %v1494 = vadd.f32 0.0, %v1493
      %v1495 = vpop.f32.mrb[0].mxu0
      %v1496 = vadd.f32 0.0, %v1495
      %v1497 = vpop.f32.mrb[0].mxu0
      %v1498 = vpop.f32.mrb[0].mxu0
      %1499 = vdwg.mxu0
      %v1500 = vadd.f32 %v1353, %v1453
      %v1501 = vadd.f32 %v1354, %v1455
      %v1502 = vadd.f32 %v1355, %v1494
      %v1503 = vadd.f32 %v1356, %v1496
      %s1504 = scalar_lea.vmem %s2, 16
      %v1505 = vld [vmem:[%s1504] sm:$0x3]
      %v1506 = vmul.bf16 %v1505, %v378
      %v1507 = vld [vmem:[#allocation2] sm:$0xff]
      %v1508 = vld [vmem:[#allocation2 + $0x8] sm:$0x3]
      %v1511 = vcombine.high %v1507, %v1507
      %v1513 = vunpack.c.l.s4 1983009808
      %v1514 = vunpack.c.0.s8 %v1513
      %v1515 = vlaneseq
      %v1516 = vshrl.u32 %v1515, 7
      %v1517 = vsub.s32 %v1514, %v1516
      %v1518 = vrot.slane %v1507, %v1517
      %v1520 = vunpack.c.l.s4 1983009808
      %v1521 = vunpack.c.0.s8 %v1520
      %v1522 = vlaneseq
      %v1523 = vshrl.u32 %v1522, 7
      %v1524 = vsub.s32 %v1521, %v1523
      %v1525 = vrot.slane %v1511, %v1524
      %v1526 = vcombine.high %v1518, %v1518
      %v1527 = vcombine.high %v1525, %v1525
      %v1529 = vunpack.c.l.s4 1983009808
      %v1530 = vunpack.c.0.s8 %v1529
      %v1531 = vlaneseq
      %v1532 = vshrl.u32 %v1531, 7
      %v1533 = vsub.s32 %v1530, %v1532
      %v1534 = vrot.slane %v1508, %v1533
      %1535 = vrot.lane.b32.xlu0 %v1518, 98
      %v1536 = vpop.permute.xlu0 %1535
      %1537 = vrot.lane.b32.xlu0 %v1526, 98
      %v1538 = vpop.permute.xlu0 %1537
      %1539 = vrot.lane.b32.xlu0 %v1525, 98
      %v1540 = vpop.permute.xlu0 %1539
      %1541 = vrot.lane.b32.xlu0 %v1527, 98
      %v1542 = vpop.permute.xlu0 %1541
      %1543 = vrot.lane.b32.xlu0 %v1534, 98
      %v1544 = vpop.permute.xlu0 %1543
      %vm1545 = vcmask 801792
      %v1546 = vsel %vm1545, %v1536, %v1538
      %v1547 = vsel %vm1545, %v1538, %v1540
      %v1548 = vsel %vm1545, %v1540, %v1542
      %v1549 = vsel %vm1545, %v1542, %v1544
      %v1551 = vsel %vm426, %v1506, 0
      %v1554 = vsel %vm430, %v1546, 0
      %v1557 = vsel %vm430, %v1547, 0
      %v1560 = vsel %vm430, %v1548, 0
      %v1563 = vsel %vm430, %v1549, 0
      %1565 = vmatprep.subr.bf16.mxu0 %v1557
      %1566 = vmatpush1.bf16.msra.mxu0 %v1554
      %1567 = vmatprep.subr.bf16.mxu0 0
      %1568 = vmatpush1.bf16.msra.mxu0 0
      %1569 = vmatprep.subr.bf16.mxu0 0
      %1570 = vmatpush1.bf16.msra.mxu0 0
      %1571 = vmatprep.subr.bf16.mxu0 0
      %1572 = vmatpush1.bf16.msra.mxu0 0
      %1573 = vmatprep.subr.bf16.mxu0 0
      %1574 = vmatpush1.bf16.msra.mxu0 0
      %1575 = vmatprep.subr.bf16.mxu0 0
      %1576 = vmatpush1.bf16.msra.mxu0 0
      %1577 = vmatprep.subr.bf16.mxu0 0
      %1578 = vmatpush1.bf16.msra.mxu0 0
      %1579 = vmatprep.subr.bf16.mxu0 0
      %1580 = vmatpush1.bf16.msra.mxu0 0
      %1581 = vmatprep.subr.bf16.mxu0 0
      %1582 = vmatpush1.bf16.msra.mxu0 0
      %1583 = vmatprep.subr.bf16.mxu0 0
      %1584 = vmatpush1.bf16.msra.mxu0 0
      %1585 = vmatprep.subr.bf16.mxu0 0
      %1586 = vmatpush1.bf16.msra.mxu0 0
      %1587 = vmatprep.subr.bf16.mxu0 0
      %1588 = vmatpush1.bf16.msra.mxu0 0
      %1589 = vmatprep.subr.bf16.mxu0 0
      %1590 = vmatpush1.bf16.msra.mxu0 0
      %1591 = vmatprep.subr.bf16.mxu0 0
      %1592 = vmatpush1.bf16.msra.mxu0 0
      %1593 = vmatprep.subr.bf16.mxu0 0
      %1594 = vmatpush1.bf16.msra.mxu0 0
      %1595 = vmatprep.subr.bf16.mxu0 0
      %1596 = vmatpush1.bf16.msra.mxu0 0
      %1597 = vmatprep.mubr.bf16.mxu0 0
      %1598 = vmatmul.mubr.bf16.gmra.mrb[0].mxu0 %v1551
      %v1599 = vpop.f32.mrb[0].mxu0
      %v1600 = vadd.f32 0.0, %v1599
      %v1601 = vpop.f32.mrb[0].mxu0
      %v1602 = vadd.f32 0.0, %v1601
      %v1603 = vpop.f32.mrb[0].mxu0
      %v1604 = vpop.f32.mrb[0].mxu0
      %1605 = vdwg.mxu0
      %1606 = vmatprep.subr.bf16.mxu0 %v1563
      %1607 = vmatpush1.bf16.msra.mxu0 %v1560
      %1608 = vmatprep.subr.bf16.mxu0 0
      %1609 = vmatpush1.bf16.msra.mxu0 0
      %1610 = vmatprep.subr.bf16.mxu0 0
      %1611 = vmatpush1.bf16.msra.mxu0 0
      %1612 = vmatprep.subr.bf16.mxu0 0
      %1613 = vmatpush1.bf16.msra.mxu0 0
      %1614 = vmatprep.subr.bf16.mxu0 0
      %1615 = vmatpush1.bf16.msra.mxu0 0
      %1616 = vmatprep.subr.bf16.mxu0 0
      %1617 = vmatpush1.bf16.msra.mxu0 0
      %1618 = vmatprep.subr.bf16.mxu0 0
      %1619 = vmatpush1.bf16.msra.mxu0 0
      %1620 = vmatprep.subr.bf16.mxu0 0
      %1621 = vmatpush1.bf16.msra.mxu0 0
      %1622 = vmatprep.subr.bf16.mxu0 0
      %1623 = vmatpush1.bf16.msra.mxu0 0
      %1624 = vmatprep.subr.bf16.mxu0 0
      %1625 = vmatpush1.bf16.msra.mxu0 0
      %1626 = vmatprep.subr.bf16.mxu0 0
      %1627 = vmatpush1.bf16.msra.mxu0 0
      %1628 = vmatprep.subr.bf16.mxu0 0
      %1629 = vmatpush1.bf16.msra.mxu0 0
      %1630 = vmatprep.subr.bf16.mxu0 0
      %1631 = vmatpush1.bf16.msra.mxu0 0
      %1632 = vmatprep.subr.bf16.mxu0 0
      %1633 = vmatpush1.bf16.msra.mxu0 0
      %1634 = vmatprep.subr.bf16.mxu0 0
      %1635 = vmatpush1.bf16.msra.mxu0 0
      %1636 = vmatprep.subr.bf16.mxu0 0
      %1637 = vmatpush1.bf16.msra.mxu0 0
      %1638 = vmatprep.mubr.bf16.mxu0 0
      %1639 = vmatmul.mubr.bf16.gmra.mrb[0].mxu0 %v1551
      %v1640 = vpop.f32.mrb[0].mxu0
      %v1641 = vadd.f32 0.0, %v1640
      %v1642 = vpop.f32.mrb[0].mxu0
      %v1643 = vadd.f32 0.0, %v1642
      %v1644 = vpop.f32.mrb[0].mxu0
      %v1645 = vpop.f32.mrb[0].mxu0
      %1646 = vdwg.mxu0
      %v1647 = vadd.f32 %v1500, %v1600
      %v1648 = vadd.f32 %v1501, %v1602
      %v1649 = vadd.f32 %v1502, %v1641
      %v1650 = vadd.f32 %v1503, %v1643
      %s1651 = scalar_lea.vmem %s2, 18
      %v1652 = vld [vmem:[%s1651] sm:$0x3]
      %v1653 = vmul.bf16 %v1652, %v378
      %v1654 = vld [vmem:[#allocation2 + $0x2] sm:$0xff]
      %v1655 = vld [vmem:[#allocation2 + $0xa] sm:$0x3]
      %v1658 = vcombine.high %v1654, %v1654
      %v1660 = vunpack.c.l.s4 1983009808
      %v1661 = vunpack.c.0.s8 %v1660
      %v1662 = vlaneseq
      %v1663 = vshrl.u32 %v1662, 7
      %v1664 = vsub.s32 %v1661, %v1663
      %v1665 = vrot.slane %v1654, %v1664
      %v1667 = vunpack.c.l.s4 1983009808
      %v1668 = vunpack.c.0.s8 %v1667
      %v1669 = vlaneseq
      %v1670 = vshrl.u32 %v1669, 7
      %v1671 = vsub.s32 %v1668, %v1670
      %v1672 = vrot.slane %v1658, %v1671
      %v1673 = vcombine.high %v1665, %v1665
      %v1674 = vcombine.high %v1672, %v1672
      %v1676 = vunpack.c.l.s4 1983009808
      %v1677 = vunpack.c.0.s8 %v1676
      %v1678 = vlaneseq
      %v1679 = vshrl.u32 %v1678, 7
      %v1680 = vsub.s32 %v1677, %v1679
      %v1681 = vrot.slane %v1655, %v1680
      %1682 = vrot.lane.b32.xlu0 %v1665, 60
      %v1683 = vpop.permute.xlu0 %1682
      %1684 = vrot.lane.b32.xlu0 %v1673, 60
      %v1685 = vpop.permute.xlu0 %1684
      %1686 = vrot.lane.b32.xlu0 %v1672, 60
      %v1687 = vpop.permute.xlu0 %1686
      %1688 = vrot.lane.b32.xlu0 %v1674, 60
      %v1689 = vpop.permute.xlu0 %1688
      %1690 = vrot.lane.b32.xlu0 %v1681, 60
      %v1691 = vpop.permute.xlu0 %1690
      %vm1692 = vcmask 490496
      %v1693 = vsel %vm1692, %v1683, %v1685
      %v1694 = vsel %vm1692, %v1685, %v1687
      %v1695 = vsel %vm1692, %v1687, %v1689
      %v1696 = vsel %vm1692, %v1689, %v1691
      %v1698 = vsel %vm426, %v1653, 0
      %v1701 = vsel %vm430, %v1693, 0
      %v1704 = vsel %vm430, %v1694, 0
      %v1707 = vsel %vm430, %v1695, 0
      %v1710 = vsel %vm430, %v1696, 0
      %1712 = vmatprep.subr.bf16.mxu0 %v1704
      %1713 = vmatpush1.bf16.msra.mxu0 %v1701
      %1714 = vmatprep.subr.bf16.mxu0 0
      %1715 = vmatpush1.bf16.msra.mxu0 0
      %1716 = vmatprep.subr.bf16.mxu0 0
      %1717 = vmatpush1.bf16.msra.mxu0 0
      %1718 = vmatprep.subr.bf16.mxu0 0
      %1719 = vmatpush1.bf16.msra.mxu0 0
      %1720 = vmatprep.subr.bf16.mxu0 0
      %1721 = vmatpush1.bf16.msra.mxu0 0
      %1722 = vmatprep.subr.bf16.mxu0 0
      %1723 = vmatpush1.bf16.msra.mxu0 0
      %1724 = vmatprep.subr.bf16.mxu0 0
      %1725 = vmatpush1.bf16.msra.mxu0 0
      %1726 = vmatprep.subr.bf16.mxu0 0
      %1727 = vmatpush1.bf16.msra.mxu0 0
      %1728 = vmatprep.subr.bf16.mxu0 0
      %1729 = vmatpush1.bf16.msra.mxu0 0
      %1730 = vmatprep.subr.bf16.mxu0 0
      %1731 = vmatpush1.bf16.msra.mxu0 0
      %1732 = vmatprep.subr.bf16.mxu0 0
      %1733 = vmatpush1.bf16.msra.mxu0 0
      %1734 = vmatprep.subr.bf16.mxu0 0
      %1735 = vmatpush1.bf16.msra.mxu0 0
      %1736 = vmatprep.subr.bf16.mxu0 0
      %1737 = vmatpush1.bf16.msra.mxu0 0
      %1738 = vmatprep.subr.bf16.mxu0 0
      %1739 = vmatpush1.bf16.msra.mxu0 0
      %1740 = vmatprep.subr.bf16.mxu0 0
      %1741 = vmatpush1.bf16.msra.mxu0 0
      %1742 = vmatprep.subr.bf16.mxu0 0
      %1743 = vmatpush1.bf16.msra.mxu0 0
      %1744 = vmatprep.mubr.bf16.mxu0 0
      %1745 = vmatmul.mubr.bf16.gmra.mrb[0].mxu0 %v1698
      %v1746 = vpop.f32.mrb[0].mxu0
      %v1747 = vadd.f32 0.0, %v1746
      %v1748 = vpop.f32.mrb[0].mxu0
      %v1749 = vadd.f32 0.0, %v1748
      %v1750 = vpop.f32.mrb[0].mxu0
      %v1751 = vpop.f32.mrb[0].mxu0
      %1752 = vdwg.mxu0
      %1753 = vmatprep.subr.bf16.mxu0 %v1710
      %1754 = vmatpush1.bf16.msra.mxu0 %v1707
      %1755 = vmatprep.subr.bf16.mxu0 0
      %1756 = vmatpush1.bf16.msra.mxu0 0
      %1757 = vmatprep.subr.bf16.mxu0 0
      %1758 = vmatpush1.bf16.msra.mxu0 0
      %1759 = vmatprep.subr.bf16.mxu0 0
      %1760 = vmatpush1.bf16.msra.mxu0 0
      %1761 = vmatprep.subr.bf16.mxu0 0
      %1762 = vmatpush1.bf16.msra.mxu0 0
      %1763 = vmatprep.subr.bf16.mxu0 0
      %1764 = vmatpush1.bf16.msra.mxu0 0
      %1765 = vmatprep.subr.bf16.mxu0 0
      %1766 = vmatpush1.bf16.msra.mxu0 0
      %1767 = vmatprep.subr.bf16.mxu0 0
      %1768 = vmatpush1.bf16.msra.mxu0 0
      %1769 = vmatprep.subr.bf16.mxu0 0
      %1770 = vmatpush1.bf16.msra.mxu0 0
      %1771 = vmatprep.subr.bf16.mxu0 0
      %1772 = vmatpush1.bf16.msra.mxu0 0
      %1773 = vmatprep.subr.bf16.mxu0 0
      %1774 = vmatpush1.bf16.msra.mxu0 0
      %1775 = vmatprep.subr.bf16.mxu0 0
      %1776 = vmatpush1.bf16.msra.mxu0 0
      %1777 = vmatprep.subr.bf16.mxu0 0
      %1778 = vmatpush1.bf16.msra.mxu0 0
      %1779 = vmatprep.subr.bf16.mxu0 0
      %1780 = vmatpush1.bf16.msra.mxu0 0
      %1781 = vmatprep.subr.bf16.mxu0 0
      %1782 = vmatpush1.bf16.msra.mxu0 0
      %1783 = vmatprep.subr.bf16.mxu0 0
      %1784 = vmatpush1.bf16.msra.mxu0 0
      %1785 = vmatprep.mubr.bf16.mxu0 0
      %1786 = vmatmul.mubr.bf16.gmra.mrb[0].mxu0 %v1698
      %v1787 = vpop.f32.mrb[0].mxu0
      %v1788 = vadd.f32 0.0, %v1787
      %v1789 = vpop.f32.mrb[0].mxu0
      %v1790 = vadd.f32 0.0, %v1789
      %v1791 = vpop.f32.mrb[0].mxu0
      %v1792 = vpop.f32.mrb[0].mxu0
      %1793 = vdwg.mxu0
      %v1794 = vadd.f32 %v1647, %v1747
      %v1795 = vadd.f32 %v1648, %v1749
      %v1796 = vadd.f32 %v1649, %v1788
      %v1797 = vadd.f32 %v1650, %v1790
      %s1798 = scalar_lea.vmem %s2, 20
      %v1799 = vld [vmem:[%s1798] sm:$0x3]
      %v1800 = vmul.bf16 %v1799, %v378
      %v1801 = vld [vmem:[#allocation2 + $0x2] sm:$0xff]
      %v1802 = vld [vmem:[#allocation2 + $0xa] sm:$0x3]
      %v1805 = vcombine.high %v1801, %v1801
      %v1807 = vunpack.c.l.s4 1983009808
      %v1808 = vunpack.c.0.s8 %v1807
      %v1809 = vlaneseq
      %v1810 = vshrl.u32 %v1809, 7
      %v1811 = vsub.s32 %v1808, %v1810
      %v1812 = vrot.slane %v1801, %v1811
      %v1814 = vunpack.c.l.s4 1983009808
      %v1815 = vunpack.c.0.s8 %v1814
      %v1816 = vlaneseq
      %v1817 = vshrl.u32 %v1816, 7
      %v1818 = vsub.s32 %v1815, %v1817
      %v1819 = vrot.slane %v1805, %v1818
      %v1820 = vcombine.high %v1812, %v1812
      %v1821 = vcombine.high %v1819, %v1819
      %v1823 = vunpack.c.l.s4 1983009808
      %v1824 = vunpack.c.0.s8 %v1823
      %v1825 = vlaneseq
      %v1826 = vshrl.u32 %v1825, 7
      %v1827 = vsub.s32 %v1824, %v1826
      %v1828 = vrot.slane %v1802, %v1827
      %1829 = vrot.lane.b32.xlu0 %v1812, 59
      %v1830 = vpop.permute.xlu0 %1829
      %1831 = vrot.lane.b32.xlu0 %v1820, 59
      %v1832 = vpop.permute.xlu0 %1831
      %1833 = vrot.lane.b32.xlu0 %v1819, 59
      %v1834 = vpop.permute.xlu0 %1833
      %1835 = vrot.lane.b32.xlu0 %v1821, 59
      %v1836 = vpop.permute.xlu0 %1835
      %1837 = vrot.lane.b32.xlu0 %v1828, 59
      %v1838 = vpop.permute.xlu0 %1837
      %vm1839 = vcmask 482304
      %v1840 = vsel %vm1839, %v1830, %v1832
      %v1841 = vsel %vm1839, %v1832, %v1834
      %v1842 = vsel %vm1839, %v1834, %v1836
      %v1843 = vsel %vm1839, %v1836, %v1838
      %v1845 = vsel %vm426, %v1800, 0
      %v1848 = vsel %vm430, %v1840, 0
      %v1851 = vsel %vm430, %v1841, 0
      %v1854 = vsel %vm430, %v1842, 0
      %v1857 = vsel %vm430, %v1843, 0
      %1859 = vmatprep.subr.bf16.mxu0 %v1851
      %1860 = vmatpush1.bf16.msra.mxu0 %v1848
      %1861 = vmatprep.subr.bf16.mxu0 0
      %1862 = vmatpush1.bf16.msra.mxu0 0
      %1863 = vmatprep.subr.bf16.mxu0 0
      %1864 = vmatpush1.bf16.msra.mxu0 0
      %1865 = vmatprep.subr.bf16.mxu0 0
      %1866 = vmatpush1.bf16.msra.mxu0 0
      %1867 = vmatprep.subr.bf16.mxu0 0
      %1868 = vmatpush1.bf16.msra.mxu0 0
      %1869 = vmatprep.subr.bf16.mxu0 0
      %1870 = vmatpush1.bf16.msra.mxu0 0
      %1871 = vmatprep.subr.bf16.mxu0 0
      %1872 = vmatpush1.bf16.msra.mxu0 0
      %1873 = vmatprep.subr.bf16.mxu0 0
      %1874 = vmatpush1.bf16.msra.mxu0 0
      %1875 = vmatprep.subr.bf16.mxu0 0
      %1876 = vmatpush1.bf16.msra.mxu0 0
      %1877 = vmatprep.subr.bf16.mxu0 0
      %1878 = vmatpush1.bf16.msra.mxu0 0
      %1879 = vmatprep.subr.bf16.mxu0 0
      %1880 = vmatpush1.bf16.msra.mxu0 0
      %1881 = vmatprep.subr.bf16.mxu0 0
      %1882 = vmatpush1.bf16.msra.mxu0 0
      %1883 = vmatprep.subr.bf16.mxu0 0
      %1884 = vmatpush1.bf16.msra.mxu0 0
      %1885 = vmatprep.subr.bf16.mxu0 0
      %1886 = vmatpush1.bf16.msra.mxu0 0
      %1887 = vmatprep.subr.bf16.mxu0 0
      %1888 = vmatpush1.bf16.msra.mxu0 0
      %1889 = vmatprep.subr.bf16.mxu0 0
      %1890 = vmatpush1.bf16.msra.mxu0 0
      %1891 = vmatprep.mubr.bf16.mxu0 0
      %1892 = vmatmul.mubr.bf16.gmra.mrb[0].mxu0 %v1845
      %v1893 = vpop.f32.mrb[0].mxu0
      %v1894 = vadd.f32 0.0, %v1893
      %v1895 = vpop.f32.mrb[0].mxu0
      %v1896 = vadd.f32 0.0, %v1895
      %v1897 = vpop.f32.mrb[0].mxu0
      %v1898 = vpop.f32.mrb[0].mxu0
      %1899 = vdwg.mxu0
      %1900 = vmatprep.subr.bf16.mxu0 %v1857
      %1901 = vmatpush1.bf16.msra.mxu0 %v1854
      %1902 = vmatprep.subr.bf16.mxu0 0
      %1903 = vmatpush1.bf16.msra.mxu0 0
      %1904 = vmatprep.subr.bf16.mxu0 0
      %1905 = vmatpush1.bf16.msra.mxu0 0
      %1906 = vmatprep.subr.bf16.mxu0 0
      %1907 = vmatpush1.bf16.msra.mxu0 0
      %1908 = vmatprep.subr.bf16.mxu0 0
      %1909 = vmatpush1.bf16.msra.mxu0 0
      %1910 = vmatprep.subr.bf16.mxu0 0
      %1911 = vmatpush1.bf16.msra.mxu0 0
      %1912 = vmatprep.subr.bf16.mxu0 0
      %1913 = vmatpush1.bf16.msra.mxu0 0
      %1914 = vmatprep.subr.bf16.mxu0 0
      %1915 = vmatpush1.bf16.msra.mxu0 0
      %1916 = vmatprep.subr.bf16.mxu0 0
      %1917 = vmatpush1.bf16.msra.mxu0 0
      %1918 = vmatprep.subr.bf16.mxu0 0
      %1919 = vmatpush1.bf16.msra.mxu0 0
      %1920 = vmatprep.subr.bf16.mxu0 0
      %1921 = vmatpush1.bf16.msra.mxu0 0
      %1922 = vmatprep.subr.bf16.mxu0 0
      %1923 = vmatpush1.bf16.msra.mxu0 0
      %1924 = vmatprep.subr.bf16.mxu0 0
      %1925 = vmatpush1.bf16.msra.mxu0 0
      %1926 = vmatprep.subr.bf16.mxu0 0
      %1927 = vmatpush1.bf16.msra.mxu0 0
      %1928 = vmatprep.subr.bf16.mxu0 0
      %1929 = vmatpush1.bf16.msra.mxu0 0
      %1930 = vmatprep.subr.bf16.mxu0 0
      %1931 = vmatpush1.bf16.msra.mxu0 0
      %1932 = vmatprep.mubr.bf16.mxu0 0
      %1933 = vmatmul.mubr.bf16.gmra.mrb[0].mxu0 %v1845
      %v1934 = vpop.f32.mrb[0].mxu0
      %v1935 = vadd.f32 0.0, %v1934
      %v1936 = vpop.f32.mrb[0].mxu0
      %v1937 = vadd.f32 0.0, %v1936
      %v1938 = vpop.f32.mrb[0].mxu0
      %v1939 = vpop.f32.mrb[0].mxu0
      %1940 = vdwg.mxu0
      %v1941 = vadd.f32 %v1794, %v1894
      %v1942 = vadd.f32 %v1795, %v1896
      %v1943 = vadd.f32 %v1796, %v1935
      %v1944 = vadd.f32 %v1797, %v1937
      %s1945 = scalar_lea.vmem %s2, 22
      %v1946 = vld [vmem:[%s1945] sm:$0x3]
      %v1947 = vmul.bf16 %v1946, %v378
      %v1948 = vld [vmem:[#allocation2 + $0x2] sm:$0xff]
      %v1949 = vld [vmem:[#allocation2 + $0xa] sm:$0x3]
      %v1952 = vcombine.high %v1948, %v1948
      %v1954 = vunpack.c.l.s4 1983009808
      %v1955 = vunpack.c.0.s8 %v1954
      %v1956 = vlaneseq
      %v1957 = vshrl.u32 %v1956, 7
      %v1958 = vsub.s32 %v1955, %v1957
      %v1959 = vrot.slane %v1948, %v1958
      %v1961 = vunpack.c.l.s4 1983009808
      %v1962 = vunpack.c.0.s8 %v1961
      %v1963 = vlaneseq
      %v1964 = vshrl.u32 %v1963, 7
      %v1965 = vsub.s32 %v1962, %v1964
      %v1966 = vrot.slane %v1952, %v1965
      %v1967 = vcombine.high %v1959, %v1959
      %v1968 = vcombine.high %v1966, %v1966
      %v1970 = vunpack.c.l.s4 1983009808
      %v1971 = vunpack.c.0.s8 %v1970
      %v1972 = vlaneseq
      %v1973 = vshrl.u32 %v1972, 7
      %v1974 = vsub.s32 %v1971, %v1973
      %v1975 = vrot.slane %v1949, %v1974
      %1976 = vrot.lane.b32.xlu0 %v1959, 58
      %v1977 = vpop.permute.xlu0 %1976
      %1978 = vrot.lane.b32.xlu0 %v1967, 58
      %v1979 = vpop.permute.xlu0 %1978
      %1980 = vrot.lane.b32.xlu0 %v1966, 58
      %v1981 = vpop.permute.xlu0 %1980
      %1982 = vrot.lane.b32.xlu0 %v1968, 58
      %v1983 = vpop.permute.xlu0 %1982
      %1984 = vrot.lane.b32.xlu0 %v1975, 58
      %v1985 = vpop.permute.xlu0 %1984
      %vm1986 = vcmask 474112
      %v1987 = vsel %vm1986, %v1977, %v1979
      %v1988 = vsel %vm1986, %v1979, %v1981
      %v1989 = vsel %vm1986, %v1981, %v1983
      %v1990 = vsel %vm1986, %v1983, %v1985
      %v1992 = vsel %vm426, %v1947, 0
      %v1995 = vsel %vm430, %v1987, 0
      %v1998 = vsel %vm430, %v1988, 0
      %v2001 = vsel %vm430, %v1989, 0
      %v2004 = vsel %vm430, %v1990, 0
      %2006 = vmatprep.subr.bf16.mxu0 %v1998
      %2007 = vmatpush1.bf16.msra.mxu0 %v1995
      %2008 = vmatprep.subr.bf16.mxu0 0
      %2009 = vmatpush1.bf16.msra.mxu0 0
      %2010 = vmatprep.subr.bf16.mxu0 0
      %2011 = vmatpush1.bf16.msra.mxu0 0
      %2012 = vmatprep.subr.bf16.mxu0 0
      %2013 = vmatpush1.bf16.msra.mxu0 0
      %2014 = vmatprep.subr.bf16.mxu0 0
      %2015 = vmatpush1.bf16.msra.mxu0 0
      %2016 = vmatprep.subr.bf16.mxu0 0
      %2017 = vmatpush1.bf16.msra.mxu0 0
      %2018 = vmatprep.subr.bf16.mxu0 0
      %2019 = vmatpush1.bf16.msra.mxu0 0
      %2020 = vmatprep.subr.bf16.mxu0 0
      %2021 = vmatpush1.bf16.msra.mxu0 0
      %2022 = vmatprep.subr.bf16.mxu0 0
      %2023 = vmatpush1.bf16.msra.mxu0 0
      %2024 = vmatprep.subr.bf16.mxu0 0
      %2025 = vmatpush1.bf16.msra.mxu0 0
      %2026 = vmatprep.subr.bf16.mxu0 0
      %2027 = vmatpush1.bf16.msra.mxu0 0
      %2028 = vmatprep.subr.bf16.mxu0 0
      %2029 = vmatpush1.bf16.msra.mxu0 0
      %2030 = vmatprep.subr.bf16.mxu0 0
      %2031 = vmatpush1.bf16.msra.mxu0 0
      %2032 = vmatprep.subr.bf16.mxu0 0
      %2033 = vmatpush1.bf16.msra.mxu0 0
      %2034 = vmatprep.subr.bf16.mxu0 0
      %2035 = vmatpush1.bf16.msra.mxu0 0
      %2036 = vmatprep.subr.bf16.mxu0 0
      %2037 = vmatpush1.bf16.msra.mxu0 0
      %2038 = vmatprep.mubr.bf16.mxu0 0
      %2039 = vmatmul.mubr.bf16.gmra.mrb[0].mxu0 %v1992
      %v2040 = vpop.f32.mrb[0].mxu0
      %v2041 = vadd.f32 0.0, %v2040
      %v2042 = vpop.f32.mrb[0].mxu0
      %v2043 = vadd.f32 0.0, %v2042
      %v2044 = vpop.f32.mrb[0].mxu0
      %v2045 = vpop.f32.mrb[0].mxu0
      %2046 = vdwg.mxu0
      %2047 = vmatprep.subr.bf16.mxu0 %v2004
      %2048 = vmatpush1.bf16.msra.mxu0 %v2001
      %2049 = vmatprep.subr.bf16.mxu0 0
      %2050 = vmatpush1.bf16.msra.mxu0 0
      %2051 = vmatprep.subr.bf16.mxu0 0
      %2052 = vmatpush1.bf16.msra.mxu0 0
      %2053 = vmatprep.subr.bf16.mxu0 0
      %2054 = vmatpush1.bf16.msra.mxu0 0
      %2055 = vmatprep.subr.bf16.mxu0 0
      %2056 = vmatpush1.bf16.msra.mxu0 0
      %2057 = vmatprep.subr.bf16.mxu0 0
      %2058 = vmatpush1.bf16.msra.mxu0 0
      %2059 = vmatprep.subr.bf16.mxu0 0
      %2060 = vmatpush1.bf16.msra.mxu0 0
      %2061 = vmatprep.subr.bf16.mxu0 0
      %2062 = vmatpush1.bf16.msra.mxu0 0
      %2063 = vmatprep.subr.bf16.mxu0 0
      %2064 = vmatpush1.bf16.msra.mxu0 0
      %2065 = vmatprep.subr.bf16.mxu0 0
      %2066 = vmatpush1.bf16.msra.mxu0 0
      %2067 = vmatprep.subr.bf16.mxu0 0
      %2068 = vmatpush1.bf16.msra.mxu0 0
      %2069 = vmatprep.subr.bf16.mxu0 0
      %2070 = vmatpush1.bf16.msra.mxu0 0
      %2071 = vmatprep.subr.bf16.mxu0 0
      %2072 = vmatpush1.bf16.msra.mxu0 0
      %2073 = vmatprep.subr.bf16.mxu0 0
      %2074 = vmatpush1.bf16.msra.mxu0 0
      %2075 = vmatprep.subr.bf16.mxu0 0
      %2076 = vmatpush1.bf16.msra.mxu0 0
      %2077 = vmatprep.subr.bf16.mxu0 0
      %2078 = vmatpush1.bf16.msra.mxu0 0
      %2079 = vmatprep.mubr.bf16.mxu0 0
      %2080 = vmatmul.mubr.bf16.gmra.mrb[0].mxu0 %v1992
      %v2081 = vpop.f32.mrb[0].mxu0
      %v2082 = vadd.f32 0.0, %v2081
      %v2083 = vpop.f32.mrb[0].mxu0
      %v2084 = vadd.f32 0.0, %v2083
      %v2085 = vpop.f32.mrb[0].mxu0
      %v2086 = vpop.f32.mrb[0].mxu0
      %2087 = vdwg.mxu0
      %v2088 = vadd.f32 %v1941, %v2041
      %v2089 = vadd.f32 %v1942, %v2043
      %v2090 = vadd.f32 %v1943, %v2082
      %v2091 = vadd.f32 %v1944, %v2084
      %s2092 = scalar_lea.vmem %s2, 24
      %v2093 = vld [vmem:[%s2092] sm:$0x3]
      %v2094 = vmul.bf16 %v2093, %v378
      %v2095 = vld [vmem:[#allocation2 + $0x2] sm:$0xff]
      %v2096 = vld [vmem:[#allocation2 + $0xa] sm:$0x3]
      %v2099 = vcombine.high %v2095, %v2095
      %v2101 = vunpack.c.l.s4 1983009808
      %v2102 = vunpack.c.0.s8 %v2101
      %v2103 = vlaneseq
      %v2104 = vshrl.u32 %v2103, 7
      %v2105 = vsub.s32 %v2102, %v2104
      %v2106 = vrot.slane %v2095, %v2105
      %v2108 = vunpack.c.l.s4 1983009808
      %v2109 = vunpack.c.0.s8 %v2108
      %v2110 = vlaneseq
      %v2111 = vshrl.u32 %v2110, 7
      %v2112 = vsub.s32 %v2109, %v2111
      %v2113 = vrot.slane %v2099, %v2112
      %v2114 = vcombine.high %v2106, %v2106
      %v2115 = vcombine.high %v2113, %v2113
      %v2117 = vunpack.c.l.s4 1983009808
      %v2118 = vunpack.c.0.s8 %v2117
      %v2119 = vlaneseq
      %v2120 = vshrl.u32 %v2119, 7
      %v2121 = vsub.s32 %v2118, %v2120
      %v2122 = vrot.slane %v2096, %v2121
      %2123 = vrot.lane.b32.xlu0 %v2106, 46
      %v2124 = vpop.permute.xlu0 %2123
      %2125 = vrot.lane.b32.xlu0 %v2114, 46
      %v2126 = vpop.permute.xlu0 %2125
      %2127 = vrot.lane.b32.xlu0 %v2113, 46
      %v2128 = vpop.permute.xlu0 %2127
      %2129 = vrot.lane.b32.xlu0 %v2115, 46
      %v2130 = vpop.permute.xlu0 %2129
      %2131 = vrot.lane.b32.xlu0 %v2122, 46
      %v2132 = vpop.permute.xlu0 %2131
      %vm2133 = vcmask 375808
      %v2134 = vsel %vm2133, %v2124, %v2126
      %v2135 = vsel %vm2133, %v2126, %v2128
      %v2136 = vsel %vm2133, %v2128, %v2130
      %v2137 = vsel %vm2133, %v2130, %v2132
      %v2139 = vsel %vm426, %v2094, 0
      %v2142 = vsel %vm430, %v2134, 0
      %v2145 = vsel %vm430, %v2135, 0
      %v2148 = vsel %vm430, %v2136, 0
      %v2151 = vsel %vm430, %v2137, 0
      %2153 = vmatprep.subr.bf16.mxu0 %v2145
      %2154 = vmatpush1.bf16.msra.mxu0 %v2142
      %2155 = vmatprep.subr.bf16.mxu0 0
      %2156 = vmatpush1.bf16.msra.mxu0 0
      %2157 = vmatprep.subr.bf16.mxu0 0
      %2158 = vmatpush1.bf16.msra.mxu0 0
      %2159 = vmatprep.subr.bf16.mxu0 0
      %2160 = vmatpush1.bf16.msra.mxu0 0
      %2161 = vmatprep.subr.bf16.mxu0 0
      %2162 = vmatpush1.bf16.msra.mxu0 0
      %2163 = vmatprep.subr.bf16.mxu0 0
      %2164 = vmatpush1.bf16.msra.mxu0 0
      %2165 = vmatprep.subr.bf16.mxu0 0
      %2166 = vmatpush1.bf16.msra.mxu0 0
      %2167 = vmatprep.subr.bf16.mxu0 0
      %2168 = vmatpush1.bf16.msra.mxu0 0
      %2169 = vmatprep.subr.bf16.mxu0 0
      %2170 = vmatpush1.bf16.msra.mxu0 0
      %2171 = vmatprep.subr.bf16.mxu0 0
      %2172 = vmatpush1.bf16.msra.mxu0 0
      %2173 = vmatprep.subr.bf16.mxu0 0
      %2174 = vmatpush1.bf16.msra.mxu0 0
      %2175 = vmatprep.subr.bf16.mxu0 0
      %2176 = vmatpush1.bf16.msra.mxu0 0
      %2177 = vmatprep.subr.bf16.mxu0 0
      %2178 = vmatpush1.bf16.msra.mxu0 0
      %2179 = vmatprep.subr.bf16.mxu0 0
      %2180 = vmatpush1.bf16.msra.mxu0 0
      %2181 = vmatprep.subr.bf16.mxu0 0
      %2182 = vmatpush1.bf16.msra.mxu0 0
      %2183 = vmatprep.subr.bf16.mxu0 0
      %2184 = vmatpush1.bf16.msra.mxu0 0
      %2185 = vmatprep.mubr.bf16.mxu0 0
      %2186 = vmatmul.mubr.bf16.gmra.mrb[0].mxu0 %v2139
      %v2187 = vpop.f32.mrb[0].mxu0
      %v2188 = vadd.f32 0.0, %v2187
      %v2189 = vpop.f32.mrb[0].mxu0
      %v2190 = vadd.f32 0.0, %v2189
      %v2191 = vpop.f32.mrb[0].mxu0
      %v2192 = vpop.f32.mrb[0].mxu0
      %2193 = vdwg.mxu0
      %2194 = vmatprep.subr.bf16.mxu0 %v2151
      %2195 = vmatpush1.bf16.msra.mxu0 %v2148
      %2196 = vmatprep.subr.bf16.mxu0 0
      %2197 = vmatpush1.bf16.msra.mxu0 0
      %2198 = vmatprep.subr.bf16.mxu0 0
      %2199 = vmatpush1.bf16.msra.mxu0 0
      %2200 = vmatprep.subr.bf16.mxu0 0
      %2201 = vmatpush1.bf16.msra.mxu0 0
      %2202 = vmatprep.subr.bf16.mxu0 0
      %2203 = vmatpush1.bf16.msra.mxu0 0
      %2204 = vmatprep.subr.bf16.mxu0 0
      %2205 = vmatpush1.bf16.msra.mxu0 0
      %2206 = vmatprep.subr.bf16.mxu0 0
      %2207 = vmatpush1.bf16.msra.mxu0 0
      %2208 = vmatprep.subr.bf16.mxu0 0
      %2209 = vmatpush1.bf16.msra.mxu0 0
      %2210 = vmatprep.subr.bf16.mxu0 0
      %2211 = vmatpush1.bf16.msra.mxu0 0
      %2212 = vmatprep.subr.bf16.mxu0 0
      %2213 = vmatpush1.bf16.msra.mxu0 0
      %2214 = vmatprep.subr.bf16.mxu0 0
      %2215 = vmatpush1.bf16.msra.mxu0 0
      %2216 = vmatprep.subr.bf16.mxu0 0
      %2217 = vmatpush1.bf16.msra.mxu0 0
      %2218 = vmatprep.subr.bf16.mxu0 0
      %2219 = vmatpush1.bf16.msra.mxu0 0
      %2220 = vmatprep.subr.bf16.mxu0 0
      %2221 = vmatpush1.bf16.msra.mxu0 0
      %2222 = vmatprep.subr.bf16.mxu0 0
      %2223 = vmatpush1.bf16.msra.mxu0 0
      %2224 = vmatprep.subr.bf16.mxu0 0
      %2225 = vmatpush1.bf16.msra.mxu0 0
      %2226 = vmatprep.mubr.bf16.mxu0 0
      %2227 = vmatmul.mubr.bf16.gmra.mrb[0].mxu0 %v2139
      %v2228 = vpop.f32.mrb[0].mxu0
      %v2229 = vadd.f32 0.0, %v2228
      %v2230 = vpop.f32.mrb[0].mxu0
      %v2231 = vadd.f32 0.0, %v2230
      %v2232 = vpop.f32.mrb[0].mxu0
      %v2233 = vpop.f32.mrb[0].mxu0
      %2234 = vdwg.mxu0
      %v2235 = vadd.f32 %v2088, %v2188
      %v2236 = vadd.f32 %v2089, %v2190
      %v2237 = vadd.f32 %v2090, %v2229
      %v2238 = vadd.f32 %v2091, %v2231
      %s2239 = scalar_lea.vmem %s2, 26
      %v2240 = vld [vmem:[%s2239] sm:$0x3]
      %v2241 = vmul.bf16 %v2240, %v378
      %v2242 = vld [vmem:[#allocation2 + $0x2] sm:$0xff]
      %v2243 = vld [vmem:[#allocation2 + $0xa] sm:$0x3]
      %v2246 = vcombine.high %v2242, %v2242
      %v2248 = vunpack.c.l.s4 1983009808
      %v2249 = vunpack.c.0.s8 %v2248
      %v2250 = vlaneseq
      %v2251 = vshrl.u32 %v2250, 7
      %v2252 = vsub.s32 %v2249, %v2251
      %v2253 = vrot.slane %v2242, %v2252
      %v2255 = vunpack.c.l.s4 1983009808
      %v2256 = vunpack.c.0.s8 %v2255
      %v2257 = vlaneseq
      %v2258 = vshrl.u32 %v2257, 7
      %v2259 = vsub.s32 %v2256, %v2258
      %v2260 = vrot.slane %v2246, %v2259
      %v2261 = vcombine.high %v2253, %v2253
      %v2262 = vcombine.high %v2260, %v2260
      %v2264 = vunpack.c.l.s4 1983009808
      %v2265 = vunpack.c.0.s8 %v2264
      %v2266 = vlaneseq
      %v2267 = vshrl.u32 %v2266, 7
      %v2268 = vsub.s32 %v2265, %v2267
      %v2269 = vrot.slane %v2243, %v2268
      %2270 = vrot.lane.b32.xlu0 %v2253, 45
      %v2271 = vpop.permute.xlu0 %2270
      %2272 = vrot.lane.b32.xlu0 %v2261, 45
      %v2273 = vpop.permute.xlu0 %2272
      %2274 = vrot.lane.b32.xlu0 %v2260, 45
      %v2275 = vpop.permute.xlu0 %2274
      %2276 = vrot.lane.b32.xlu0 %v2262, 45
      %v2277 = vpop.permute.xlu0 %2276
      %2278 = vrot.lane.b32.xlu0 %v2269, 45
      %v2279 = vpop.permute.xlu0 %2278
      %vm2280 = vcmask 367616
      %v2281 = vsel %vm2280, %v2271, %v2273
      %v2282 = vsel %vm2280, %v2273, %v2275
      %v2283 = vsel %vm2280, %v2275, %v2277
      %v2284 = vsel %vm2280, %v2277, %v2279
      %v2286 = vsel %vm426, %v2241, 0
      %v2289 = vsel %vm430, %v2281, 0
      %v2292 = vsel %vm430, %v2282, 0
      %v2295 = vsel %vm430, %v2283, 0
      %v2298 = vsel %vm430, %v2284, 0
      %2300 = vmatprep.subr.bf16.mxu0 %v2292
      %2301 = vmatpush1.bf16.msra.mxu0 %v2289
      %2302 = vmatprep.subr.bf16.mxu0 0
      %2303 = vmatpush1.bf16.msra.mxu0 0
      %2304 = vmatprep.subr.bf16.mxu0 0
      %2305 = vmatpush1.bf16.msra.mxu0 0
      %2306 = vmatprep.subr.bf16.mxu0 0
      %2307 = vmatpush1.bf16.msra.mxu0 0
      %2308 = vmatprep.subr.bf16.mxu0 0
      %2309 = vmatpush1.bf16.msra.mxu0 0
      %2310 = vmatprep.subr.bf16.mxu0 0
      %2311 = vmatpush1.bf16.msra.mxu0 0
      %2312 = vmatprep.subr.bf16.mxu0 0
      %2313 = vmatpush1.bf16.msra.mxu0 0
      %2314 = vmatprep.subr.bf16.mxu0 0
      %2315 = vmatpush1.bf16.msra.mxu0 0
      %2316 = vmatprep.subr.bf16.mxu0 0
      %2317 = vmatpush1.bf16.msra.mxu0 0
      %2318 = vmatprep.subr.bf16.mxu0 0
      %2319 = vmatpush1.bf16.msra.mxu0 0
      %2320 = vmatprep.subr.bf16.mxu0 0
      %2321 = vmatpush1.bf16.msra.mxu0 0
      %2322 = vmatprep.subr.bf16.mxu0 0
      %2323 = vmatpush1.bf16.msra.mxu0 0
      %2324 = vmatprep.subr.bf16.mxu0 0
      %2325 = vmatpush1.bf16.msra.mxu0 0
      %2326 = vmatprep.subr.bf16.mxu0 0
      %2327 = vmatpush1.bf16.msra.mxu0 0
      %2328 = vmatprep.subr.bf16.mxu0 0
      %2329 = vmatpush1.bf16.msra.mxu0 0
      %2330 = vmatprep.subr.bf16.mxu0 0
      %2331 = vmatpush1.bf16.msra.mxu0 0
      %2332 = vmatprep.mubr.bf16.mxu0 0
      %2333 = vmatmul.mubr.bf16.gmra.mrb[0].mxu0 %v2286
      %v2334 = vpop.f32.mrb[0].mxu0
      %v2335 = vadd.f32 0.0, %v2334
      %v2336 = vpop.f32.mrb[0].mxu0
      %v2337 = vadd.f32 0.0, %v2336
      %v2338 = vpop.f32.mrb[0].mxu0
      %v2339 = vpop.f32.mrb[0].mxu0
      %2340 = vdwg.mxu0
      %2341 = vmatprep.subr.bf16.mxu0 %v2298
      %2342 = vmatpush1.bf16.msra.mxu0 %v2295
      %2343 = vmatprep.subr.bf16.mxu0 0
      %2344 = vmatpush1.bf16.msra.mxu0 0
      %2345 = vmatprep.subr.bf16.mxu0 0
      %2346 = vmatpush1.bf16.msra.mxu0 0
      %2347 = vmatprep.subr.bf16.mxu0 0
      %2348 = vmatpush1.bf16.msra.mxu0 0
      %2349 = vmatprep.subr.bf16.mxu0 0
      %2350 = vmatpush1.bf16.msra.mxu0 0
      %2351 = vmatprep.subr.bf16.mxu0 0
      %2352 = vmatpush1.bf16.msra.mxu0 0
      %2353 = vmatprep.subr.bf16.mxu0 0
      %2354 = vmatpush1.bf16.msra.mxu0 0
      %2355 = vmatprep.subr.bf16.mxu0 0
      %2356 = vmatpush1.bf16.msra.mxu0 0
      %2357 = vmatprep.subr.bf16.mxu0 0
      %2358 = vmatpush1.bf16.msra.mxu0 0
      %2359 = vmatprep.subr.bf16.mxu0 0
      %2360 = vmatpush1.bf16.msra.mxu0 0
      %2361 = vmatprep.subr.bf16.mxu0 0
      %2362 = vmatpush1.bf16.msra.mxu0 0
      %2363 = vmatprep.subr.bf16.mxu0 0
      %2364 = vmatpush1.bf16.msra.mxu0 0
      %2365 = vmatprep.subr.bf16.mxu0 0
      %2366 = vmatpush1.bf16.msra.mxu0 0
      %2367 = vmatprep.subr.bf16.mxu0 0
      %2368 = vmatpush1.bf16.msra.mxu0 0
      %2369 = vmatprep.subr.bf16.mxu0 0
      %2370 = vmatpush1.bf16.msra.mxu0 0
      %2371 = vmatprep.subr.bf16.mxu0 0
      %2372 = vmatpush1.bf16.msra.mxu0 0
      %2373 = vmatprep.mubr.bf16.mxu0 0
      %2374 = vmatmul.mubr.bf16.gmra.mrb[0].mxu0 %v2286
      %v2375 = vpop.f32.mrb[0].mxu0
      %v2376 = vadd.f32 0.0, %v2375
      %v2377 = vpop.f32.mrb[0].mxu0
      %v2378 = vadd.f32 0.0, %v2377
      %v2379 = vpop.f32.mrb[0].mxu0
      %v2380 = vpop.f32.mrb[0].mxu0
      %2381 = vdwg.mxu0
      %v2382 = vadd.f32 %v2235, %v2335
      %v2383 = vadd.f32 %v2236, %v2337
      %v2384 = vadd.f32 %v2237, %v2376
      %v2385 = vadd.f32 %v2238, %v2378
      %s2386 = scalar_lea.vmem %s2, 28
      %v2387 = vld [vmem:[%s2386] sm:$0x3]
      %v2388 = vmul.bf16 %v2387, %v378
      %v2389 = vld [vmem:[#allocation2 + $0x2] sm:$0xff]
      %v2390 = vld [vmem:[#allocation2 + $0xa] sm:$0x3]
      %v2393 = vcombine.high %v2389, %v2389
      %v2395 = vunpack.c.l.s4 1983009808
      %v2396 = vunpack.c.0.s8 %v2395
      %v2397 = vlaneseq
      %v2398 = vshrl.u32 %v2397, 7
      %v2399 = vsub.s32 %v2396, %v2398
      %v2400 = vrot.slane %v2389, %v2399
      %v2402 = vunpack.c.l.s4 1983009808
      %v2403 = vunpack.c.0.s8 %v2402
      %v2404 = vlaneseq
      %v2405 = vshrl.u32 %v2404, 7
      %v2406 = vsub.s32 %v2403, %v2405
      %v2407 = vrot.slane %v2393, %v2406
      %v2408 = vcombine.high %v2400, %v2400
      %v2409 = vcombine.high %v2407, %v2407
      %v2411 = vunpack.c.l.s4 1983009808
      %v2412 = vunpack.c.0.s8 %v2411
      %v2413 = vlaneseq
      %v2414 = vshrl.u32 %v2413, 7
      %v2415 = vsub.s32 %v2412, %v2414
      %v2416 = vrot.slane %v2390, %v2415
      %2417 = vrot.lane.b32.xlu0 %v2400, 44
      %v2418 = vpop.permute.xlu0 %2417
      %2419 = vrot.lane.b32.xlu0 %v2408, 44
      %v2420 = vpop.permute.xlu0 %2419
      %2421 = vrot.lane.b32.xlu0 %v2407, 44
      %v2422 = vpop.permute.xlu0 %2421
      %2423 = vrot.lane.b32.xlu0 %v2409, 44
      %v2424 = vpop.permute.xlu0 %2423
      %2425 = vrot.lane.b32.xlu0 %v2416, 44
      %v2426 = vpop.permute.xlu0 %2425
      %vm2427 = vcmask 359424
      %v2428 = vsel %vm2427, %v2418, %v2420
      %v2429 = vsel %vm2427, %v2420, %v2422
      %v2430 = vsel %vm2427, %v2422, %v2424
      %v2431 = vsel %vm2427, %v2424, %v2426
      %v2433 = vsel %vm426, %v2388, 0
      %v2436 = vsel %vm430, %v2428, 0
      %v2439 = vsel %vm430, %v2429, 0
      %v2442 = vsel %vm430, %v2430, 0
      %v2445 = vsel %vm430, %v2431, 0
      %2447 = vmatprep.subr.bf16.mxu0 %v2439
      %2448 = vmatpush1.bf16.msra.mxu0 %v2436
      %2449 = vmatprep.subr.bf16.mxu0 0
      %2450 = vmatpush1.bf16.msra.mxu0 0
      %2451 = vmatprep.subr.bf16.mxu0 0
      %2452 = vmatpush1.bf16.msra.mxu0 0
      %2453 = vmatprep.subr.bf16.mxu0 0
      %2454 = vmatpush1.bf16.msra.mxu0 0
      %2455 = vmatprep.subr.bf16.mxu0 0
      %2456 = vmatpush1.bf16.msra.mxu0 0
      %2457 = vmatprep.subr.bf16.mxu0 0
      %2458 = vmatpush1.bf16.msra.mxu0 0
      %2459 = vmatprep.subr.bf16.mxu0 0
      %2460 = vmatpush1.bf16.msra.mxu0 0
      %2461 = vmatprep.subr.bf16.mxu0 0
      %2462 = vmatpush1.bf16.msra.mxu0 0
      %2463 = vmatprep.subr.bf16.mxu0 0
      %2464 = vmatpush1.bf16.msra.mxu0 0
      %2465 = vmatprep.subr.bf16.mxu0 0
      %2466 = vmatpush1.bf16.msra.mxu0 0
      %2467 = vmatprep.subr.bf16.mxu0 0
      %2468 = vmatpush1.bf16.msra.mxu0 0
      %2469 = vmatprep.subr.bf16.mxu0 0
      %2470 = vmatpush1.bf16.msra.mxu0 0
      %2471 = vmatprep.subr.bf16.mxu0 0
      %2472 = vmatpush1.bf16.msra.mxu0 0
      %2473 = vmatprep.subr.bf16.mxu0 0
      %2474 = vmatpush1.bf16.msra.mxu0 0
      %2475 = vmatprep.subr.bf16.mxu0 0
      %2476 = vmatpush1.bf16.msra.mxu0 0
      %2477 = vmatprep.subr.bf16.mxu0 0
      %2478 = vmatpush1.bf16.msra.mxu0 0
      %2479 = vmatprep.mubr.bf16.mxu0 0
      %2480 = vmatmul.mubr.bf16.gmra.mrb[0].mxu0 %v2433
      %v2481 = vpop.f32.mrb[0].mxu0
      %v2482 = vadd.f32 0.0, %v2481
      %v2483 = vpop.f32.mrb[0].mxu0
      %v2484 = vadd.f32 0.0, %v2483
      %v2485 = vpop.f32.mrb[0].mxu0
      %v2486 = vpop.f32.mrb[0].mxu0
      %2487 = vdwg.mxu0
      %2488 = vmatprep.subr.bf16.mxu0 %v2445
      %2489 = vmatpush1.bf16.msra.mxu0 %v2442
      %2490 = vmatprep.subr.bf16.mxu0 0
      %2491 = vmatpush1.bf16.msra.mxu0 0
      %2492 = vmatprep.subr.bf16.mxu0 0
      %2493 = vmatpush1.bf16.msra.mxu0 0
      %2494 = vmatprep.subr.bf16.mxu0 0
      %2495 = vmatpush1.bf16.msra.mxu0 0
      %2496 = vmatprep.subr.bf16.mxu0 0
      %2497 = vmatpush1.bf16.msra.mxu0 0
      %2498 = vmatprep.subr.bf16.mxu0 0
      %2499 = vmatpush1.bf16.msra.mxu0 0
      %2500 = vmatprep.subr.bf16.mxu0 0
      %2501 = vmatpush1.bf16.msra.mxu0 0
      %2502 = vmatprep.subr.bf16.mxu0 0
      %2503 = vmatpush1.bf16.msra.mxu0 0
      %2504 = vmatprep.subr.bf16.mxu0 0
      %2505 = vmatpush1.bf16.msra.mxu0 0
      %2506 = vmatprep.subr.bf16.mxu0 0
      %2507 = vmatpush1.bf16.msra.mxu0 0
      %2508 = vmatprep.subr.bf16.mxu0 0
      %2509 = vmatpush1.bf16.msra.mxu0 0
      %2510 = vmatprep.subr.bf16.mxu0 0
      %2511 = vmatpush1.bf16.msra.mxu0 0
      %2512 = vmatprep.subr.bf16.mxu0 0
      %2513 = vmatpush1.bf16.msra.mxu0 0
      %2514 = vmatprep.subr.bf16.mxu0 0
      %2515 = vmatpush1.bf16.msra.mxu0 0
      %2516 = vmatprep.subr.bf16.mxu0 0
      %2517 = vmatpush1.bf16.msra.mxu0 0
      %2518 = vmatprep.subr.bf16.mxu0 0
      %2519 = vmatpush1.bf16.msra.mxu0 0
      %2520 = vmatprep.mubr.bf16.mxu0 0
      %2521 = vmatmul.mubr.bf16.gmra.mrb[0].mxu0 %v2433
      %v2522 = vpop.f32.mrb[0].mxu0
      %v2523 = vadd.f32 0.0, %v2522
      %v2524 = vpop.f32.mrb[0].mxu0
      %v2525 = vadd.f32 0.0, %v2524
      %v2526 = vpop.f32.mrb[0].mxu0
      %v2527 = vpop.f32.mrb[0].mxu0
      %2528 = vdwg.mxu0
      %v2529 = vadd.f32 %v2382, %v2482
      %v2530 = vadd.f32 %v2383, %v2484
      %v2531 = vadd.f32 %v2384, %v2523
      %v2532 = vadd.f32 %v2385, %v2525
      %s2533 = scalar_lea.vmem %s2, 30
      %v2534 = vld [vmem:[%s2533] sm:$0x3]
      %v2535 = vmul.bf16 %v2534, %v378
      %v2536 = vld [vmem:[#allocation2 + $0x2] sm:$0xff]
      %v2537 = vld [vmem:[#allocation2 + $0xa] sm:$0x3]
      %v2540 = vcombine.high %v2536, %v2536
      %v2542 = vunpack.c.l.s4 1983009808
      %v2543 = vunpack.c.0.s8 %v2542
      %v2544 = vlaneseq
      %v2545 = vshrl.u32 %v2544, 7
      %v2546 = vsub.s32 %v2543, %v2545
      %v2547 = vrot.slane %v2536, %v2546
      %v2549 = vunpack.c.l.s4 1983009808
      %v2550 = vunpack.c.0.s8 %v2549
      %v2551 = vlaneseq
      %v2552 = vshrl.u32 %v2551, 7
      %v2553 = vsub.s32 %v2550, %v2552
      %v2554 = vrot.slane %v2540, %v2553
      %v2555 = vcombine.high %v2547, %v2547
      %v2556 = vcombine.high %v2554, %v2554
      %v2558 = vunpack.c.l.s4 1983009808
      %v2559 = vunpack.c.0.s8 %v2558
      %v2560 = vlaneseq
      %v2561 = vshrl.u32 %v2560, 7
      %v2562 = vsub.s32 %v2559, %v2561
      %v2563 = vrot.slane %v2537, %v2562
      %2564 = vrot.lane.b32.xlu0 %v2547, 32
      %v2565 = vpop.permute.xlu0 %2564
      %2566 = vrot.lane.b32.xlu0 %v2555, 32
      %v2567 = vpop.permute.xlu0 %2566
      %2568 = vrot.lane.b32.xlu0 %v2554, 32
      %v2569 = vpop.permute.xlu0 %2568
      %2570 = vrot.lane.b32.xlu0 %v2556, 32
      %v2571 = vpop.permute.xlu0 %2570
      %2572 = vrot.lane.b32.xlu0 %v2563, 32
      %v2573 = vpop.permute.xlu0 %2572
      %vm2574 = vcmask 261120
      %v2575 = vsel %vm2574, %v2565, %v2567
      %v2576 = vsel %vm2574, %v2567, %v2569
      %v2577 = vsel %vm2574, %v2569, %v2571
      %v2578 = vsel %vm2574, %v2571, %v2573
      %v2580 = vsel %vm426, %v2535, 0
      %v2583 = vsel %vm430, %v2575, 0
      %v2586 = vsel %vm430, %v2576, 0
      %v2589 = vsel %vm430, %v2577, 0
      %v2592 = vsel %vm430, %v2578, 0
      %2594 = vmatprep.subr.bf16.mxu0 %v2586
      %2595 = vmatpush1.bf16.msra.mxu0 %v2583
      %2596 = vmatprep.subr.bf16.mxu0 0
      %2597 = vmatpush1.bf16.msra.mxu0 0
      %2598 = vmatprep.subr.bf16.mxu0 0
      %2599 = vmatpush1.bf16.msra.mxu0 0
      %2600 = vmatprep.subr.bf16.mxu0 0
      %2601 = vmatpush1.bf16.msra.mxu0 0
      %2602 = vmatprep.subr.bf16.mxu0 0
      %2603 = vmatpush1.bf16.msra.mxu0 0
      %2604 = vmatprep.subr.bf16.mxu0 0
      %2605 = vmatpush1.bf16.msra.mxu0 0
      %2606 = vmatprep.subr.bf16.mxu0 0
      %2607 = vmatpush1.bf16.msra.mxu0 0
      %2608 = vmatprep.subr.bf16.mxu0 0
      %2609 = vmatpush1.bf16.msra.mxu0 0
      %2610 = vmatprep.subr.bf16.mxu0 0
      %2611 = vmatpush1.bf16.msra.mxu0 0
      %2612 = vmatprep.subr.bf16.mxu0 0
      %2613 = vmatpush1.bf16.msra.mxu0 0
      %2614 = vmatprep.subr.bf16.mxu0 0
      %2615 = vmatpush1.bf16.msra.mxu0 0
      %2616 = vmatprep.subr.bf16.mxu0 0
      %2617 = vmatpush1.bf16.msra.mxu0 0
      %2618 = vmatprep.subr.bf16.mxu0 0
      %2619 = vmatpush1.bf16.msra.mxu0 0
      %2620 = vmatprep.subr.bf16.mxu0 0
      %2621 = vmatpush1.bf16.msra.mxu0 0
      %2622 = vmatprep.subr.bf16.mxu0 0
      %2623 = vmatpush1.bf16.msra.mxu0 0
      %2624 = vmatprep.subr.bf16.mxu0 0
      %2625 = vmatpush1.bf16.msra.mxu0 0
      %2626 = vmatprep.mubr.bf16.mxu0 0
      %2627 = vmatmul.mubr.bf16.gmra.mrb[0].mxu0 %v2580
      %v2628 = vpop.f32.mrb[0].mxu0
      %v2629 = vadd.f32 0.0, %v2628
      %v2630 = vpop.f32.mrb[0].mxu0
      %v2631 = vadd.f32 0.0, %v2630
      %v2632 = vpop.f32.mrb[0].mxu0
      %v2633 = vpop.f32.mrb[0].mxu0
      %2634 = vdwg.mxu0
      %2635 = vmatprep.subr.bf16.mxu0 %v2592
      %2636 = vmatpush1.bf16.msra.mxu0 %v2589
      %2637 = vmatprep.subr.bf16.mxu0 0
      %2638 = vmatpush1.bf16.msra.mxu0 0
      %2639 = vmatprep.subr.bf16.mxu0 0
      %2640 = vmatpush1.bf16.msra.mxu0 0
      %2641 = vmatprep.subr.bf16.mxu0 0
      %2642 = vmatpush1.bf16.msra.mxu0 0
      %2643 = vmatprep.subr.bf16.mxu0 0
      %2644 = vmatpush1.bf16.msra.mxu0 0
      %2645 = vmatprep.subr.bf16.mxu0 0
      %2646 = vmatpush1.bf16.msra.mxu0 0
      %2647 = vmatprep.subr.bf16.mxu0 0
      %2648 = vmatpush1.bf16.msra.mxu0 0
      %2649 = vmatprep.subr.bf16.mxu0 0
      %2650 = vmatpush1.bf16.msra.mxu0 0
      %2651 = vmatprep.subr.bf16.mxu0 0
      %2652 = vmatpush1.bf16.msra.mxu0 0
      %2653 = vmatprep.subr.bf16.mxu0 0
      %2654 = vmatpush1.bf16.msra.mxu0 0
      %2655 = vmatprep.subr.bf16.mxu0 0
      %2656 = vmatpush1.bf16.msra.mxu0 0
      %2657 = vmatprep.subr.bf16.mxu0 0
      %2658 = vmatpush1.bf16.msra.mxu0 0
      %2659 = vmatprep.subr.bf16.mxu0 0
      %2660 = vmatpush1.bf16.msra.mxu0 0
      %2661 = vmatprep.subr.bf16.mxu0 0
      %2662 = vmatpush1.bf16.msra.mxu0 0
      %2663 = vmatprep.subr.bf16.mxu0 0
      %2664 = vmatpush1.bf16.msra.mxu0 0
      %2665 = vmatprep.subr.bf16.mxu0 0
      %2666 = vmatpush1.bf16.msra.mxu0 0
      %2667 = vmatprep.mubr.bf16.mxu0 0
      %2668 = vmatmul.mubr.bf16.gmra.mrb[0].mxu0 %v2580
      %v2669 = vpop.f32.mrb[0].mxu0
      %v2670 = vadd.f32 0.0, %v2669
      %v2671 = vpop.f32.mrb[0].mxu0
      %v2672 = vadd.f32 0.0, %v2671
      %v2673 = vpop.f32.mrb[0].mxu0
      %v2674 = vpop.f32.mrb[0].mxu0
      %2675 = vdwg.mxu0
      %v2676 = vadd.f32 %v2529, %v2629
      %v2677 = vadd.f32 %v2530, %v2631
      %v2678 = vadd.f32 %v2531, %v2670
      %v2679 = vadd.f32 %v2532, %v2672
      %s2680 = scalar_lea.vmem %s2, 32
      %v2681 = vld [vmem:[%s2680] sm:$0x3]
      %v2682 = vmul.bf16 %v2681, %v378
      %v2683 = vld [vmem:[#allocation2 + $0x2] sm:$0xff]
      %v2684 = vld [vmem:[#allocation2 + $0xa] sm:$0x3]
      %v2687 = vcombine.high %v2683, %v2683
      %v2689 = vunpack.c.l.s4 1983009808
      %v2690 = vunpack.c.0.s8 %v2689
      %v2691 = vlaneseq
      %v2692 = vshrl.u32 %v2691, 7
      %v2693 = vsub.s32 %v2690, %v2692
      %v2694 = vrot.slane %v2683, %v2693
      %v2696 = vunpack.c.l.s4 1983009808
      %v2697 = vunpack.c.0.s8 %v2696
      %v2698 = vlaneseq
      %v2699 = vshrl.u32 %v2698, 7
      %v2700 = vsub.s32 %v2697, %v2699
      %v2701 = vrot.slane %v2687, %v2700
      %v2702 = vcombine.high %v2694, %v2694
      %v2703 = vcombine.high %v2701, %v2701
      %v2705 = vunpack.c.l.s4 1983009808
      %v2706 = vunpack.c.0.s8 %v2705
      %v2707 = vlaneseq
      %v2708 = vshrl.u32 %v2707, 7
      %v2709 = vsub.s32 %v2706, %v2708
      %v2710 = vrot.slane %v2684, %v2709
      %2711 = vrot.lane.b32.xlu0 %v2694, 31
      %v2712 = vpop.permute.xlu0 %2711
      %2713 = vrot.lane.b32.xlu0 %v2702, 31
      %v2714 = vpop.permute.xlu0 %2713
      %2715 = vrot.lane.b32.xlu0 %v2701, 31
      %v2716 = vpop.permute.xlu0 %2715
      %2717 = vrot.lane.b32.xlu0 %v2703, 31
      %v2718 = vpop.permute.xlu0 %2717
      %2719 = vrot.lane.b32.xlu0 %v2710, 31
      %v2720 = vpop.permute.xlu0 %2719
      %vm2721 = vcmask 252928
      %v2722 = vsel %vm2721, %v2712, %v2714
      %v2723 = vsel %vm2721, %v2714, %v2716
      %v2724 = vsel %vm2721, %v2716, %v2718
      %v2725 = vsel %vm2721, %v2718, %v2720
      %v2727 = vsel %vm426, %v2682, 0
      %v2730 = vsel %vm430, %v2722, 0
      %v2733 = vsel %vm430, %v2723, 0
      %v2736 = vsel %vm430, %v2724, 0
      %v2739 = vsel %vm430, %v2725, 0
      %2741 = vmatprep.subr.bf16.mxu0 %v2733
      %2742 = vmatpush1.bf16.msra.mxu0 %v2730
      %2743 = vmatprep.subr.bf16.mxu0 0
      %2744 = vmatpush1.bf16.msra.mxu0 0
      %2745 = vmatprep.subr.bf16.mxu0 0
      %2746 = vmatpush1.bf16.msra.mxu0 0
      %2747 = vmatprep.subr.bf16.mxu0 0
      %2748 = vmatpush1.bf16.msra.mxu0 0
      %2749 = vmatprep.subr.bf16.mxu0 0
      %2750 = vmatpush1.bf16.msra.mxu0 0
      %2751 = vmatprep.subr.bf16.mxu0 0
      %2752 = vmatpush1.bf16.msra.mxu0 0
      %2753 = vmatprep.subr.bf16.mxu0 0
      %2754 = vmatpush1.bf16.msra.mxu0 0
      %2755 = vmatprep.subr.bf16.mxu0 0
      %2756 = vmatpush1.bf16.msra.mxu0 0
      %2757 = vmatprep.subr.bf16.mxu0 0
      %2758 = vmatpush1.bf16.msra.mxu0 0
      %2759 = vmatprep.subr.bf16.mxu0 0
      %2760 = vmatpush1.bf16.msra.mxu0 0
      %2761 = vmatprep.subr.bf16.mxu0 0
      %2762 = vmatpush1.bf16.msra.mxu0 0
      %2763 = vmatprep.subr.bf16.mxu0 0
      %2764 = vmatpush1.bf16.msra.mxu0 0
      %2765 = vmatprep.subr.bf16.mxu0 0
      %2766 = vmatpush1.bf16.msra.mxu0 0
      %2767 = vmatprep.subr.bf16.mxu0 0
      %2768 = vmatpush1.bf16.msra.mxu0 0
      %2769 = vmatprep.subr.bf16.mxu0 0
      %2770 = vmatpush1.bf16.msra.mxu0 0
      %2771 = vmatprep.subr.bf16.mxu0 0
      %2772 = vmatpush1.bf16.msra.mxu0 0
      %2773 = vmatprep.mubr.bf16.mxu0 0
      %2774 = vmatmul.mubr.bf16.gmra.mrb[0].mxu0 %v2727
      %v2775 = vpop.f32.mrb[0].mxu0
      %v2776 = vadd.f32 0.0, %v2775
      %v2777 = vpop.f32.mrb[0].mxu0
      %v2778 = vadd.f32 0.0, %v2777
      %v2779 = vpop.f32.mrb[0].mxu0
      %v2780 = vpop.f32.mrb[0].mxu0
      %2781 = vdwg.mxu0
      %2782 = vmatprep.subr.bf16.mxu0 %v2739
      %2783 = vmatpush1.bf16.msra.mxu0 %v2736
      %2784 = vmatprep.subr.bf16.mxu0 0
      %2785 = vmatpush1.bf16.msra.mxu0 0
      %2786 = vmatprep.subr.bf16.mxu0 0
      %2787 = vmatpush1.bf16.msra.mxu0 0
      %2788 = vmatprep.subr.bf16.mxu0 0
      %2789 = vmatpush1.bf16.msra.mxu0 0
      %2790 = vmatprep.subr.bf16.mxu0 0
      %2791 = vmatpush1.bf16.msra.mxu0 0
      %2792 = vmatprep.subr.bf16.mxu0 0
      %2793 = vmatpush1.bf16.msra.mxu0 0
      %2794 = vmatprep.subr.bf16.mxu0 0
      %2795 = vmatpush1.bf16.msra.mxu0 0
      %2796 = vmatprep.subr.bf16.mxu0 0
      %2797 = vmatpush1.bf16.msra.mxu0 0
      %2798 = vmatprep.subr.bf16.mxu0 0
      %2799 = vmatpush1.bf16.msra.mxu0 0
      %2800 = vmatprep.subr.bf16.mxu0 0
      %2801 = vmatpush1.bf16.msra.mxu0 0
      %2802 = vmatprep.subr.bf16.mxu0 0
      %2803 = vmatpush1.bf16.msra.mxu0 0
      %2804 = vmatprep.subr.bf16.mxu0 0
      %2805 = vmatpush1.bf16.msra.mxu0 0
      %2806 = vmatprep.subr.bf16.mxu0 0
      %2807 = vmatpush1.bf16.msra.mxu0 0
      %2808 = vmatprep.subr.bf16.mxu0 0
      %2809 = vmatpush1.bf16.msra.mxu0 0
      %2810 = vmatprep.subr.bf16.mxu0 0
      %2811 = vmatpush1.bf16.msra.mxu0 0
      %2812 = vmatprep.subr.bf16.mxu0 0
      %2813 = vmatpush1.bf16.msra.mxu0 0
      %2814 = vmatprep.mubr.bf16.mxu0 0
      %2815 = vmatmul.mubr.bf16.gmra.mrb[0].mxu0 %v2727
      %v2816 = vpop.f32.mrb[0].mxu0
      %v2817 = vadd.f32 0.0, %v2816
      %v2818 = vpop.f32.mrb[0].mxu0
      %v2819 = vadd.f32 0.0, %v2818
      %v2820 = vpop.f32.mrb[0].mxu0
      %v2821 = vpop.f32.mrb[0].mxu0
      %2822 = vdwg.mxu0
      %v2823 = vadd.f32 %v2676, %v2776
      %v2824 = vadd.f32 %v2677, %v2778
      %v2825 = vadd.f32 %v2678, %v2817
      %v2826 = vadd.f32 %v2679, %v2819
      %s2827 = scalar_lea.vmem %s2, 34
      %v2828 = vld [vmem:[%s2827] sm:$0x3]
      %v2829 = vmul.bf16 %v2828, %v378
      %v2830 = vld [vmem:[#allocation2 + $0x2] sm:$0xff]
      %v2831 = vld [vmem:[#allocation2 + $0xa] sm:$0x3]
      %v2834 = vcombine.high %v2830, %v2830
      %v2836 = vunpack.c.l.s4 1983009808
      %v2837 = vunpack.c.0.s8 %v2836
      %v2838 = vlaneseq
      %v2839 = vshrl.u32 %v2838, 7
      %v2840 = vsub.s32 %v2837, %v2839
      %v2841 = vrot.slane %v2830, %v2840
      %v2843 = vunpack.c.l.s4 1983009808
      %v2844 = vunpack.c.0.s8 %v2843
      %v2845 = vlaneseq
      %v2846 = vshrl.u32 %v2845, 7
      %v2847 = vsub.s32 %v2844, %v2846
      %v2848 = vrot.slane %v2834, %v2847
      %v2849 = vcombine.high %v2841, %v2841
      %v2850 = vcombine.high %v2848, %v2848
      %v2852 = vunpack.c.l.s4 1983009808
      %v2853 = vunpack.c.0.s8 %v2852
      %v2854 = vlaneseq
      %v2855 = vshrl.u32 %v2854, 7
      %v2856 = vsub.s32 %v2853, %v2855
      %v2857 = vrot.slane %v2831, %v2856
      %2858 = vrot.lane.b32.xlu0 %v2841, 30
      %v2859 = vpop.permute.xlu0 %2858
      %2860 = vrot.lane.b32.xlu0 %v2849, 30
      %v2861 = vpop.permute.xlu0 %2860
      %2862 = vrot.lane.b32.xlu0 %v2848, 30
      %v2863 = vpop.permute.xlu0 %2862
      %2864 = vrot.lane.b32.xlu0 %v2850, 30
      %v2865 = vpop.permute.xlu0 %2864
      %2866 = vrot.lane.b32.xlu0 %v2857, 30
      %v2867 = vpop.permute.xlu0 %2866
      %vm2868 = vcmask 244736
      %v2869 = vsel %vm2868, %v2859, %v2861
      %v2870 = vsel %vm2868, %v2861, %v2863
      %v2871 = vsel %vm2868, %v2863, %v2865
      %v2872 = vsel %vm2868, %v2865, %v2867
      %v2874 = vsel %vm426, %v2829, 0
      %v2877 = vsel %vm430, %v2869, 0
      %v2880 = vsel %vm430, %v2870, 0
      %v2883 = vsel %vm430, %v2871, 0
      %v2886 = vsel %vm430, %v2872, 0
      %2888 = vmatprep.subr.bf16.mxu0 %v2880
      %2889 = vmatpush1.bf16.msra.mxu0 %v2877
      %2890 = vmatprep.subr.bf16.mxu0 0
      %2891 = vmatpush1.bf16.msra.mxu0 0
      %2892 = vmatprep.subr.bf16.mxu0 0
      %2893 = vmatpush1.bf16.msra.mxu0 0
      %2894 = vmatprep.subr.bf16.mxu0 0
      %2895 = vmatpush1.bf16.msra.mxu0 0
      %2896 = vmatprep.subr.bf16.mxu0 0
      %2897 = vmatpush1.bf16.msra.mxu0 0
      %2898 = vmatprep.subr.bf16.mxu0 0
      %2899 = vmatpush1.bf16.msra.mxu0 0
      %2900 = vmatprep.subr.bf16.mxu0 0
      %2901 = vmatpush1.bf16.msra.mxu0 0
      %2902 = vmatprep.subr.bf16.mxu0 0
      %2903 = vmatpush1.bf16.msra.mxu0 0
      %2904 = vmatprep.subr.bf16.mxu0 0
      %2905 = vmatpush1.bf16.msra.mxu0 0
      %2906 = vmatprep.subr.bf16.mxu0 0
      %2907 = vmatpush1.bf16.msra.mxu0 0
      %2908 = vmatprep.subr.bf16.mxu0 0
      %2909 = vmatpush1.bf16.msra.mxu0 0
      %2910 = vmatprep.subr.bf16.mxu0 0
      %2911 = vmatpush1.bf16.msra.mxu0 0
      %2912 = vmatprep.subr.bf16.mxu0 0
      %2913 = vmatpush1.bf16.msra.mxu0 0
      %2914 = vmatprep.subr.bf16.mxu0 0
      %2915 = vmatpush1.bf16.msra.mxu0 0
      %2916 = vmatprep.subr.bf16.mxu0 0
      %2917 = vmatpush1.bf16.msra.mxu0 0
      %2918 = vmatprep.subr.bf16.mxu0 0
      %2919 = vmatpush1.bf16.msra.mxu0 0
      %2920 = vmatprep.mubr.bf16.mxu0 0
      %2921 = vmatmul.mubr.bf16.gmra.mrb[0].mxu0 %v2874
      %v2922 = vpop.f32.mrb[0].mxu0
      %v2923 = vadd.f32 0.0, %v2922
      %v2924 = vpop.f32.mrb[0].mxu0
      %v2925 = vadd.f32 0.0, %v2924
      %v2926 = vpop.f32.mrb[0].mxu0
      %v2927 = vpop.f32.mrb[0].mxu0
      %2928 = vdwg.mxu0
      %2929 = vmatprep.subr.bf16.mxu0 %v2886
      %2930 = vmatpush1.bf16.msra.mxu0 %v2883
      %2931 = vmatprep.subr.bf16.mxu0 0
      %2932 = vmatpush1.bf16.msra.mxu0 0
      %2933 = vmatprep.subr.bf16.mxu0 0
      %2934 = vmatpush1.bf16.msra.mxu0 0
      %2935 = vmatprep.subr.bf16.mxu0 0
      %2936 = vmatpush1.bf16.msra.mxu0 0
      %2937 = vmatprep.subr.bf16.mxu0 0
      %2938 = vmatpush1.bf16.msra.mxu0 0
      %2939 = vmatprep.subr.bf16.mxu0 0
      %2940 = vmatpush1.bf16.msra.mxu0 0
      %2941 = vmatprep.subr.bf16.mxu0 0
      %2942 = vmatpush1.bf16.msra.mxu0 0
      %2943 = vmatprep.subr.bf16.mxu0 0
      %2944 = vmatpush1.bf16.msra.mxu0 0
      %2945 = vmatprep.subr.bf16.mxu0 0
      %2946 = vmatpush1.bf16.msra.mxu0 0
      %2947 = vmatprep.subr.bf16.mxu0 0
      %2948 = vmatpush1.bf16.msra.mxu0 0
      %2949 = vmatprep.subr.bf16.mxu0 0
      %2950 = vmatpush1.bf16.msra.mxu0 0
      %2951 = vmatprep.subr.bf16.mxu0 0
      %2952 = vmatpush1.bf16.msra.mxu0 0
      %2953 = vmatprep.subr.bf16.mxu0 0
      %2954 = vmatpush1.bf16.msra.mxu0 0
      %2955 = vmatprep.subr.bf16.mxu0 0
      %2956 = vmatpush1.bf16.msra.mxu0 0
      %2957 = vmatprep.subr.bf16.mxu0 0
      %2958 = vmatpush1.bf16.msra.mxu0 0
      %2959 = vmatprep.subr.bf16.mxu0 0
      %2960 = vmatpush1.bf16.msra.mxu0 0
      %2961 = vmatprep.mubr.bf16.mxu0 0
      %2962 = vmatmul.mubr.bf16.gmra.mrb[0].mxu0 %v2874
      %v2963 = vpop.f32.mrb[0].mxu0
      %v2964 = vadd.f32 0.0, %v2963
      %v2965 = vpop.f32.mrb[0].mxu0
      %v2966 = vadd.f32 0.0, %v2965
      %v2967 = vpop.f32.mrb[0].mxu0
      %v2968 = vpop.f32.mrb[0].mxu0
      %2969 = vdwg.mxu0
      %v2970 = vadd.f32 %v2823, %v2923
      %v2971 = vadd.f32 %v2824, %v2925
      %v2972 = vadd.f32 %v2825, %v2964
      %v2973 = vadd.f32 %v2826, %v2966
      %s2974 = scalar_lea.vmem %s2, 36
      %v2975 = vld [vmem:[%s2974] sm:$0x3]
      %v2976 = vmul.bf16 %v2975, %v378
      %v2977 = vld [vmem:[#allocation2 + $0x6] sm:$0xff]
      %v2978 = vld [vmem:[#allocation2 + $0xe] sm:$0x3]
      %v2981 = vcombine.high %v2977, %v2977
      %v2983 = vunpack.c.l.s4 1983009808
      %v2984 = vunpack.c.0.s8 %v2983
      %v2985 = vlaneseq
      %v2986 = vshrl.u32 %v2985, 7
      %v2987 = vsub.s32 %v2984, %v2986
      %v2988 = vrot.slane %v2977, %v2987
      %v2990 = vunpack.c.l.s4 1983009808
      %v2991 = vunpack.c.0.s8 %v2990
      %v2992 = vlaneseq
      %v2993 = vshrl.u32 %v2992, 7
      %v2994 = vsub.s32 %v2991, %v2993
      %v2995 = vrot.slane %v2981, %v2994
      %v2996 = vcombine.high %v2988, %v2988
      %v2997 = vcombine.high %v2995, %v2995
      %v2999 = vunpack.c.l.s4 1983009808
      %v3000 = vunpack.c.0.s8 %v2999
      %v3001 = vlaneseq
      %v3002 = vshrl.u32 %v3001, 7
      %v3003 = vsub.s32 %v3000, %v3002
      %v3004 = vrot.slane %v2978, %v3003
      %3005 = vrot.lane.b32.xlu0 %v2988, 120
      %v3006 = vpop.permute.xlu0 %3005
      %3007 = vrot.lane.b32.xlu0 %v2996, 120
      %v3008 = vpop.permute.xlu0 %3007
      %3009 = vrot.lane.b32.xlu0 %v2995, 120
      %v3010 = vpop.permute.xlu0 %3009
      %3011 = vrot.lane.b32.xlu0 %v2997, 120
      %v3012 = vpop.permute.xlu0 %3011
      %3013 = vrot.lane.b32.xlu0 %v3004, 120
      %v3014 = vpop.permute.xlu0 %3013
      %vm3015 = vcmask 982016
      %v3016 = vsel %vm3015, %v3006, %v3008
      %v3017 = vsel %vm3015, %v3008, %v3010
      %v3018 = vsel %vm3015, %v3010, %v3012
      %v3019 = vsel %vm3015, %v3012, %v3014
      %v3021 = vsel %vm426, %v2976, 0
      %v3024 = vsel %vm430, %v3016, 0
      %v3027 = vsel %vm430, %v3017, 0
      %v3030 = vsel %vm430, %v3018, 0
      %v3033 = vsel %vm430, %v3019, 0
      %3035 = vmatprep.subr.bf16.mxu0 %v3027
      %3036 = vmatpush1.bf16.msra.mxu0 %v3024
      %3037 = vmatprep.subr.bf16.mxu0 0
      %3038 = vmatpush1.bf16.msra.mxu0 0
      %3039 = vmatprep.subr.bf16.mxu0 0
      %3040 = vmatpush1.bf16.msra.mxu0 0
      %3041 = vmatprep.subr.bf16.mxu0 0
      %3042 = vmatpush1.bf16.msra.mxu0 0
      %3043 = vmatprep.subr.bf16.mxu0 0
      %3044 = vmatpush1.bf16.msra.mxu0 0
      %3045 = vmatprep.subr.bf16.mxu0 0
      %3046 = vmatpush1.bf16.msra.mxu0 0
      %3047 = vmatprep.subr.bf16.mxu0 0
      %3048 = vmatpush1.bf16.msra.mxu0 0
      %3049 = vmatprep.subr.bf16.mxu0 0
      %3050 = vmatpush1.bf16.msra.mxu0 0
      %3051 = vmatprep.subr.bf16.mxu0 0
      %3052 = vmatpush1.bf16.msra.mxu0 0
      %3053 = vmatprep.subr.bf16.mxu0 0
      %3054 = vmatpush1.bf16.msra.mxu0 0
      %3055 = vmatprep.subr.bf16.mxu0 0
      %3056 = vmatpush1.bf16.msra.mxu0 0
      %3057 = vmatprep.subr.bf16.mxu0 0
      %3058 = vmatpush1.bf16.msra.mxu0 0
      %3059 = vmatprep.subr.bf16.mxu0 0
      %3060 = vmatpush1.bf16.msra.mxu0 0
      %3061 = vmatprep.subr.bf16.mxu0 0
      %3062 = vmatpush1.bf16.msra.mxu0 0
      %3063 = vmatprep.subr.bf16.mxu0 0
      %3064 = vmatpush1.bf16.msra.mxu0 0
      %3065 = vmatprep.subr.bf16.mxu0 0
      %3066 = vmatpush1.bf16.msra.mxu0 0
      %3067 = vmatprep.mubr.bf16.mxu0 0
      %3068 = vmatmul.mubr.bf16.gmra.mrb[0].mxu0 %v3021
      %v3069 = vpop.f32.mrb[0].mxu0
      %v3070 = vadd.f32 0.0, %v3069
      %v3071 = vpop.f32.mrb[0].mxu0
      %v3072 = vadd.f32 0.0, %v3071
      %v3073 = vpop.f32.mrb[0].mxu0
      %v3074 = vpop.f32.mrb[0].mxu0
      %3075 = vdwg.mxu0
      %3076 = vmatprep.subr.bf16.mxu0 %v3033
      %3077 = vmatpush1.bf16.msra.mxu0 %v3030
      %3078 = vmatprep.subr.bf16.mxu0 0
      %3079 = vmatpush1.bf16.msra.mxu0 0
      %3080 = vmatprep.subr.bf16.mxu0 0
      %3081 = vmatpush1.bf16.msra.mxu0 0
      %3082 = vmatprep.subr.bf16.mxu0 0
      %3083 = vmatpush1.bf16.msra.mxu0 0
      %3084 = vmatprep.subr.bf16.mxu0 0
      %3085 = vmatpush1.bf16.msra.mxu0 0
      %3086 = vmatprep.subr.bf16.mxu0 0
      %3087 = vmatpush1.bf16.msra.mxu0 0
      %3088 = vmatprep.subr.bf16.mxu0 0
      %3089 = vmatpush1.bf16.msra.mxu0 0
      %3090 = vmatprep.subr.bf16.mxu0 0
      %3091 = vmatpush1.bf16.msra.mxu0 0
      %3092 = vmatprep.subr.bf16.mxu0 0
      %3093 = vmatpush1.bf16.msra.mxu0 0
      %3094 = vmatprep.subr.bf16.mxu0 0
      %3095 = vmatpush1.bf16.msra.mxu0 0
      %3096 = vmatprep.subr.bf16.mxu0 0
      %3097 = vmatpush1.bf16.msra.mxu0 0
      %3098 = vmatprep.subr.bf16.mxu0 0
      %3099 = vmatpush1.bf16.msra.mxu0 0
      %3100 = vmatprep.subr.bf16.mxu0 0
      %3101 = vmatpush1.bf16.msra.mxu0 0
      %3102 = vmatprep.subr.bf16.mxu0 0
      %3103 = vmatpush1.bf16.msra.mxu0 0
      %3104 = vmatprep.subr.bf16.mxu0 0
      %3105 = vmatpush1.bf16.msra.mxu0 0
      %3106 = vmatprep.subr.bf16.mxu0 0
      %3107 = vmatpush1.bf16.msra.mxu0 0
      %3108 = vmatprep.mubr.bf16.mxu0 0
      %3109 = vmatmul.mubr.bf16.gmra.mrb[0].mxu0 %v3021
      %v3110 = vpop.f32.mrb[0].mxu0
      %v3111 = vadd.f32 0.0, %v3110
      %v3112 = vpop.f32.mrb[0].mxu0
      %v3113 = vadd.f32 0.0, %v3112
      %v3114 = vpop.f32.mrb[0].mxu0
      %v3115 = vpop.f32.mrb[0].mxu0
      %3116 = vdwg.mxu0
      %v3117 = vadd.f32 %v2970, %v3070
      %v3118 = vadd.f32 %v2971, %v3072
      %v3119 = vadd.f32 %v2972, %v3111
      %v3120 = vadd.f32 %v2973, %v3113
      %s3121 = scalar_lea.vmem %s2, 38
      %v3122 = vld [vmem:[%s3121] sm:$0x3]
      %v3123 = vmul.bf16 %v3122, %v378
      %v3124 = vld [vmem:[#allocation2 + $0x6] sm:$0xff]
      %v3125 = vld [vmem:[#allocation2 + $0xe] sm:$0x3]
      %v3128 = vcombine.high %v3124, %v3124
      %v3130 = vunpack.c.l.s4 1983009808
      %v3131 = vunpack.c.0.s8 %v3130
      %v3132 = vlaneseq
      %v3133 = vshrl.u32 %v3132, 7
      %v3134 = vsub.s32 %v3131, %v3133
      %v3135 = vrot.slane %v3124, %v3134
      %v3137 = vunpack.c.l.s4 1983009808
      %v3138 = vunpack.c.0.s8 %v3137
      %v3139 = vlaneseq
      %v3140 = vshrl.u32 %v3139, 7
      %v3141 = vsub.s32 %v3138, %v3140
      %v3142 = vrot.slane %v3128, %v3141
      %v3143 = vcombine.high %v3135, %v3135
      %v3144 = vcombine.high %v3142, %v3142
      %v3146 = vunpack.c.l.s4 1983009808
      %v3147 = vunpack.c.0.s8 %v3146
      %v3148 = vlaneseq
      %v3149 = vshrl.u32 %v3148, 7
      %v3150 = vsub.s32 %v3147, %v3149
      %v3151 = vrot.slane %v3125, %v3150
      %3152 = vrot.lane.b32.xlu0 %v3135, 119
      %v3153 = vpop.permute.xlu0 %3152
      %3154 = vrot.lane.b32.xlu0 %v3143, 119
      %v3155 = vpop.permute.xlu0 %3154
      %3156 = vrot.lane.b32.xlu0 %v3142, 119
      %v3157 = vpop.permute.xlu0 %3156
      %3158 = vrot.lane.b32.xlu0 %v3144, 119
      %v3159 = vpop.permute.xlu0 %3158
      %3160 = vrot.lane.b32.xlu0 %v3151, 119
      %v3161 = vpop.permute.xlu0 %3160
      %vm3162 = vcmask 973824
      %v3163 = vsel %vm3162, %v3153, %v3155
      %v3164 = vsel %vm3162, %v3155, %v3157
      %v3165 = vsel %vm3162, %v3157, %v3159
      %v3166 = vsel %vm3162, %v3159, %v3161
      %v3168 = vsel %vm426, %v3123, 0
      %v3171 = vsel %vm430, %v3163, 0
      %v3174 = vsel %vm430, %v3164, 0
      %v3177 = vsel %vm430, %v3165, 0
      %v3180 = vsel %vm430, %v3166, 0
      %3182 = vmatprep.subr.bf16.mxu0 %v3174
      %3183 = vmatpush1.bf16.msra.mxu0 %v3171
      %3184 = vmatprep.subr.bf16.mxu0 0
      %3185 = vmatpush1.bf16.msra.mxu0 0
      %3186 = vmatprep.subr.bf16.mxu0 0
      %3187 = vmatpush1.bf16.msra.mxu0 0
      %3188 = vmatprep.subr.bf16.mxu0 0
      %3189 = vmatpush1.bf16.msra.mxu0 0
      %3190 = vmatprep.subr.bf16.mxu0 0
      %3191 = vmatpush1.bf16.msra.mxu0 0
      %3192 = vmatprep.subr.bf16.mxu0 0
      %3193 = vmatpush1.bf16.msra.mxu0 0
      %3194 = vmatprep.subr.bf16.mxu0 0
      %3195 = vmatpush1.bf16.msra.mxu0 0
      %3196 = vmatprep.subr.bf16.mxu0 0
      %3197 = vmatpush1.bf16.msra.mxu0 0
      %3198 = vmatprep.subr.bf16.mxu0 0
      %3199 = vmatpush1.bf16.msra.mxu0 0
      %3200 = vmatprep.subr.bf16.mxu0 0
      %3201 = vmatpush1.bf16.msra.mxu0 0
      %3202 = vmatprep.subr.bf16.mxu0 0
      %3203 = vmatpush1.bf16.msra.mxu0 0
      %3204 = vmatprep.subr.bf16.mxu0 0
      %3205 = vmatpush1.bf16.msra.mxu0 0
      %3206 = vmatprep.subr.bf16.mxu0 0
      %3207 = vmatpush1.bf16.msra.mxu0 0
      %3208 = vmatprep.subr.bf16.mxu0 0
      %3209 = vmatpush1.bf16.msra.mxu0 0
      %3210 = vmatprep.subr.bf16.mxu0 0
      %3211 = vmatpush1.bf16.msra.mxu0 0
      %3212 = vmatprep.subr.bf16.mxu0 0
      %3213 = vmatpush1.bf16.msra.mxu0 0
      %3214 = vmatprep.mubr.bf16.mxu0 0
      %3215 = vmatmul.mubr.bf16.gmra.mrb[0].mxu0 %v3168
      %v3216 = vpop.f32.mrb[0].mxu0
      %v3217 = vadd.f32 0.0, %v3216
      %v3218 = vpop.f32.mrb[0].mxu0
      %v3219 = vadd.f32 0.0, %v3218
      %v3220 = vpop.f32.mrb[0].mxu0
      %v3221 = vpop.f32.mrb[0].mxu0
      %3222 = vdwg.mxu0
      %3223 = vmatprep.subr.bf16.mxu0 %v3180
      %3224 = vmatpush1.bf16.msra.mxu0 %v3177
      %3225 = vmatprep.subr.bf16.mxu0 0
      %3226 = vmatpush1.bf16.msra.mxu0 0
      %3227 = vmatprep.subr.bf16.mxu0 0
      %3228 = vmatpush1.bf16.msra.mxu0 0
      %3229 = vmatprep.subr.bf16.mxu0 0
      %3230 = vmatpush1.bf16.msra.mxu0 0
      %3231 = vmatprep.subr.bf16.mxu0 0
      %3232 = vmatpush1.bf16.msra.mxu0 0
      %3233 = vmatprep.subr.bf16.mxu0 0
      %3234 = vmatpush1.bf16.msra.mxu0 0
      %3235 = vmatprep.subr.bf16.mxu0 0
      %3236 = vmatpush1.bf16.msra.mxu0 0
      %3237 = vmatprep.subr.bf16.mxu0 0
      %3238 = vmatpush1.bf16.msra.mxu0 0
      %3239 = vmatprep.subr.bf16.mxu0 0
      %3240 = vmatpush1.bf16.msra.mxu0 0
      %3241 = vmatprep.subr.bf16.mxu0 0
      %3242 = vmatpush1.bf16.msra.mxu0 0
      %3243 = vmatprep.subr.bf16.mxu0 0
      %3244 = vmatpush1.bf16.msra.mxu0 0
      %3245 = vmatprep.subr.bf16.mxu0 0
      %3246 = vmatpush1.bf16.msra.mxu0 0
      %3247 = vmatprep.subr.bf16.mxu0 0
      %3248 = vmatpush1.bf16.msra.mxu0 0
      %3249 = vmatprep.subr.bf16.mxu0 0
      %3250 = vmatpush1.bf16.msra.mxu0 0
      %3251 = vmatprep.subr.bf16.mxu0 0
      %3252 = vmatpush1.bf16.msra.mxu0 0
      %3253 = vmatprep.subr.bf16.mxu0 0
      %3254 = vmatpush1.bf16.msra.mxu0 0
      %3255 = vmatprep.mubr.bf16.mxu0 0
      %3256 = vmatmul.mubr.bf16.gmra.mrb[0].mxu0 %v3168
      %v3257 = vpop.f32.mrb[0].mxu0
      %v3258 = vadd.f32 0.0, %v3257
      %v3259 = vpop.f32.mrb[0].mxu0
      %v3260 = vadd.f32 0.0, %v3259
      %v3261 = vpop.f32.mrb[0].mxu0
      %v3262 = vpop.f32.mrb[0].mxu0
      %3263 = vdwg.mxu0
      %v3264 = vadd.f32 %v3117, %v3217
      %v3265 = vadd.f32 %v3118, %v3219
      %v3266 = vadd.f32 %v3119, %v3258
      %v3267 = vadd.f32 %v3120, %v3260
      %s3268 = scalar_lea.vmem %s2, 40
      %v3269 = vld [vmem:[%s3268] sm:$0x3]
      %v3270 = vmul.bf16 %v3269, %v378
      %v3271 = vld [vmem:[#allocation2 + $0x6] sm:$0xff]
      %v3272 = vld [vmem:[#allocation2 + $0xe] sm:$0x3]
      %v3275 = vcombine.high %v3271, %v3271
      %v3277 = vunpack.c.l.s4 1983009808
      %v3278 = vunpack.c.0.s8 %v3277
      %v3279 = vlaneseq
      %v3280 = vshrl.u32 %v3279, 7
      %v3281 = vsub.s32 %v3278, %v3280
      %v3282 = vrot.slane %v3271, %v3281
      %v3284 = vunpack.c.l.s4 1983009808
      %v3285 = vunpack.c.0.s8 %v3284
      %v3286 = vlaneseq
      %v3287 = vshrl.u32 %v3286, 7
      %v3288 = vsub.s32 %v3285, %v3287
      %v3289 = vrot.slane %v3275, %v3288
      %v3290 = vcombine.high %v3282, %v3282
      %v3291 = vcombine.high %v3289, %v3289
      %v3293 = vunpack.c.l.s4 1983009808
      %v3294 = vunpack.c.0.s8 %v3293
      %v3295 = vlaneseq
      %v3296 = vshrl.u32 %v3295, 7
      %v3297 = vsub.s32 %v3294, %v3296
      %v3298 = vrot.slane %v3272, %v3297
      %3299 = vrot.lane.b32.xlu0 %v3282, 118
      %v3300 = vpop.permute.xlu0 %3299
      %3301 = vrot.lane.b32.xlu0 %v3290, 118
      %v3302 = vpop.permute.xlu0 %3301
      %3303 = vrot.lane.b32.xlu0 %v3289, 118
      %v3304 = vpop.permute.xlu0 %3303
      %3305 = vrot.lane.b32.xlu0 %v3291, 118
      %v3306 = vpop.permute.xlu0 %3305
      %3307 = vrot.lane.b32.xlu0 %v3298, 118
      %v3308 = vpop.permute.xlu0 %3307
      %vm3309 = vcmask 965632
      %v3310 = vsel %vm3309, %v3300, %v3302
      %v3311 = vsel %vm3309, %v3302, %v3304
      %v3312 = vsel %vm3309, %v3304, %v3306
      %v3313 = vsel %vm3309, %v3306, %v3308
      %v3315 = vsel %vm426, %v3270, 0
      %v3318 = vsel %vm430, %v3310, 0
      %v3321 = vsel %vm430, %v3311, 0
      %v3324 = vsel %vm430, %v3312, 0
      %v3327 = vsel %vm430, %v3313, 0
      %3329 = vmatprep.subr.bf16.mxu0 %v3321
      %3330 = vmatpush1.bf16.msra.mxu0 %v3318
      %3331 = vmatprep.subr.bf16.mxu0 0
      %3332 = vmatpush1.bf16.msra.mxu0 0
      %3333 = vmatprep.subr.bf16.mxu0 0
      %3334 = vmatpush1.bf16.msra.mxu0 0
      %3335 = vmatprep.subr.bf16.mxu0 0
      %3336 = vmatpush1.bf16.msra.mxu0 0
      %3337 = vmatprep.subr.bf16.mxu0 0
      %3338 = vmatpush1.bf16.msra.mxu0 0
      %3339 = vmatprep.subr.bf16.mxu0 0
      %3340 = vmatpush1.bf16.msra.mxu0 0
      %3341 = vmatprep.subr.bf16.mxu0 0
      %3342 = vmatpush1.bf16.msra.mxu0 0
      %3343 = vmatprep.subr.bf16.mxu0 0
      %3344 = vmatpush1.bf16.msra.mxu0 0
      %3345 = vmatprep.subr.bf16.mxu0 0
      %3346 = vmatpush1.bf16.msra.mxu0 0
      %3347 = vmatprep.subr.bf16.mxu0 0
      %3348 = vmatpush1.bf16.msra.mxu0 0
      %3349 = vmatprep.subr.bf16.mxu0 0
      %3350 = vmatpush1.bf16.msra.mxu0 0
      %3351 = vmatprep.subr.bf16.mxu0 0
      %3352 = vmatpush1.bf16.msra.mxu0 0
      %3353 = vmatprep.subr.bf16.mxu0 0
      %3354 = vmatpush1.bf16.msra.mxu0 0
      %3355 = vmatprep.subr.bf16.mxu0 0
      %3356 = vmatpush1.bf16.msra.mxu0 0
      %3357 = vmatprep.subr.bf16.mxu0 0
      %3358 = vmatpush1.bf16.msra.mxu0 0
      %3359 = vmatprep.subr.bf16.mxu0 0
      %3360 = vmatpush1.bf16.msra.mxu0 0
      %3361 = vmatprep.mubr.bf16.mxu0 0
      %3362 = vmatmul.mubr.bf16.gmra.mrb[0].mxu0 %v3315
      %v3363 = vpop.f32.mrb[0].mxu0
      %v3364 = vadd.f32 0.0, %v3363
      %v3365 = vpop.f32.mrb[0].mxu0
      %v3366 = vadd.f32 0.0, %v3365
      %v3367 = vpop.f32.mrb[0].mxu0
      %v3368 = vpop.f32.mrb[0].mxu0
      %3369 = vdwg.mxu0
      %3370 = vmatprep.subr.bf16.mxu0 %v3327
      %3371 = vmatpush1.bf16.msra.mxu0 %v3324
      %3372 = vmatprep.subr.bf16.mxu0 0
      %3373 = vmatpush1.bf16.msra.mxu0 0
      %3374 = vmatprep.subr.bf16.mxu0 0
      %3375 = vmatpush1.bf16.msra.mxu0 0
      %3376 = vmatprep.subr.bf16.mxu0 0
      %3377 = vmatpush1.bf16.msra.mxu0 0
      %3378 = vmatprep.subr.bf16.mxu0 0
      %3379 = vmatpush1.bf16.msra.mxu0 0
      %3380 = vmatprep.subr.bf16.mxu0 0
      %3381 = vmatpush1.bf16.msra.mxu0 0
      %3382 = vmatprep.subr.bf16.mxu0 0
      %3383 = vmatpush1.bf16.msra.mxu0 0
      %3384 = vmatprep.subr.bf16.mxu0 0
      %3385 = vmatpush1.bf16.msra.mxu0 0
      %3386 = vmatprep.subr.bf16.mxu0 0
      %3387 = vmatpush1.bf16.msra.mxu0 0
      %3388 = vmatprep.subr.bf16.mxu0 0
      %3389 = vmatpush1.bf16.msra.mxu0 0
      %3390 = vmatprep.subr.bf16.mxu0 0
      %3391 = vmatpush1.bf16.msra.mxu0 0
      %3392 = vmatprep.subr.bf16.mxu0 0
      %3393 = vmatpush1.bf16.msra.mxu0 0
      %3394 = vmatprep.subr.bf16.mxu0 0
      %3395 = vmatpush1.bf16.msra.mxu0 0
      %3396 = vmatprep.subr.bf16.mxu0 0
      %3397 = vmatpush1.bf16.msra.mxu0 0
      %3398 = vmatprep.subr.bf16.mxu0 0
      %3399 = vmatpush1.bf16.msra.mxu0 0
      %3400 = vmatprep.subr.bf16.mxu0 0
      %3401 = vmatpush1.bf16.msra.mxu0 0
      %3402 = vmatprep.mubr.bf16.mxu0 0
      %3403 = vmatmul.mubr.bf16.gmra.mrb[0].mxu0 %v3315
      %v3404 = vpop.f32.mrb[0].mxu0
      %v3405 = vadd.f32 0.0, %v3404
      %v3406 = vpop.f32.mrb[0].mxu0
      %v3407 = vadd.f32 0.0, %v3406
      %v3408 = vpop.f32.mrb[0].mxu0
      %v3409 = vpop.f32.mrb[0].mxu0
      %3410 = vdwg.mxu0
      %v3411 = vadd.f32 %v3264, %v3364
      %v3412 = vadd.f32 %v3265, %v3366
      %v3413 = vadd.f32 %v3266, %v3405
      %v3414 = vadd.f32 %v3267, %v3407
      %s3415 = scalar_lea.vmem %s2, 42
      %v3416 = vld [vmem:[%s3415] sm:$0x3]
      %v3417 = vmul.bf16 %v3416, %v378
      %v3418 = vld [vmem:[#allocation2 + $0x6] sm:$0xff]
      %v3419 = vld [vmem:[#allocation2 + $0xe] sm:$0x3]
      %v3422 = vcombine.high %v3418, %v3418
      %v3424 = vunpack.c.l.s4 1983009808
      %v3425 = vunpack.c.0.s8 %v3424
      %v3426 = vlaneseq
      %v3427 = vshrl.u32 %v3426, 7
      %v3428 = vsub.s32 %v3425, %v3427
      %v3429 = vrot.slane %v3418, %v3428
      %v3431 = vunpack.c.l.s4 1983009808
      %v3432 = vunpack.c.0.s8 %v3431
      %v3433 = vlaneseq
      %v3434 = vshrl.u32 %v3433, 7
      %v3435 = vsub.s32 %v3432, %v3434
      %v3436 = vrot.slane %v3422, %v3435
      %v3437 = vcombine.high %v3429, %v3429
      %v3438 = vcombine.high %v3436, %v3436
      %v3440 = vunpack.c.l.s4 1983009808
      %v3441 = vunpack.c.0.s8 %v3440
      %v3442 = vlaneseq
      %v3443 = vshrl.u32 %v3442, 7
      %v3444 = vsub.s32 %v3441, %v3443
      %v3445 = vrot.slane %v3419, %v3444
      %3446 = vrot.lane.b32.xlu0 %v3429, 106
      %v3447 = vpop.permute.xlu0 %3446
      %3448 = vrot.lane.b32.xlu0 %v3437, 106
      %v3449 = vpop.permute.xlu0 %3448
      %3450 = vrot.lane.b32.xlu0 %v3436, 106
      %v3451 = vpop.permute.xlu0 %3450
      %3452 = vrot.lane.b32.xlu0 %v3438, 106
      %v3453 = vpop.permute.xlu0 %3452
      %3454 = vrot.lane.b32.xlu0 %v3445, 106
      %v3455 = vpop.permute.xlu0 %3454
      %vm3456 = vcmask 867328
      %v3457 = vsel %vm3456, %v3447, %v3449
      %v3458 = vsel %vm3456, %v3449, %v3451
      %v3459 = vsel %vm3456, %v3451, %v3453
      %v3460 = vsel %vm3456, %v3453, %v3455
      %v3462 = vsel %vm426, %v3417, 0
      %v3465 = vsel %vm430, %v3457, 0
      %v3468 = vsel %vm430, %v3458, 0
      %v3471 = vsel %vm430, %v3459, 0
      %v3474 = vsel %vm430, %v3460, 0
      %3476 = vmatprep.subr.bf16.mxu0 %v3468
      %3477 = vmatpush1.bf16.msra.mxu0 %v3465
      %3478 = vmatprep.subr.bf16.mxu0 0
      %3479 = vmatpush1.bf16.msra.mxu0 0
      %3480 = vmatprep.subr.bf16.mxu0 0
      %3481 = vmatpush1.bf16.msra.mxu0 0
      %3482 = vmatprep.subr.bf16.mxu0 0
      %3483 = vmatpush1.bf16.msra.mxu0 0
      %3484 = vmatprep.subr.bf16.mxu0 0
      %3485 = vmatpush1.bf16.msra.mxu0 0
      %3486 = vmatprep.subr.bf16.mxu0 0
      %3487 = vmatpush1.bf16.msra.mxu0 0
      %3488 = vmatprep.subr.bf16.mxu0 0
      %3489 = vmatpush1.bf16.msra.mxu0 0
      %3490 = vmatprep.subr.bf16.mxu0 0
      %3491 = vmatpush1.bf16.msra.mxu0 0
      %3492 = vmatprep.subr.bf16.mxu0 0
      %3493 = vmatpush1.bf16.msra.mxu0 0
      %3494 = vmatprep.subr.bf16.mxu0 0
      %3495 = vmatpush1.bf16.msra.mxu0 0
      %3496 = vmatprep.subr.bf16.mxu0 0
      %3497 = vmatpush1.bf16.msra.mxu0 0
      %3498 = vmatprep.subr.bf16.mxu0 0
      %3499 = vmatpush1.bf16.msra.mxu0 0
      %3500 = vmatprep.subr.bf16.mxu0 0
      %3501 = vmatpush1.bf16.msra.mxu0 0
      %3502 = vmatprep.subr.bf16.mxu0 0
      %3503 = vmatpush1.bf16.msra.mxu0 0
      %3504 = vmatprep.subr.bf16.mxu0 0
      %3505 = vmatpush1.bf16.msra.mxu0 0
      %3506 = vmatprep.subr.bf16.mxu0 0
      %3507 = vmatpush1.bf16.msra.mxu0 0
      %3508 = vmatprep.mubr.bf16.mxu0 0
      %3509 = vmatmul.mubr.bf16.gmra.mrb[0].mxu0 %v3462
      %v3510 = vpop.f32.mrb[0].mxu0
      %v3511 = vadd.f32 0.0, %v3510
      %v3512 = vpop.f32.mrb[0].mxu0
      %v3513 = vadd.f32 0.0, %v3512
      %v3514 = vpop.f32.mrb[0].mxu0
      %v3515 = vpop.f32.mrb[0].mxu0
      %3516 = vdwg.mxu0
      %3517 = vmatprep.subr.bf16.mxu0 %v3474
      %3518 = vmatpush1.bf16.msra.mxu0 %v3471
      %3519 = vmatprep.subr.bf16.mxu0 0
      %3520 = vmatpush1.bf16.msra.mxu0 0
      %3521 = vmatprep.subr.bf16.mxu0 0
      %3522 = vmatpush1.bf16.msra.mxu0 0
      %3523 = vmatprep.subr.bf16.mxu0 0
      %3524 = vmatpush1.bf16.msra.mxu0 0
      %3525 = vmatprep.subr.bf16.mxu0 0
      %3526 = vmatpush1.bf16.msra.mxu0 0
      %3527 = vmatprep.subr.bf16.mxu0 0
      %3528 = vmatpush1.bf16.msra.mxu0 0
      %3529 = vmatprep.subr.bf16.mxu0 0
      %3530 = vmatpush1.bf16.msra.mxu0 0
      %3531 = vmatprep.subr.bf16.mxu0 0
      %3532 = vmatpush1.bf16.msra.mxu0 0
      %3533 = vmatprep.subr.bf16.mxu0 0
      %3534 = vmatpush1.bf16.msra.mxu0 0
      %3535 = vmatprep.subr.bf16.mxu0 0
      %3536 = vmatpush1.bf16.msra.mxu0 0
      %3537 = vmatprep.subr.bf16.mxu0 0
      %3538 = vmatpush1.bf16.msra.mxu0 0
      %3539 = vmatprep.subr.bf16.mxu0 0
      %3540 = vmatpush1.bf16.msra.mxu0 0
      %3541 = vmatprep.subr.bf16.mxu0 0
      %3542 = vmatpush1.bf16.msra.mxu0 0
      %3543 = vmatprep.subr.bf16.mxu0 0
      %3544 = vmatpush1.bf16.msra.mxu0 0
      %3545 = vmatprep.subr.bf16.mxu0 0
      %3546 = vmatpush1.bf16.msra.mxu0 0
      %3547 = vmatprep.subr.bf16.mxu0 0
      %3548 = vmatpush1.bf16.msra.mxu0 0
      %3549 = vmatprep.mubr.bf16.mxu0 0
      %3550 = vmatmul.mubr.bf16.gmra.mrb[0].mxu0 %v3462
      %v3551 = vpop.f32.mrb[0].mxu0
      %v3552 = vadd.f32 0.0, %v3551
      %v3553 = vpop.f32.mrb[0].mxu0
      %v3554 = vadd.f32 0.0, %v3553
      %v3555 = vpop.f32.mrb[0].mxu0
      %v3556 = vpop.f32.mrb[0].mxu0
      %3557 = vdwg.mxu0
      %v3558 = vadd.f32 %v3411, %v3511
      %v3559 = vadd.f32 %v3412, %v3513
      %v3560 = vadd.f32 %v3413, %v3552
      %v3561 = vadd.f32 %v3414, %v3554
      %s3562 = scalar_lea.vmem %s2, 44
      %v3563 = vld [vmem:[%s3562] sm:$0x3]
      %v3564 = vmul.bf16 %v3563, %v378
      %v3565 = vld [vmem:[#allocation2 + $0x6] sm:$0xff]
      %v3566 = vld [vmem:[#allocation2 + $0xe] sm:$0x3]
      %v3569 = vcombine.high %v3565, %v3565
      %v3571 = vunpack.c.l.s4 1983009808
      %v3572 = vunpack.c.0.s8 %v3571
      %v3573 = vlaneseq
      %v3574 = vshrl.u32 %v3573, 7
      %v3575 = vsub.s32 %v3572, %v3574
      %v3576 = vrot.slane %v3565, %v3575
      %v3578 = vunpack.c.l.s4 1983009808
      %v3579 = vunpack.c.0.s8 %v3578
      %v3580 = vlaneseq
      %v3581 = vshrl.u32 %v3580, 7
      %v3582 = vsub.s32 %v3579, %v3581
      %v3583 = vrot.slane %v3569, %v3582
      %v3584 = vcombine.high %v3576, %v3576
      %v3585 = vcombine.high %v3583, %v3583
      %v3587 = vunpack.c.l.s4 1983009808
      %v3588 = vunpack.c.0.s8 %v3587
      %v3589 = vlaneseq
      %v3590 = vshrl.u32 %v3589, 7
      %v3591 = vsub.s32 %v3588, %v3590
      %v3592 = vrot.slane %v3566, %v3591
      %3593 = vrot.lane.b32.xlu0 %v3576, 105
      %v3594 = vpop.permute.xlu0 %3593
      %3595 = vrot.lane.b32.xlu0 %v3584, 105
      %v3596 = vpop.permute.xlu0 %3595
      %3597 = vrot.lane.b32.xlu0 %v3583, 105
      %v3598 = vpop.permute.xlu0 %3597
      %3599 = vrot.lane.b32.xlu0 %v3585, 105
      %v3600 = vpop.permute.xlu0 %3599
      %3601 = vrot.lane.b32.xlu0 %v3592, 105
      %v3602 = vpop.permute.xlu0 %3601
      %vm3603 = vcmask 859136
      %v3604 = vsel %vm3603, %v3594, %v3596
      %v3605 = vsel %vm3603, %v3596, %v3598
      %v3606 = vsel %vm3603, %v3598, %v3600
      %v3607 = vsel %vm3603, %v3600, %v3602
      %v3609 = vsel %vm426, %v3564, 0
      %v3612 = vsel %vm430, %v3604, 0
      %v3615 = vsel %vm430, %v3605, 0
      %v3618 = vsel %vm430, %v3606, 0
      %v3621 = vsel %vm430, %v3607, 0
      %3623 = vmatprep.subr.bf16.mxu0 %v3615
      %3624 = vmatpush1.bf16.msra.mxu0 %v3612
      %3625 = vmatprep.subr.bf16.mxu0 0
      %3626 = vmatpush1.bf16.msra.mxu0 0
      %3627 = vmatprep.subr.bf16.mxu0 0
      %3628 = vmatpush1.bf16.msra.mxu0 0
      %3629 = vmatprep.subr.bf16.mxu0 0
      %3630 = vmatpush1.bf16.msra.mxu0 0
      %3631 = vmatprep.subr.bf16.mxu0 0
      %3632 = vmatpush1.bf16.msra.mxu0 0
      %3633 = vmatprep.subr.bf16.mxu0 0
      %3634 = vmatpush1.bf16.msra.mxu0 0
      %3635 = vmatprep.subr.bf16.mxu0 0
      %3636 = vmatpush1.bf16.msra.mxu0 0
      %3637 = vmatprep.subr.bf16.mxu0 0
      %3638 = vmatpush1.bf16.msra.mxu0 0
      %3639 = vmatprep.subr.bf16.mxu0 0
      %3640 = vmatpush1.bf16.msra.mxu0 0
      %3641 = vmatprep.subr.bf16.mxu0 0
      %3642 = vmatpush1.bf16.msra.mxu0 0
      %3643 = vmatprep.subr.bf16.mxu0 0
      %3644 = vmatpush1.bf16.msra.mxu0 0
      %3645 = vmatprep.subr.bf16.mxu0 0
      %3646 = vmatpush1.bf16.msra.mxu0 0
      %3647 = vmatprep.subr.bf16.mxu0 0
      %3648 = vmatpush1.bf16.msra.mxu0 0
      %3649 = vmatprep.subr.bf16.mxu0 0
      %3650 = vmatpush1.bf16.msra.mxu0 0
      %3651 = vmatprep.subr.bf16.mxu0 0
      %3652 = vmatpush1.bf16.msra.mxu0 0
      %3653 = vmatprep.subr.bf16.mxu0 0
      %3654 = vmatpush1.bf16.msra.mxu0 0
      %3655 = vmatprep.mubr.bf16.mxu0 0
      %3656 = vmatmul.mubr.bf16.gmra.mrb[0].mxu0 %v3609
      %v3657 = vpop.f32.mrb[0].mxu0
      %v3658 = vadd.f32 0.0, %v3657
      %v3659 = vpop.f32.mrb[0].mxu0
      %v3660 = vadd.f32 0.0, %v3659
      %v3661 = vpop.f32.mrb[0].mxu0
      %v3662 = vpop.f32.mrb[0].mxu0
      %3663 = vdwg.mxu0
      %3664 = vmatprep.subr.bf16.mxu0 %v3621
      %3665 = vmatpush1.bf16.msra.mxu0 %v3618
      %3666 = vmatprep.subr.bf16.mxu0 0
      %3667 = vmatpush1.bf16.msra.mxu0 0
      %3668 = vmatprep.subr.bf16.mxu0 0
      %3669 = vmatpush1.bf16.msra.mxu0 0
      %3670 = vmatprep.subr.bf16.mxu0 0
      %3671 = vmatpush1.bf16.msra.mxu0 0
      %3672 = vmatprep.subr.bf16.mxu0 0
      %3673 = vmatpush1.bf16.msra.mxu0 0
      %3674 = vmatprep.subr.bf16.mxu0 0
      %3675 = vmatpush1.bf16.msra.mxu0 0
      %3676 = vmatprep.subr.bf16.mxu0 0
      %3677 = vmatpush1.bf16.msra.mxu0 0
      %3678 = vmatprep.subr.bf16.mxu0 0
      %3679 = vmatpush1.bf16.msra.mxu0 0
      %3680 = vmatprep.subr.bf16.mxu0 0
      %3681 = vmatpush1.bf16.msra.mxu0 0
      %3682 = vmatprep.subr.bf16.mxu0 0
      %3683 = vmatpush1.bf16.msra.mxu0 0
      %3684 = vmatprep.subr.bf16.mxu0 0
      %3685 = vmatpush1.bf16.msra.mxu0 0
      %3686 = vmatprep.subr.bf16.mxu0 0
      %3687 = vmatpush1.bf16.msra.mxu0 0
      %3688 = vmatprep.subr.bf16.mxu0 0
      %3689 = vmatpush1.bf16.msra.mxu0 0
      %3690 = vmatprep.subr.bf16.mxu0 0
      %3691 = vmatpush1.bf16.msra.mxu0 0
      %3692 = vmatprep.subr.bf16.mxu0 0
      %3693 = vmatpush1.bf16.msra.mxu0 0
      %3694 = vmatprep.subr.bf16.mxu0 0
      %3695 = vmatpush1.bf16.msra.mxu0 0
      %3696 = vmatprep.mubr.bf16.mxu0 0
      %3697 = vmatmul.mubr.bf16.gmra.mrb[0].mxu0 %v3609
      %v3698 = vpop.f32.mrb[0].mxu0
      %v3699 = vadd.f32 0.0, %v3698
      %v3700 = vpop.f32.mrb[0].mxu0
      %v3701 = vadd.f32 0.0, %v3700
      %v3702 = vpop.f32.mrb[0].mxu0
      %v3703 = vpop.f32.mrb[0].mxu0
      %3704 = vdwg.mxu0
      %v3705 = vadd.f32 %v3558, %v3658
      %v3706 = vadd.f32 %v3559, %v3660
      %v3707 = vadd.f32 %v3560, %v3699
      %v3708 = vadd.f32 %v3561, %v3701
      %s3709 = scalar_lea.vmem %s2, 46
      %v3710 = vld [vmem:[%s3709] sm:$0x3]
      %v3711 = vmul.bf16 %v3710, %v378
      %v3712 = vld [vmem:[#allocation2 + $0x6] sm:$0xff]
      %v3713 = vld [vmem:[#allocation2 + $0xe] sm:$0x3]
      %v3716 = vcombine.high %v3712, %v3712
      %v3718 = vunpack.c.l.s4 1983009808
      %v3719 = vunpack.c.0.s8 %v3718
      %v3720 = vlaneseq
      %v3721 = vshrl.u32 %v3720, 7
      %v3722 = vsub.s32 %v3719, %v3721
      %v3723 = vrot.slane %v3712, %v3722
      %v3725 = vunpack.c.l.s4 1983009808
      %v3726 = vunpack.c.0.s8 %v3725
      %v3727 = vlaneseq
      %v3728 = vshrl.u32 %v3727, 7
      %v3729 = vsub.s32 %v3726, %v3728
      %v3730 = vrot.slane %v3716, %v3729
      %v3731 = vcombine.high %v3723, %v3723
      %v3732 = vcombine.high %v3730, %v3730
      %v3734 = vunpack.c.l.s4 1983009808
      %v3735 = vunpack.c.0.s8 %v3734
      %v3736 = vlaneseq
      %v3737 = vshrl.u32 %v3736, 7
      %v3738 = vsub.s32 %v3735, %v3737
      %v3739 = vrot.slane %v3713, %v3738
      %3740 = vrot.lane.b32.xlu0 %v3723, 104
      %v3741 = vpop.permute.xlu0 %3740
      %3742 = vrot.lane.b32.xlu0 %v3731, 104
      %v3743 = vpop.permute.xlu0 %3742
      %3744 = vrot.lane.b32.xlu0 %v3730, 104
      %v3745 = vpop.permute.xlu0 %3744
      %3746 = vrot.lane.b32.xlu0 %v3732, 104
      %v3747 = vpop.permute.xlu0 %3746
      %3748 = vrot.lane.b32.xlu0 %v3739, 104
      %v3749 = vpop.permute.xlu0 %3748
      %vm3750 = vcmask 850944
      %v3751 = vsel %vm3750, %v3741, %v3743
      %v3752 = vsel %vm3750, %v3743, %v3745
      %v3753 = vsel %vm3750, %v3745, %v3747
      %v3754 = vsel %vm3750, %v3747, %v3749
      %v3756 = vsel %vm426, %v3711, 0
      %v3759 = vsel %vm430, %v3751, 0
      %v3762 = vsel %vm430, %v3752, 0
      %v3765 = vsel %vm430, %v3753, 0
      %v3768 = vsel %vm430, %v3754, 0
      %3770 = vmatprep.subr.bf16.mxu0 %v3762
      %3771 = vmatpush1.bf16.msra.mxu0 %v3759
      %3772 = vmatprep.subr.bf16.mxu0 0
      %3773 = vmatpush1.bf16.msra.mxu0 0
      %3774 = vmatprep.subr.bf16.mxu0 0
      %3775 = vmatpush1.bf16.msra.mxu0 0
      %3776 = vmatprep.subr.bf16.mxu0 0
      %3777 = vmatpush1.bf16.msra.mxu0 0
      %3778 = vmatprep.subr.bf16.mxu0 0
      %3779 = vmatpush1.bf16.msra.mxu0 0
      %3780 = vmatprep.subr.bf16.mxu0 0
      %3781 = vmatpush1.bf16.msra.mxu0 0
      %3782 = vmatprep.subr.bf16.mxu0 0
      %3783 = vmatpush1.bf16.msra.mxu0 0
      %3784 = vmatprep.subr.bf16.mxu0 0
      %3785 = vmatpush1.bf16.msra.mxu0 0
      %3786 = vmatprep.subr.bf16.mxu0 0
      %3787 = vmatpush1.bf16.msra.mxu0 0
      %3788 = vmatprep.subr.bf16.mxu0 0
      %3789 = vmatpush1.bf16.msra.mxu0 0
      %3790 = vmatprep.subr.bf16.mxu0 0
      %3791 = vmatpush1.bf16.msra.mxu0 0
      %3792 = vmatprep.subr.bf16.mxu0 0
      %3793 = vmatpush1.bf16.msra.mxu0 0
      %3794 = vmatprep.subr.bf16.mxu0 0
      %3795 = vmatpush1.bf16.msra.mxu0 0
      %3796 = vmatprep.subr.bf16.mxu0 0
      %3797 = vmatpush1.bf16.msra.mxu0 0
      %3798 = vmatprep.subr.bf16.mxu0 0
      %3799 = vmatpush1.bf16.msra.mxu0 0
      %3800 = vmatprep.subr.bf16.mxu0 0
      %3801 = vmatpush1.bf16.msra.mxu0 0
      %3802 = vmatprep.mubr.bf16.mxu0 0
      %3803 = vmatmul.mubr.bf16.gmra.mrb[0].mxu0 %v3756
      %v3804 = vpop.f32.mrb[0].mxu0
      %v3805 = vadd.f32 0.0, %v3804
      %v3806 = vpop.f32.mrb[0].mxu0
      %v3807 = vadd.f32 0.0, %v3806
      %v3808 = vpop.f32.mrb[0].mxu0
      %v3809 = vpop.f32.mrb[0].mxu0
      %3810 = vdwg.mxu0
      %3811 = vmatprep.subr.bf16.mxu0 %v3768
      %3812 = vmatpush1.bf16.msra.mxu0 %v3765
      %3813 = vmatprep.subr.bf16.mxu0 0
      %3814 = vmatpush1.bf16.msra.mxu0 0
      %3815 = vmatprep.subr.bf16.mxu0 0
      %3816 = vmatpush1.bf16.msra.mxu0 0
      %3817 = vmatprep.subr.bf16.mxu0 0
      %3818 = vmatpush1.bf16.msra.mxu0 0
      %3819 = vmatprep.subr.bf16.mxu0 0
      %3820 = vmatpush1.bf16.msra.mxu0 0
      %3821 = vmatprep.subr.bf16.mxu0 0
      %3822 = vmatpush1.bf16.msra.mxu0 0
      %3823 = vmatprep.subr.bf16.mxu0 0
      %3824 = vmatpush1.bf16.msra.mxu0 0
      %3825 = vmatprep.subr.bf16.mxu0 0
      %3826 = vmatpush1.bf16.msra.mxu0 0
      %3827 = vmatprep.subr.bf16.mxu0 0
      %3828 = vmatpush1.bf16.msra.mxu0 0
      %3829 = vmatprep.subr.bf16.mxu0 0
      %3830 = vmatpush1.bf16.msra.mxu0 0
      %3831 = vmatprep.subr.bf16.mxu0 0
      %3832 = vmatpush1.bf16.msra.mxu0 0
      %3833 = vmatprep.subr.bf16.mxu0 0
      %3834 = vmatpush1.bf16.msra.mxu0 0
      %3835 = vmatprep.subr.bf16.mxu0 0
      %3836 = vmatpush1.bf16.msra.mxu0 0
      %3837 = vmatprep.subr.bf16.mxu0 0
      %3838 = vmatpush1.bf16.msra.mxu0 0
      %3839 = vmatprep.subr.bf16.mxu0 0
      %3840 = vmatpush1.bf16.msra.mxu0 0
      %3841 = vmatprep.subr.bf16.mxu0 0
      %3842 = vmatpush1.bf16.msra.mxu0 0
      %3843 = vmatprep.mubr.bf16.mxu0 0
      %3844 = vmatmul.mubr.bf16.gmra.mrb[0].mxu0 %v3756
      %v3845 = vpop.f32.mrb[0].mxu0
      %v3846 = vadd.f32 0.0, %v3845
      %v3847 = vpop.f32.mrb[0].mxu0
      %v3848 = vadd.f32 0.0, %v3847
      %v3849 = vpop.f32.mrb[0].mxu0
      %v3850 = vpop.f32.mrb[0].mxu0
      %3851 = vdwg.mxu0
      %v3852 = vadd.f32 %v3705, %v3805
      %v3853 = vadd.f32 %v3706, %v3807
      %v3854 = vadd.f32 %v3707, %v3846
      %v3855 = vadd.f32 %v3708, %v3848
      %s3856 = scalar_lea.vmem %s2, 48
      %v3857 = vld [vmem:[%s3856] sm:$0x3]
      %v3858 = vmul.bf16 %v3857, %v378
      %v3859 = vld [vmem:[#allocation2 + $0x6] sm:$0xff]
      %v3860 = vld [vmem:[#allocation2 + $0xe] sm:$0x3]
      %v3863 = vcombine.high %v3859, %v3859
      %v3865 = vunpack.c.l.s4 1983009808
      %v3866 = vunpack.c.0.s8 %v3865
      %v3867 = vlaneseq
      %v3868 = vshrl.u32 %v3867, 7
      %v3869 = vsub.s32 %v3866, %v3868
      %v3870 = vrot.slane %v3859, %v3869
      %v3872 = vunpack.c.l.s4 1983009808
      %v3873 = vunpack.c.0.s8 %v3872
      %v3874 = vlaneseq
      %v3875 = vshrl.u32 %v3874, 7
      %v3876 = vsub.s32 %v3873, %v3875
      %v3877 = vrot.slane %v3863, %v3876
      %v3878 = vcombine.high %v3870, %v3870
      %v3879 = vcombine.high %v3877, %v3877
      %v3881 = vunpack.c.l.s4 1983009808
      %v3882 = vunpack.c.0.s8 %v3881
      %v3883 = vlaneseq
      %v3884 = vshrl.u32 %v3883, 7
      %v3885 = vsub.s32 %v3882, %v3884
      %v3886 = vrot.slane %v3860, %v3885
      %3887 = vrot.lane.b32.xlu0 %v3870, 92
      %v3888 = vpop.permute.xlu0 %3887
      %3889 = vrot.lane.b32.xlu0 %v3878, 92
      %v3890 = vpop.permute.xlu0 %3889
      %3891 = vrot.lane.b32.xlu0 %v3877, 92
      %v3892 = vpop.permute.xlu0 %3891
      %3893 = vrot.lane.b32.xlu0 %v3879, 92
      %v3894 = vpop.permute.xlu0 %3893
      %3895 = vrot.lane.b32.xlu0 %v3886, 92
      %v3896 = vpop.permute.xlu0 %3895
      %vm3897 = vcmask 752640
      %v3898 = vsel %vm3897, %v3888, %v3890
      %v3899 = vsel %vm3897, %v3890, %v3892
      %v3900 = vsel %vm3897, %v3892, %v3894
      %v3901 = vsel %vm3897, %v3894, %v3896
      %v3903 = vsel %vm426, %v3858, 0
      %v3906 = vsel %vm430, %v3898, 0
      %v3909 = vsel %vm430, %v3899, 0
      %v3912 = vsel %vm430, %v3900, 0
      %v3915 = vsel %vm430, %v3901, 0
      %3917 = vmatprep.subr.bf16.mxu0 %v3909
      %3918 = vmatpush1.bf16.msra.mxu0 %v3906
      %3919 = vmatprep.subr.bf16.mxu0 0
      %3920 = vmatpush1.bf16.msra.mxu0 0
      %3921 = vmatprep.subr.bf16.mxu0 0
      %3922 = vmatpush1.bf16.msra.mxu0 0
      %3923 = vmatprep.subr.bf16.mxu0 0
      %3924 = vmatpush1.bf16.msra.mxu0 0
      %3925 = vmatprep.subr.bf16.mxu0 0
      %3926 = vmatpush1.bf16.msra.mxu0 0
      %3927 = vmatprep.subr.bf16.mxu0 0
      %3928 = vmatpush1.bf16.msra.mxu0 0
      %3929 = vmatprep.subr.bf16.mxu0 0
      %3930 = vmatpush1.bf16.msra.mxu0 0
      %3931 = vmatprep.subr.bf16.mxu0 0
      %3932 = vmatpush1.bf16.msra.mxu0 0
      %3933 = vmatprep.subr.bf16.mxu0 0
      %3934 = vmatpush1.bf16.msra.mxu0 0
      %3935 = vmatprep.subr.bf16.mxu0 0
      %3936 = vmatpush1.bf16.msra.mxu0 0
      %3937 = vmatprep.subr.bf16.mxu0 0
      %3938 = vmatpush1.bf16.msra.mxu0 0
      %3939 = vmatprep.subr.bf16.mxu0 0
      %3940 = vmatpush1.bf16.msra.mxu0 0
      %3941 = vmatprep.subr.bf16.mxu0 0
      %3942 = vmatpush1.bf16.msra.mxu0 0
      %3943 = vmatprep.subr.bf16.mxu0 0
      %3944 = vmatpush1.bf16.msra.mxu0 0
      %3945 = vmatprep.subr.bf16.mxu0 0
      %3946 = vmatpush1.bf16.msra.mxu0 0
      %3947 = vmatprep.subr.bf16.mxu0 0
      %3948 = vmatpush1.bf16.msra.mxu0 0
      %3949 = vmatprep.mubr.bf16.mxu0 0
      %3950 = vmatmul.mubr.bf16.gmra.mrb[0].mxu0 %v3903
      %v3951 = vpop.f32.mrb[0].mxu0
      %v3952 = vadd.f32 0.0, %v3951
      %v3953 = vpop.f32.mrb[0].mxu0
      %v3954 = vadd.f32 0.0, %v3953
      %v3955 = vpop.f32.mrb[0].mxu0
      %v3956 = vpop.f32.mrb[0].mxu0
      %3957 = vdwg.mxu0
      %3958 = vmatprep.subr.bf16.mxu0 %v3915
      %3959 = vmatpush1.bf16.msra.mxu0 %v3912
      %3960 = vmatprep.subr.bf16.mxu0 0
      %3961 = vmatpush1.bf16.msra.mxu0 0
      %3962 = vmatprep.subr.bf16.mxu0 0
      %3963 = vmatpush1.bf16.msra.mxu0 0
      %3964 = vmatprep.subr.bf16.mxu0 0
      %3965 = vmatpush1.bf16.msra.mxu0 0
      %3966 = vmatprep.subr.bf16.mxu0 0
      %3967 = vmatpush1.bf16.msra.mxu0 0
      %3968 = vmatprep.subr.bf16.mxu0 0
      %3969 = vmatpush1.bf16.msra.mxu0 0
      %3970 = vmatprep.subr.bf16.mxu0 0
      %3971 = vmatpush1.bf16.msra.mxu0 0
      %3972 = vmatprep.subr.bf16.mxu0 0
      %3973 = vmatpush1.bf16.msra.mxu0 0
      %3974 = vmatprep.subr.bf16.mxu0 0
      %3975 = vmatpush1.bf16.msra.mxu0 0
      %3976 = vmatprep.subr.bf16.mxu0 0
      %3977 = vmatpush1.bf16.msra.mxu0 0
      %3978 = vmatprep.subr.bf16.mxu0 0
      %3979 = vmatpush1.bf16.msra.mxu0 0
      %3980 = vmatprep.subr.bf16.mxu0 0
      %3981 = vmatpush1.bf16.msra.mxu0 0
      %3982 = vmatprep.subr.bf16.mxu0 0
      %3983 = vmatpush1.bf16.msra.mxu0 0
      %3984 = vmatprep.subr.bf16.mxu0 0
      %3985 = vmatpush1.bf16.msra.mxu0 0
      %3986 = vmatprep.subr.bf16.mxu0 0
      %3987 = vmatpush1.bf16.msra.mxu0 0
      %3988 = vmatprep.subr.bf16.mxu0 0
      %3989 = vmatpush1.bf16.msra.mxu0 0
      %3990 = vmatprep.mubr.bf16.mxu0 0
      %3991 = vmatmul.mubr.bf16.gmra.mrb[0].mxu0 %v3903
      %v3992 = vpop.f32.mrb[0].mxu0
      %v3993 = vadd.f32 0.0, %v3992
      %v3994 = vpop.f32.mrb[0].mxu0
      %v3995 = vadd.f32 0.0, %v3994
      %v3996 = vpop.f32.mrb[0].mxu0
      %v3997 = vpop.f32.mrb[0].mxu0
      %3998 = vdwg.mxu0
      %v3999 = vadd.f32 %v3852, %v3952
      %v4000 = vadd.f32 %v3853, %v3954
      %v4001 = vadd.f32 %v3854, %v3993
      %v4002 = vadd.f32 %v3855, %v3995
      %s4003 = scalar_lea.vmem %s2, 50
      %v4004 = vld [vmem:[%s4003] sm:$0x3]
      %v4005 = vmul.bf16 %v4004, %v378
      %v4006 = vld [vmem:[#allocation2 + $0x6] sm:$0xff]
      %v4007 = vld [vmem:[#allocation2 + $0xe] sm:$0x3]
      %v4010 = vcombine.high %v4006, %v4006
      %v4012 = vunpack.c.l.s4 1983009808
      %v4013 = vunpack.c.0.s8 %v4012
      %v4014 = vlaneseq
      %v4015 = vshrl.u32 %v4014, 7
      %v4016 = vsub.s32 %v4013, %v4015
      %v4017 = vrot.slane %v4006, %v4016
      %v4019 = vunpack.c.l.s4 1983009808
      %v4020 = vunpack.c.0.s8 %v4019
      %v4021 = vlaneseq
      %v4022 = vshrl.u32 %v4021, 7
      %v4023 = vsub.s32 %v4020, %v4022
      %v4024 = vrot.slane %v4010, %v4023
      %v4025 = vcombine.high %v4017, %v4017
      %v4026 = vcombine.high %v4024, %v4024
      %v4028 = vunpack.c.l.s4 1983009808
      %v4029 = vunpack.c.0.s8 %v4028
      %v4030 = vlaneseq
      %v4031 = vshrl.u32 %v4030, 7
      %v4032 = vsub.s32 %v4029, %v4031
      %v4033 = vrot.slane %v4007, %v4032
      %4034 = vrot.lane.b32.xlu0 %v4017, 91
      %v4035 = vpop.permute.xlu0 %4034
      %4036 = vrot.lane.b32.xlu0 %v4025, 91
      %v4037 = vpop.permute.xlu0 %4036
      %4038 = vrot.lane.b32.xlu0 %v4024, 91
      %v4039 = vpop.permute.xlu0 %4038
      %4040 = vrot.lane.b32.xlu0 %v4026, 91
      %v4041 = vpop.permute.xlu0 %4040
      %4042 = vrot.lane.b32.xlu0 %v4033, 91
      %v4043 = vpop.permute.xlu0 %4042
      %vm4044 = vcmask 744448
      %v4045 = vsel %vm4044, %v4035, %v4037
      %v4046 = vsel %vm4044, %v4037, %v4039
      %v4047 = vsel %vm4044, %v4039, %v4041
      %v4048 = vsel %vm4044, %v4041, %v4043
      %v4050 = vsel %vm426, %v4005, 0
      %v4053 = vsel %vm430, %v4045, 0
      %v4056 = vsel %vm430, %v4046, 0
      %v4059 = vsel %vm430, %v4047, 0
      %v4062 = vsel %vm430, %v4048, 0
      %4064 = vmatprep.subr.bf16.mxu0 %v4056
      %4065 = vmatpush1.bf16.msra.mxu0 %v4053
      %4066 = vmatprep.subr.bf16.mxu0 0
      %4067 = vmatpush1.bf16.msra.mxu0 0
      %4068 = vmatprep.subr.bf16.mxu0 0
      %4069 = vmatpush1.bf16.msra.mxu0 0
      %4070 = vmatprep.subr.bf16.mxu0 0
      %4071 = vmatpush1.bf16.msra.mxu0 0
      %4072 = vmatprep.subr.bf16.mxu0 0
      %4073 = vmatpush1.bf16.msra.mxu0 0
      %4074 = vmatprep.subr.bf16.mxu0 0
      %4075 = vmatpush1.bf16.msra.mxu0 0
      %4076 = vmatprep.subr.bf16.mxu0 0
      %4077 = vmatpush1.bf16.msra.mxu0 0
      %4078 = vmatprep.subr.bf16.mxu0 0
      %4079 = vmatpush1.bf16.msra.mxu0 0
      %4080 = vmatprep.subr.bf16.mxu0 0
      %4081 = vmatpush1.bf16.msra.mxu0 0
      %4082 = vmatprep.subr.bf16.mxu0 0
      %4083 = vmatpush1.bf16.msra.mxu0 0
      %4084 = vmatprep.subr.bf16.mxu0 0
      %4085 = vmatpush1.bf16.msra.mxu0 0
      %4086 = vmatprep.subr.bf16.mxu0 0
      %4087 = vmatpush1.bf16.msra.mxu0 0
      %4088 = vmatprep.subr.bf16.mxu0 0
      %4089 = vmatpush1.bf16.msra.mxu0 0
      %4090 = vmatprep.subr.bf16.mxu0 0
      %4091 = vmatpush1.bf16.msra.mxu0 0
      %4092 = vmatprep.subr.bf16.mxu0 0
      %4093 = vmatpush1.bf16.msra.mxu0 0
      %4094 = vmatprep.subr.bf16.mxu0 0
      %4095 = vmatpush1.bf16.msra.mxu0 0
      %4096 = vmatprep.mubr.bf16.mxu0 0
      %4097 = vmatmul.mubr.bf16.gmra.mrb[0].mxu0 %v4050
      %v4098 = vpop.f32.mrb[0].mxu0
      %v4099 = vadd.f32 0.0, %v4098
      %v4100 = vpop.f32.mrb[0].mxu0
      %v4101 = vadd.f32 0.0, %v4100
      %v4102 = vpop.f32.mrb[0].mxu0
      %v4103 = vpop.f32.mrb[0].mxu0
      %4104 = vdwg.mxu0
      %4105 = vmatprep.subr.bf16.mxu0 %v4062
      %4106 = vmatpush1.bf16.msra.mxu0 %v4059
      %4107 = vmatprep.subr.bf16.mxu0 0
      %4108 = vmatpush1.bf16.msra.mxu0 0
      %4109 = vmatprep.subr.bf16.mxu0 0
      %4110 = vmatpush1.bf16.msra.mxu0 0
      %4111 = vmatprep.subr.bf16.mxu0 0
      %4112 = vmatpush1.bf16.msra.mxu0 0
      %4113 = vmatprep.subr.bf16.mxu0 0
      %4114 = vmatpush1.bf16.msra.mxu0 0
      %4115 = vmatprep.subr.bf16.mxu0 0
      %4116 = vmatpush1.bf16.msra.mxu0 0
      %4117 = vmatprep.subr.bf16.mxu0 0
      %4118 = vmatpush1.bf16.msra.mxu0 0
      %4119 = vmatprep.subr.bf16.mxu0 0
      %4120 = vmatpush1.bf16.msra.mxu0 0
      %4121 = vmatprep.subr.bf16.mxu0 0
      %4122 = vmatpush1.bf16.msra.mxu0 0
      %4123 = vmatprep.subr.bf16.mxu0 0
      %4124 = vmatpush1.bf16.msra.mxu0 0
      %4125 = vmatprep.subr.bf16.mxu0 0
      %4126 = vmatpush1.bf16.msra.mxu0 0
      %4127 = vmatprep.subr.bf16.mxu0 0
      %4128 = vmatpush1.bf16.msra.mxu0 0
      %4129 = vmatprep.subr.bf16.mxu0 0
      %4130 = vmatpush1.bf16.msra.mxu0 0
      %4131 = vmatprep.subr.bf16.mxu0 0
      %4132 = vmatpush1.bf16.msra.mxu0 0
      %4133 = vmatprep.subr.bf16.mxu0 0
      %4134 = vmatpush1.bf16.msra.mxu0 0
      %4135 = vmatprep.subr.bf16.mxu0 0
      %4136 = vmatpush1.bf16.msra.mxu0 0
      %4137 = vmatprep.mubr.bf16.mxu0 0
      %4138 = vmatmul.mubr.bf16.gmra.mrb[0].mxu0 %v4050
      %v4139 = vpop.f32.mrb[0].mxu0
      %v4140 = vadd.f32 0.0, %v4139
      %v4141 = vpop.f32.mrb[0].mxu0
      %v4142 = vadd.f32 0.0, %v4141
      %v4143 = vpop.f32.mrb[0].mxu0
      %v4144 = vpop.f32.mrb[0].mxu0
      %4145 = vdwg.mxu0
      %v4146 = vadd.f32 %v3999, %v4099
      %v4147 = vadd.f32 %v4000, %v4101
      %v4148 = vadd.f32 %v4001, %v4140
      %v4149 = vadd.f32 %v4002, %v4142
      %s4150 = scalar_lea.vmem %s2, 52
      %v4151 = vld [vmem:[%s4150] sm:$0x3]
      %v4152 = vmul.bf16 %v4151, %v378
      %v4153 = vld [vmem:[#allocation2 + $0x6] sm:$0xff]
      %v4154 = vld [vmem:[#allocation2 + $0xe] sm:$0x3]
      %v4157 = vcombine.high %v4153, %v4153
      %v4159 = vunpack.c.l.s4 1983009808
      %v4160 = vunpack.c.0.s8 %v4159
      %v4161 = vlaneseq
      %v4162 = vshrl.u32 %v4161, 7
      %v4163 = vsub.s32 %v4160, %v4162
      %v4164 = vrot.slane %v4153, %v4163
      %v4166 = vunpack.c.l.s4 1983009808
      %v4167 = vunpack.c.0.s8 %v4166
      %v4168 = vlaneseq
      %v4169 = vshrl.u32 %v4168, 7
      %v4170 = vsub.s32 %v4167, %v4169
      %v4171 = vrot.slane %v4157, %v4170
      %v4172 = vcombine.high %v4164, %v4164
      %v4173 = vcombine.high %v4171, %v4171
      %v4175 = vunpack.c.l.s4 1983009808
      %v4176 = vunpack.c.0.s8 %v4175
      %v4177 = vlaneseq
      %v4178 = vshrl.u32 %v4177, 7
      %v4179 = vsub.s32 %v4176, %v4178
      %v4180 = vrot.slane %v4154, %v4179
      %4181 = vrot.lane.b32.xlu0 %v4164, 90
      %v4182 = vpop.permute.xlu0 %4181
      %4183 = vrot.lane.b32.xlu0 %v4172, 90
      %v4184 = vpop.permute.xlu0 %4183
      %4185 = vrot.lane.b32.xlu0 %v4171, 90
      %v4186 = vpop.permute.xlu0 %4185
      %4187 = vrot.lane.b32.xlu0 %v4173, 90
      %v4188 = vpop.permute.xlu0 %4187
      %4189 = vrot.lane.b32.xlu0 %v4180, 90
      %v4190 = vpop.permute.xlu0 %4189
      %vm4191 = vcmask 736256
      %v4192 = vsel %vm4191, %v4182, %v4184
      %v4193 = vsel %vm4191, %v4184, %v4186
      %v4194 = vsel %vm4191, %v4186, %v4188
      %v4195 = vsel %vm4191, %v4188, %v4190
      %v4197 = vsel %vm426, %v4152, 0
      %v4200 = vsel %vm430, %v4192, 0
      %v4203 = vsel %vm430, %v4193, 0
      %v4206 = vsel %vm430, %v4194, 0
      %v4209 = vsel %vm430, %v4195, 0
      %4211 = vmatprep.subr.bf16.mxu0 %v4203
      %4212 = vmatpush1.bf16.msra.mxu0 %v4200
      %4213 = vmatprep.subr.bf16.mxu0 0
      %4214 = vmatpush1.bf16.msra.mxu0 0
      %4215 = vmatprep.subr.bf16.mxu0 0
      %4216 = vmatpush1.bf16.msra.mxu0 0
      %4217 = vmatprep.subr.bf16.mxu0 0
      %4218 = vmatpush1.bf16.msra.mxu0 0
      %4219 = vmatprep.subr.bf16.mxu0 0
      %4220 = vmatpush1.bf16.msra.mxu0 0
      %4221 = vmatprep.subr.bf16.mxu0 0
      %4222 = vmatpush1.bf16.msra.mxu0 0
      %4223 = vmatprep.subr.bf16.mxu0 0
      %4224 = vmatpush1.bf16.msra.mxu0 0
      %4225 = vmatprep.subr.bf16.mxu0 0
      %4226 = vmatpush1.bf16.msra.mxu0 0
      %4227 = vmatprep.subr.bf16.mxu0 0
      %4228 = vmatpush1.bf16.msra.mxu0 0
      %4229 = vmatprep.subr.bf16.mxu0 0
      %4230 = vmatpush1.bf16.msra.mxu0 0
      %4231 = vmatprep.subr.bf16.mxu0 0
      %4232 = vmatpush1.bf16.msra.mxu0 0
      %4233 = vmatprep.subr.bf16.mxu0 0
      %4234 = vmatpush1.bf16.msra.mxu0 0
      %4235 = vmatprep.subr.bf16.mxu0 0
      %4236 = vmatpush1.bf16.msra.mxu0 0
      %4237 = vmatprep.subr.bf16.mxu0 0
      %4238 = vmatpush1.bf16.msra.mxu0 0
      %4239 = vmatprep.subr.bf16.mxu0 0
      %4240 = vmatpush1.bf16.msra.mxu0 0
      %4241 = vmatprep.subr.bf16.mxu0 0
      %4242 = vmatpush1.bf16.msra.mxu0 0
      %4243 = vmatprep.mubr.bf16.mxu0 0
      %4244 = vmatmul.mubr.bf16.gmra.mrb[0].mxu0 %v4197
      %v4245 = vpop.f32.mrb[0].mxu0
      %v4246 = vadd.f32 0.0, %v4245
      %v4247 = vpop.f32.mrb[0].mxu0
      %v4248 = vadd.f32 0.0, %v4247
      %v4249 = vpop.f32.mrb[0].mxu0
      %v4250 = vpop.f32.mrb[0].mxu0
      %4251 = vdwg.mxu0
      %4252 = vmatprep.subr.bf16.mxu0 %v4209
      %4253 = vmatpush1.bf16.msra.mxu0 %v4206
      %4254 = vmatprep.subr.bf16.mxu0 0
      %4255 = vmatpush1.bf16.msra.mxu0 0
      %4256 = vmatprep.subr.bf16.mxu0 0
      %4257 = vmatpush1.bf16.msra.mxu0 0
      %4258 = vmatprep.subr.bf16.mxu0 0
      %4259 = vmatpush1.bf16.msra.mxu0 0
      %4260 = vmatprep.subr.bf16.mxu0 0
      %4261 = vmatpush1.bf16.msra.mxu0 0
      %4262 = vmatprep.subr.bf16.mxu0 0
      %4263 = vmatpush1.bf16.msra.mxu0 0
      %4264 = vmatprep.subr.bf16.mxu0 0
      %4265 = vmatpush1.bf16.msra.mxu0 0
      %4266 = vmatprep.subr.bf16.mxu0 0
      %4267 = vmatpush1.bf16.msra.mxu0 0
      %4268 = vmatprep.subr.bf16.mxu0 0
      %4269 = vmatpush1.bf16.msra.mxu0 0
      %4270 = vmatprep.subr.bf16.mxu0 0
      %4271 = vmatpush1.bf16.msra.mxu0 0
      %4272 = vmatprep.subr.bf16.mxu0 0
      %4273 = vmatpush1.bf16.msra.mxu0 0
      %4274 = vmatprep.subr.bf16.mxu0 0
      %4275 = vmatpush1.bf16.msra.mxu0 0
      %4276 = vmatprep.subr.bf16.mxu0 0
      %4277 = vmatpush1.bf16.msra.mxu0 0
      %4278 = vmatprep.subr.bf16.mxu0 0
      %4279 = vmatpush1.bf16.msra.mxu0 0
      %4280 = vmatprep.subr.bf16.mxu0 0
      %4281 = vmatpush1.bf16.msra.mxu0 0
      %4282 = vmatprep.subr.bf16.mxu0 0
      %4283 = vmatpush1.bf16.msra.mxu0 0
      %4284 = vmatprep.mubr.bf16.mxu0 0
      %4285 = vmatmul.mubr.bf16.gmra.mrb[0].mxu0 %v4197
      %v4286 = vpop.f32.mrb[0].mxu0
      %v4287 = vadd.f32 0.0, %v4286
      %v4288 = vpop.f32.mrb[0].mxu0
      %v4289 = vadd.f32 0.0, %v4288
      %v4290 = vpop.f32.mrb[0].mxu0
      %v4291 = vpop.f32.mrb[0].mxu0
      %4292 = vdwg.mxu0
      %v4293 = vadd.f32 %v4146, %v4246
      %v4294 = vadd.f32 %v4147, %v4248
      %v4295 = vadd.f32 %v4148, %v4287
      %v4296 = vadd.f32 %v4149, %v4289
      %v4297 = vld [vmem:[%s354] sm:$0xf]
      %4299 = vset.pattern.permute.xlu0 0
      %4300 = vperm.xlu0 %4299, %v4297
      %v4301 = vpop.permute.xlu0 %4300
      %v4303 = vmul.f32 %v4293, %v4301
      %v4304 = vmul.f32 %v4294, %v4301
      %v4305 = vmul.f32 %v4295, %v4301
      %v4306 = vmul.f32 %v4296, %v4301
      %v4307 = vld [vmem:[%s5] sm:$0xf]
      %4309 = vset.pattern.permute.xlu0 0
      %4310 = vperm.xlu0 %4309, %v4307
      %v4311 = vpop.permute.xlu0 %4310
      %v4313 = vadd.f32 %v4303, %v4311
      %v4314 = vadd.f32 %v4304, %v4311
      %v4315 = vadd.f32 %v4305, %v4311
      %v4316 = vadd.f32 %v4306, %v4311
      %vm4317 = vcmp.ge.f32.partialorder %v4313, 0.0
      %vm4318 = vcmp.ge.f32.partialorder %v4314, 0.0
      %vm4319 = vcmp.ge.f32.partialorder %v4315, 0.0
      %vm4320 = vcmp.ge.f32.partialorder %v4316, 0.0
      %v4321 = vmul.f32 %v4313, 0.2
      %v4322 = vmul.f32 %v4314, 0.2
      %v4323 = vmul.f32 %v4315, 0.2
      %v4324 = vmul.f32 %v4316, 0.2
      %v4325 = vsel %vm4317, %v4313, %v4321
      %v4326 = vsel %vm4318, %v4314, %v4322
      %v4327 = vsel %vm4319, %v4315, %v4323
      %v4328 = vsel %vm4320, %v4316, %v4324
      %v4329 = vpack.c.bf16 %v4325, %v4325
      %v4330 = vpack.c.bf16 %v4326, %v4326
      %v4331 = vpack.c.bf16 %v4327, %v4327
      %v4332 = vpack.c.bf16 %v4328, %v4328
      %v4337 = vcombine.low %v4329, %v4330
      %v4338 = vcombine.low %v4331, %v4332
      %v4340 = vunpack.c.l.s4 1983009808
      %v4341 = vunpack.c.0.s8 %v4340
      %v4342 = vlaneseq
      %v4343 = vshrl.u32 %v4342, 7
      %v4344 = vsub.s32 %v4341, %v4343
      %v4345 = vrot.slane %v4337, %v4344
      %v4347 = vunpack.c.l.s4 1983009808
      %v4348 = vunpack.c.0.s8 %v4347
      %v4349 = vlaneseq
      %v4350 = vshrl.u32 %v4349, 7
      %v4351 = vsub.s32 %v4348, %v4350
      %v4352 = vrot.slane %v4338, %v4351
      %v4353 = vcombine.low %v4345, %v4352
      %4355 = vst [vmem:[%s363] sm:$0xff] %v4353
      %s4356 = smul.u32 4, %s22
      %p4357 = scmp.lt.s32.totalorder %s21, 1
      %s4358 = scalar_select %p4357, %s21, 1
      %p4359 = scmp.lt.s32.totalorder %s4356, 27
      %s4360 = scalar_select %p4359, %s4356, 27
      %s4361 = smul.addr %s4358, 28
      %s4362 = sadd.s32 %s4360, %s4361
      %s4363 = smul.addr %s4362, 2
      %s4364 = scalar_lea.vmem %s6, %s4363
      // Predicated region
      $region45: #{hblock_forward.2} parent=43 // pred_check
        %p4365 = pneg %p201
      $region46: #{hblock_forward.2} parent=43 // pred_check_branch
        %4367 = sbr.rel (%p4365) target = $region48
      $region47: #{hblock_forward.2} parent=43 // pred_region
        %s4368 = smul.u32 4, %s22
      $region48: #{hblock_forward.2} parent=43 // pred_fallthru
        _
    $region44: #{hblock_forward.2} parent=5 // pred_fallthru
      _
    %p4369 = scmp.le.s32.totalorder 2, %s12
    // Predicated region
    $region49: #{hblock_forward.2} parent=5 // pred_check
      %p4370 = pneg %p4369
    $region50: #{hblock_forward.2} parent=5 // pred_check_branch
      %4372 = sbr.rel (%p4370) target = $region52
    $region51: #{hblock_forward.2} parent=5 // pred_region
      %s4373 = ssub.s32 %s12, 2
      // Predicated region
      $region53: #{hblock_forward.2} parent=51 // pred_check
        %p4374 = pneg %p207
      $region54: #{hblock_forward.2} parent=51 // pred_check_branch
        %4376 = sbr.rel (%p4374) target = $region56
      $region55: #{hblock_forward.2} parent=51 // pred_region
        %s4377 = smul.u32 4, %s24
        %p4378 = scmp.lt.s32.totalorder %s23, 1
        %s4379 = scalar_select %p4378, %s23, 1
        %p4380 = scmp.lt.s32.totalorder %s4377, 27
        %s4381 = scalar_select %p4380, %s4377, 27
        %s4382 = smul.addr %s4379, 28
        %s4383 = sadd.s32 %s4381, %s4382
        %s4384 = smul.addr %s4383, 2
        %s4385 = scalar_lea.vmem %s6, %s4384
      $region56: #{hblock_forward.2} parent=51 // pred_fallthru
        _
    $region52: #{hblock_forward.2} parent=5 // pred_fallthru
      _
  $region6: #{hblock_forward.2} parent=0 // loop_footer
    %s16 = sadd.s32 1, %s12
  $region7: #{hblock_forward.2} parent=0 // loop_footer_branch
    %11 = sbr.rel target = $region3
  $region8: #{hblock_forward.2} parent=0 // loop_exit
    _

// kernel: hblock_forward.3
$region0: #{hblock_forward.3}
  #allocation0 [shape = 'u32[]', space=smem, size = 0x4, offset = 0x4, fixed_abs, tag = 'smem constant byte address 0x4 - core index']
  #allocation1 [shape = 'u32[144,128]{1,0:T(1,128)}', space=vmem, size = 0x12000, scoped, tag = 'internal scratch']
  #allocation2 [shape = 'bf16[4,1024]{1,0:T(4,128)(2,1)}', space=vmem, size = 0x2000, scoped, tag = 'scratch operand']
  %s0 = inlined_call_operand.vmem [shape: bf16[2,4,3584], index: 0, kind: input, shape index: {}, may-alias: {0,1}]
  %s1 = inlined_call_operand.vmem [shape: bf16[2,4,3584], index: 1, kind: input, shape index: {}, may-alias: {0,1}]
  %s2 = inlined_call_operand.vmem [shape: bf16[27,4,4], index: 2, kind: input, shape index: {}]
  %s3 = inlined_call_operand.vmem [shape: bf16[2,1,4], index: 3, kind: input, shape index: {}]
  %s4 = inlined_call_operand.vmem [shape: f32[2,4,1], index: 4, kind: input, shape index: {}]
  %s5 = inlined_call_operand.vmem [shape: f32[4,1], index: 5, kind: input, shape index: {}]
  %s6 = inlined_call_operand.vmem [shape: bf16[2,4], index: 6, kind: input, shape index: {}]
  %s7 = inlined_call_operand.vmem [shape: bf16[2,1,4], index: 7, kind: input, shape index: {}]
  %s8 = inlined_call_operand.vmem [shape: f32[2,2,1], index: 8, kind: input, shape index: {}]
  %s9 = inlined_call_operand.vmem [shape: f32[2,1], index: 9, kind: input, shape index: {}]
  %s10 = inlined_call_operand.vmem [shape: f32[2,2,3072], index: 10, kind: input, shape index: {}, may-alias: {10,12}]
  %s11 = inlined_call_operand.vmem [shape: f32[2,4,3072], index: 11, kind: output, shape index: {0}]
  %s12 = inlined_call_operand.vmem [shape: f32[2,2,3072], index: 12, kind: output, shape index: {1}, may-alias: {10,12}]
  %13 = xla_tuple %s11, %s12
  %s14 = sld [smem:[#allocation0]]
  $region85: #{hblock_forward.3} parent=0
    _
  %s16 = ssub.s32 1, %s14
  %s17 = scalar_select 0, %s16, %s14
  loop: start=0, step=1, limit=14
  $region2: #{hblock_forward.3} parent=0 // loop_pre_header
    _
  $region3: #{hblock_forward.3} parent=0 // loop_header
    %s19 = sphi 0, %s23
    %p20 = scmp.ge.s32.totalorder %s19, 14
    %s26 = sphi 0, %s38
    %s27 = sphi 0, %s34
    %s28 = sphi 0, %s26
    %s29 = sphi 0, %s27
    %s30 = sphi 0, %s28
    %s31 = sphi 0, %s29
    %s43 = sphi 0, %s45
    %s46 = sphi 0, %s43
    %s47 = sphi 0, %s46
    %s63 = sphi 0, %s47
    %s73 = sphi 0, %s75
    %s76 = sphi 0, %s73
    %s77 = sphi 0, %s76
    %s93 = sphi 0, %s77
    %s97 = sphi 0, %s97
    %s99 = sphi 0, %s97
    %s100 = sphi 0, %s99
    %s114 = sphi 0, %s100
    %s120 = sphi 0, %s122
    %s123 = sphi 0, %s120
    %s124 = sphi 0, %s123
    %s140 = sphi 0, %s124
    %s146 = sphi 0, %s148
    %s149 = sphi 0, %s146
    %s150 = sphi 0, %s149
    %s166 = sphi 0, %s150
    %s170 = sphi 0, %s170
    %s172 = sphi 0, %s170
    %s173 = sphi 0, %s172
    %s187 = sphi 0, %s173
    %s191 = sphi 0, %s191
    %s193 = sphi 0, %s191
    %s194 = sphi 0, %s193
    %s208 = sphi 0, %s194
    %s214 = sphi 0, %s216
    %s217 = sphi 0, %s214
    %s218 = sphi 0, %s217
    %s234 = sphi 0, %s218
    %s240 = sphi 0, %s242
    %s243 = sphi 0, %s240
    %s244 = sphi 0, %s243
    %s260 = sphi 0, %s244
    %s264 = sphi 0, %s264
    %s266 = sphi 0, %s264
    %s267 = sphi 0, %s266
    %s281 = sphi 0, %s267
    %s289 = sphi 0, %s291
    %s292 = sphi 0, %s289
    %s293 = sphi 0, %s292
    %s309 = sphi 0, %s293
    %s317 = sphi 0, %s319
    %s320 = sphi 0, %s317
    %s321 = sphi 0, %s320
    %s337 = sphi 0, %s321
    %s345 = sphi 0, %s347
    %s348 = sphi 0, %s345
    %s349 = sphi 0, %s348
    %s365 = sphi 0, %s349
  $region4: #{hblock_forward.3} parent=0 // loop_header_branch
    %22 = sbr.rel (%p20) target = $region8
  $region5: #{hblock_forward.3} parent=0 // loop_body
    %s24 = ssub.s32 %s19, 1
    %s25 = ssub.s32 %s19, 2
    %s32 = sadd.s32 1, %s27
    %p33 = scmp.ge.s32.totalorder %s32, 6
    %s34 = scalar_select %p33, 0, %s32
    %s35 = sadd.s32 1, %s26
    %s36 = scalar_select %p33, %s35, %s26
    %p37 = scmp.ge.s32.totalorder %s36, 2
    %s38 = scalar_select %p37, 0, %s36
    %s39 = ssub.s32 %s26, %s38
    %s40 = ssub.s32 %s27, %s34
    %s41 = sor.u32 %s39, %s40
    %p42 = scmp.eq.s32.totalorder %s41, 0
    %s44 = sadd.s32 %s43, 1
    %s45 = scalar_select %p42, %s43, %s44
    %p48 = pneg %p42
    %p49 = scmp.eq.s32.totalorder %s19, 11
    %p50 = por %p48, %p49
    %p51 = scmp.ne.s32.totalorder %s43, %s46
    %p52 = scmp.eq.s32.totalorder %s19, 0
    %p53 = por %p51, %p52
    %p54 = scmp.ne.s32.totalorder %s43, %s46
    %p55 = scmp.eq.s32.totalorder %s24, 11
    %p56 = por %p54, %p55
    %p57 = scmp.ne.s32.totalorder %s46, %s47
    %p58 = scmp.eq.s32.totalorder %s24, 0
    %p59 = por %p57, %p58
    %p60 = scmp.ne.s32.totalorder %s46, %s47
    %p61 = scmp.eq.s32.totalorder %s25, 11
    %p62 = por %p60, %p61
    %p64 = scmp.ne.s32.totalorder %s47, %s63
    %p65 = scmp.eq.s32.totalorder %s25, 0
    %p66 = por %p64, %p65
    %s67 = sadd.s32 %s27, 1
    %s68 = sadd.s32 %s34, 1
    %s69 = ssub.s32 %s26, %s38
    %s70 = ssub.s32 %s67, %s68
    %s71 = sor.u32 %s69, %s70
    %p72 = scmp.eq.s32.totalorder %s71, 0
    %s74 = sadd.s32 %s73, 1
    %s75 = scalar_select %p72, %s73, %s74
    %p78 = pneg %p72
    %p79 = scmp.eq.s32.totalorder %s19, 11
    %p80 = por %p78, %p79
    %p81 = scmp.ne.s32.totalorder %s73, %s76
    %p82 = scmp.eq.s32.totalorder %s19, 0
    %p83 = por %p81, %p82
    %p84 = scmp.ne.s32.totalorder %s73, %s76
    %p85 = scmp.eq.s32.totalorder %s24, 11
    %p86 = por %p84, %p85
    %p87 = scmp.ne.s32.totalorder %s76, %s77
    %p88 = scmp.eq.s32.totalorder %s24, 0
    %p89 = por %p87, %p88
    %p90 = scmp.ne.s32.totalorder %s76, %s77
    %p91 = scmp.eq.s32.totalorder %s25, 11
    %p92 = por %p90, %p91
    %p94 = scmp.ne.s32.totalorder %s77, %s93
    %p95 = scmp.eq.s32.totalorder %s25, 0
    %p96 = por %p94, %p95
    %s98 = sadd.s32 %s97, 1
    %p101 = scmp.eq.s32.totalorder %s19, 11
    %p102 = scmp.ne.s32.totalorder %s97, %s99
    %p103 = scmp.eq.s32.totalorder %s19, 0
    %p104 = por %p102, %p103
    %p105 = scmp.ne.s32.totalorder %s97, %s99
    %p106 = scmp.eq.s32.totalorder %s24, 11
    %p107 = por %p105, %p106
    %p108 = scmp.ne.s32.totalorder %s99, %s100
    %p109 = scmp.eq.s32.totalorder %s24, 0
    %p110 = por %p108, %p109
    %p111 = scmp.ne.s32.totalorder %s99, %s100
    %p112 = scmp.eq.s32.totalorder %s25, 11
    %p113 = por %p111, %p112
    %p115 = scmp.ne.s32.totalorder %s100, %s114
    %p116 = scmp.eq.s32.totalorder %s25, 0
    %p117 = por %p115, %p116
    %s118 = ssub.s32 %s26, %s38
    %p119 = scmp.eq.s32.totalorder %s118, 0
    %s121 = sadd.s32 %s120, 1
    %s122 = scalar_select %p119, %s120, %s121
    %p125 = pneg %p119
    %p126 = scmp.eq.s32.totalorder %s19, 11
    %p127 = por %p125, %p126
    %p128 = scmp.ne.s32.totalorder %s120, %s123
    %p129 = scmp.eq.s32.totalorder %s19, 0
    %p130 = por %p128, %p129
    %p131 = scmp.ne.s32.totalorder %s120, %s123
    %p132 = scmp.eq.s32.totalorder %s24, 11
    %p133 = por %p131, %p132
    %p134 = scmp.ne.s32.totalorder %s123, %s124
    %p135 = scmp.eq.s32.totalorder %s24, 0
    %p136 = por %p134, %p135
    %p137 = scmp.ne.s32.totalorder %s123, %s124
    %p138 = scmp.eq.s32.totalorder %s25, 11
    %p139 = por %p137, %p138
    %p141 = scmp.ne.s32.totalorder %s124, %s140
    %p142 = scmp.eq.s32.totalorder %s25, 0
    %p143 = por %p141, %p142
    %s144 = ssub.s32 %s26, %s38
    %p145 = scmp.eq.s32.totalorder %s144, 0
    %s147 = sadd.s32 %s146, 1
    %s148 = scalar_select %p145, %s146, %s147
    %p151 = pneg %p145
    %p152 = scmp.eq.s32.totalorder %s19, 11
    %p153 = por %p151, %p152
    %p154 = scmp.ne.s32.totalorder %s146, %s149
    %p155 = scmp.eq.s32.totalorder %s19, 0
    %p156 = por %p154, %p155
    %p157 = scmp.ne.s32.totalorder %s146, %s149
    %p158 = scmp.eq.s32.totalorder %s24, 11
    %p159 = por %p157, %p158
    %p160 = scmp.ne.s32.totalorder %s149, %s150
    %p161 = scmp.eq.s32.totalorder %s24, 0
    %p162 = por %p160, %p161
    %p163 = scmp.ne.s32.totalorder %s149, %s150
    %p164 = scmp.eq.s32.totalorder %s25, 11
    %p165 = por %p163, %p164
    %p167 = scmp.ne.s32.totalorder %s150, %s166
    %p168 = scmp.eq.s32.totalorder %s25, 0
    %p169 = por %p167, %p168
    %s171 = sadd.s32 %s170, 1
    %p174 = scmp.eq.s32.totalorder %s19, 11
    %p175 = scmp.ne.s32.totalorder %s170, %s172
    %p176 = scmp.eq.s32.totalorder %s19, 0
    %p177 = por %p175, %p176
    %p178 = scmp.ne.s32.totalorder %s170, %s172
    %p179 = scmp.eq.s32.totalorder %s24, 11
    %p180 = por %p178, %p179
    %p181 = scmp.ne.s32.totalorder %s172, %s173
    %p182 = scmp.eq.s32.totalorder %s24, 0
    %p183 = por %p181, %p182
    %p184 = scmp.ne.s32.totalorder %s172, %s173
    %p185 = scmp.eq.s32.totalorder %s25, 11
    %p186 = por %p184, %p185
    %p188 = scmp.ne.s32.totalorder %s173, %s187
    %p189 = scmp.eq.s32.totalorder %s25, 0
    %p190 = por %p188, %p189
    %s192 = sadd.s32 %s191, 1
    %p195 = scmp.eq.s32.totalorder %s19, 11
    %p196 = scmp.ne.s32.totalorder %s191, %s193
    %p197 = scmp.eq.s32.totalorder %s19, 0
    %p198 = por %p196, %p197
    %p199 = scmp.ne.s32.totalorder %s191, %s193
    %p200 = scmp.eq.s32.totalorder %s24, 11
    %p201 = por %p199, %p200
    %p202 = scmp.ne.s32.totalorder %s193, %s194
    %p203 = scmp.eq.s32.totalorder %s24, 0
    %p204 = por %p202, %p203
    %p205 = scmp.ne.s32.totalorder %s193, %s194
    %p206 = scmp.eq.s32.totalorder %s25, 11
    %p207 = por %p205, %p206
    %p209 = scmp.ne.s32.totalorder %s194, %s208
    %p210 = scmp.eq.s32.totalorder %s25, 0
    %p211 = por %p209, %p210
    %s212 = ssub.s32 %s26, %s38
    %p213 = scmp.eq.s32.totalorder %s212, 0
    %s215 = sadd.s32 %s214, 1
    %s216 = scalar_select %p213, %s214, %s215
    %p219 = pneg %p213
    %p220 = scmp.eq.s32.totalorder %s19, 11
    %p221 = por %p219, %p220
    %p222 = scmp.ne.s32.totalorder %s214, %s217
    %p223 = scmp.eq.s32.totalorder %s19, 0
    %p224 = por %p222, %p223
    %p225 = scmp.ne.s32.totalorder %s214, %s217
    %p226 = scmp.eq.s32.totalorder %s24, 11
    %p227 = por %p225, %p226
    %p228 = scmp.ne.s32.totalorder %s217, %s218
    %p229 = scmp.eq.s32.totalorder %s24, 0
    %p230 = por %p228, %p229
    %p231 = scmp.ne.s32.totalorder %s217, %s218
    %p232 = scmp.eq.s32.totalorder %s25, 11
    %p233 = por %p231, %p232
    %p235 = scmp.ne.s32.totalorder %s218, %s234
    %p236 = scmp.eq.s32.totalorder %s25, 0
    %p237 = por %p235, %p236
    %s238 = ssub.s32 %s26, %s38
    %p239 = scmp.eq.s32.totalorder %s238, 0
    %s241 = sadd.s32 %s240, 1
    %s242 = scalar_select %p239, %s240, %s241
    %p245 = pneg %p239
    %p246 = scmp.eq.s32.totalorder %s19, 11
    %p247 = por %p245, %p246
    %p248 = scmp.ne.s32.totalorder %s240, %s243
    %p249 = scmp.eq.s32.totalorder %s19, 0
    %p250 = por %p248, %p249
    %p251 = scmp.ne.s32.totalorder %s240, %s243
    %p252 = scmp.eq.s32.totalorder %s24, 11
    %p253 = por %p251, %p252
    %p254 = scmp.ne.s32.totalorder %s243, %s244
    %p255 = scmp.eq.s32.totalorder %s24, 0
    %p256 = por %p254, %p255
    %p257 = scmp.ne.s32.totalorder %s243, %s244
    %p258 = scmp.eq.s32.totalorder %s25, 11
    %p259 = por %p257, %p258
    %p261 = scmp.ne.s32.totalorder %s244, %s260
    %p262 = scmp.eq.s32.totalorder %s25, 0
    %p263 = por %p261, %p262
    %s265 = sadd.s32 %s264, 1
    %p268 = scmp.eq.s32.totalorder %s19, 11
    %p269 = scmp.ne.s32.totalorder %s264, %s266
    %p270 = scmp.eq.s32.totalorder %s19, 0
    %p271 = por %p269, %p270
    %p272 = scmp.ne.s32.totalorder %s264, %s266
    %p273 = scmp.eq.s32.totalorder %s24, 11
    %p274 = por %p272, %p273
    %p275 = scmp.ne.s32.totalorder %s266, %s267
    %p276 = scmp.eq.s32.totalorder %s24, 0
    %p277 = por %p275, %p276
    %p278 = scmp.ne.s32.totalorder %s266, %s267
    %p279 = scmp.eq.s32.totalorder %s25, 11
    %p280 = por %p278, %p279
    %p282 = scmp.ne.s32.totalorder %s267, %s281
    %p283 = scmp.eq.s32.totalorder %s25, 0
    %p284 = por %p282, %p283
    %s285 = ssub.s32 %s26, %s38
    %s286 = ssub.s32 %s27, %s34
    %s287 = sor.u32 %s285, %s286
    %p288 = scmp.eq.s32.totalorder %s287, 0
    %s290 = sadd.s32 %s289, 1
    %s291 = scalar_select %p288, %s289, %s290
    %p294 = pneg %p288
    %p295 = scmp.eq.s32.totalorder %s19, 11
    %p296 = por %p294, %p295
    %p297 = scmp.ne.s32.totalorder %s289, %s292
    %p298 = scmp.eq.s32.totalorder %s19, 0
    %p299 = por %p297, %p298
    %p300 = scmp.ne.s32.totalorder %s289, %s292
    %p301 = scmp.eq.s32.totalorder %s24, 11
    %p302 = por %p300, %p301
    %p303 = scmp.ne.s32.totalorder %s292, %s293
    %p304 = scmp.eq.s32.totalorder %s24, 0
    %p305 = por %p303, %p304
    %p306 = scmp.ne.s32.totalorder %s292, %s293
    %p307 = scmp.eq.s32.totalorder %s25, 11
    %p308 = por %p306, %p307
    %p310 = scmp.ne.s32.totalorder %s293, %s309
    %p311 = scmp.eq.s32.totalorder %s25, 0
    %p312 = por %p310, %p311
    %s313 = ssub.s32 %s26, %s38
    %s314 = ssub.s32 %s27, %s34
    %s315 = sor.u32 %s313, %s314
    %p316 = scmp.eq.s32.totalorder %s315, 0
    %s318 = sadd.s32 %s317, 1
    %s319 = scalar_select %p316, %s317, %s318
    %p322 = pneg %p316
    %p323 = scmp.eq.s32.totalorder %s19, 11
    %p324 = por %p322, %p323
    %p325 = scmp.ne.s32.totalorder %s317, %s320
    %p326 = scmp.eq.s32.totalorder %s19, 0
    %p327 = por %p325, %p326
    %p328 = scmp.ne.s32.totalorder %s317, %s320
    %p329 = scmp.eq.s32.totalorder %s24, 11
    %p330 = por %p328, %p329
    %p331 = scmp.ne.s32.totalorder %s320, %s321
    %p332 = scmp.eq.s32.totalorder %s24, 0
    %p333 = por %p331, %p332
    %p334 = scmp.ne.s32.totalorder %s320, %s321
    %p335 = scmp.eq.s32.totalorder %s25, 11
    %p336 = por %p334, %p335
    %p338 = scmp.ne.s32.totalorder %s321, %s337
    %p339 = scmp.eq.s32.totalorder %s25, 0
    %p340 = por %p338, %p339
    %s341 = ssub.s32 %s26, %s38
    %s342 = ssub.s32 %s27, %s34
    %s343 = sor.u32 %s341, %s342
    %p344 = scmp.eq.s32.totalorder %s343, 0
    %s346 = sadd.s32 %s345, 1
    %s347 = scalar_select %p344, %s345, %s346
    %p350 = pneg %p344
    %p351 = scmp.eq.s32.totalorder %s19, 11
    %p352 = por %p350, %p351
    %p353 = scmp.ne.s32.totalorder %s345, %s348
    %p354 = scmp.eq.s32.totalorder %s19, 0
    %p355 = por %p353, %p354
    %p356 = scmp.ne.s32.totalorder %s345, %s348
    %p357 = scmp.eq.s32.totalorder %s24, 11
    %p358 = por %p356, %p357
    %p359 = scmp.ne.s32.totalorder %s348, %s349
    %p360 = scmp.eq.s32.totalorder %s24, 0
    %p361 = por %p359, %p360
    %p362 = scmp.ne.s32.totalorder %s348, %s349
    %p363 = scmp.eq.s32.totalorder %s25, 11
    %p364 = por %p362, %p363
    %p366 = scmp.ne.s32.totalorder %s349, %s365
    %p367 = scmp.eq.s32.totalorder %s25, 0
    %p368 = por %p366, %p367
    %p369 = scmp.le.s32.totalorder 1, %s19
    %p370 = scmp.lt.s32.totalorder %s19, 13
    %p371 = pnand %p369, %p370
    %p372 = pneg %p371
    // Predicated region
    $region9: #{hblock_forward.3} parent=5 // pred_check
      _
    $region10: #{hblock_forward.3} parent=5 // pred_check_branch
      %374 = sbr.rel (%p371) target = $region12
    $region11: #{hblock_forward.3} parent=5 // pred_region
      %s375 = ssub.s32 %s19, 1
      // Predicated region
      $region13: #{hblock_forward.3} parent=11 // pred_check
        %p376 = pneg %p110
      $region14: #{hblock_forward.3} parent=11 // pred_check_branch
        %378 = sbr.rel (%p376) target = $region16
      $region15: #{hblock_forward.3} parent=11 // pred_region
        _
      $region16: #{hblock_forward.3} parent=11 // pred_fallthru
        _
      // Predicated region
      $region17: #{hblock_forward.3} parent=11 // pred_check
        %p379 = pneg %p183
      $region18: #{hblock_forward.3} parent=11 // pred_check_branch
        %381 = sbr.rel (%p379) target = $region20
      $region19: #{hblock_forward.3} parent=11 // pred_region
        _
      $region20: #{hblock_forward.3} parent=11 // pred_fallthru
        _
      // Predicated region
      $region21: #{hblock_forward.3} parent=11 // pred_check
        %p382 = pneg %p204
      $region22: #{hblock_forward.3} parent=11 // pred_check_branch
        %384 = sbr.rel (%p382) target = $region24
      $region23: #{hblock_forward.3} parent=11 // pred_region
        _
      $region24: #{hblock_forward.3} parent=11 // pred_fallthru
        _
      // Predicated region
      $region25: #{hblock_forward.3} parent=11 // pred_check
        %p385 = pneg %p277
      $region26: #{hblock_forward.3} parent=11 // pred_check_branch
        %387 = sbr.rel (%p385) target = $region28
      $region27: #{hblock_forward.3} parent=11 // pred_region
        _
      $region28: #{hblock_forward.3} parent=11 // pred_fallthru
        _
    $region12: #{hblock_forward.3} parent=5 // pred_fallthru
      _
    %p388 = scmp.lt.s32.totalorder %s19, 12
    // Predicated region
    $region29: #{hblock_forward.3} parent=5 // pred_check
      %p389 = pneg %p388
    $region30: #{hblock_forward.3} parent=5 // pred_check_branch
      %391 = sbr.rel (%p389) target = $region32
    $region31: #{hblock_forward.3} parent=5 // pred_region
      // Predicated region
      $region33: #{hblock_forward.3} parent=31 // pred_check
        %p392 = pneg %p53
      $region34: #{hblock_forward.3} parent=31 // pred_check_branch
        %394 = sbr.rel (%p392) target = $region36
      $region35: #{hblock_forward.3} parent=31 // pred_region
        %s395 = smul.u32 4, %s27
        %p396 = scmp.lt.s32.totalorder %s26, 1
        %s397 = scalar_select %p396, %s26, 1
        %p398 = scmp.lt.s32.totalorder %s395, 27
        %s399 = scalar_select %p398, %s395, 27
        %s400 = smul.addr %s397, 28
        %s401 = sadd.s32 %s399, %s400
        %s402 = smul.addr %s401, 2
        %s403 = scalar_lea.vmem %s0, %s402
        %s404 = smul.u32 4, %s27
      $region36: #{hblock_forward.3} parent=31 // pred_fallthru
        _
      // Predicated region
      $region37: #{hblock_forward.3} parent=31 // pred_check
        %p405 = pneg %p83
      $region38: #{hblock_forward.3} parent=31 // pred_check_branch
        %407 = sbr.rel (%p405) target = $region40
      $region39: #{hblock_forward.3} parent=31 // pred_region
        %s408 = sadd.s32 %s27, 1
        %s409 = smul.u32 4, %s408
        %p410 = scmp.lt.s32.totalorder %s26, 1
        %s411 = scalar_select %p410, %s26, 1
        %p412 = scmp.lt.s32.totalorder %s409, 27
        %s413 = scalar_select %p412, %s409, 27
        %s414 = smul.addr %s411, 28
        %s415 = sadd.s32 %s413, %s414
        %s416 = smul.addr %s415, 2
        %s417 = scalar_lea.vmem %s1, %s416
        %s418 = sadd.s32 %s27, 1
        %s419 = smul.u32 4, %s418
      $region40: #{hblock_forward.3} parent=31 // pred_fallthru
        _
      // Predicated region
      $region41: #{hblock_forward.3} parent=31 // pred_check
        %p420 = pneg %p130
      $region42: #{hblock_forward.3} parent=31 // pred_check_branch
        %422 = sbr.rel (%p420) target = $region44
      $region43: #{hblock_forward.3} parent=31 // pred_region
        %p423 = scmp.lt.s32.totalorder %s26, 1
        %s424 = scalar_select %p423, %s26, 1
        %s425 = scalar_lea.vmem %s3, %s424
      $region44: #{hblock_forward.3} parent=31 // pred_fallthru
        _
      // Predicated region
      $region45: #{hblock_forward.3} parent=31 // pred_check
        %p426 = pneg %p156
      $region46: #{hblock_forward.3} parent=31 // pred_check_branch
        %428 = sbr.rel (%p426) target = $region48
      $region47: #{hblock_forward.3} parent=31 // pred_region
        %p429 = scmp.lt.s32.totalorder %s26, 1
        %s430 = scalar_select %p429, %s26, 1
        %s431 = smul.addr %s430, 4
        %s432 = scalar_lea.vmem %s4, %s431
      $region48: #{hblock_forward.3} parent=31 // pred_fallthru
        _
      // Predicated region
      $region49: #{hblock_forward.3} parent=31 // pred_check
        %p433 = pneg %p224
      $region50: #{hblock_forward.3} parent=31 // pred_check_branch
        %435 = sbr.rel (%p433) target = $region52
      $region51: #{hblock_forward.3} parent=31 // pred_region
        %p436 = scmp.lt.s32.totalorder %s26, 1
        %s437 = scalar_select %p436, %s26, 1
        %s438 = scalar_lea.vmem %s7, %s437
      $region52: #{hblock_forward.3} parent=31 // pred_fallthru
        _
      // Predicated region
      $region53: #{hblock_forward.3} parent=31 // pred_check
        %p439 = pneg %p250
      $region54: #{hblock_forward.3} parent=31 // pred_check_branch
        %441 = sbr.rel (%p439) target = $region56
      $region55: #{hblock_forward.3} parent=31 // pred_region
        %p442 = scmp.lt.s32.totalorder %s26, 1
        %s443 = scalar_select %p442, %s26, 1
        %s444 = smul.addr %s443, 2
        %s445 = scalar_lea.vmem %s8, %s444
      $region56: #{hblock_forward.3} parent=31 // pred_fallthru
        _
      // Predicated region
      $region57: #{hblock_forward.3} parent=31 // pred_check
        %p446 = pneg %p299
      $region58: #{hblock_forward.3} parent=31 // pred_check_branch
        %448 = sbr.rel (%p446) target = $region60
      $region59: #{hblock_forward.3} parent=31 // pred_region
        %s449 = smul.u32 4, %s27
        %p450 = scmp.lt.s32.totalorder %s26, 1
        %s451 = scalar_select %p450, %s26, 1
        %p452 = scmp.lt.s32.totalorder %s449, 23
        %s453 = scalar_select %p452, %s449, 23
        %s454 = smul.addr %s451, 24
        %s455 = sadd.s32 %s453, %s454
        %s456 = smul.addr %s455, 2
        %s457 = scalar_lea.vmem %s10, %s456
        %s458 = smul.u32 4, %s27
      $region60: #{hblock_forward.3} parent=31 // pred_fallthru
        _
    $region32: #{hblock_forward.3} parent=5 // pred_fallthru
      _
    %p459 = scmp.le.s32.totalorder 1, %s19
    %p460 = scmp.lt.s32.totalorder %s19, 13
    %p461 = pnand %p459, %p460
    %p462 = pneg %p461
    // Predicated region
    $region61: #{hblock_forward.3} parent=5 // pred_check
      _
    $region62: #{hblock_forward.3} parent=5 // pred_check_branch
      %464 = sbr.rel (%p461) target = $region64
    $region63: #{hblock_forward.3} parent=5 // pred_region
      %s465 = ssub.s32 %s19, 1
      %s466 = smul.u32 4, %s29
      %p467 = scmp.lt.s32.totalorder %s28, 1
      %s468 = scalar_select %p467, %s28, 1
      %p469 = scmp.lt.s32.totalorder %s466, 27
      %s470 = scalar_select %p469, %s466, 27
      %s471 = smul.addr %s468, 28
      %s472 = sadd.s32 %s470, %s471
      %s473 = smul.addr %s472, 2
      %s474 = scalar_lea.vmem %s0, %s473
      %p475 = pneg %p59
      %p476 = pneg %p56
      %s477 = sadd.s32 %s29, 1
      %s478 = smul.u32 4, %s477
      %p479 = scmp.lt.s32.totalorder %s28, 1
      %s480 = scalar_select %p479, %s28, 1
      %p481 = scmp.lt.s32.totalorder %s478, 27
      %s482 = scalar_select %p481, %s478, 27
      %s483 = smul.addr %s480, 28
      %s484 = sadd.s32 %s482, %s483
      %s485 = smul.addr %s484, 2
      %s486 = scalar_lea.vmem %s1, %s485
      %p487 = pneg %p89
      %p488 = pneg %p86
      %p489 = pneg %p110
      %p490 = pneg %p107
      %p491 = scmp.lt.s32.totalorder %s28, 1
      %s492 = scalar_select %p491, %s28, 1
      %s493 = scalar_lea.vmem %s3, %s492
      %p494 = pneg %p136
      %p495 = pneg %p133
      %p496 = scmp.lt.s32.totalorder %s28, 1
      %s497 = scalar_select %p496, %s28, 1
      %s498 = smul.addr %s497, 4
      %s499 = scalar_lea.vmem %s4, %s498
      %p500 = pneg %p162
      %p501 = pneg %p159
      %p502 = pneg %p183
      %p503 = pneg %p180
      %p504 = pneg %p204
      %p505 = pneg %p201
      %p506 = scmp.lt.s32.totalorder %s28, 1
      %s507 = scalar_select %p506, %s28, 1
      %s508 = scalar_lea.vmem %s7, %s507
      %p509 = pneg %p230
      %p510 = pneg %p227
      %p511 = scmp.lt.s32.totalorder %s28, 1
      %s512 = scalar_select %p511, %s28, 1
      %s513 = smul.addr %s512, 2
      %s514 = scalar_lea.vmem %s8, %s513
      %p515 = pneg %p256
      %p516 = pneg %p253
      %p517 = pneg %p277
      %p518 = pneg %p274
      %s519 = smul.u32 4, %s29
      %p520 = scmp.lt.s32.totalorder %s28, 1
      %s521 = scalar_select %p520, %s28, 1
      %p522 = scmp.lt.s32.totalorder %s519, 23
      %s523 = scalar_select %p522, %s519, 23
      %s524 = smul.addr %s521, 24
      %s525 = sadd.s32 %s523, %s524
      %s526 = smul.addr %s525, 2
      %s527 = scalar_lea.vmem %s10, %s526
      %p528 = pneg %p305
      %p529 = pneg %p302
      %p530 = pneg %p333
      %p531 = pneg %p330
      %s532 = smul.u32 4, %s29
      %p533 = scmp.lt.s32.totalorder %s28, 1
      %s534 = scalar_select %p533, %s28, 1
      %p535 = scmp.lt.s32.totalorder %s532, 23
      %s536 = scalar_select %p535, %s532, 23
      %s537 = smul.addr %s534, 24
      %s538 = sadd.s32 %s536, %s537
      %s539 = smul.addr %s538, 4
      %s540 = scalar_lea.vmem %s11, %s539
      %p541 = pneg %p361
      %p542 = pneg %p358
      %s543 = smul.u32 4, %s29
      %p544 = scmp.lt.s32.totalorder %s28, 1
      %s545 = scalar_select %p544, %s28, 1
      %p546 = scmp.lt.s32.totalorder %s543, 23
      %s547 = scalar_select %p546, %s543, 23
      %s548 = smul.addr %s545, 24
      %s549 = sadd.s32 %s547, %s548
      %s550 = smul.addr %s549, 2
      %s551 = scalar_lea.vmem %s12, %s550
      %s552 = smul.u32 4, %s29
      %p553 = scmp.lt.s32.totalorder %s28, 1
      %s554 = scalar_select %p553, %s28, 1
      %p555 = scmp.lt.s32.totalorder %s552, 27
      %s556 = scalar_select %p555, %s552, 27
      %s557 = smul.addr %s554, 28
      %s558 = sadd.s32 %s556, %s557
      %s559 = smul.addr %s558, 2
      %s560 = scalar_lea.vmem %s0, %s559
      %s561 = smul.u32 4, %s29
      %s562 = sadd.s32 %s29, 1
      %s563 = smul.u32 4, %s562
      %p564 = scmp.lt.s32.totalorder %s28, 1
      %s565 = scalar_select %p564, %s28, 1
      %p566 = scmp.lt.s32.totalorder %s563, 27
      %s567 = scalar_select %p566, %s563, 27
      %s568 = smul.addr %s565, 28
      %s569 = sadd.s32 %s567, %s568
      %s570 = smul.addr %s569, 2
      %s571 = scalar_lea.vmem %s1, %s570
      %s572 = sadd.s32 %s29, 1
      %s573 = smul.u32 4, %s572
      %p574 = scmp.lt.s32.totalorder %s28, 1
      %s575 = scalar_select %p574, %s28, 1
      %s576 = scalar_lea.vmem %s3, %s575
      %p577 = scmp.lt.s32.totalorder %s28, 1
      %s578 = scalar_select %p577, %s28, 1
      %s579 = smul.addr %s578, 4
      %s580 = scalar_lea.vmem %s4, %s579
      %p581 = scmp.lt.s32.totalorder %s28, 1
      %s582 = scalar_select %p581, %s28, 1
      %s583 = scalar_lea.vmem %s7, %s582
      %p584 = scmp.lt.s32.totalorder %s28, 1
      %s585 = scalar_select %p584, %s28, 1
      %s586 = smul.addr %s585, 2
      %s587 = scalar_lea.vmem %s8, %s586
      %s588 = smul.u32 4, %s29
      %p589 = scmp.lt.s32.totalorder %s28, 1
      %s590 = scalar_select %p589, %s28, 1
      %p591 = scmp.lt.s32.totalorder %s588, 23
      %s592 = scalar_select %p591, %s588, 23
      %s593 = smul.addr %s590, 24
      %s594 = sadd.s32 %s592, %s593
      %s595 = smul.addr %s594, 2
      %s596 = scalar_lea.vmem %s10, %s595
      %s597 = smul.u32 4, %s29
      %s598 = smul.u32 4, %s29
      %p599 = scmp.lt.s32.totalorder %s28, 1
      %s600 = scalar_select %p599, %s28, 1
      %p601 = scmp.lt.s32.totalorder %s598, 23
      %s602 = scalar_select %p601, %s598, 23
      %s603 = smul.addr %s600, 24
      %s604 = sadd.s32 %s602, %s603
      %s605 = smul.addr %s604, 4
      %s606 = scalar_lea.vmem %s11, %s605
      %s607 = smul.u32 4, %s29
      %s608 = smul.u32 4, %s29
      %p609 = scmp.lt.s32.totalorder %s28, 1
      %s610 = scalar_select %p609, %s28, 1
      %p611 = scmp.lt.s32.totalorder %s608, 23
      %s612 = scalar_select %p611, %s608, 23
      %s613 = smul.addr %s610, 24
      %s614 = sadd.s32 %s612, %s613
      %s615 = smul.addr %s614, 2
      %s616 = scalar_lea.vmem %s12, %s615
      %s617 = smul.u32 4, %s29
      %v619 = vld [vmem:[%s560] sm:$0xff]
      %620 = vst [vmem:[#allocation2] sm:$0xff] %v619
      %v621 = vld [vmem:[%s571] sm:$0xff]
      %622 = vst [vmem:[#allocation2 + $0x8] sm:$0xff] %v621
      %v623 = vld [vmem:[%s576] sm:$0x1]
      %v624 = vld [vmem:[%s2] sm:$0x3]
      %v626 = vpack.i.b16 %v623, %v623
      %v628 = vlaneseq
      %v629 = vshrl.u32 %v628, 7
      %v630 = vsub.s32 0, %v629
      %v631 = vrot.slane %v626, %v630
      %v632 = vmul.bf16 %v624, %v631
      %v633 = vld [vmem:[#allocation2] sm:$0xff]
      %s634 = scalar_lea.vmem %s2, 2
      %v635 = vld [vmem:[%s634] sm:$0x3]
      %v636 = vmul.bf16 %v635, %v631
      %v637 = vld [vmem:[#allocation2 + $0x8] sm:$0x3]
      %v640 = vcombine.high %v633, %v633
      %v642 = vunpack.c.l.s4 1983009808
      %v643 = vunpack.c.0.s8 %v642
      %v644 = vlaneseq
      %v645 = vshrl.u32 %v644, 7
      %v646 = vsub.s32 %v643, %v645
      %v647 = vrot.slane %v633, %v646
      %v649 = vunpack.c.l.s4 1983009808
      %v650 = vunpack.c.0.s8 %v649
      %v651 = vlaneseq
      %v652 = vshrl.u32 %v651, 7
      %v653 = vsub.s32 %v650, %v652
      %v654 = vrot.slane %v640, %v653
      %v655 = vcombine.high %v647, %v647
      %v656 = vcombine.high %v654, %v654
      %v658 = vunpack.c.l.s4 1983009808
      %v659 = vunpack.c.0.s8 %v658
      %v660 = vlaneseq
      %v661 = vshrl.u32 %v660, 7
      %v662 = vsub.s32 %v659, %v661
      %v663 = vrot.slane %v637, %v662
      %664 = vrot.lane.b32.xlu0 %v647, 127
      %v665 = vpop.permute.xlu0 %664
      %666 = vrot.lane.b32.xlu0 %v655, 127
      %v667 = vpop.permute.xlu0 %666
      %668 = vrot.lane.b32.xlu0 %v654, 127
      %v669 = vpop.permute.xlu0 %668
      %670 = vrot.lane.b32.xlu0 %v656, 127
      %v671 = vpop.permute.xlu0 %670
      %672 = vrot.lane.b32.xlu0 %v663, 127
      %v673 = vpop.permute.xlu0 %672
      %vm674 = vcmask 1039360
      %v675 = vsel %vm674, %v665, %v667
      %v676 = vsel %vm674, %v667, %v669
      %v677 = vsel %vm674, %v669, %v671
      %v678 = vsel %vm674, %v671, %v673
      %vm679 = vcmask 31744
      %v681 = vsel %vm679, %v636, 0
      %vm683 = vcmask 1041408
      %v685 = vsel %vm683, %v675, 0
      %v688 = vsel %vm683, %v676, 0
      %v691 = vsel %vm683, %v677, 0
      %v694 = vsel %vm683, %v678, 0
      %696 = vmatprep.subr.bf16.mxu0 %v688
      %697 = vmatpush1.bf16.msra.mxu0 %v685
      %698 = vmatprep.subr.bf16.mxu0 0
      %699 = vmatpush1.bf16.msra.mxu0 0
      %700 = vmatprep.subr.bf16.mxu0 0
      %701 = vmatpush1.bf16.msra.mxu0 0
      %702 = vmatprep.subr.bf16.mxu0 0
      %703 = vmatpush1.bf16.msra.mxu0 0
      %704 = vmatprep.subr.bf16.mxu0 0
      %705 = vmatpush1.bf16.msra.mxu0 0
      %706 = vmatprep.subr.bf16.mxu0 0
      %707 = vmatpush1.bf16.msra.mxu0 0
      %708 = vmatprep.subr.bf16.mxu0 0
      %709 = vmatpush1.bf16.msra.mxu0 0
      %710 = vmatprep.subr.bf16.mxu0 0
      %711 = vmatpush1.bf16.msra.mxu0 0
      %712 = vmatprep.subr.bf16.mxu0 0
      %713 = vmatpush1.bf16.msra.mxu0 0
      %714 = vmatprep.subr.bf16.mxu0 0
      %715 = vmatpush1.bf16.msra.mxu0 0
      %716 = vmatprep.subr.bf16.mxu0 0
      %717 = vmatpush1.bf16.msra.mxu0 0
      %718 = vmatprep.subr.bf16.mxu0 0
      %719 = vmatpush1.bf16.msra.mxu0 0
      %720 = vmatprep.subr.bf16.mxu0 0
      %721 = vmatpush1.bf16.msra.mxu0 0
      %722 = vmatprep.subr.bf16.mxu0 0
      %723 = vmatpush1.bf16.msra.mxu0 0
      %724 = vmatprep.subr.bf16.mxu0 0
      %725 = vmatpush1.bf16.msra.mxu0 0
      %726 = vmatprep.subr.bf16.mxu0 0
      %727 = vmatpush1.bf16.msra.mxu0 0
      %728 = vmatprep.mubr.bf16.mxu0 0
      %729 = vmatmul.mubr.bf16.gmra.mrb[0].mxu0 %v681
      %v730 = vpop.f32.mrb[0].mxu0
      %v731 = vadd.f32 0.0, %v730
      %v732 = vpop.f32.mrb[0].mxu0
      %v733 = vadd.f32 0.0, %v732
      %v734 = vpop.f32.mrb[0].mxu0
      %v735 = vpop.f32.mrb[0].mxu0
      %736 = vdwg.mxu0
      %737 = vmatprep.subr.bf16.mxu0 %v694
      %738 = vmatpush1.bf16.msra.mxu0 %v691
      %739 = vmatprep.subr.bf16.mxu0 0
      %740 = vmatpush1.bf16.msra.mxu0 0
      %741 = vmatprep.subr.bf16.mxu0 0
      %742 = vmatpush1.bf16.msra.mxu0 0
      %743 = vmatprep.subr.bf16.mxu0 0
      %744 = vmatpush1.bf16.msra.mxu0 0
      %745 = vmatprep.subr.bf16.mxu0 0
      %746 = vmatpush1.bf16.msra.mxu0 0
      %747 = vmatprep.subr.bf16.mxu0 0
      %748 = vmatpush1.bf16.msra.mxu0 0
      %749 = vmatprep.subr.bf16.mxu0 0
      %750 = vmatpush1.bf16.msra.mxu0 0
      %751 = vmatprep.subr.bf16.mxu0 0
      %752 = vmatpush1.bf16.msra.mxu0 0
      %753 = vmatprep.subr.bf16.mxu0 0
      %754 = vmatpush1.bf16.msra.mxu0 0
      %755 = vmatprep.subr.bf16.mxu0 0
      %756 = vmatpush1.bf16.msra.mxu0 0
      %757 = vmatprep.subr.bf16.mxu0 0
      %758 = vmatpush1.bf16.msra.mxu0 0
      %759 = vmatprep.subr.bf16.mxu0 0
      %760 = vmatpush1.bf16.msra.mxu0 0
      %761 = vmatprep.subr.bf16.mxu0 0
      %762 = vmatpush1.bf16.msra.mxu0 0
      %763 = vmatprep.subr.bf16.mxu0 0
      %764 = vmatpush1.bf16.msra.mxu0 0
      %765 = vmatprep.subr.bf16.mxu0 0
      %766 = vmatpush1.bf16.msra.mxu0 0
      %767 = vmatprep.subr.bf16.mxu0 0
      %768 = vmatpush1.bf16.msra.mxu0 0
      %769 = vmatprep.mubr.bf16.mxu0 0
      %770 = vmatmul.mubr.bf16.gmra.mrb[0].mxu0 %v681
      %v771 = vpop.f32.mrb[0].mxu0
      %v772 = vadd.f32 0.0, %v771
      %v773 = vpop.f32.mrb[0].mxu0
      %v774 = vadd.f32 0.0, %v773
      %v775 = vpop.f32.mrb[0].mxu0
      %v776 = vpop.f32.mrb[0].mxu0
      %777 = vdwg.mxu0
      %v779 = vsel %vm679, %v632, 0
      %v782 = vsel %vm683, %v647, 0
      %v785 = vsel %vm683, %v655, 0
      %v788 = vsel %vm683, %v654, 0
      %v791 = vsel %vm683, %v656, 0
      %793 = vmatprep.subr.bf16.mxu0 %v785
      %794 = vmatpush1.bf16.msra.mxu0 %v782
      %795 = vmatprep.subr.bf16.mxu0 0
      %796 = vmatpush1.bf16.msra.mxu0 0
      %797 = vmatprep.subr.bf16.mxu0 0
      %798 = vmatpush1.bf16.msra.mxu0 0
      %799 = vmatprep.subr.bf16.mxu0 0
      %800 = vmatpush1.bf16.msra.mxu0 0
      %801 = vmatprep.subr.bf16.mxu0 0
      %802 = vmatpush1.bf16.msra.mxu0 0
      %803 = vmatprep.subr.bf16.mxu0 0
      %804 = vmatpush1.bf16.msra.mxu0 0
      %805 = vmatprep.subr.bf16.mxu0 0
      %806 = vmatpush1.bf16.msra.mxu0 0
      %807 = vmatprep.subr.bf16.mxu0 0
      %808 = vmatpush1.bf16.msra.mxu0 0
      %809 = vmatprep.subr.bf16.mxu0 0
      %810 = vmatpush1.bf16.msra.mxu0 0
      %811 = vmatprep.subr.bf16.mxu0 0
      %812 = vmatpush1.bf16.msra.mxu0 0
      %813 = vmatprep.subr.bf16.mxu0 0
      %814 = vmatpush1.bf16.msra.mxu0 0
      %815 = vmatprep.subr.bf16.mxu0 0
      %816 = vmatpush1.bf16.msra.mxu0 0
      %817 = vmatprep.subr.bf16.mxu0 0
      %818 = vmatpush1.bf16.msra.mxu0 0
      %819 = vmatprep.subr.bf16.mxu0 0
      %820 = vmatpush1.bf16.msra.mxu0 0
      %821 = vmatprep.subr.bf16.mxu0 0
      %822 = vmatpush1.bf16.msra.mxu0 0
      %823 = vmatprep.subr.bf16.mxu0 0
      %824 = vmatpush1.bf16.msra.mxu0 0
      %825 = vmatprep.mubr.bf16.mxu0 0
      %826 = vmatmul.mubr.bf16.gmra.mrb[0].mxu0 %v779
      %v827 = vpop.f32.mrb[0].mxu0
      %v828 = vadd.f32 %v731, %v827
      %v829 = vpop.f32.mrb[0].mxu0
      %v830 = vadd.f32 %v733, %v829
      %v831 = vpop.f32.mrb[0].mxu0
      %v832 = vpop.f32.mrb[0].mxu0
      %833 = vdwg.mxu0
      %834 = vmatprep.subr.bf16.mxu0 %v791
      %835 = vmatpush1.bf16.msra.mxu0 %v788
      %836 = vmatprep.subr.bf16.mxu0 0
      %837 = vmatpush1.bf16.msra.mxu0 0
      %838 = vmatprep.subr.bf16.mxu0 0
      %839 = vmatpush1.bf16.msra.mxu0 0
      %840 = vmatprep.subr.bf16.mxu0 0
      %841 = vmatpush1.bf16.msra.mxu0 0
      %842 = vmatprep.subr.bf16.mxu0 0
      %843 = vmatpush1.bf16.msra.mxu0 0
      %844 = vmatprep.subr.bf16.mxu0 0
      %845 = vmatpush1.bf16.msra.mxu0 0
      %846 = vmatprep.subr.bf16.mxu0 0
      %847 = vmatpush1.bf16.msra.mxu0 0
      %848 = vmatprep.subr.bf16.mxu0 0
      %849 = vmatpush1.bf16.msra.mxu0 0
      %850 = vmatprep.subr.bf16.mxu0 0
      %851 = vmatpush1.bf16.msra.mxu0 0
      %852 = vmatprep.subr.bf16.mxu0 0
      %853 = vmatpush1.bf16.msra.mxu0 0
      %854 = vmatprep.subr.bf16.mxu0 0
      %855 = vmatpush1.bf16.msra.mxu0 0
      %856 = vmatprep.subr.bf16.mxu0 0
      %857 = vmatpush1.bf16.msra.mxu0 0
      %858 = vmatprep.subr.bf16.mxu0 0
      %859 = vmatpush1.bf16.msra.mxu0 0
      %860 = vmatprep.subr.bf16.mxu0 0
      %861 = vmatpush1.bf16.msra.mxu0 0
      %862 = vmatprep.subr.bf16.mxu0 0
      %863 = vmatpush1.bf16.msra.mxu0 0
      %864 = vmatprep.subr.bf16.mxu0 0
      %865 = vmatpush1.bf16.msra.mxu0 0
      %866 = vmatprep.mubr.bf16.mxu0 0
      %867 = vmatmul.mubr.bf16.gmra.mrb[0].mxu0 %v779
      %v868 = vpop.f32.mrb[0].mxu0
      %v869 = vadd.f32 %v772, %v868
      %v870 = vpop.f32.mrb[0].mxu0
      %v871 = vadd.f32 %v774, %v870
      %v872 = vpop.f32.mrb[0].mxu0
      %v873 = vpop.f32.mrb[0].mxu0
      %874 = vdwg.mxu0
      %s875 = scalar_lea.vmem %s2, 4
      %v876 = vld [vmem:[%s875] sm:$0x3]
      %v877 = vmul.bf16 %v876, %v631
      %v878 = vld [vmem:[#allocation2] sm:$0xff]
      %v879 = vld [vmem:[#allocation2 + $0x8] sm:$0x3]
      %v882 = vcombine.high %v878, %v878
      %v884 = vunpack.c.l.s4 1983009808
      %v885 = vunpack.c.0.s8 %v884
      %v886 = vlaneseq
      %v887 = vshrl.u32 %v886, 7
      %v888 = vsub.s32 %v885, %v887
      %v889 = vrot.slane %v878, %v888
      %v891 = vunpack.c.l.s4 1983009808
      %v892 = vunpack.c.0.s8 %v891
      %v893 = vlaneseq
      %v894 = vshrl.u32 %v893, 7
      %v895 = vsub.s32 %v892, %v894
      %v896 = vrot.slane %v882, %v895
      %v897 = vcombine.high %v889, %v889
      %v898 = vcombine.high %v896, %v896
      %v900 = vunpack.c.l.s4 1983009808
      %v901 = vunpack.c.0.s8 %v900
      %v902 = vlaneseq
      %v903 = vshrl.u32 %v902, 7
      %v904 = vsub.s32 %v901, %v903
      %v905 = vrot.slane %v879, %v904
      %906 = vrot.lane.b32.xlu0 %v889, 126
      %v907 = vpop.permute.xlu0 %906
      %908 = vrot.lane.b32.xlu0 %v897, 126
      %v909 = vpop.permute.xlu0 %908
      %910 = vrot.lane.b32.xlu0 %v896, 126
      %v911 = vpop.permute.xlu0 %910
      %912 = vrot.lane.b32.xlu0 %v898, 126
      %v913 = vpop.permute.xlu0 %912
      %914 = vrot.lane.b32.xlu0 %v905, 126
      %v915 = vpop.permute.xlu0 %914
      %vm916 = vcmask 1031168
      %v917 = vsel %vm916, %v907, %v909
      %v918 = vsel %vm916, %v909, %v911
      %v919 = vsel %vm916, %v911, %v913
      %v920 = vsel %vm916, %v913, %v915
      %v922 = vsel %vm679, %v877, 0
      %v925 = vsel %vm683, %v917, 0
      %v928 = vsel %vm683, %v918, 0
      %v931 = vsel %vm683, %v919, 0
      %v934 = vsel %vm683, %v920, 0
      %936 = vmatprep.subr.bf16.mxu0 %v928
      %937 = vmatpush1.bf16.msra.mxu0 %v925
      %938 = vmatprep.subr.bf16.mxu0 0
      %939 = vmatpush1.bf16.msra.mxu0 0
      %940 = vmatprep.subr.bf16.mxu0 0
      %941 = vmatpush1.bf16.msra.mxu0 0
      %942 = vmatprep.subr.bf16.mxu0 0
      %943 = vmatpush1.bf16.msra.mxu0 0
      %944 = vmatprep.subr.bf16.mxu0 0
      %945 = vmatpush1.bf16.msra.mxu0 0
      %946 = vmatprep.subr.bf16.mxu0 0
      %947 = vmatpush1.bf16.msra.mxu0 0
      %948 = vmatprep.subr.bf16.mxu0 0
      %949 = vmatpush1.bf16.msra.mxu0 0
      %950 = vmatprep.subr.bf16.mxu0 0
      %951 = vmatpush1.bf16.msra.mxu0 0
      %952 = vmatprep.subr.bf16.mxu0 0
      %953 = vmatpush1.bf16.msra.mxu0 0
      %954 = vmatprep.subr.bf16.mxu0 0
      %955 = vmatpush1.bf16.msra.mxu0 0
      %956 = vmatprep.subr.bf16.mxu0 0
      %957 = vmatpush1.bf16.msra.mxu0 0
      %958 = vmatprep.subr.bf16.mxu0 0
      %959 = vmatpush1.bf16.msra.mxu0 0
      %960 = vmatprep.subr.bf16.mxu0 0
      %961 = vmatpush1.bf16.msra.mxu0 0
      %962 = vmatprep.subr.bf16.mxu0 0
      %963 = vmatpush1.bf16.msra.mxu0 0
      %964 = vmatprep.subr.bf16.mxu0 0
      %965 = vmatpush1.bf16.msra.mxu0 0
      %966 = vmatprep.subr.bf16.mxu0 0
      %967 = vmatpush1.bf16.msra.mxu0 0
      %968 = vmatprep.mubr.bf16.mxu0 0
      %969 = vmatmul.mubr.bf16.gmra.mrb[0].mxu0 %v922
      %v970 = vpop.f32.mrb[0].mxu0
      %v971 = vadd.f32 0.0, %v970
      %v972 = vpop.f32.mrb[0].mxu0
      %v973 = vadd.f32 0.0, %v972
      %v974 = vpop.f32.mrb[0].mxu0
      %v975 = vpop.f32.mrb[0].mxu0
      %976 = vdwg.mxu0
      %977 = vmatprep.subr.bf16.mxu0 %v934
      %978 = vmatpush1.bf16.msra.mxu0 %v931
      %979 = vmatprep.subr.bf16.mxu0 0
      %980 = vmatpush1.bf16.msra.mxu0 0
      %981 = vmatprep.subr.bf16.mxu0 0
      %982 = vmatpush1.bf16.msra.mxu0 0
      %983 = vmatprep.subr.bf16.mxu0 0
      %984 = vmatpush1.bf16.msra.mxu0 0
      %985 = vmatprep.subr.bf16.mxu0 0
      %986 = vmatpush1.bf16.msra.mxu0 0
      %987 = vmatprep.subr.bf16.mxu0 0
      %988 = vmatpush1.bf16.msra.mxu0 0
      %989 = vmatprep.subr.bf16.mxu0 0
      %990 = vmatpush1.bf16.msra.mxu0 0
      %991 = vmatprep.subr.bf16.mxu0 0
      %992 = vmatpush1.bf16.msra.mxu0 0
      %993 = vmatprep.subr.bf16.mxu0 0
      %994 = vmatpush1.bf16.msra.mxu0 0
      %995 = vmatprep.subr.bf16.mxu0 0
      %996 = vmatpush1.bf16.msra.mxu0 0
      %997 = vmatprep.subr.bf16.mxu0 0
      %998 = vmatpush1.bf16.msra.mxu0 0
      %999 = vmatprep.subr.bf16.mxu0 0
      %1000 = vmatpush1.bf16.msra.mxu0 0
      %1001 = vmatprep.subr.bf16.mxu0 0
      %1002 = vmatpush1.bf16.msra.mxu0 0
      %1003 = vmatprep.subr.bf16.mxu0 0
      %1004 = vmatpush1.bf16.msra.mxu0 0
      %1005 = vmatprep.subr.bf16.mxu0 0
      %1006 = vmatpush1.bf16.msra.mxu0 0
      %1007 = vmatprep.subr.bf16.mxu0 0
      %1008 = vmatpush1.bf16.msra.mxu0 0
      %1009 = vmatprep.mubr.bf16.mxu0 0
      %1010 = vmatmul.mubr.bf16.gmra.mrb[0].mxu0 %v922
      %v1011 = vpop.f32.mrb[0].mxu0
      %v1012 = vadd.f32 0.0, %v1011
      %v1013 = vpop.f32.mrb[0].mxu0
      %v1014 = vadd.f32 0.0, %v1013
      %v1015 = vpop.f32.mrb[0].mxu0
      %v1016 = vpop.f32.mrb[0].mxu0
      %1017 = vdwg.mxu0
      %v1018 = vadd.f32 %v828, %v971
      %v1019 = vadd.f32 %v830, %v973
      %v1020 = vadd.f32 %v869, %v1012
      %v1021 = vadd.f32 %v871, %v1014
      %s1022 = scalar_lea.vmem %s2, 6
      %v1023 = vld [vmem:[%s1022] sm:$0x3]
      %v1024 = vmul.bf16 %v1023, %v631
      %v1025 = vld [vmem:[#allocation2] sm:$0xff]
      %v1026 = vld [vmem:[#allocation2 + $0x8] sm:$0x3]
      %v1029 = vcombine.high %v1025, %v1025
      %v1031 = vunpack.c.l.s4 1983009808
      %v1032 = vunpack.c.0.s8 %v1031
      %v1033 = vlaneseq
      %v1034 = vshrl.u32 %v1033, 7
      %v1035 = vsub.s32 %v1032, %v1034
      %v1036 = vrot.slane %v1025, %v1035
      %v1038 = vunpack.c.l.s4 1983009808
      %v1039 = vunpack.c.0.s8 %v1038
      %v1040 = vlaneseq
      %v1041 = vshrl.u32 %v1040, 7
      %v1042 = vsub.s32 %v1039, %v1041
      %v1043 = vrot.slane %v1029, %v1042
      %v1044 = vcombine.high %v1036, %v1036
      %v1045 = vcombine.high %v1043, %v1043
      %v1047 = vunpack.c.l.s4 1983009808
      %v1048 = vunpack.c.0.s8 %v1047
      %v1049 = vlaneseq
      %v1050 = vshrl.u32 %v1049, 7
      %v1051 = vsub.s32 %v1048, %v1050
      %v1052 = vrot.slane %v1026, %v1051
      %1053 = vrot.lane.b32.xlu0 %v1036, 114
      %v1054 = vpop.permute.xlu0 %1053
      %1055 = vrot.lane.b32.xlu0 %v1044, 114
      %v1056 = vpop.permute.xlu0 %1055
      %1057 = vrot.lane.b32.xlu0 %v1043, 114
      %v1058 = vpop.permute.xlu0 %1057
      %1059 = vrot.lane.b32.xlu0 %v1045, 114
      %v1060 = vpop.permute.xlu0 %1059
      %1061 = vrot.lane.b32.xlu0 %v1052, 114
      %v1062 = vpop.permute.xlu0 %1061
      %vm1063 = vcmask 932864
      %v1064 = vsel %vm1063, %v1054, %v1056
      %v1065 = vsel %vm1063, %v1056, %v1058
      %v1066 = vsel %vm1063, %v1058, %v1060
      %v1067 = vsel %vm1063, %v1060, %v1062
      %v1069 = vsel %vm679, %v1024, 0
      %v1072 = vsel %vm683, %v1064, 0
      %v1075 = vsel %vm683, %v1065, 0
      %v1078 = vsel %vm683, %v1066, 0
      %v1081 = vsel %vm683, %v1067, 0
      %1083 = vmatprep.subr.bf16.mxu0 %v1075
      %1084 = vmatpush1.bf16.msra.mxu0 %v1072
      %1085 = vmatprep.subr.bf16.mxu0 0
      %1086 = vmatpush1.bf16.msra.mxu0 0
      %1087 = vmatprep.subr.bf16.mxu0 0
      %1088 = vmatpush1.bf16.msra.mxu0 0
      %1089 = vmatprep.subr.bf16.mxu0 0
      %1090 = vmatpush1.bf16.msra.mxu0 0
      %1091 = vmatprep.subr.bf16.mxu0 0
      %1092 = vmatpush1.bf16.msra.mxu0 0
      %1093 = vmatprep.subr.bf16.mxu0 0
      %1094 = vmatpush1.bf16.msra.mxu0 0
      %1095 = vmatprep.subr.bf16.mxu0 0
      %1096 = vmatpush1.bf16.msra.mxu0 0
      %1097 = vmatprep.subr.bf16.mxu0 0
      %1098 = vmatpush1.bf16.msra.mxu0 0
      %1099 = vmatprep.subr.bf16.mxu0 0
      %1100 = vmatpush1.bf16.msra.mxu0 0
      %1101 = vmatprep.subr.bf16.mxu0 0
      %1102 = vmatpush1.bf16.msra.mxu0 0
      %1103 = vmatprep.subr.bf16.mxu0 0
      %1104 = vmatpush1.bf16.msra.mxu0 0
      %1105 = vmatprep.subr.bf16.mxu0 0
      %1106 = vmatpush1.bf16.msra.mxu0 0
      %1107 = vmatprep.subr.bf16.mxu0 0
      %1108 = vmatpush1.bf16.msra.mxu0 0
      %1109 = vmatprep.subr.bf16.mxu0 0
      %1110 = vmatpush1.bf16.msra.mxu0 0
      %1111 = vmatprep.subr.bf16.mxu0 0
      %1112 = vmatpush1.bf16.msra.mxu0 0
      %1113 = vmatprep.subr.bf16.mxu0 0
      %1114 = vmatpush1.bf16.msra.mxu0 0
      %1115 = vmatprep.mubr.bf16.mxu0 0
      %1116 = vmatmul.mubr.bf16.gmra.mrb[0].mxu0 %v1069
      %v1117 = vpop.f32.mrb[0].mxu0
      %v1118 = vadd.f32 0.0, %v1117
      %v1119 = vpop.f32.mrb[0].mxu0
      %v1120 = vadd.f32 0.0, %v1119
      %v1121 = vpop.f32.mrb[0].mxu0
      %v1122 = vpop.f32.mrb[0].mxu0
      %1123 = vdwg.mxu0
      %1124 = vmatprep.subr.bf16.mxu0 %v1081
      %1125 = vmatpush1.bf16.msra.mxu0 %v1078
      %1126 = vmatprep.subr.bf16.mxu0 0
      %1127 = vmatpush1.bf16.msra.mxu0 0
      %1128 = vmatprep.subr.bf16.mxu0 0
      %1129 = vmatpush1.bf16.msra.mxu0 0
      %1130 = vmatprep.subr.bf16.mxu0 0
      %1131 = vmatpush1.bf16.msra.mxu0 0
      %1132 = vmatprep.subr.bf16.mxu0 0
      %1133 = vmatpush1.bf16.msra.mxu0 0
      %1134 = vmatprep.subr.bf16.mxu0 0
      %1135 = vmatpush1.bf16.msra.mxu0 0
      %1136 = vmatprep.subr.bf16.mxu0 0
      %1137 = vmatpush1.bf16.msra.mxu0 0
      %1138 = vmatprep.subr.bf16.mxu0 0
      %1139 = vmatpush1.bf16.msra.mxu0 0
      %1140 = vmatprep.subr.bf16.mxu0 0
      %1141 = vmatpush1.bf16.msra.mxu0 0
      %1142 = vmatprep.subr.bf16.mxu0 0
      %1143 = vmatpush1.bf16.msra.mxu0 0
      %1144 = vmatprep.subr.bf16.mxu0 0
      %1145 = vmatpush1.bf16.msra.mxu0 0
      %1146 = vmatprep.subr.bf16.mxu0 0
      %1147 = vmatpush1.bf16.msra.mxu0 0
      %1148 = vmatprep.subr.bf16.mxu0 0
      %1149 = vmatpush1.bf16.msra.mxu0 0
      %1150 = vmatprep.subr.bf16.mxu0 0
      %1151 = vmatpush1.bf16.msra.mxu0 0
      %1152 = vmatprep.subr.bf16.mxu0 0
      %1153 = vmatpush1.bf16.msra.mxu0 0
      %1154 = vmatprep.subr.bf16.mxu0 0
      %1155 = vmatpush1.bf16.msra.mxu0 0
      %1156 = vmatprep.mubr.bf16.mxu0 0
      %1157 = vmatmul.mubr.bf16.gmra.mrb[0].mxu0 %v1069
      %v1158 = vpop.f32.mrb[0].mxu0
      %v1159 = vadd.f32 0.0, %v1158
      %v1160 = vpop.f32.mrb[0].mxu0
      %v1161 = vadd.f32 0.0, %v1160
      %v1162 = vpop.f32.mrb[0].mxu0
      %v1163 = vpop.f32.mrb[0].mxu0
      %1164 = vdwg.mxu0
      %v1165 = vadd.f32 %v1018, %v1118
      %v1166 = vadd.f32 %v1019, %v1120
      %v1167 = vadd.f32 %v1020, %v1159
      %v1168 = vadd.f32 %v1021, %v1161
      %s1169 = scalar_lea.vmem %s2, 8
      %v1170 = vld [vmem:[%s1169] sm:$0x3]
      %v1171 = vmul.bf16 %v1170, %v631
      %v1172 = vld [vmem:[#allocation2] sm:$0xff]
      %v1173 = vld [vmem:[#allocation2 + $0x8] sm:$0x3]
      %v1176 = vcombine.high %v1172, %v1172
      %v1178 = vunpack.c.l.s4 1983009808
      %v1179 = vunpack.c.0.s8 %v1178
      %v1180 = vlaneseq
      %v1181 = vshrl.u32 %v1180, 7
      %v1182 = vsub.s32 %v1179, %v1181
      %v1183 = vrot.slane %v1172, %v1182
      %v1185 = vunpack.c.l.s4 1983009808
      %v1186 = vunpack.c.0.s8 %v1185
      %v1187 = vlaneseq
      %v1188 = vshrl.u32 %v1187, 7
      %v1189 = vsub.s32 %v1186, %v1188
      %v1190 = vrot.slane %v1176, %v1189
      %v1191 = vcombine.high %v1183, %v1183
      %v1192 = vcombine.high %v1190, %v1190
      %v1194 = vunpack.c.l.s4 1983009808
      %v1195 = vunpack.c.0.s8 %v1194
      %v1196 = vlaneseq
      %v1197 = vshrl.u32 %v1196, 7
      %v1198 = vsub.s32 %v1195, %v1197
      %v1199 = vrot.slane %v1173, %v1198
      %1200 = vrot.lane.b32.xlu0 %v1183, 113
      %v1201 = vpop.permute.xlu0 %1200
      %1202 = vrot.lane.b32.xlu0 %v1191, 113
      %v1203 = vpop.permute.xlu0 %1202
      %1204 = vrot.lane.b32.xlu0 %v1190, 113
      %v1205 = vpop.permute.xlu0 %1204
      %1206 = vrot.lane.b32.xlu0 %v1192, 113
      %v1207 = vpop.permute.xlu0 %1206
      %1208 = vrot.lane.b32.xlu0 %v1199, 113
      %v1209 = vpop.permute.xlu0 %1208
      %vm1210 = vcmask 924672
      %v1211 = vsel %vm1210, %v1201, %v1203
      %v1212 = vsel %vm1210, %v1203, %v1205
      %v1213 = vsel %vm1210, %v1205, %v1207
      %v1214 = vsel %vm1210, %v1207, %v1209
      %v1216 = vsel %vm679, %v1171, 0
      %v1219 = vsel %vm683, %v1211, 0
      %v1222 = vsel %vm683, %v1212, 0
      %v1225 = vsel %vm683, %v1213, 0
      %v1228 = vsel %vm683, %v1214, 0
      %1230 = vmatprep.subr.bf16.mxu0 %v1222
      %1231 = vmatpush1.bf16.msra.mxu0 %v1219
      %1232 = vmatprep.subr.bf16.mxu0 0
      %1233 = vmatpush1.bf16.msra.mxu0 0
      %1234 = vmatprep.subr.bf16.mxu0 0
      %1235 = vmatpush1.bf16.msra.mxu0 0
      %1236 = vmatprep.subr.bf16.mxu0 0
      %1237 = vmatpush1.bf16.msra.mxu0 0
      %1238 = vmatprep.subr.bf16.mxu0 0
      %1239 = vmatpush1.bf16.msra.mxu0 0
      %1240 = vmatprep.subr.bf16.mxu0 0
      %1241 = vmatpush1.bf16.msra.mxu0 0
      %1242 = vmatprep.subr.bf16.mxu0 0
      %1243 = vmatpush1.bf16.msra.mxu0 0
      %1244 = vmatprep.subr.bf16.mxu0 0
      %1245 = vmatpush1.bf16.msra.mxu0 0
      %1246 = vmatprep.subr.bf16.mxu0 0
      %1247 = vmatpush1.bf16.msra.mxu0 0
      %1248 = vmatprep.subr.bf16.mxu0 0
      %1249 = vmatpush1.bf16.msra.mxu0 0
      %1250 = vmatprep.subr.bf16.mxu0 0
      %1251 = vmatpush1.bf16.msra.mxu0 0
      %1252 = vmatprep.subr.bf16.mxu0 0
      %1253 = vmatpush1.bf16.msra.mxu0 0
      %1254 = vmatprep.subr.bf16.mxu0 0
      %1255 = vmatpush1.bf16.msra.mxu0 0
      %1256 = vmatprep.subr.bf16.mxu0 0
      %1257 = vmatpush1.bf16.msra.mxu0 0
      %1258 = vmatprep.subr.bf16.mxu0 0
      %1259 = vmatpush1.bf16.msra.mxu0 0
      %1260 = vmatprep.subr.bf16.mxu0 0
      %1261 = vmatpush1.bf16.msra.mxu0 0
      %1262 = vmatprep.mubr.bf16.mxu0 0
      %1263 = vmatmul.mubr.bf16.gmra.mrb[0].mxu0 %v1216
      %v1264 = vpop.f32.mrb[0].mxu0
      %v1265 = vadd.f32 0.0, %v1264
      %v1266 = vpop.f32.mrb[0].mxu0
      %v1267 = vadd.f32 0.0, %v1266
      %v1268 = vpop.f32.mrb[0].mxu0
      %v1269 = vpop.f32.mrb[0].mxu0
      %1270 = vdwg.mxu0
      %1271 = vmatprep.subr.bf16.mxu0 %v1228
      %1272 = vmatpush1.bf16.msra.mxu0 %v1225
      %1273 = vmatprep.subr.bf16.mxu0 0
      %1274 = vmatpush1.bf16.msra.mxu0 0
      %1275 = vmatprep.subr.bf16.mxu0 0
      %1276 = vmatpush1.bf16.msra.mxu0 0
      %1277 = vmatprep.subr.bf16.mxu0 0
      %1278 = vmatpush1.bf16.msra.mxu0 0
      %1279 = vmatprep.subr.bf16.mxu0 0
      %1280 = vmatpush1.bf16.msra.mxu0 0
      %1281 = vmatprep.subr.bf16.mxu0 0
      %1282 = vmatpush1.bf16.msra.mxu0 0
      %1283 = vmatprep.subr.bf16.mxu0 0
      %1284 = vmatpush1.bf16.msra.mxu0 0
      %1285 = vmatprep.subr.bf16.mxu0 0
      %1286 = vmatpush1.bf16.msra.mxu0 0
      %1287 = vmatprep.subr.bf16.mxu0 0
      %1288 = vmatpush1.bf16.msra.mxu0 0
      %1289 = vmatprep.subr.bf16.mxu0 0
      %1290 = vmatpush1.bf16.msra.mxu0 0
      %1291 = vmatprep.subr.bf16.mxu0 0
      %1292 = vmatpush1.bf16.msra.mxu0 0
      %1293 = vmatprep.subr.bf16.mxu0 0
      %1294 = vmatpush1.bf16.msra.mxu0 0
      %1295 = vmatprep.subr.bf16.mxu0 0
      %1296 = vmatpush1.bf16.msra.mxu0 0
      %1297 = vmatprep.subr.bf16.mxu0 0
      %1298 = vmatpush1.bf16.msra.mxu0 0
      %1299 = vmatprep.subr.bf16.mxu0 0
      %1300 = vmatpush1.bf16.msra.mxu0 0
      %1301 = vmatprep.subr.bf16.mxu0 0
      %1302 = vmatpush1.bf16.msra.mxu0 0
      %1303 = vmatprep.mubr.bf16.mxu0 0
      %1304 = vmatmul.mubr.bf16.gmra.mrb[0].mxu0 %v1216
      %v1305 = vpop.f32.mrb[0].mxu0
      %v1306 = vadd.f32 0.0, %v1305
      %v1307 = vpop.f32.mrb[0].mxu0
      %v1308 = vadd.f32 0.0, %v1307
      %v1309 = vpop.f32.mrb[0].mxu0
      %v1310 = vpop.f32.mrb[0].mxu0
      %1311 = vdwg.mxu0
      %v1312 = vadd.f32 %v1165, %v1265
      %v1313 = vadd.f32 %v1166, %v1267
      %v1314 = vadd.f32 %v1167, %v1306
      %v1315 = vadd.f32 %v1168, %v1308
      %s1316 = scalar_lea.vmem %s2, 10
      %v1317 = vld [vmem:[%s1316] sm:$0x3]
      %v1318 = vmul.bf16 %v1317, %v631
      %v1319 = vld [vmem:[#allocation2] sm:$0xff]
      %v1320 = vld [vmem:[#allocation2 + $0x8] sm:$0x3]
      %v1323 = vcombine.high %v1319, %v1319
      %v1325 = vunpack.c.l.s4 1983009808
      %v1326 = vunpack.c.0.s8 %v1325
      %v1327 = vlaneseq
      %v1328 = vshrl.u32 %v1327, 7
      %v1329 = vsub.s32 %v1326, %v1328
      %v1330 = vrot.slane %v1319, %v1329
      %v1332 = vunpack.c.l.s4 1983009808
      %v1333 = vunpack.c.0.s8 %v1332
      %v1334 = vlaneseq
      %v1335 = vshrl.u32 %v1334, 7
      %v1336 = vsub.s32 %v1333, %v1335
      %v1337 = vrot.slane %v1323, %v1336
      %v1338 = vcombine.high %v1330, %v1330
      %v1339 = vcombine.high %v1337, %v1337
      %v1341 = vunpack.c.l.s4 1983009808
      %v1342 = vunpack.c.0.s8 %v1341
      %v1343 = vlaneseq
      %v1344 = vshrl.u32 %v1343, 7
      %v1345 = vsub.s32 %v1342, %v1344
      %v1346 = vrot.slane %v1320, %v1345
      %1347 = vrot.lane.b32.xlu0 %v1330, 112
      %v1348 = vpop.permute.xlu0 %1347
      %1349 = vrot.lane.b32.xlu0 %v1338, 112
      %v1350 = vpop.permute.xlu0 %1349
      %1351 = vrot.lane.b32.xlu0 %v1337, 112
      %v1352 = vpop.permute.xlu0 %1351
      %1353 = vrot.lane.b32.xlu0 %v1339, 112
      %v1354 = vpop.permute.xlu0 %1353
      %1355 = vrot.lane.b32.xlu0 %v1346, 112
      %v1356 = vpop.permute.xlu0 %1355
      %vm1357 = vcmask 916480
      %v1358 = vsel %vm1357, %v1348, %v1350
      %v1359 = vsel %vm1357, %v1350, %v1352
      %v1360 = vsel %vm1357, %v1352, %v1354
      %v1361 = vsel %vm1357, %v1354, %v1356
      %v1363 = vsel %vm679, %v1318, 0
      %v1366 = vsel %vm683, %v1358, 0
      %v1369 = vsel %vm683, %v1359, 0
      %v1372 = vsel %vm683, %v1360, 0
      %v1375 = vsel %vm683, %v1361, 0
      %1377 = vmatprep.subr.bf16.mxu0 %v1369
      %1378 = vmatpush1.bf16.msra.mxu0 %v1366
      %1379 = vmatprep.subr.bf16.mxu0 0
      %1380 = vmatpush1.bf16.msra.mxu0 0
      %1381 = vmatprep.subr.bf16.mxu0 0
      %1382 = vmatpush1.bf16.msra.mxu0 0
      %1383 = vmatprep.subr.bf16.mxu0 0
      %1384 = vmatpush1.bf16.msra.mxu0 0
      %1385 = vmatprep.subr.bf16.mxu0 0
      %1386 = vmatpush1.bf16.msra.mxu0 0
      %1387 = vmatprep.subr.bf16.mxu0 0
      %1388 = vmatpush1.bf16.msra.mxu0 0
      %1389 = vmatprep.subr.bf16.mxu0 0
      %1390 = vmatpush1.bf16.msra.mxu0 0
      %1391 = vmatprep.subr.bf16.mxu0 0
      %1392 = vmatpush1.bf16.msra.mxu0 0
      %1393 = vmatprep.subr.bf16.mxu0 0
      %1394 = vmatpush1.bf16.msra.mxu0 0
      %1395 = vmatprep.subr.bf16.mxu0 0
      %1396 = vmatpush1.bf16.msra.mxu0 0
      %1397 = vmatprep.subr.bf16.mxu0 0
      %1398 = vmatpush1.bf16.msra.mxu0 0
      %1399 = vmatprep.subr.bf16.mxu0 0
      %1400 = vmatpush1.bf16.msra.mxu0 0
      %1401 = vmatprep.subr.bf16.mxu0 0
      %1402 = vmatpush1.bf16.msra.mxu0 0
      %1403 = vmatprep.subr.bf16.mxu0 0
      %1404 = vmatpush1.bf16.msra.mxu0 0
      %1405 = vmatprep.subr.bf16.mxu0 0
      %1406 = vmatpush1.bf16.msra.mxu0 0
      %1407 = vmatprep.subr.bf16.mxu0 0
      %1408 = vmatpush1.bf16.msra.mxu0 0
      %1409 = vmatprep.mubr.bf16.mxu0 0
      %1410 = vmatmul.mubr.bf16.gmra.mrb[0].mxu0 %v1363
      %v1411 = vpop.f32.mrb[0].mxu0
      %v1412 = vadd.f32 0.0, %v1411
      %v1413 = vpop.f32.mrb[0].mxu0
      %v1414 = vadd.f32 0.0, %v1413
      %v1415 = vpop.f32.mrb[0].mxu0
      %v1416 = vpop.f32.mrb[0].mxu0
      %1417 = vdwg.mxu0
      %1418 = vmatprep.subr.bf16.mxu0 %v1375
      %1419 = vmatpush1.bf16.msra.mxu0 %v1372
      %1420 = vmatprep.subr.bf16.mxu0 0
      %1421 = vmatpush1.bf16.msra.mxu0 0
      %1422 = vmatprep.subr.bf16.mxu0 0
      %1423 = vmatpush1.bf16.msra.mxu0 0
      %1424 = vmatprep.subr.bf16.mxu0 0
      %1425 = vmatpush1.bf16.msra.mxu0 0
      %1426 = vmatprep.subr.bf16.mxu0 0
      %1427 = vmatpush1.bf16.msra.mxu0 0
      %1428 = vmatprep.subr.bf16.mxu0 0
      %1429 = vmatpush1.bf16.msra.mxu0 0
      %1430 = vmatprep.subr.bf16.mxu0 0
      %1431 = vmatpush1.bf16.msra.mxu0 0
      %1432 = vmatprep.subr.bf16.mxu0 0
      %1433 = vmatpush1.bf16.msra.mxu0 0
      %1434 = vmatprep.subr.bf16.mxu0 0
      %1435 = vmatpush1.bf16.msra.mxu0 0
      %1436 = vmatprep.subr.bf16.mxu0 0
      %1437 = vmatpush1.bf16.msra.mxu0 0
      %1438 = vmatprep.subr.bf16.mxu0 0
      %1439 = vmatpush1.bf16.msra.mxu0 0
      %1440 = vmatprep.subr.bf16.mxu0 0
      %1441 = vmatpush1.bf16.msra.mxu0 0
      %1442 = vmatprep.subr.bf16.mxu0 0
      %1443 = vmatpush1.bf16.msra.mxu0 0
      %1444 = vmatprep.subr.bf16.mxu0 0
      %1445 = vmatpush1.bf16.msra.mxu0 0
      %1446 = vmatprep.subr.bf16.mxu0 0
      %1447 = vmatpush1.bf16.msra.mxu0 0
      %1448 = vmatprep.subr.bf16.mxu0 0
      %1449 = vmatpush1.bf16.msra.mxu0 0
      %1450 = vmatprep.mubr.bf16.mxu0 0
      %1451 = vmatmul.mubr.bf16.gmra.mrb[0].mxu0 %v1363
      %v1452 = vpop.f32.mrb[0].mxu0
      %v1453 = vadd.f32 0.0, %v1452
      %v1454 = vpop.f32.mrb[0].mxu0
      %v1455 = vadd.f32 0.0, %v1454
      %v1456 = vpop.f32.mrb[0].mxu0
      %v1457 = vpop.f32.mrb[0].mxu0
      %1458 = vdwg.mxu0
      %v1459 = vadd.f32 %v1312, %v1412
      %v1460 = vadd.f32 %v1313, %v1414
      %v1461 = vadd.f32 %v1314, %v1453
      %v1462 = vadd.f32 %v1315, %v1455
      %s1463 = scalar_lea.vmem %s2, 12
      %v1464 = vld [vmem:[%s1463] sm:$0x3]
      %v1465 = vmul.bf16 %v1464, %v631
      %v1466 = vld [vmem:[#allocation2] sm:$0xff]
      %v1467 = vld [vmem:[#allocation2 + $0x8] sm:$0x3]
      %v1470 = vcombine.high %v1466, %v1466
      %v1472 = vunpack.c.l.s4 1983009808
      %v1473 = vunpack.c.0.s8 %v1472
      %v1474 = vlaneseq
      %v1475 = vshrl.u32 %v1474, 7
      %v1476 = vsub.s32 %v1473, %v1475
      %v1477 = vrot.slane %v1466, %v1476
      %v1479 = vunpack.c.l.s4 1983009808
      %v1480 = vunpack.c.0.s8 %v1479
      %v1481 = vlaneseq
      %v1482 = vshrl.u32 %v1481, 7
      %v1483 = vsub.s32 %v1480, %v1482
      %v1484 = vrot.slane %v1470, %v1483
      %v1485 = vcombine.high %v1477, %v1477
      %v1486 = vcombine.high %v1484, %v1484
      %v1488 = vunpack.c.l.s4 1983009808
      %v1489 = vunpack.c.0.s8 %v1488
      %v1490 = vlaneseq
      %v1491 = vshrl.u32 %v1490, 7
      %v1492 = vsub.s32 %v1489, %v1491
      %v1493 = vrot.slane %v1467, %v1492
      %1494 = vrot.lane.b32.xlu0 %v1477, 100
      %v1495 = vpop.permute.xlu0 %1494
      %1496 = vrot.lane.b32.xlu0 %v1485, 100
      %v1497 = vpop.permute.xlu0 %1496
      %1498 = vrot.lane.b32.xlu0 %v1484, 100
      %v1499 = vpop.permute.xlu0 %1498
      %1500 = vrot.lane.b32.xlu0 %v1486, 100
      %v1501 = vpop.permute.xlu0 %1500
      %1502 = vrot.lane.b32.xlu0 %v1493, 100
      %v1503 = vpop.permute.xlu0 %1502
      %vm1504 = vcmask 818176
      %v1505 = vsel %vm1504, %v1495, %v1497
      %v1506 = vsel %vm1504, %v1497, %v1499
      %v1507 = vsel %vm1504, %v1499, %v1501
      %v1508 = vsel %vm1504, %v1501, %v1503
      %v1510 = vsel %vm679, %v1465, 0
      %v1513 = vsel %vm683, %v1505, 0
      %v1516 = vsel %vm683, %v1506, 0
      %v1519 = vsel %vm683, %v1507, 0
      %v1522 = vsel %vm683, %v1508, 0
      %1524 = vmatprep.subr.bf16.mxu0 %v1516
      %1525 = vmatpush1.bf16.msra.mxu0 %v1513
      %1526 = vmatprep.subr.bf16.mxu0 0
      %1527 = vmatpush1.bf16.msra.mxu0 0
      %1528 = vmatprep.subr.bf16.mxu0 0
      %1529 = vmatpush1.bf16.msra.mxu0 0
      %1530 = vmatprep.subr.bf16.mxu0 0
      %1531 = vmatpush1.bf16.msra.mxu0 0
      %1532 = vmatprep.subr.bf16.mxu0 0
      %1533 = vmatpush1.bf16.msra.mxu0 0
      %1534 = vmatprep.subr.bf16.mxu0 0
      %1535 = vmatpush1.bf16.msra.mxu0 0
      %1536 = vmatprep.subr.bf16.mxu0 0
      %1537 = vmatpush1.bf16.msra.mxu0 0
      %1538 = vmatprep.subr.bf16.mxu0 0
      %1539 = vmatpush1.bf16.msra.mxu0 0
      %1540 = vmatprep.subr.bf16.mxu0 0
      %1541 = vmatpush1.bf16.msra.mxu0 0
      %1542 = vmatprep.subr.bf16.mxu0 0
      %1543 = vmatpush1.bf16.msra.mxu0 0
      %1544 = vmatprep.subr.bf16.mxu0 0
      %1545 = vmatpush1.bf16.msra.mxu0 0
      %1546 = vmatprep.subr.bf16.mxu0 0
      %1547 = vmatpush1.bf16.msra.mxu0 0
      %1548 = vmatprep.subr.bf16.mxu0 0
      %1549 = vmatpush1.bf16.msra.mxu0 0
      %1550 = vmatprep.subr.bf16.mxu0 0
      %1551 = vmatpush1.bf16.msra.mxu0 0
      %1552 = vmatprep.subr.bf16.mxu0 0
      %1553 = vmatpush1.bf16.msra.mxu0 0
      %1554 = vmatprep.subr.bf16.mxu0 0
      %1555 = vmatpush1.bf16.msra.mxu0 0
      %1556 = vmatprep.mubr.bf16.mxu0 0
      %1557 = vmatmul.mubr.bf16.gmra.mrb[0].mxu0 %v1510
      %v1558 = vpop.f32.mrb[0].mxu0
      %v1559 = vadd.f32 0.0, %v1558
      %v1560 = vpop.f32.mrb[0].mxu0
      %v1561 = vadd.f32 0.0, %v1560
      %v1562 = vpop.f32.mrb[0].mxu0
      %v1563 = vpop.f32.mrb[0].mxu0
      %1564 = vdwg.mxu0
      %1565 = vmatprep.subr.bf16.mxu0 %v1522
      %1566 = vmatpush1.bf16.msra.mxu0 %v1519
      %1567 = vmatprep.subr.bf16.mxu0 0
      %1568 = vmatpush1.bf16.msra.mxu0 0
      %1569 = vmatprep.subr.bf16.mxu0 0
      %1570 = vmatpush1.bf16.msra.mxu0 0
      %1571 = vmatprep.subr.bf16.mxu0 0
      %1572 = vmatpush1.bf16.msra.mxu0 0
      %1573 = vmatprep.subr.bf16.mxu0 0
      %1574 = vmatpush1.bf16.msra.mxu0 0
      %1575 = vmatprep.subr.bf16.mxu0 0
      %1576 = vmatpush1.bf16.msra.mxu0 0
      %1577 = vmatprep.subr.bf16.mxu0 0
      %1578 = vmatpush1.bf16.msra.mxu0 0
      %1579 = vmatprep.subr.bf16.mxu0 0
      %1580 = vmatpush1.bf16.msra.mxu0 0
      %1581 = vmatprep.subr.bf16.mxu0 0
      %1582 = vmatpush1.bf16.msra.mxu0 0
      %1583 = vmatprep.subr.bf16.mxu0 0
      %1584 = vmatpush1.bf16.msra.mxu0 0
      %1585 = vmatprep.subr.bf16.mxu0 0
      %1586 = vmatpush1.bf16.msra.mxu0 0
      %1587 = vmatprep.subr.bf16.mxu0 0
      %1588 = vmatpush1.bf16.msra.mxu0 0
      %1589 = vmatprep.subr.bf16.mxu0 0
      %1590 = vmatpush1.bf16.msra.mxu0 0
      %1591 = vmatprep.subr.bf16.mxu0 0
      %1592 = vmatpush1.bf16.msra.mxu0 0
      %1593 = vmatprep.subr.bf16.mxu0 0
      %1594 = vmatpush1.bf16.msra.mxu0 0
      %1595 = vmatprep.subr.bf16.mxu0 0
      %1596 = vmatpush1.bf16.msra.mxu0 0
      %1597 = vmatprep.mubr.bf16.mxu0 0
      %1598 = vmatmul.mubr.bf16.gmra.mrb[0].mxu0 %v1510
      %v1599 = vpop.f32.mrb[0].mxu0
      %v1600 = vadd.f32 0.0, %v1599
      %v1601 = vpop.f32.mrb[0].mxu0
      %v1602 = vadd.f32 0.0, %v1601
      %v1603 = vpop.f32.mrb[0].mxu0
      %v1604 = vpop.f32.mrb[0].mxu0
      %1605 = vdwg.mxu0
      %v1606 = vadd.f32 %v1459, %v1559
      %v1607 = vadd.f32 %v1460, %v1561
      %v1608 = vadd.f32 %v1461, %v1600
      %v1609 = vadd.f32 %v1462, %v1602
      %s1610 = scalar_lea.vmem %s2, 14
      %v1611 = vld [vmem:[%s1610] sm:$0x3]
      %v1612 = vmul.bf16 %v1611, %v631
      %v1613 = vld [vmem:[#allocation2] sm:$0xff]
      %v1614 = vld [vmem:[#allocation2 + $0x8] sm:$0x3]
      %v1617 = vcombine.high %v1613, %v1613
      %v1619 = vunpack.c.l.s4 1983009808
      %v1620 = vunpack.c.0.s8 %v1619
      %v1621 = vlaneseq
      %v1622 = vshrl.u32 %v1621, 7
      %v1623 = vsub.s32 %v1620, %v1622
      %v1624 = vrot.slane %v1613, %v1623
      %v1626 = vunpack.c.l.s4 1983009808
      %v1627 = vunpack.c.0.s8 %v1626
      %v1628 = vlaneseq
      %v1629 = vshrl.u32 %v1628, 7
      %v1630 = vsub.s32 %v1627, %v1629
      %v1631 = vrot.slane %v1617, %v1630
      %v1632 = vcombine.high %v1624, %v1624
      %v1633 = vcombine.high %v1631, %v1631
      %v1635 = vunpack.c.l.s4 1983009808
      %v1636 = vunpack.c.0.s8 %v1635
      %v1637 = vlaneseq
      %v1638 = vshrl.u32 %v1637, 7
      %v1639 = vsub.s32 %v1636, %v1638
      %v1640 = vrot.slane %v1614, %v1639
      %1641 = vrot.lane.b32.xlu0 %v1624, 99
      %v1642 = vpop.permute.xlu0 %1641
      %1643 = vrot.lane.b32.xlu0 %v1632, 99
      %v1644 = vpop.permute.xlu0 %1643
      %1645 = vrot.lane.b32.xlu0 %v1631, 99
      %v1646 = vpop.permute.xlu0 %1645
      %1647 = vrot.lane.b32.xlu0 %v1633, 99
      %v1648 = vpop.permute.xlu0 %1647
      %1649 = vrot.lane.b32.xlu0 %v1640, 99
      %v1650 = vpop.permute.xlu0 %1649
      %vm1651 = vcmask 809984
      %v1652 = vsel %vm1651, %v1642, %v1644
      %v1653 = vsel %vm1651, %v1644, %v1646
      %v1654 = vsel %vm1651, %v1646, %v1648
      %v1655 = vsel %vm1651, %v1648, %v1650
      %v1657 = vsel %vm679, %v1612, 0
      %v1660 = vsel %vm683, %v1652, 0
      %v1663 = vsel %vm683, %v1653, 0
      %v1666 = vsel %vm683, %v1654, 0
      %v1669 = vsel %vm683, %v1655, 0
      %1671 = vmatprep.subr.bf16.mxu0 %v1663
      %1672 = vmatpush1.bf16.msra.mxu0 %v1660
      %1673 = vmatprep.subr.bf16.mxu0 0
      %1674 = vmatpush1.bf16.msra.mxu0 0
      %1675 = vmatprep.subr.bf16.mxu0 0
      %1676 = vmatpush1.bf16.msra.mxu0 0
      %1677 = vmatprep.subr.bf16.mxu0 0
      %1678 = vmatpush1.bf16.msra.mxu0 0
      %1679 = vmatprep.subr.bf16.mxu0 0
      %1680 = vmatpush1.bf16.msra.mxu0 0
      %1681 = vmatprep.subr.bf16.mxu0 0
      %1682 = vmatpush1.bf16.msra.mxu0 0
      %1683 = vmatprep.subr.bf16.mxu0 0
      %1684 = vmatpush1.bf16.msra.mxu0 0
      %1685 = vmatprep.subr.bf16.mxu0 0
      %1686 = vmatpush1.bf16.msra.mxu0 0
      %1687 = vmatprep.subr.bf16.mxu0 0
      %1688 = vmatpush1.bf16.msra.mxu0 0
      %1689 = vmatprep.subr.bf16.mxu0 0
      %1690 = vmatpush1.bf16.msra.mxu0 0
      %1691 = vmatprep.subr.bf16.mxu0 0
      %1692 = vmatpush1.bf16.msra.mxu0 0
      %1693 = vmatprep.subr.bf16.mxu0 0
      %1694 = vmatpush1.bf16.msra.mxu0 0
      %1695 = vmatprep.subr.bf16.mxu0 0
      %1696 = vmatpush1.bf16.msra.mxu0 0
      %1697 = vmatprep.subr.bf16.mxu0 0
      %1698 = vmatpush1.bf16.msra.mxu0 0
      %1699 = vmatprep.subr.bf16.mxu0 0
      %1700 = vmatpush1.bf16.msra.mxu0 0
      %1701 = vmatprep.subr.bf16.mxu0 0
      %1702 = vmatpush1.bf16.msra.mxu0 0
      %1703 = vmatprep.mubr.bf16.mxu0 0
      %1704 = vmatmul.mubr.bf16.gmra.mrb[0].mxu0 %v1657
      %v1705 = vpop.f32.mrb[0].mxu0
      %v1706 = vadd.f32 0.0, %v1705
      %v1707 = vpop.f32.mrb[0].mxu0
      %v1708 = vadd.f32 0.0, %v1707
      %v1709 = vpop.f32.mrb[0].mxu0
      %v1710 = vpop.f32.mrb[0].mxu0
      %1711 = vdwg.mxu0
      %1712 = vmatprep.subr.bf16.mxu0 %v1669
      %1713 = vmatpush1.bf16.msra.mxu0 %v1666
      %1714 = vmatprep.subr.bf16.mxu0 0
      %1715 = vmatpush1.bf16.msra.mxu0 0
      %1716 = vmatprep.subr.bf16.mxu0 0
      %1717 = vmatpush1.bf16.msra.mxu0 0
      %1718 = vmatprep.subr.bf16.mxu0 0
      %1719 = vmatpush1.bf16.msra.mxu0 0
      %1720 = vmatprep.subr.bf16.mxu0 0
      %1721 = vmatpush1.bf16.msra.mxu0 0
      %1722 = vmatprep.subr.bf16.mxu0 0
      %1723 = vmatpush1.bf16.msra.mxu0 0
      %1724 = vmatprep.subr.bf16.mxu0 0
      %1725 = vmatpush1.bf16.msra.mxu0 0
      %1726 = vmatprep.subr.bf16.mxu0 0
      %1727 = vmatpush1.bf16.msra.mxu0 0
      %1728 = vmatprep.subr.bf16.mxu0 0
      %1729 = vmatpush1.bf16.msra.mxu0 0
      %1730 = vmatprep.subr.bf16.mxu0 0
      %1731 = vmatpush1.bf16.msra.mxu0 0
      %1732 = vmatprep.subr.bf16.mxu0 0
      %1733 = vmatpush1.bf16.msra.mxu0 0
      %1734 = vmatprep.subr.bf16.mxu0 0
      %1735 = vmatpush1.bf16.msra.mxu0 0
      %1736 = vmatprep.subr.bf16.mxu0 0
      %1737 = vmatpush1.bf16.msra.mxu0 0
      %1738 = vmatprep.subr.bf16.mxu0 0
      %1739 = vmatpush1.bf16.msra.mxu0 0
      %1740 = vmatprep.subr.bf16.mxu0 0
      %1741 = vmatpush1.bf16.msra.mxu0 0
      %1742 = vmatprep.subr.bf16.mxu0 0
      %1743 = vmatpush1.bf16.msra.mxu0 0
      %1744 = vmatprep.mubr.bf16.mxu0 0
      %1745 = vmatmul.mubr.bf16.gmra.mrb[0].mxu0 %v1657
      %v1746 = vpop.f32.mrb[0].mxu0
      %v1747 = vadd.f32 0.0, %v1746
      %v1748 = vpop.f32.mrb[0].mxu0
      %v1749 = vadd.f32 0.0, %v1748
      %v1750 = vpop.f32.mrb[0].mxu0
      %v1751 = vpop.f32.mrb[0].mxu0
      %1752 = vdwg.mxu0
      %v1753 = vadd.f32 %v1606, %v1706
      %v1754 = vadd.f32 %v1607, %v1708
      %v1755 = vadd.f32 %v1608, %v1747
      %v1756 = vadd.f32 %v1609, %v1749
      %s1757 = scalar_lea.vmem %s2, 16
      %v1758 = vld [vmem:[%s1757] sm:$0x3]
      %v1759 = vmul.bf16 %v1758, %v631
      %v1760 = vld [vmem:[#allocation2] sm:$0xff]
      %v1761 = vld [vmem:[#allocation2 + $0x8] sm:$0x3]
      %v1764 = vcombine.high %v1760, %v1760
      %v1766 = vunpack.c.l.s4 1983009808
      %v1767 = vunpack.c.0.s8 %v1766
      %v1768 = vlaneseq
      %v1769 = vshrl.u32 %v1768, 7
      %v1770 = vsub.s32 %v1767, %v1769
      %v1771 = vrot.slane %v1760, %v1770
      %v1773 = vunpack.c.l.s4 1983009808
      %v1774 = vunpack.c.0.s8 %v1773
      %v1775 = vlaneseq
      %v1776 = vshrl.u32 %v1775, 7
      %v1777 = vsub.s32 %v1774, %v1776
      %v1778 = vrot.slane %v1764, %v1777
      %v1779 = vcombine.high %v1771, %v1771
      %v1780 = vcombine.high %v1778, %v1778
      %v1782 = vunpack.c.l.s4 1983009808
      %v1783 = vunpack.c.0.s8 %v1782
      %v1784 = vlaneseq
      %v1785 = vshrl.u32 %v1784, 7
      %v1786 = vsub.s32 %v1783, %v1785
      %v1787 = vrot.slane %v1761, %v1786
      %1788 = vrot.lane.b32.xlu0 %v1771, 98
      %v1789 = vpop.permute.xlu0 %1788
      %1790 = vrot.lane.b32.xlu0 %v1779, 98
      %v1791 = vpop.permute.xlu0 %1790
      %1792 = vrot.lane.b32.xlu0 %v1778, 98
      %v1793 = vpop.permute.xlu0 %1792
      %1794 = vrot.lane.b32.xlu0 %v1780, 98
      %v1795 = vpop.permute.xlu0 %1794
      %1796 = vrot.lane.b32.xlu0 %v1787, 98
      %v1797 = vpop.permute.xlu0 %1796
      %vm1798 = vcmask 801792
      %v1799 = vsel %vm1798, %v1789, %v1791
      %v1800 = vsel %vm1798, %v1791, %v1793
      %v1801 = vsel %vm1798, %v1793, %v1795
      %v1802 = vsel %vm1798, %v1795, %v1797
      %v1804 = vsel %vm679, %v1759, 0
      %v1807 = vsel %vm683, %v1799, 0
      %v1810 = vsel %vm683, %v1800, 0
      %v1813 = vsel %vm683, %v1801, 0
      %v1816 = vsel %vm683, %v1802, 0
      %1818 = vmatprep.subr.bf16.mxu0 %v1810
      %1819 = vmatpush1.bf16.msra.mxu0 %v1807
      %1820 = vmatprep.subr.bf16.mxu0 0
      %1821 = vmatpush1.bf16.msra.mxu0 0
      %1822 = vmatprep.subr.bf16.mxu0 0
      %1823 = vmatpush1.bf16.msra.mxu0 0
      %1824 = vmatprep.subr.bf16.mxu0 0
      %1825 = vmatpush1.bf16.msra.mxu0 0
      %1826 = vmatprep.subr.bf16.mxu0 0
      %1827 = vmatpush1.bf16.msra.mxu0 0
      %1828 = vmatprep.subr.bf16.mxu0 0
      %1829 = vmatpush1.bf16.msra.mxu0 0
      %1830 = vmatprep.subr.bf16.mxu0 0
      %1831 = vmatpush1.bf16.msra.mxu0 0
      %1832 = vmatprep.subr.bf16.mxu0 0
      %1833 = vmatpush1.bf16.msra.mxu0 0
      %1834 = vmatprep.subr.bf16.mxu0 0
      %1835 = vmatpush1.bf16.msra.mxu0 0
      %1836 = vmatprep.subr.bf16.mxu0 0
      %1837 = vmatpush1.bf16.msra.mxu0 0
      %1838 = vmatprep.subr.bf16.mxu0 0
      %1839 = vmatpush1.bf16.msra.mxu0 0
      %1840 = vmatprep.subr.bf16.mxu0 0
      %1841 = vmatpush1.bf16.msra.mxu0 0
      %1842 = vmatprep.subr.bf16.mxu0 0
      %1843 = vmatpush1.bf16.msra.mxu0 0
      %1844 = vmatprep.subr.bf16.mxu0 0
      %1845 = vmatpush1.bf16.msra.mxu0 0
      %1846 = vmatprep.subr.bf16.mxu0 0
      %1847 = vmatpush1.bf16.msra.mxu0 0
      %1848 = vmatprep.subr.bf16.mxu0 0
      %1849 = vmatpush1.bf16.msra.mxu0 0
      %1850 = vmatprep.mubr.bf16.mxu0 0
      %1851 = vmatmul.mubr.bf16.gmra.mrb[0].mxu0 %v1804
      %v1852 = vpop.f32.mrb[0].mxu0
      %v1853 = vadd.f32 0.0, %v1852
      %v1854 = vpop.f32.mrb[0].mxu0
      %v1855 = vadd.f32 0.0, %v1854
      %v1856 = vpop.f32.mrb[0].mxu0
      %v1857 = vpop.f32.mrb[0].mxu0
      %1858 = vdwg.mxu0
      %1859 = vmatprep.subr.bf16.mxu0 %v1816
      %1860 = vmatpush1.bf16.msra.mxu0 %v1813
      %1861 = vmatprep.subr.bf16.mxu0 0
      %1862 = vmatpush1.bf16.msra.mxu0 0
      %1863 = vmatprep.subr.bf16.mxu0 0
      %1864 = vmatpush1.bf16.msra.mxu0 0
      %1865 = vmatprep.subr.bf16.mxu0 0
      %1866 = vmatpush1.bf16.msra.mxu0 0
      %1867 = vmatprep.subr.bf16.mxu0 0
      %1868 = vmatpush1.bf16.msra.mxu0 0
      %1869 = vmatprep.subr.bf16.mxu0 0
      %1870 = vmatpush1.bf16.msra.mxu0 0
      %1871 = vmatprep.subr.bf16.mxu0 0
      %1872 = vmatpush1.bf16.msra.mxu0 0
      %1873 = vmatprep.subr.bf16.mxu0 0
      %1874 = vmatpush1.bf16.msra.mxu0 0
      %1875 = vmatprep.subr.bf16.mxu0 0
      %1876 = vmatpush1.bf16.msra.mxu0 0
      %1877 = vmatprep.subr.bf16.mxu0 0
      %1878 = vmatpush1.bf16.msra.mxu0 0
      %1879 = vmatprep.subr.bf16.mxu0 0
      %1880 = vmatpush1.bf16.msra.mxu0 0
      %1881 = vmatprep.subr.bf16.mxu0 0
      %1882 = vmatpush1.bf16.msra.mxu0 0
      %1883 = vmatprep.subr.bf16.mxu0 0
      %1884 = vmatpush1.bf16.msra.mxu0 0
      %1885 = vmatprep.subr.bf16.mxu0 0
      %1886 = vmatpush1.bf16.msra.mxu0 0
      %1887 = vmatprep.subr.bf16.mxu0 0
      %1888 = vmatpush1.bf16.msra.mxu0 0
      %1889 = vmatprep.subr.bf16.mxu0 0
      %1890 = vmatpush1.bf16.msra.mxu0 0
      %1891 = vmatprep.mubr.bf16.mxu0 0
      %1892 = vmatmul.mubr.bf16.gmra.mrb[0].mxu0 %v1804
      %v1893 = vpop.f32.mrb[0].mxu0
      %v1894 = vadd.f32 0.0, %v1893
      %v1895 = vpop.f32.mrb[0].mxu0
      %v1896 = vadd.f32 0.0, %v1895
      %v1897 = vpop.f32.mrb[0].mxu0
      %v1898 = vpop.f32.mrb[0].mxu0
      %1899 = vdwg.mxu0
      %v1900 = vadd.f32 %v1753, %v1853
      %v1901 = vadd.f32 %v1754, %v1855
      %v1902 = vadd.f32 %v1755, %v1894
      %v1903 = vadd.f32 %v1756, %v1896
      %s1904 = scalar_lea.vmem %s2, 18
      %v1905 = vld [vmem:[%s1904] sm:$0x3]
      %v1906 = vmul.bf16 %v1905, %v631
      %v1907 = vld [vmem:[#allocation2 + $0x2] sm:$0xff]
      %v1908 = vld [vmem:[#allocation2 + $0xa] sm:$0x3]
      %v1911 = vcombine.high %v1907, %v1907
      %v1913 = vunpack.c.l.s4 1983009808
      %v1914 = vunpack.c.0.s8 %v1913
      %v1915 = vlaneseq
      %v1916 = vshrl.u32 %v1915, 7
      %v1917 = vsub.s32 %v1914, %v1916
      %v1918 = vrot.slane %v1907, %v1917
      %v1920 = vunpack.c.l.s4 1983009808
      %v1921 = vunpack.c.0.s8 %v1920
      %v1922 = vlaneseq
      %v1923 = vshrl.u32 %v1922, 7
      %v1924 = vsub.s32 %v1921, %v1923
      %v1925 = vrot.slane %v1911, %v1924
      %v1926 = vcombine.high %v1918, %v1918
      %v1927 = vcombine.high %v1925, %v1925
      %v1929 = vunpack.c.l.s4 1983009808
      %v1930 = vunpack.c.0.s8 %v1929
      %v1931 = vlaneseq
      %v1932 = vshrl.u32 %v1931, 7
      %v1933 = vsub.s32 %v1930, %v1932
      %v1934 = vrot.slane %v1908, %v1933
      %1935 = vrot.lane.b32.xlu0 %v1918, 60
      %v1936 = vpop.permute.xlu0 %1935
      %1937 = vrot.lane.b32.xlu0 %v1926, 60
      %v1938 = vpop.permute.xlu0 %1937
      %1939 = vrot.lane.b32.xlu0 %v1925, 60
      %v1940 = vpop.permute.xlu0 %1939
      %1941 = vrot.lane.b32.xlu0 %v1927, 60
      %v1942 = vpop.permute.xlu0 %1941
      %1943 = vrot.lane.b32.xlu0 %v1934, 60
      %v1944 = vpop.permute.xlu0 %1943
      %vm1945 = vcmask 490496
      %v1946 = vsel %vm1945, %v1936, %v1938
      %v1947 = vsel %vm1945, %v1938, %v1940
      %v1948 = vsel %vm1945, %v1940, %v1942
      %v1949 = vsel %vm1945, %v1942, %v1944
      %v1951 = vsel %vm679, %v1906, 0
      %v1954 = vsel %vm683, %v1946, 0
      %v1957 = vsel %vm683, %v1947, 0
      %v1960 = vsel %vm683, %v1948, 0
      %v1963 = vsel %vm683, %v1949, 0
      %1965 = vmatprep.subr.bf16.mxu0 %v1957
      %1966 = vmatpush1.bf16.msra.mxu0 %v1954
      %1967 = vmatprep.subr.bf16.mxu0 0
      %1968 = vmatpush1.bf16.msra.mxu0 0
      %1969 = vmatprep.subr.bf16.mxu0 0
      %1970 = vmatpush1.bf16.msra.mxu0 0
      %1971 = vmatprep.subr.bf16.mxu0 0
      %1972 = vmatpush1.bf16.msra.mxu0 0
      %1973 = vmatprep.subr.bf16.mxu0 0
      %1974 = vmatpush1.bf16.msra.mxu0 0
      %1975 = vmatprep.subr.bf16.mxu0 0
      %1976 = vmatpush1.bf16.msra.mxu0 0
      %1977 = vmatprep.subr.bf16.mxu0 0
      %1978 = vmatpush1.bf16.msra.mxu0 0
      %1979 = vmatprep.subr.bf16.mxu0 0
      %1980 = vmatpush1.bf16.msra.mxu0 0
      %1981 = vmatprep.subr.bf16.mxu0 0
      %1982 = vmatpush1.bf16.msra.mxu0 0
      %1983 = vmatprep.subr.bf16.mxu0 0
      %1984 = vmatpush1.bf16.msra.mxu0 0
      %1985 = vmatprep.subr.bf16.mxu0 0
      %1986 = vmatpush1.bf16.msra.mxu0 0
      %1987 = vmatprep.subr.bf16.mxu0 0
      %1988 = vmatpush1.bf16.msra.mxu0 0
      %1989 = vmatprep.subr.bf16.mxu0 0
      %1990 = vmatpush1.bf16.msra.mxu0 0
      %1991 = vmatprep.subr.bf16.mxu0 0
      %1992 = vmatpush1.bf16.msra.mxu0 0
      %1993 = vmatprep.subr.bf16.mxu0 0
      %1994 = vmatpush1.bf16.msra.mxu0 0
      %1995 = vmatprep.subr.bf16.mxu0 0
      %1996 = vmatpush1.bf16.msra.mxu0 0
      %1997 = vmatprep.mubr.bf16.mxu0 0
      %1998 = vmatmul.mubr.bf16.gmra.mrb[0].mxu0 %v1951
      %v1999 = vpop.f32.mrb[0].mxu0
      %v2000 = vadd.f32 0.0, %v1999
      %v2001 = vpop.f32.mrb[0].mxu0
      %v2002 = vadd.f32 0.0, %v2001
      %v2003 = vpop.f32.mrb[0].mxu0
      %v2004 = vpop.f32.mrb[0].mxu0
      %2005 = vdwg.mxu0
      %2006 = vmatprep.subr.bf16.mxu0 %v1963
      %2007 = vmatpush1.bf16.msra.mxu0 %v1960
      %2008 = vmatprep.subr.bf16.mxu0 0
      %2009 = vmatpush1.bf16.msra.mxu0 0
      %2010 = vmatprep.subr.bf16.mxu0 0
      %2011 = vmatpush1.bf16.msra.mxu0 0
      %2012 = vmatprep.subr.bf16.mxu0 0
      %2013 = vmatpush1.bf16.msra.mxu0 0
      %2014 = vmatprep.subr.bf16.mxu0 0
      %2015 = vmatpush1.bf16.msra.mxu0 0
      %2016 = vmatprep.subr.bf16.mxu0 0
      %2017 = vmatpush1.bf16.msra.mxu0 0
      %2018 = vmatprep.subr.bf16.mxu0 0
      %2019 = vmatpush1.bf16.msra.mxu0 0
      %2020 = vmatprep.subr.bf16.mxu0 0
      %2021 = vmatpush1.bf16.msra.mxu0 0
      %2022 = vmatprep.subr.bf16.mxu0 0
      %2023 = vmatpush1.bf16.msra.mxu0 0
      %2024 = vmatprep.subr.bf16.mxu0 0
      %2025 = vmatpush1.bf16.msra.mxu0 0
      %2026 = vmatprep.subr.bf16.mxu0 0
      %2027 = vmatpush1.bf16.msra.mxu0 0
      %2028 = vmatprep.subr.bf16.mxu0 0
      %2029 = vmatpush1.bf16.msra.mxu0 0
      %2030 = vmatprep.subr.bf16.mxu0 0
      %2031 = vmatpush1.bf16.msra.mxu0 0
      %2032 = vmatprep.subr.bf16.mxu0 0
      %2033 = vmatpush1.bf16.msra.mxu0 0
      %2034 = vmatprep.subr.bf16.mxu0 0
      %2035 = vmatpush1.bf16.msra.mxu0 0
      %2036 = vmatprep.subr.bf16.mxu0 0
      %2037 = vmatpush1.bf16.msra.mxu0 0
      %2038 = vmatprep.mubr.bf16.mxu0 0
      %2039 = vmatmul.mubr.bf16.gmra.mrb[0].mxu0 %v1951
      %v2040 = vpop.f32.mrb[0].mxu0
      %v2041 = vadd.f32 0.0, %v2040
      %v2042 = vpop.f32.mrb[0].mxu0
      %v2043 = vadd.f32 0.0, %v2042
      %v2044 = vpop.f32.mrb[0].mxu0
      %v2045 = vpop.f32.mrb[0].mxu0
      %2046 = vdwg.mxu0
      %v2047 = vadd.f32 %v1900, %v2000
      %v2048 = vadd.f32 %v1901, %v2002
      %v2049 = vadd.f32 %v1902, %v2041
      %v2050 = vadd.f32 %v1903, %v2043
      %s2051 = scalar_lea.vmem %s2, 20
      %v2052 = vld [vmem:[%s2051] sm:$0x3]
      %v2053 = vmul.bf16 %v2052, %v631
      %v2054 = vld [vmem:[#allocation2 + $0x2] sm:$0xff]
      %v2055 = vld [vmem:[#allocation2 + $0xa] sm:$0x3]
      %v2058 = vcombine.high %v2054, %v2054
      %v2060 = vunpack.c.l.s4 1983009808
      %v2061 = vunpack.c.0.s8 %v2060
      %v2062 = vlaneseq
      %v2063 = vshrl.u32 %v2062, 7
      %v2064 = vsub.s32 %v2061, %v2063
      %v2065 = vrot.slane %v2054, %v2064
      %v2067 = vunpack.c.l.s4 1983009808
      %v2068 = vunpack.c.0.s8 %v2067
      %v2069 = vlaneseq
      %v2070 = vshrl.u32 %v2069, 7
      %v2071 = vsub.s32 %v2068, %v2070
      %v2072 = vrot.slane %v2058, %v2071
      %v2073 = vcombine.high %v2065, %v2065
      %v2074 = vcombine.high %v2072, %v2072
      %v2076 = vunpack.c.l.s4 1983009808
      %v2077 = vunpack.c.0.s8 %v2076
      %v2078 = vlaneseq
      %v2079 = vshrl.u32 %v2078, 7
      %v2080 = vsub.s32 %v2077, %v2079
      %v2081 = vrot.slane %v2055, %v2080
      %2082 = vrot.lane.b32.xlu0 %v2065, 59
      %v2083 = vpop.permute.xlu0 %2082
      %2084 = vrot.lane.b32.xlu0 %v2073, 59
      %v2085 = vpop.permute.xlu0 %2084
      %2086 = vrot.lane.b32.xlu0 %v2072, 59
      %v2087 = vpop.permute.xlu0 %2086
      %2088 = vrot.lane.b32.xlu0 %v2074, 59
      %v2089 = vpop.permute.xlu0 %2088
      %2090 = vrot.lane.b32.xlu0 %v2081, 59
      %v2091 = vpop.permute.xlu0 %2090
      %vm2092 = vcmask 482304
      %v2093 = vsel %vm2092, %v2083, %v2085
      %v2094 = vsel %vm2092, %v2085, %v2087
      %v2095 = vsel %vm2092, %v2087, %v2089
      %v2096 = vsel %vm2092, %v2089, %v2091
      %v2098 = vsel %vm679, %v2053, 0
      %v2101 = vsel %vm683, %v2093, 0
      %v2104 = vsel %vm683, %v2094, 0
      %v2107 = vsel %vm683, %v2095, 0
      %v2110 = vsel %vm683, %v2096, 0
      %2112 = vmatprep.subr.bf16.mxu0 %v2104
      %2113 = vmatpush1.bf16.msra.mxu0 %v2101
      %2114 = vmatprep.subr.bf16.mxu0 0
      %2115 = vmatpush1.bf16.msra.mxu0 0
      %2116 = vmatprep.subr.bf16.mxu0 0
      %2117 = vmatpush1.bf16.msra.mxu0 0
      %2118 = vmatprep.subr.bf16.mxu0 0
      %2119 = vmatpush1.bf16.msra.mxu0 0
      %2120 = vmatprep.subr.bf16.mxu0 0
      %2121 = vmatpush1.bf16.msra.mxu0 0
      %2122 = vmatprep.subr.bf16.mxu0 0
      %2123 = vmatpush1.bf16.msra.mxu0 0
      %2124 = vmatprep.subr.bf16.mxu0 0
      %2125 = vmatpush1.bf16.msra.mxu0 0
      %2126 = vmatprep.subr.bf16.mxu0 0
      %2127 = vmatpush1.bf16.msra.mxu0 0
      %2128 = vmatprep.subr.bf16.mxu0 0
      %2129 = vmatpush1.bf16.msra.mxu0 0
      %2130 = vmatprep.subr.bf16.mxu0 0
      %2131 = vmatpush1.bf16.msra.mxu0 0
      %2132 = vmatprep.subr.bf16.mxu0 0
      %2133 = vmatpush1.bf16.msra.mxu0 0
      %2134 = vmatprep.subr.bf16.mxu0 0
      %2135 = vmatpush1.bf16.msra.mxu0 0
      %2136 = vmatprep.subr.bf16.mxu0 0
      %2137 = vmatpush1.bf16.msra.mxu0 0
      %2138 = vmatprep.subr.bf16.mxu0 0
      %2139 = vmatpush1.bf16.msra.mxu0 0
      %2140 = vmatprep.subr.bf16.mxu0 0
      %2141 = vmatpush1.bf16.msra.mxu0 0
      %2142 = vmatprep.subr.bf16.mxu0 0
      %2143 = vmatpush1.bf16.msra.mxu0 0
      %2144 = vmatprep.mubr.bf16.mxu0 0
      %2145 = vmatmul.mubr.bf16.gmra.mrb[0].mxu0 %v2098
      %v2146 = vpop.f32.mrb[0].mxu0
      %v2147 = vadd.f32 0.0, %v2146
      %v2148 = vpop.f32.mrb[0].mxu0
      %v2149 = vadd.f32 0.0, %v2148
      %v2150 = vpop.f32.mrb[0].mxu0
      %v2151 = vpop.f32.mrb[0].mxu0
      %2152 = vdwg.mxu0
      %2153 = vmatprep.subr.bf16.mxu0 %v2110
      %2154 = vmatpush1.bf16.msra.mxu0 %v2107
      %2155 = vmatprep.subr.bf16.mxu0 0
      %2156 = vmatpush1.bf16.msra.mxu0 0
      %2157 = vmatprep.subr.bf16.mxu0 0
      %2158 = vmatpush1.bf16.msra.mxu0 0
      %2159 = vmatprep.subr.bf16.mxu0 0
      %2160 = vmatpush1.bf16.msra.mxu0 0
      %2161 = vmatprep.subr.bf16.mxu0 0
      %2162 = vmatpush1.bf16.msra.mxu0 0
      %2163 = vmatprep.subr.bf16.mxu0 0
      %2164 = vmatpush1.bf16.msra.mxu0 0
      %2165 = vmatprep.subr.bf16.mxu0 0
      %2166 = vmatpush1.bf16.msra.mxu0 0
      %2167 = vmatprep.subr.bf16.mxu0 0
      %2168 = vmatpush1.bf16.msra.mxu0 0
      %2169 = vmatprep.subr.bf16.mxu0 0
      %2170 = vmatpush1.bf16.msra.mxu0 0
      %2171 = vmatprep.subr.bf16.mxu0 0
      %2172 = vmatpush1.bf16.msra.mxu0 0
      %2173 = vmatprep.subr.bf16.mxu0 0
      %2174 = vmatpush1.bf16.msra.mxu0 0
      %2175 = vmatprep.subr.bf16.mxu0 0
      %2176 = vmatpush1.bf16.msra.mxu0 0
      %2177 = vmatprep.subr.bf16.mxu0 0
      %2178 = vmatpush1.bf16.msra.mxu0 0
      %2179 = vmatprep.subr.bf16.mxu0 0
      %2180 = vmatpush1.bf16.msra.mxu0 0
      %2181 = vmatprep.subr.bf16.mxu0 0
      %2182 = vmatpush1.bf16.msra.mxu0 0
      %2183 = vmatprep.subr.bf16.mxu0 0
      %2184 = vmatpush1.bf16.msra.mxu0 0
      %2185 = vmatprep.mubr.bf16.mxu0 0
      %2186 = vmatmul.mubr.bf16.gmra.mrb[0].mxu0 %v2098
      %v2187 = vpop.f32.mrb[0].mxu0
      %v2188 = vadd.f32 0.0, %v2187
      %v2189 = vpop.f32.mrb[0].mxu0
      %v2190 = vadd.f32 0.0, %v2189
      %v2191 = vpop.f32.mrb[0].mxu0
      %v2192 = vpop.f32.mrb[0].mxu0
      %2193 = vdwg.mxu0
      %v2194 = vadd.f32 %v2047, %v2147
      %v2195 = vadd.f32 %v2048, %v2149
      %v2196 = vadd.f32 %v2049, %v2188
      %v2197 = vadd.f32 %v2050, %v2190
      %s2198 = scalar_lea.vmem %s2, 22
      %v2199 = vld [vmem:[%s2198] sm:$0x3]
      %v2200 = vmul.bf16 %v2199, %v631
      %v2201 = vld [vmem:[#allocation2 + $0x2] sm:$0xff]
      %v2202 = vld [vmem:[#allocation2 + $0xa] sm:$0x3]
      %v2205 = vcombine.high %v2201, %v2201
      %v2207 = vunpack.c.l.s4 1983009808
      %v2208 = vunpack.c.0.s8 %v2207
      %v2209 = vlaneseq
      %v2210 = vshrl.u32 %v2209, 7
      %v2211 = vsub.s32 %v2208, %v2210
      %v2212 = vrot.slane %v2201, %v2211
      %v2214 = vunpack.c.l.s4 1983009808
      %v2215 = vunpack.c.0.s8 %v2214
      %v2216 = vlaneseq
      %v2217 = vshrl.u32 %v2216, 7
      %v2218 = vsub.s32 %v2215, %v2217
      %v2219 = vrot.slane %v2205, %v2218
      %v2220 = vcombine.high %v2212, %v2212
      %v2221 = vcombine.high %v2219, %v2219
      %v2223 = vunpack.c.l.s4 1983009808
      %v2224 = vunpack.c.0.s8 %v2223
      %v2225 = vlaneseq
      %v2226 = vshrl.u32 %v2225, 7
      %v2227 = vsub.s32 %v2224, %v2226
      %v2228 = vrot.slane %v2202, %v2227
      %2229 = vrot.lane.b32.xlu0 %v2212, 58
      %v2230 = vpop.permute.xlu0 %2229
      %2231 = vrot.lane.b32.xlu0 %v2220, 58
      %v2232 = vpop.permute.xlu0 %2231
      %2233 = vrot.lane.b32.xlu0 %v2219, 58
      %v2234 = vpop.permute.xlu0 %2233
      %2235 = vrot.lane.b32.xlu0 %v2221, 58
      %v2236 = vpop.permute.xlu0 %2235
      %2237 = vrot.lane.b32.xlu0 %v2228, 58
      %v2238 = vpop.permute.xlu0 %2237
      %vm2239 = vcmask 474112
      %v2240 = vsel %vm2239, %v2230, %v2232
      %v2241 = vsel %vm2239, %v2232, %v2234
      %v2242 = vsel %vm2239, %v2234, %v2236
      %v2243 = vsel %vm2239, %v2236, %v2238
      %v2245 = vsel %vm679, %v2200, 0
      %v2248 = vsel %vm683, %v2240, 0
      %v2251 = vsel %vm683, %v2241, 0
      %v2254 = vsel %vm683, %v2242, 0
      %v2257 = vsel %vm683, %v2243, 0
      %2259 = vmatprep.subr.bf16.mxu0 %v2251
      %2260 = vmatpush1.bf16.msra.mxu0 %v2248
      %2261 = vmatprep.subr.bf16.mxu0 0
      %2262 = vmatpush1.bf16.msra.mxu0 0
      %2263 = vmatprep.subr.bf16.mxu0 0
      %2264 = vmatpush1.bf16.msra.mxu0 0
      %2265 = vmatprep.subr.bf16.mxu0 0
      %2266 = vmatpush1.bf16.msra.mxu0 0
      %2267 = vmatprep.subr.bf16.mxu0 0
      %2268 = vmatpush1.bf16.msra.mxu0 0
      %2269 = vmatprep.subr.bf16.mxu0 0
      %2270 = vmatpush1.bf16.msra.mxu0 0
      %2271 = vmatprep.subr.bf16.mxu0 0
      %2272 = vmatpush1.bf16.msra.mxu0 0
      %2273 = vmatprep.subr.bf16.mxu0 0
      %2274 = vmatpush1.bf16.msra.mxu0 0
      %2275 = vmatprep.subr.bf16.mxu0 0
      %2276 = vmatpush1.bf16.msra.mxu0 0
      %2277 = vmatprep.subr.bf16.mxu0 0
      %2278 = vmatpush1.bf16.msra.mxu0 0
      %2279 = vmatprep.subr.bf16.mxu0 0
      %2280 = vmatpush1.bf16.msra.mxu0 0
      %2281 = vmatprep.subr.bf16.mxu0 0
      %2282 = vmatpush1.bf16.msra.mxu0 0
      %2283 = vmatprep.subr.bf16.mxu0 0
      %2284 = vmatpush1.bf16.msra.mxu0 0
      %2285 = vmatprep.subr.bf16.mxu0 0
      %2286 = vmatpush1.bf16.msra.mxu0 0
      %2287 = vmatprep.subr.bf16.mxu0 0
      %2288 = vmatpush1.bf16.msra.mxu0 0
      %2289 = vmatprep.subr.bf16.mxu0 0
      %2290 = vmatpush1.bf16.msra.mxu0 0
      %2291 = vmatprep.mubr.bf16.mxu0 0
      %2292 = vmatmul.mubr.bf16.gmra.mrb[0].mxu0 %v2245
      %v2293 = vpop.f32.mrb[0].mxu0
      %v2294 = vadd.f32 0.0, %v2293
      %v2295 = vpop.f32.mrb[0].mxu0
      %v2296 = vadd.f32 0.0, %v2295
      %v2297 = vpop.f32.mrb[0].mxu0
      %v2298 = vpop.f32.mrb[0].mxu0
      %2299 = vdwg.mxu0
      %2300 = vmatprep.subr.bf16.mxu0 %v2257
      %2301 = vmatpush1.bf16.msra.mxu0 %v2254
      %2302 = vmatprep.subr.bf16.mxu0 0
      %2303 = vmatpush1.bf16.msra.mxu0 0
      %2304 = vmatprep.subr.bf16.mxu0 0
      %2305 = vmatpush1.bf16.msra.mxu0 0
      %2306 = vmatprep.subr.bf16.mxu0 0
      %2307 = vmatpush1.bf16.msra.mxu0 0
      %2308 = vmatprep.subr.bf16.mxu0 0
      %2309 = vmatpush1.bf16.msra.mxu0 0
      %2310 = vmatprep.subr.bf16.mxu0 0
      %2311 = vmatpush1.bf16.msra.mxu0 0
      %2312 = vmatprep.subr.bf16.mxu0 0
      %2313 = vmatpush1.bf16.msra.mxu0 0
      %2314 = vmatprep.subr.bf16.mxu0 0
      %2315 = vmatpush1.bf16.msra.mxu0 0
      %2316 = vmatprep.subr.bf16.mxu0 0
      %2317 = vmatpush1.bf16.msra.mxu0 0
      %2318 = vmatprep.subr.bf16.mxu0 0
      %2319 = vmatpush1.bf16.msra.mxu0 0
      %2320 = vmatprep.subr.bf16.mxu0 0
      %2321 = vmatpush1.bf16.msra.mxu0 0
      %2322 = vmatprep.subr.bf16.mxu0 0
      %2323 = vmatpush1.bf16.msra.mxu0 0
      %2324 = vmatprep.subr.bf16.mxu0 0
      %2325 = vmatpush1.bf16.msra.mxu0 0
      %2326 = vmatprep.subr.bf16.mxu0 0
      %2327 = vmatpush1.bf16.msra.mxu0 0
      %2328 = vmatprep.subr.bf16.mxu0 0
      %2329 = vmatpush1.bf16.msra.mxu0 0
      %2330 = vmatprep.subr.bf16.mxu0 0
      %2331 = vmatpush1.bf16.msra.mxu0 0
      %2332 = vmatprep.mubr.bf16.mxu0 0
      %2333 = vmatmul.mubr.bf16.gmra.mrb[0].mxu0 %v2245
      %v2334 = vpop.f32.mrb[0].mxu0
      %v2335 = vadd.f32 0.0, %v2334
      %v2336 = vpop.f32.mrb[0].mxu0
      %v2337 = vadd.f32 0.0, %v2336
      %v2338 = vpop.f32.mrb[0].mxu0
      %v2339 = vpop.f32.mrb[0].mxu0
      %2340 = vdwg.mxu0
      %v2341 = vadd.f32 %v2194, %v2294
      %v2342 = vadd.f32 %v2195, %v2296
      %v2343 = vadd.f32 %v2196, %v2335
      %v2344 = vadd.f32 %v2197, %v2337
      %s2345 = scalar_lea.vmem %s2, 24
      %v2346 = vld [vmem:[%s2345] sm:$0x3]
      %v2347 = vmul.bf16 %v2346, %v631
      %v2348 = vld [vmem:[#allocation2 + $0x2] sm:$0xff]
      %v2349 = vld [vmem:[#allocation2 + $0xa] sm:$0x3]
      %v2352 = vcombine.high %v2348, %v2348
      %v2354 = vunpack.c.l.s4 1983009808
      %v2355 = vunpack.c.0.s8 %v2354
      %v2356 = vlaneseq
      %v2357 = vshrl.u32 %v2356, 7
      %v2358 = vsub.s32 %v2355, %v2357
      %v2359 = vrot.slane %v2348, %v2358
      %v2361 = vunpack.c.l.s4 1983009808
      %v2362 = vunpack.c.0.s8 %v2361
      %v2363 = vlaneseq
      %v2364 = vshrl.u32 %v2363, 7
      %v2365 = vsub.s32 %v2362, %v2364
      %v2366 = vrot.slane %v2352, %v2365
      %v2367 = vcombine.high %v2359, %v2359
      %v2368 = vcombine.high %v2366, %v2366
      %v2370 = vunpack.c.l.s4 1983009808
      %v2371 = vunpack.c.0.s8 %v2370
      %v2372 = vlaneseq
      %v2373 = vshrl.u32 %v2372, 7
      %v2374 = vsub.s32 %v2371, %v2373
      %v2375 = vrot.slane %v2349, %v2374
      %2376 = vrot.lane.b32.xlu0 %v2359, 46
      %v2377 = vpop.permute.xlu0 %2376
      %2378 = vrot.lane.b32.xlu0 %v2367, 46
      %v2379 = vpop.permute.xlu0 %2378
      %2380 = vrot.lane.b32.xlu0 %v2366, 46
      %v2381 = vpop.permute.xlu0 %2380
      %2382 = vrot.lane.b32.xlu0 %v2368, 46
      %v2383 = vpop.permute.xlu0 %2382
      %2384 = vrot.lane.b32.xlu0 %v2375, 46
      %v2385 = vpop.permute.xlu0 %2384
      %vm2386 = vcmask 375808
      %v2387 = vsel %vm2386, %v2377, %v2379
      %v2388 = vsel %vm2386, %v2379, %v2381
      %v2389 = vsel %vm2386, %v2381, %v2383
      %v2390 = vsel %vm2386, %v2383, %v2385
      %v2392 = vsel %vm679, %v2347, 0
      %v2395 = vsel %vm683, %v2387, 0
      %v2398 = vsel %vm683, %v2388, 0
      %v2401 = vsel %vm683, %v2389, 0
      %v2404 = vsel %vm683, %v2390, 0
      %2406 = vmatprep.subr.bf16.mxu0 %v2398
      %2407 = vmatpush1.bf16.msra.mxu0 %v2395
      %2408 = vmatprep.subr.bf16.mxu0 0
      %2409 = vmatpush1.bf16.msra.mxu0 0
      %2410 = vmatprep.subr.bf16.mxu0 0
      %2411 = vmatpush1.bf16.msra.mxu0 0
      %2412 = vmatprep.subr.bf16.mxu0 0
      %2413 = vmatpush1.bf16.msra.mxu0 0
      %2414 = vmatprep.subr.bf16.mxu0 0
      %2415 = vmatpush1.bf16.msra.mxu0 0
      %2416 = vmatprep.subr.bf16.mxu0 0
      %2417 = vmatpush1.bf16.msra.mxu0 0
      %2418 = vmatprep.subr.bf16.mxu0 0
      %2419 = vmatpush1.bf16.msra.mxu0 0
      %2420 = vmatprep.subr.bf16.mxu0 0
      %2421 = vmatpush1.bf16.msra.mxu0 0
      %2422 = vmatprep.subr.bf16.mxu0 0
      %2423 = vmatpush1.bf16.msra.mxu0 0
      %2424 = vmatprep.subr.bf16.mxu0 0
      %2425 = vmatpush1.bf16.msra.mxu0 0
      %2426 = vmatprep.subr.bf16.mxu0 0
      %2427 = vmatpush1.bf16.msra.mxu0 0
      %2428 = vmatprep.subr.bf16.mxu0 0
      %2429 = vmatpush1.bf16.msra.mxu0 0
      %2430 = vmatprep.subr.bf16.mxu0 0
      %2431 = vmatpush1.bf16.msra.mxu0 0
      %2432 = vmatprep.subr.bf16.mxu0 0
      %2433 = vmatpush1.bf16.msra.mxu0 0
      %2434 = vmatprep.subr.bf16.mxu0 0
      %2435 = vmatpush1.bf16.msra.mxu0 0
      %2436 = vmatprep.subr.bf16.mxu0 0
      %2437 = vmatpush1.bf16.msra.mxu0 0
      %2438 = vmatprep.mubr.bf16.mxu0 0
      %2439 = vmatmul.mubr.bf16.gmra.mrb[0].mxu0 %v2392
      %v2440 = vpop.f32.mrb[0].mxu0
      %v2441 = vadd.f32 0.0, %v2440
      %v2442 = vpop.f32.mrb[0].mxu0
      %v2443 = vadd.f32 0.0, %v2442
      %v2444 = vpop.f32.mrb[0].mxu0
      %v2445 = vpop.f32.mrb[0].mxu0
      %2446 = vdwg.mxu0
      %2447 = vmatprep.subr.bf16.mxu0 %v2404
      %2448 = vmatpush1.bf16.msra.mxu0 %v2401
      %2449 = vmatprep.subr.bf16.mxu0 0
      %2450 = vmatpush1.bf16.msra.mxu0 0
      %2451 = vmatprep.subr.bf16.mxu0 0
      %2452 = vmatpush1.bf16.msra.mxu0 0
      %2453 = vmatprep.subr.bf16.mxu0 0
      %2454 = vmatpush1.bf16.msra.mxu0 0
      %2455 = vmatprep.subr.bf16.mxu0 0
      %2456 = vmatpush1.bf16.msra.mxu0 0
      %2457 = vmatprep.subr.bf16.mxu0 0
      %2458 = vmatpush1.bf16.msra.mxu0 0
      %2459 = vmatprep.subr.bf16.mxu0 0
      %2460 = vmatpush1.bf16.msra.mxu0 0
      %2461 = vmatprep.subr.bf16.mxu0 0
      %2462 = vmatpush1.bf16.msra.mxu0 0
      %2463 = vmatprep.subr.bf16.mxu0 0
      %2464 = vmatpush1.bf16.msra.mxu0 0
      %2465 = vmatprep.subr.bf16.mxu0 0
      %2466 = vmatpush1.bf16.msra.mxu0 0
      %2467 = vmatprep.subr.bf16.mxu0 0
      %2468 = vmatpush1.bf16.msra.mxu0 0
      %2469 = vmatprep.subr.bf16.mxu0 0
      %2470 = vmatpush1.bf16.msra.mxu0 0
      %2471 = vmatprep.subr.bf16.mxu0 0
      %2472 = vmatpush1.bf16.msra.mxu0 0
      %2473 = vmatprep.subr.bf16.mxu0 0
      %2474 = vmatpush1.bf16.msra.mxu0 0
      %2475 = vmatprep.subr.bf16.mxu0 0
      %2476 = vmatpush1.bf16.msra.mxu0 0
      %2477 = vmatprep.subr.bf16.mxu0 0
      %2478 = vmatpush1.bf16.msra.mxu0 0
      %2479 = vmatprep.mubr.bf16.mxu0 0
      %2480 = vmatmul.mubr.bf16.gmra.mrb[0].mxu0 %v2392
      %v2481 = vpop.f32.mrb[0].mxu0
      %v2482 = vadd.f32 0.0, %v2481
      %v2483 = vpop.f32.mrb[0].mxu0
      %v2484 = vadd.f32 0.0, %v2483
      %v2485 = vpop.f32.mrb[0].mxu0
      %v2486 = vpop.f32.mrb[0].mxu0
      %2487 = vdwg.mxu0
      %v2488 = vadd.f32 %v2341, %v2441
      %v2489 = vadd.f32 %v2342, %v2443
      %v2490 = vadd.f32 %v2343, %v2482
      %v2491 = vadd.f32 %v2344, %v2484
      %s2492 = scalar_lea.vmem %s2, 26
      %v2493 = vld [vmem:[%s2492] sm:$0x3]
      %v2494 = vmul.bf16 %v2493, %v631
      %v2495 = vld [vmem:[#allocation2 + $0x2] sm:$0xff]
      %v2496 = vld [vmem:[#allocation2 + $0xa] sm:$0x3]
      %v2499 = vcombine.high %v2495, %v2495
      %v2501 = vunpack.c.l.s4 1983009808
      %v2502 = vunpack.c.0.s8 %v2501
      %v2503 = vlaneseq
      %v2504 = vshrl.u32 %v2503, 7
      %v2505 = vsub.s32 %v2502, %v2504
      %v2506 = vrot.slane %v2495, %v2505
      %v2508 = vunpack.c.l.s4 1983009808
      %v2509 = vunpack.c.0.s8 %v2508
      %v2510 = vlaneseq
      %v2511 = vshrl.u32 %v2510, 7
      %v2512 = vsub.s32 %v2509, %v2511
      %v2513 = vrot.slane %v2499, %v2512
      %v2514 = vcombine.high %v2506, %v2506
      %v2515 = vcombine.high %v2513, %v2513
      %v2517 = vunpack.c.l.s4 1983009808
      %v2518 = vunpack.c.0.s8 %v2517
      %v2519 = vlaneseq
      %v2520 = vshrl.u32 %v2519, 7
      %v2521 = vsub.s32 %v2518, %v2520
      %v2522 = vrot.slane %v2496, %v2521
      %2523 = vrot.lane.b32.xlu0 %v2506, 45
      %v2524 = vpop.permute.xlu0 %2523
      %2525 = vrot.lane.b32.xlu0 %v2514, 45
      %v2526 = vpop.permute.xlu0 %2525
      %2527 = vrot.lane.b32.xlu0 %v2513, 45
      %v2528 = vpop.permute.xlu0 %2527
      %2529 = vrot.lane.b32.xlu0 %v2515, 45
      %v2530 = vpop.permute.xlu0 %2529
      %2531 = vrot.lane.b32.xlu0 %v2522, 45
      %v2532 = vpop.permute.xlu0 %2531
      %vm2533 = vcmask 367616
      %v2534 = vsel %vm2533, %v2524, %v2526
      %v2535 = vsel %vm2533, %v2526, %v2528
      %v2536 = vsel %vm2533, %v2528, %v2530
      %v2537 = vsel %vm2533, %v2530, %v2532
      %v2539 = vsel %vm679, %v2494, 0
      %v2542 = vsel %vm683, %v2534, 0
      %v2545 = vsel %vm683, %v2535, 0
      %v2548 = vsel %vm683, %v2536, 0
      %v2551 = vsel %vm683, %v2537, 0
      %2553 = vmatprep.subr.bf16.mxu0 %v2545
      %2554 = vmatpush1.bf16.msra.mxu0 %v2542
      %2555 = vmatprep.subr.bf16.mxu0 0
      %2556 = vmatpush1.bf16.msra.mxu0 0
      %2557 = vmatprep.subr.bf16.mxu0 0
      %2558 = vmatpush1.bf16.msra.mxu0 0
      %2559 = vmatprep.subr.bf16.mxu0 0
      %2560 = vmatpush1.bf16.msra.mxu0 0
      %2561 = vmatprep.subr.bf16.mxu0 0
      %2562 = vmatpush1.bf16.msra.mxu0 0
      %2563 = vmatprep.subr.bf16.mxu0 0
      %2564 = vmatpush1.bf16.msra.mxu0 0
      %2565 = vmatprep.subr.bf16.mxu0 0
      %2566 = vmatpush1.bf16.msra.mxu0 0
      %2567 = vmatprep.subr.bf16.mxu0 0
      %2568 = vmatpush1.bf16.msra.mxu0 0
      %2569 = vmatprep.subr.bf16.mxu0 0
      %2570 = vmatpush1.bf16.msra.mxu0 0
      %2571 = vmatprep.subr.bf16.mxu0 0
      %2572 = vmatpush1.bf16.msra.mxu0 0
      %2573 = vmatprep.subr.bf16.mxu0 0
      %2574 = vmatpush1.bf16.msra.mxu0 0
      %2575 = vmatprep.subr.bf16.mxu0 0
      %2576 = vmatpush1.bf16.msra.mxu0 0
      %2577 = vmatprep.subr.bf16.mxu0 0
      %2578 = vmatpush1.bf16.msra.mxu0 0
      %2579 = vmatprep.subr.bf16.mxu0 0
      %2580 = vmatpush1.bf16.msra.mxu0 0
      %2581 = vmatprep.subr.bf16.mxu0 0
      %2582 = vmatpush1.bf16.msra.mxu0 0
      %2583 = vmatprep.subr.bf16.mxu0 0
      %2584 = vmatpush1.bf16.msra.mxu0 0
      %2585 = vmatprep.mubr.bf16.mxu0 0
      %2586 = vmatmul.mubr.bf16.gmra.mrb[0].mxu0 %v2539
      %v2587 = vpop.f32.mrb[0].mxu0
      %v2588 = vadd.f32 0.0, %v2587
      %v2589 = vpop.f32.mrb[0].mxu0
      %v2590 = vadd.f32 0.0, %v2589
      %v2591 = vpop.f32.mrb[0].mxu0
      %v2592 = vpop.f32.mrb[0].mxu0
      %2593 = vdwg.mxu0
      %2594 = vmatprep.subr.bf16.mxu0 %v2551
      %2595 = vmatpush1.bf16.msra.mxu0 %v2548
      %2596 = vmatprep.subr.bf16.mxu0 0
      %2597 = vmatpush1.bf16.msra.mxu0 0
      %2598 = vmatprep.subr.bf16.mxu0 0
      %2599 = vmatpush1.bf16.msra.mxu0 0
      %2600 = vmatprep.subr.bf16.mxu0 0
      %2601 = vmatpush1.bf16.msra.mxu0 0
      %2602 = vmatprep.subr.bf16.mxu0 0
      %2603 = vmatpush1.bf16.msra.mxu0 0
      %2604 = vmatprep.subr.bf16.mxu0 0
      %2605 = vmatpush1.bf16.msra.mxu0 0
      %2606 = vmatprep.subr.bf16.mxu0 0
      %2607 = vmatpush1.bf16.msra.mxu0 0
      %2608 = vmatprep.subr.bf16.mxu0 0
      %2609 = vmatpush1.bf16.msra.mxu0 0
      %2610 = vmatprep.subr.bf16.mxu0 0
      %2611 = vmatpush1.bf16.msra.mxu0 0
      %2612 = vmatprep.subr.bf16.mxu0 0
      %2613 = vmatpush1.bf16.msra.mxu0 0
      %2614 = vmatprep.subr.bf16.mxu0 0
      %2615 = vmatpush1.bf16.msra.mxu0 0
      %2616 = vmatprep.subr.bf16.mxu0 0
      %2617 = vmatpush1.bf16.msra.mxu0 0
      %2618 = vmatprep.subr.bf16.mxu0 0
      %2619 = vmatpush1.bf16.msra.mxu0 0
      %2620 = vmatprep.subr.bf16.mxu0 0
      %2621 = vmatpush1.bf16.msra.mxu0 0
      %2622 = vmatprep.subr.bf16.mxu0 0
      %2623 = vmatpush1.bf16.msra.mxu0 0
      %2624 = vmatprep.subr.bf16.mxu0 0
      %2625 = vmatpush1.bf16.msra.mxu0 0
      %2626 = vmatprep.mubr.bf16.mxu0 0
      %2627 = vmatmul.mubr.bf16.gmra.mrb[0].mxu0 %v2539
      %v2628 = vpop.f32.mrb[0].mxu0
      %v2629 = vadd.f32 0.0, %v2628
      %v2630 = vpop.f32.mrb[0].mxu0
      %v2631 = vadd.f32 0.0, %v2630
      %v2632 = vpop.f32.mrb[0].mxu0
      %v2633 = vpop.f32.mrb[0].mxu0
      %2634 = vdwg.mxu0
      %v2635 = vadd.f32 %v2488, %v2588
      %v2636 = vadd.f32 %v2489, %v2590
      %v2637 = vadd.f32 %v2490, %v2629
      %v2638 = vadd.f32 %v2491, %v2631
      %s2639 = scalar_lea.vmem %s2, 28
      %v2640 = vld [vmem:[%s2639] sm:$0x3]
      %v2641 = vmul.bf16 %v2640, %v631
      %v2642 = vld [vmem:[#allocation2 + $0x2] sm:$0xff]
      %v2643 = vld [vmem:[#allocation2 + $0xa] sm:$0x3]
      %v2646 = vcombine.high %v2642, %v2642
      %v2648 = vunpack.c.l.s4 1983009808
      %v2649 = vunpack.c.0.s8 %v2648
      %v2650 = vlaneseq
      %v2651 = vshrl.u32 %v2650, 7
      %v2652 = vsub.s32 %v2649, %v2651
      %v2653 = vrot.slane %v2642, %v2652
      %v2655 = vunpack.c.l.s4 1983009808
      %v2656 = vunpack.c.0.s8 %v2655
      %v2657 = vlaneseq
      %v2658 = vshrl.u32 %v2657, 7
      %v2659 = vsub.s32 %v2656, %v2658
      %v2660 = vrot.slane %v2646, %v2659
      %v2661 = vcombine.high %v2653, %v2653
      %v2662 = vcombine.high %v2660, %v2660
      %v2664 = vunpack.c.l.s4 1983009808
      %v2665 = vunpack.c.0.s8 %v2664
      %v2666 = vlaneseq
      %v2667 = vshrl.u32 %v2666, 7
      %v2668 = vsub.s32 %v2665, %v2667
      %v2669 = vrot.slane %v2643, %v2668
      %2670 = vrot.lane.b32.xlu0 %v2653, 44
      %v2671 = vpop.permute.xlu0 %2670
      %2672 = vrot.lane.b32.xlu0 %v2661, 44
      %v2673 = vpop.permute.xlu0 %2672
      %2674 = vrot.lane.b32.xlu0 %v2660, 44
      %v2675 = vpop.permute.xlu0 %2674
      %2676 = vrot.lane.b32.xlu0 %v2662, 44
      %v2677 = vpop.permute.xlu0 %2676
      %2678 = vrot.lane.b32.xlu0 %v2669, 44
      %v2679 = vpop.permute.xlu0 %2678
      %vm2680 = vcmask 359424
      %v2681 = vsel %vm2680, %v2671, %v2673
      %v2682 = vsel %vm2680, %v2673, %v2675
      %v2683 = vsel %vm2680, %v2675, %v2677
      %v2684 = vsel %vm2680, %v2677, %v2679
      %v2686 = vsel %vm679, %v2641, 0
      %v2689 = vsel %vm683, %v2681, 0
      %v2692 = vsel %vm683, %v2682, 0
      %v2695 = vsel %vm683, %v2683, 0
      %v2698 = vsel %vm683, %v2684, 0
      %2700 = vmatprep.subr.bf16.mxu0 %v2692
      %2701 = vmatpush1.bf16.msra.mxu0 %v2689
      %2702 = vmatprep.subr.bf16.mxu0 0
      %2703 = vmatpush1.bf16.msra.mxu0 0
      %2704 = vmatprep.subr.bf16.mxu0 0
      %2705 = vmatpush1.bf16.msra.mxu0 0
      %2706 = vmatprep.subr.bf16.mxu0 0
      %2707 = vmatpush1.bf16.msra.mxu0 0
      %2708 = vmatprep.subr.bf16.mxu0 0
      %2709 = vmatpush1.bf16.msra.mxu0 0
      %2710 = vmatprep.subr.bf16.mxu0 0
      %2711 = vmatpush1.bf16.msra.mxu0 0
      %2712 = vmatprep.subr.bf16.mxu0 0
      %2713 = vmatpush1.bf16.msra.mxu0 0
      %2714 = vmatprep.subr.bf16.mxu0 0
      %2715 = vmatpush1.bf16.msra.mxu0 0
      %2716 = vmatprep.subr.bf16.mxu0 0
      %2717 = vmatpush1.bf16.msra.mxu0 0
      %2718 = vmatprep.subr.bf16.mxu0 0
      %2719 = vmatpush1.bf16.msra.mxu0 0
      %2720 = vmatprep.subr.bf16.mxu0 0
      %2721 = vmatpush1.bf16.msra.mxu0 0
      %2722 = vmatprep.subr.bf16.mxu0 0
      %2723 = vmatpush1.bf16.msra.mxu0 0
      %2724 = vmatprep.subr.bf16.mxu0 0
      %2725 = vmatpush1.bf16.msra.mxu0 0
      %2726 = vmatprep.subr.bf16.mxu0 0
      %2727 = vmatpush1.bf16.msra.mxu0 0
      %2728 = vmatprep.subr.bf16.mxu0 0
      %2729 = vmatpush1.bf16.msra.mxu0 0
      %2730 = vmatprep.subr.bf16.mxu0 0
      %2731 = vmatpush1.bf16.msra.mxu0 0
      %2732 = vmatprep.mubr.bf16.mxu0 0
      %2733 = vmatmul.mubr.bf16.gmra.mrb[0].mxu0 %v2686
      %v2734 = vpop.f32.mrb[0].mxu0
      %v2735 = vadd.f32 0.0, %v2734
      %v2736 = vpop.f32.mrb[0].mxu0
      %v2737 = vadd.f32 0.0, %v2736
      %v2738 = vpop.f32.mrb[0].mxu0
      %v2739 = vpop.f32.mrb[0].mxu0
      %2740 = vdwg.mxu0
      %2741 = vmatprep.subr.bf16.mxu0 %v2698
      %2742 = vmatpush1.bf16.msra.mxu0 %v2695
      %2743 = vmatprep.subr.bf16.mxu0 0
      %2744 = vmatpush1.bf16.msra.mxu0 0
      %2745 = vmatprep.subr.bf16.mxu0 0
      %2746 = vmatpush1.bf16.msra.mxu0 0
      %2747 = vmatprep.subr.bf16.mxu0 0
      %2748 = vmatpush1.bf16.msra.mxu0 0
      %2749 = vmatprep.subr.bf16.mxu0 0
      %2750 = vmatpush1.bf16.msra.mxu0 0
      %2751 = vmatprep.subr.bf16.mxu0 0
      %2752 = vmatpush1.bf16.msra.mxu0 0
      %2753 = vmatprep.subr.bf16.mxu0 0
      %2754 = vmatpush1.bf16.msra.mxu0 0
      %2755 = vmatprep.subr.bf16.mxu0 0
      %2756 = vmatpush1.bf16.msra.mxu0 0
      %2757 = vmatprep.subr.bf16.mxu0 0
      %2758 = vmatpush1.bf16.msra.mxu0 0
      %2759 = vmatprep.subr.bf16.mxu0 0
      %2760 = vmatpush1.bf16.msra.mxu0 0
      %2761 = vmatprep.subr.bf16.mxu0 0
      %2762 = vmatpush1.bf16.msra.mxu0 0
      %2763 = vmatprep.subr.bf16.mxu0 0
      %2764 = vmatpush1.bf16.msra.mxu0 0
      %2765 = vmatprep.subr.bf16.mxu0 0
      %2766 = vmatpush1.bf16.msra.mxu0 0
      %2767 = vmatprep.subr.bf16.mxu0 0
      %2768 = vmatpush1.bf16.msra.mxu0 0
      %2769 = vmatprep.subr.bf16.mxu0 0
      %2770 = vmatpush1.bf16.msra.mxu0 0
      %2771 = vmatprep.subr.bf16.mxu0 0
      %2772 = vmatpush1.bf16.msra.mxu0 0
      %2773 = vmatprep.mubr.bf16.mxu0 0
      %2774 = vmatmul.mubr.bf16.gmra.mrb[0].mxu0 %v2686
      %v2775 = vpop.f32.mrb[0].mxu0
      %v2776 = vadd.f32 0.0, %v2775
      %v2777 = vpop.f32.mrb[0].mxu0
      %v2778 = vadd.f32 0.0, %v2777
      %v2779 = vpop.f32.mrb[0].mxu0
      %v2780 = vpop.f32.mrb[0].mxu0
      %2781 = vdwg.mxu0
      %v2782 = vadd.f32 %v2635, %v2735
      %v2783 = vadd.f32 %v2636, %v2737
      %v2784 = vadd.f32 %v2637, %v2776
      %v2785 = vadd.f32 %v2638, %v2778
      %s2786 = scalar_lea.vmem %s2, 30
      %v2787 = vld [vmem:[%s2786] sm:$0x3]
      %v2788 = vmul.bf16 %v2787, %v631
      %v2789 = vld [vmem:[#allocation2 + $0x2] sm:$0xff]
      %v2790 = vld [vmem:[#allocation2 + $0xa] sm:$0x3]
      %v2793 = vcombine.high %v2789, %v2789
      %v2795 = vunpack.c.l.s4 1983009808
      %v2796 = vunpack.c.0.s8 %v2795
      %v2797 = vlaneseq
      %v2798 = vshrl.u32 %v2797, 7
      %v2799 = vsub.s32 %v2796, %v2798
      %v2800 = vrot.slane %v2789, %v2799
      %v2802 = vunpack.c.l.s4 1983009808
      %v2803 = vunpack.c.0.s8 %v2802
      %v2804 = vlaneseq
      %v2805 = vshrl.u32 %v2804, 7
      %v2806 = vsub.s32 %v2803, %v2805
      %v2807 = vrot.slane %v2793, %v2806
      %v2808 = vcombine.high %v2800, %v2800
      %v2809 = vcombine.high %v2807, %v2807
      %v2811 = vunpack.c.l.s4 1983009808
      %v2812 = vunpack.c.0.s8 %v2811
      %v2813 = vlaneseq
      %v2814 = vshrl.u32 %v2813, 7
      %v2815 = vsub.s32 %v2812, %v2814
      %v2816 = vrot.slane %v2790, %v2815
      %2817 = vrot.lane.b32.xlu0 %v2800, 32
      %v2818 = vpop.permute.xlu0 %2817
      %2819 = vrot.lane.b32.xlu0 %v2808, 32
      %v2820 = vpop.permute.xlu0 %2819
      %2821 = vrot.lane.b32.xlu0 %v2807, 32
      %v2822 = vpop.permute.xlu0 %2821
      %2823 = vrot.lane.b32.xlu0 %v2809, 32
      %v2824 = vpop.permute.xlu0 %2823
      %2825 = vrot.lane.b32.xlu0 %v2816, 32
      %v2826 = vpop.permute.xlu0 %2825
      %vm2827 = vcmask 261120
      %v2828 = vsel %vm2827, %v2818, %v2820
      %v2829 = vsel %vm2827, %v2820, %v2822
      %v2830 = vsel %vm2827, %v2822, %v2824
      %v2831 = vsel %vm2827, %v2824, %v2826
      %v2833 = vsel %vm679, %v2788, 0
      %v2836 = vsel %vm683, %v2828, 0
      %v2839 = vsel %vm683, %v2829, 0
      %v2842 = vsel %vm683, %v2830, 0
      %v2845 = vsel %vm683, %v2831, 0
      %2847 = vmatprep.subr.bf16.mxu0 %v2839
      %2848 = vmatpush1.bf16.msra.mxu0 %v2836
      %2849 = vmatprep.subr.bf16.mxu0 0
      %2850 = vmatpush1.bf16.msra.mxu0 0
      %2851 = vmatprep.subr.bf16.mxu0 0
      %2852 = vmatpush1.bf16.msra.mxu0 0
      %2853 = vmatprep.subr.bf16.mxu0 0
      %2854 = vmatpush1.bf16.msra.mxu0 0
      %2855 = vmatprep.subr.bf16.mxu0 0
      %2856 = vmatpush1.bf16.msra.mxu0 0
      %2857 = vmatprep.subr.bf16.mxu0 0
      %2858 = vmatpush1.bf16.msra.mxu0 0
      %2859 = vmatprep.subr.bf16.mxu0 0
      %2860 = vmatpush1.bf16.msra.mxu0 0
      %2861 = vmatprep.subr.bf16.mxu0 0
      %2862 = vmatpush1.bf16.msra.mxu0 0
      %2863 = vmatprep.subr.bf16.mxu0 0
      %2864 = vmatpush1.bf16.msra.mxu0 0
      %2865 = vmatprep.subr.bf16.mxu0 0
      %2866 = vmatpush1.bf16.msra.mxu0 0
      %2867 = vmatprep.subr.bf16.mxu0 0
      %2868 = vmatpush1.bf16.msra.mxu0 0
      %2869 = vmatprep.subr.bf16.mxu0 0
      %2870 = vmatpush1.bf16.msra.mxu0 0
      %2871 = vmatprep.subr.bf16.mxu0 0
      %2872 = vmatpush1.bf16.msra.mxu0 0
      %2873 = vmatprep.subr.bf16.mxu0 0
      %2874 = vmatpush1.bf16.msra.mxu0 0
      %2875 = vmatprep.subr.bf16.mxu0 0
      %2876 = vmatpush1.bf16.msra.mxu0 0
      %2877 = vmatprep.subr.bf16.mxu0 0
      %2878 = vmatpush1.bf16.msra.mxu0 0
      %2879 = vmatprep.mubr.bf16.mxu0 0
      %2880 = vmatmul.mubr.bf16.gmra.mrb[0].mxu0 %v2833
      %v2881 = vpop.f32.mrb[0].mxu0
      %v2882 = vadd.f32 0.0, %v2881
      %v2883 = vpop.f32.mrb[0].mxu0
      %v2884 = vadd.f32 0.0, %v2883
      %v2885 = vpop.f32.mrb[0].mxu0
      %v2886 = vpop.f32.mrb[0].mxu0
      %2887 = vdwg.mxu0
      %2888 = vmatprep.subr.bf16.mxu0 %v2845
      %2889 = vmatpush1.bf16.msra.mxu0 %v2842
      %2890 = vmatprep.subr.bf16.mxu0 0
      %2891 = vmatpush1.bf16.msra.mxu0 0
      %2892 = vmatprep.subr.bf16.mxu0 0
      %2893 = vmatpush1.bf16.msra.mxu0 0
      %2894 = vmatprep.subr.bf16.mxu0 0
      %2895 = vmatpush1.bf16.msra.mxu0 0
      %2896 = vmatprep.subr.bf16.mxu0 0
      %2897 = vmatpush1.bf16.msra.mxu0 0
      %2898 = vmatprep.subr.bf16.mxu0 0
      %2899 = vmatpush1.bf16.msra.mxu0 0
      %2900 = vmatprep.subr.bf16.mxu0 0
      %2901 = vmatpush1.bf16.msra.mxu0 0
      %2902 = vmatprep.subr.bf16.mxu0 0
      %2903 = vmatpush1.bf16.msra.mxu0 0
      %2904 = vmatprep.subr.bf16.mxu0 0
      %2905 = vmatpush1.bf16.msra.mxu0 0
      %2906 = vmatprep.subr.bf16.mxu0 0
      %2907 = vmatpush1.bf16.msra.mxu0 0
      %2908 = vmatprep.subr.bf16.mxu0 0
      %2909 = vmatpush1.bf16.msra.mxu0 0
      %2910 = vmatprep.subr.bf16.mxu0 0
      %2911 = vmatpush1.bf16.msra.mxu0 0
      %2912 = vmatprep.subr.bf16.mxu0 0
      %2913 = vmatpush1.bf16.msra.mxu0 0
      %2914 = vmatprep.subr.bf16.mxu0 0
      %2915 = vmatpush1.bf16.msra.mxu0 0
      %2916 = vmatprep.subr.bf16.mxu0 0
      %2917 = vmatpush1.bf16.msra.mxu0 0
      %2918 = vmatprep.subr.bf16.mxu0 0
      %2919 = vmatpush1.bf16.msra.mxu0 0
      %2920 = vmatprep.mubr.bf16.mxu0 0
      %2921 = vmatmul.mubr.bf16.gmra.mrb[0].mxu0 %v2833
      %v2922 = vpop.f32.mrb[0].mxu0
      %v2923 = vadd.f32 0.0, %v2922
      %v2924 = vpop.f32.mrb[0].mxu0
      %v2925 = vadd.f32 0.0, %v2924
      %v2926 = vpop.f32.mrb[0].mxu0
      %v2927 = vpop.f32.mrb[0].mxu0
      %2928 = vdwg.mxu0
      %v2929 = vadd.f32 %v2782, %v2882
      %v2930 = vadd.f32 %v2783, %v2884
      %v2931 = vadd.f32 %v2784, %v2923
      %v2932 = vadd.f32 %v2785, %v2925
      %s2933 = scalar_lea.vmem %s2, 32
      %v2934 = vld [vmem:[%s2933] sm:$0x3]
      %v2935 = vmul.bf16 %v2934, %v631
      %v2936 = vld [vmem:[#allocation2 + $0x2] sm:$0xff]
      %v2937 = vld [vmem:[#allocation2 + $0xa] sm:$0x3]
      %v2940 = vcombine.high %v2936, %v2936
      %v2942 = vunpack.c.l.s4 1983009808
      %v2943 = vunpack.c.0.s8 %v2942
      %v2944 = vlaneseq
      %v2945 = vshrl.u32 %v2944, 7
      %v2946 = vsub.s32 %v2943, %v2945
      %v2947 = vrot.slane %v2936, %v2946
      %v2949 = vunpack.c.l.s4 1983009808
      %v2950 = vunpack.c.0.s8 %v2949
      %v2951 = vlaneseq
      %v2952 = vshrl.u32 %v2951, 7
      %v2953 = vsub.s32 %v2950, %v2952
      %v2954 = vrot.slane %v2940, %v2953
      %v2955 = vcombine.high %v2947, %v2947
      %v2956 = vcombine.high %v2954, %v2954
      %v2958 = vunpack.c.l.s4 1983009808
      %v2959 = vunpack.c.0.s8 %v2958
      %v2960 = vlaneseq
      %v2961 = vshrl.u32 %v2960, 7
      %v2962 = vsub.s32 %v2959, %v2961
      %v2963 = vrot.slane %v2937, %v2962
      %2964 = vrot.lane.b32.xlu0 %v2947, 31
      %v2965 = vpop.permute.xlu0 %2964
      %2966 = vrot.lane.b32.xlu0 %v2955, 31
      %v2967 = vpop.permute.xlu0 %2966
      %2968 = vrot.lane.b32.xlu0 %v2954, 31
      %v2969 = vpop.permute.xlu0 %2968
      %2970 = vrot.lane.b32.xlu0 %v2956, 31
      %v2971 = vpop.permute.xlu0 %2970
      %2972 = vrot.lane.b32.xlu0 %v2963, 31
      %v2973 = vpop.permute.xlu0 %2972
      %vm2974 = vcmask 252928
      %v2975 = vsel %vm2974, %v2965, %v2967
      %v2976 = vsel %vm2974, %v2967, %v2969
      %v2977 = vsel %vm2974, %v2969, %v2971
      %v2978 = vsel %vm2974, %v2971, %v2973
      %v2980 = vsel %vm679, %v2935, 0
      %v2983 = vsel %vm683, %v2975, 0
      %v2986 = vsel %vm683, %v2976, 0
      %v2989 = vsel %vm683, %v2977, 0
      %v2992 = vsel %vm683, %v2978, 0
      %2994 = vmatprep.subr.bf16.mxu0 %v2986
      %2995 = vmatpush1.bf16.msra.mxu0 %v2983
      %2996 = vmatprep.subr.bf16.mxu0 0
      %2997 = vmatpush1.bf16.msra.mxu0 0
      %2998 = vmatprep.subr.bf16.mxu0 0
      %2999 = vmatpush1.bf16.msra.mxu0 0
      %3000 = vmatprep.subr.bf16.mxu0 0
      %3001 = vmatpush1.bf16.msra.mxu0 0
      %3002 = vmatprep.subr.bf16.mxu0 0
      %3003 = vmatpush1.bf16.msra.mxu0 0
      %3004 = vmatprep.subr.bf16.mxu0 0
      %3005 = vmatpush1.bf16.msra.mxu0 0
      %3006 = vmatprep.subr.bf16.mxu0 0
      %3007 = vmatpush1.bf16.msra.mxu0 0
      %3008 = vmatprep.subr.bf16.mxu0 0
      %3009 = vmatpush1.bf16.msra.mxu0 0
      %3010 = vmatprep.subr.bf16.mxu0 0
      %3011 = vmatpush1.bf16.msra.mxu0 0
      %3012 = vmatprep.subr.bf16.mxu0 0
      %3013 = vmatpush1.bf16.msra.mxu0 0
      %3014 = vmatprep.subr.bf16.mxu0 0
      %3015 = vmatpush1.bf16.msra.mxu0 0
      %3016 = vmatprep.subr.bf16.mxu0 0
      %3017 = vmatpush1.bf16.msra.mxu0 0
      %3018 = vmatprep.subr.bf16.mxu0 0
      %3019 = vmatpush1.bf16.msra.mxu0 0
      %3020 = vmatprep.subr.bf16.mxu0 0
      %3021 = vmatpush1.bf16.msra.mxu0 0
      %3022 = vmatprep.subr.bf16.mxu0 0
      %3023 = vmatpush1.bf16.msra.mxu0 0
      %3024 = vmatprep.subr.bf16.mxu0 0
      %3025 = vmatpush1.bf16.msra.mxu0 0
      %3026 = vmatprep.mubr.bf16.mxu0 0
      %3027 = vmatmul.mubr.bf16.gmra.mrb[0].mxu0 %v2980
      %v3028 = vpop.f32.mrb[0].mxu0
      %v3029 = vadd.f32 0.0, %v3028
      %v3030 = vpop.f32.mrb[0].mxu0
      %v3031 = vadd.f32 0.0, %v3030
      %v3032 = vpop.f32.mrb[0].mxu0
      %v3033 = vpop.f32.mrb[0].mxu0
      %3034 = vdwg.mxu0
      %3035 = vmatprep.subr.bf16.mxu0 %v2992
      %3036 = vmatpush1.bf16.msra.mxu0 %v2989
      %3037 = vmatprep.subr.bf16.mxu0 0
      %3038 = vmatpush1.bf16.msra.mxu0 0
      %3039 = vmatprep.subr.bf16.mxu0 0
      %3040 = vmatpush1.bf16.msra.mxu0 0
      %3041 = vmatprep.subr.bf16.mxu0 0
      %3042 = vmatpush1.bf16.msra.mxu0 0
      %3043 = vmatprep.subr.bf16.mxu0 0
      %3044 = vmatpush1.bf16.msra.mxu0 0
      %3045 = vmatprep.subr.bf16.mxu0 0
      %3046 = vmatpush1.bf16.msra.mxu0 0
      %3047 = vmatprep.subr.bf16.mxu0 0
      %3048 = vmatpush1.bf16.msra.mxu0 0
      %3049 = vmatprep.subr.bf16.mxu0 0
      %3050 = vmatpush1.bf16.msra.mxu0 0
      %3051 = vmatprep.subr.bf16.mxu0 0
      %3052 = vmatpush1.bf16.msra.mxu0 0
      %3053 = vmatprep.subr.bf16.mxu0 0
      %3054 = vmatpush1.bf16.msra.mxu0 0
      %3055 = vmatprep.subr.bf16.mxu0 0
      %3056 = vmatpush1.bf16.msra.mxu0 0
      %3057 = vmatprep.subr.bf16.mxu0 0
      %3058 = vmatpush1.bf16.msra.mxu0 0
      %3059 = vmatprep.subr.bf16.mxu0 0
      %3060 = vmatpush1.bf16.msra.mxu0 0
      %3061 = vmatprep.subr.bf16.mxu0 0
      %3062 = vmatpush1.bf16.msra.mxu0 0
      %3063 = vmatprep.subr.bf16.mxu0 0
      %3064 = vmatpush1.bf16.msra.mxu0 0
      %3065 = vmatprep.subr.bf16.mxu0 0
      %3066 = vmatpush1.bf16.msra.mxu0 0
      %3067 = vmatprep.mubr.bf16.mxu0 0
      %3068 = vmatmul.mubr.bf16.gmra.mrb[0].mxu0 %v2980
      %v3069 = vpop.f32.mrb[0].mxu0
      %v3070 = vadd.f32 0.0, %v3069
      %v3071 = vpop.f32.mrb[0].mxu0
      %v3072 = vadd.f32 0.0, %v3071
      %v3073 = vpop.f32.mrb[0].mxu0
      %v3074 = vpop.f32.mrb[0].mxu0
      %3075 = vdwg.mxu0
      %v3076 = vadd.f32 %v2929, %v3029
      %v3077 = vadd.f32 %v2930, %v3031
      %v3078 = vadd.f32 %v2931, %v3070
      %v3079 = vadd.f32 %v2932, %v3072
      %s3080 = scalar_lea.vmem %s2, 34
      %v3081 = vld [vmem:[%s3080] sm:$0x3]
      %v3082 = vmul.bf16 %v3081, %v631
      %v3083 = vld [vmem:[#allocation2 + $0x2] sm:$0xff]
      %v3084 = vld [vmem:[#allocation2 + $0xa] sm:$0x3]
      %v3087 = vcombine.high %v3083, %v3083
      %v3089 = vunpack.c.l.s4 1983009808
      %v3090 = vunpack.c.0.s8 %v3089
      %v3091 = vlaneseq
      %v3092 = vshrl.u32 %v3091, 7
      %v3093 = vsub.s32 %v3090, %v3092
      %v3094 = vrot.slane %v3083, %v3093
      %v3096 = vunpack.c.l.s4 1983009808
      %v3097 = vunpack.c.0.s8 %v3096
      %v3098 = vlaneseq
      %v3099 = vshrl.u32 %v3098, 7
      %v3100 = vsub.s32 %v3097, %v3099
      %v3101 = vrot.slane %v3087, %v3100
      %v3102 = vcombine.high %v3094, %v3094
      %v3103 = vcombine.high %v3101, %v3101
      %v3105 = vunpack.c.l.s4 1983009808
      %v3106 = vunpack.c.0.s8 %v3105
      %v3107 = vlaneseq
      %v3108 = vshrl.u32 %v3107, 7
      %v3109 = vsub.s32 %v3106, %v3108
      %v3110 = vrot.slane %v3084, %v3109
      %3111 = vrot.lane.b32.xlu0 %v3094, 30
      %v3112 = vpop.permute.xlu0 %3111
      %3113 = vrot.lane.b32.xlu0 %v3102, 30
      %v3114 = vpop.permute.xlu0 %3113
      %3115 = vrot.lane.b32.xlu0 %v3101, 30
      %v3116 = vpop.permute.xlu0 %3115
      %3117 = vrot.lane.b32.xlu0 %v3103, 30
      %v3118 = vpop.permute.xlu0 %3117
      %3119 = vrot.lane.b32.xlu0 %v3110, 30
      %v3120 = vpop.permute.xlu0 %3119
      %vm3121 = vcmask 244736
      %v3122 = vsel %vm3121, %v3112, %v3114
      %v3123 = vsel %vm3121, %v3114, %v3116
      %v3124 = vsel %vm3121, %v3116, %v3118
      %v3125 = vsel %vm3121, %v3118, %v3120
      %v3127 = vsel %vm679, %v3082, 0
      %v3130 = vsel %vm683, %v3122, 0
      %v3133 = vsel %vm683, %v3123, 0
      %v3136 = vsel %vm683, %v3124, 0
      %v3139 = vsel %vm683, %v3125, 0
      %3141 = vmatprep.subr.bf16.mxu0 %v3133
      %3142 = vmatpush1.bf16.msra.mxu0 %v3130
      %3143 = vmatprep.subr.bf16.mxu0 0
      %3144 = vmatpush1.bf16.msra.mxu0 0
      %3145 = vmatprep.subr.bf16.mxu0 0
      %3146 = vmatpush1.bf16.msra.mxu0 0
      %3147 = vmatprep.subr.bf16.mxu0 0
      %3148 = vmatpush1.bf16.msra.mxu0 0
      %3149 = vmatprep.subr.bf16.mxu0 0
      %3150 = vmatpush1.bf16.msra.mxu0 0
      %3151 = vmatprep.subr.bf16.mxu0 0
      %3152 = vmatpush1.bf16.msra.mxu0 0
      %3153 = vmatprep.subr.bf16.mxu0 0
      %3154 = vmatpush1.bf16.msra.mxu0 0
      %3155 = vmatprep.subr.bf16.mxu0 0
      %3156 = vmatpush1.bf16.msra.mxu0 0
      %3157 = vmatprep.subr.bf16.mxu0 0
      %3158 = vmatpush1.bf16.msra.mxu0 0
      %3159 = vmatprep.subr.bf16.mxu0 0
      %3160 = vmatpush1.bf16.msra.mxu0 0
      %3161 = vmatprep.subr.bf16.mxu0 0
      %3162 = vmatpush1.bf16.msra.mxu0 0
      %3163 = vmatprep.subr.bf16.mxu0 0
      %3164 = vmatpush1.bf16.msra.mxu0 0
      %3165 = vmatprep.subr.bf16.mxu0 0
      %3166 = vmatpush1.bf16.msra.mxu0 0
      %3167 = vmatprep.subr.bf16.mxu0 0
      %3168 = vmatpush1.bf16.msra.mxu0 0
      %3169 = vmatprep.subr.bf16.mxu0 0
      %3170 = vmatpush1.bf16.msra.mxu0 0
      %3171 = vmatprep.subr.bf16.mxu0 0
      %3172 = vmatpush1.bf16.msra.mxu0 0
      %3173 = vmatprep.mubr.bf16.mxu0 0
      %3174 = vmatmul.mubr.bf16.gmra.mrb[0].mxu0 %v3127
      %v3175 = vpop.f32.mrb[0].mxu0
      %v3176 = vadd.f32 0.0, %v3175
      %v3177 = vpop.f32.mrb[0].mxu0
      %v3178 = vadd.f32 0.0, %v3177
      %v3179 = vpop.f32.mrb[0].mxu0
      %v3180 = vpop.f32.mrb[0].mxu0
      %3181 = vdwg.mxu0
      %3182 = vmatprep.subr.bf16.mxu0 %v3139
      %3183 = vmatpush1.bf16.msra.mxu0 %v3136
      %3184 = vmatprep.subr.bf16.mxu0 0
      %3185 = vmatpush1.bf16.msra.mxu0 0
      %3186 = vmatprep.subr.bf16.mxu0 0
      %3187 = vmatpush1.bf16.msra.mxu0 0
      %3188 = vmatprep.subr.bf16.mxu0 0
      %3189 = vmatpush1.bf16.msra.mxu0 0
      %3190 = vmatprep.subr.bf16.mxu0 0
      %3191 = vmatpush1.bf16.msra.mxu0 0
      %3192 = vmatprep.subr.bf16.mxu0 0
      %3193 = vmatpush1.bf16.msra.mxu0 0
      %3194 = vmatprep.subr.bf16.mxu0 0
      %3195 = vmatpush1.bf16.msra.mxu0 0
      %3196 = vmatprep.subr.bf16.mxu0 0
      %3197 = vmatpush1.bf16.msra.mxu0 0
      %3198 = vmatprep.subr.bf16.mxu0 0
      %3199 = vmatpush1.bf16.msra.mxu0 0
      %3200 = vmatprep.subr.bf16.mxu0 0
      %3201 = vmatpush1.bf16.msra.mxu0 0
      %3202 = vmatprep.subr.bf16.mxu0 0
      %3203 = vmatpush1.bf16.msra.mxu0 0
      %3204 = vmatprep.subr.bf16.mxu0 0
      %3205 = vmatpush1.bf16.msra.mxu0 0
      %3206 = vmatprep.subr.bf16.mxu0 0
      %3207 = vmatpush1.bf16.msra.mxu0 0
      %3208 = vmatprep.subr.bf16.mxu0 0
      %3209 = vmatpush1.bf16.msra.mxu0 0
      %3210 = vmatprep.subr.bf16.mxu0 0
      %3211 = vmatpush1.bf16.msra.mxu0 0
      %3212 = vmatprep.subr.bf16.mxu0 0
      %3213 = vmatpush1.bf16.msra.mxu0 0
      %3214 = vmatprep.mubr.bf16.mxu0 0
      %3215 = vmatmul.mubr.bf16.gmra.mrb[0].mxu0 %v3127
      %v3216 = vpop.f32.mrb[0].mxu0
      %v3217 = vadd.f32 0.0, %v3216
      %v3218 = vpop.f32.mrb[0].mxu0
      %v3219 = vadd.f32 0.0, %v3218
      %v3220 = vpop.f32.mrb[0].mxu0
      %v3221 = vpop.f32.mrb[0].mxu0
      %3222 = vdwg.mxu0
      %v3223 = vadd.f32 %v3076, %v3176
      %v3224 = vadd.f32 %v3077, %v3178
      %v3225 = vadd.f32 %v3078, %v3217
      %v3226 = vadd.f32 %v3079, %v3219
      %s3227 = scalar_lea.vmem %s2, 36
      %v3228 = vld [vmem:[%s3227] sm:$0x3]
      %v3229 = vmul.bf16 %v3228, %v631
      %v3230 = vld [vmem:[#allocation2 + $0x6] sm:$0xff]
      %v3231 = vld [vmem:[#allocation2 + $0xe] sm:$0x3]
      %v3234 = vcombine.high %v3230, %v3230
      %v3236 = vunpack.c.l.s4 1983009808
      %v3237 = vunpack.c.0.s8 %v3236
      %v3238 = vlaneseq
      %v3239 = vshrl.u32 %v3238, 7
      %v3240 = vsub.s32 %v3237, %v3239
      %v3241 = vrot.slane %v3230, %v3240
      %v3243 = vunpack.c.l.s4 1983009808
      %v3244 = vunpack.c.0.s8 %v3243
      %v3245 = vlaneseq
      %v3246 = vshrl.u32 %v3245, 7
      %v3247 = vsub.s32 %v3244, %v3246
      %v3248 = vrot.slane %v3234, %v3247
      %v3249 = vcombine.high %v3241, %v3241
      %v3250 = vcombine.high %v3248, %v3248
      %v3252 = vunpack.c.l.s4 1983009808
      %v3253 = vunpack.c.0.s8 %v3252
      %v3254 = vlaneseq
      %v3255 = vshrl.u32 %v3254, 7
      %v3256 = vsub.s32 %v3253, %v3255
      %v3257 = vrot.slane %v3231, %v3256
      %3258 = vrot.lane.b32.xlu0 %v3241, 120
      %v3259 = vpop.permute.xlu0 %3258
      %3260 = vrot.lane.b32.xlu0 %v3249, 120
      %v3261 = vpop.permute.xlu0 %3260
      %3262 = vrot.lane.b32.xlu0 %v3248, 120
      %v3263 = vpop.permute.xlu0 %3262
      %3264 = vrot.lane.b32.xlu0 %v3250, 120
      %v3265 = vpop.permute.xlu0 %3264
      %3266 = vrot.lane.b32.xlu0 %v3257, 120
      %v3267 = vpop.permute.xlu0 %3266
      %vm3268 = vcmask 982016
      %v3269 = vsel %vm3268, %v3259, %v3261
      %v3270 = vsel %vm3268, %v3261, %v3263
      %v3271 = vsel %vm3268, %v3263, %v3265
      %v3272 = vsel %vm3268, %v3265, %v3267
      %v3274 = vsel %vm679, %v3229, 0
      %v3277 = vsel %vm683, %v3269, 0
      %v3280 = vsel %vm683, %v3270, 0
      %v3283 = vsel %vm683, %v3271, 0
      %v3286 = vsel %vm683, %v3272, 0
      %3288 = vmatprep.subr.bf16.mxu0 %v3280
      %3289 = vmatpush1.bf16.msra.mxu0 %v3277
      %3290 = vmatprep.subr.bf16.mxu0 0
      %3291 = vmatpush1.bf16.msra.mxu0 0
      %3292 = vmatprep.subr.bf16.mxu0 0
      %3293 = vmatpush1.bf16.msra.mxu0 0
      %3294 = vmatprep.subr.bf16.mxu0 0
      %3295 = vmatpush1.bf16.msra.mxu0 0
      %3296 = vmatprep.subr.bf16.mxu0 0
      %3297 = vmatpush1.bf16.msra.mxu0 0
      %3298 = vmatprep.subr.bf16.mxu0 0
      %3299 = vmatpush1.bf16.msra.mxu0 0
      %3300 = vmatprep.subr.bf16.mxu0 0
      %3301 = vmatpush1.bf16.msra.mxu0 0
      %3302 = vmatprep.subr.bf16.mxu0 0
      %3303 = vmatpush1.bf16.msra.mxu0 0
      %3304 = vmatprep.subr.bf16.mxu0 0
      %3305 = vmatpush1.bf16.msra.mxu0 0
      %3306 = vmatprep.subr.bf16.mxu0 0
      %3307 = vmatpush1.bf16.msra.mxu0 0
      %3308 = vmatprep.subr.bf16.mxu0 0
      %3309 = vmatpush1.bf16.msra.mxu0 0
      %3310 = vmatprep.subr.bf16.mxu0 0
      %3311 = vmatpush1.bf16.msra.mxu0 0
      %3312 = vmatprep.subr.bf16.mxu0 0
      %3313 = vmatpush1.bf16.msra.mxu0 0
      %3314 = vmatprep.subr.bf16.mxu0 0
      %3315 = vmatpush1.bf16.msra.mxu0 0
      %3316 = vmatprep.subr.bf16.mxu0 0
      %3317 = vmatpush1.bf16.msra.mxu0 0
      %3318 = vmatprep.subr.bf16.mxu0 0
      %3319 = vmatpush1.bf16.msra.mxu0 0
      %3320 = vmatprep.mubr.bf16.mxu0 0
      %3321 = vmatmul.mubr.bf16.gmra.mrb[0].mxu0 %v3274
      %v3322 = vpop.f32.mrb[0].mxu0
      %v3323 = vadd.f32 0.0, %v3322
      %v3324 = vpop.f32.mrb[0].mxu0
      %v3325 = vadd.f32 0.0, %v3324
      %v3326 = vpop.f32.mrb[0].mxu0
      %v3327 = vpop.f32.mrb[0].mxu0
      %3328 = vdwg.mxu0
      %3329 = vmatprep.subr.bf16.mxu0 %v3286
      %3330 = vmatpush1.bf16.msra.mxu0 %v3283
      %3331 = vmatprep.subr.bf16.mxu0 0
      %3332 = vmatpush1.bf16.msra.mxu0 0
      %3333 = vmatprep.subr.bf16.mxu0 0
      %3334 = vmatpush1.bf16.msra.mxu0 0
      %3335 = vmatprep.subr.bf16.mxu0 0
      %3336 = vmatpush1.bf16.msra.mxu0 0
      %3337 = vmatprep.subr.bf16.mxu0 0
      %3338 = vmatpush1.bf16.msra.mxu0 0
      %3339 = vmatprep.subr.bf16.mxu0 0
      %3340 = vmatpush1.bf16.msra.mxu0 0
      %3341 = vmatprep.subr.bf16.mxu0 0
      %3342 = vmatpush1.bf16.msra.mxu0 0
      %3343 = vmatprep.subr.bf16.mxu0 0
      %3344 = vmatpush1.bf16.msra.mxu0 0
      %3345 = vmatprep.subr.bf16.mxu0 0
      %3346 = vmatpush1.bf16.msra.mxu0 0
      %3347 = vmatprep.subr.bf16.mxu0 0
      %3348 = vmatpush1.bf16.msra.mxu0 0
      %3349 = vmatprep.subr.bf16.mxu0 0
      %3350 = vmatpush1.bf16.msra.mxu0 0
      %3351 = vmatprep.subr.bf16.mxu0 0
      %3352 = vmatpush1.bf16.msra.mxu0 0
      %3353 = vmatprep.subr.bf16.mxu0 0
      %3354 = vmatpush1.bf16.msra.mxu0 0
      %3355 = vmatprep.subr.bf16.mxu0 0
      %3356 = vmatpush1.bf16.msra.mxu0 0
      %3357 = vmatprep.subr.bf16.mxu0 0
      %3358 = vmatpush1.bf16.msra.mxu0 0
      %3359 = vmatprep.subr.bf16.mxu0 0
      %3360 = vmatpush1.bf16.msra.mxu0 0
      %3361 = vmatprep.mubr.bf16.mxu0 0
      %3362 = vmatmul.mubr.bf16.gmra.mrb[0].mxu0 %v3274
      %v3363 = vpop.f32.mrb[0].mxu0
      %v3364 = vadd.f32 0.0, %v3363
      %v3365 = vpop.f32.mrb[0].mxu0
      %v3366 = vadd.f32 0.0, %v3365
      %v3367 = vpop.f32.mrb[0].mxu0
      %v3368 = vpop.f32.mrb[0].mxu0
      %3369 = vdwg.mxu0
      %v3370 = vadd.f32 %v3223, %v3323
      %v3371 = vadd.f32 %v3224, %v3325
      %v3372 = vadd.f32 %v3225, %v3364
      %v3373 = vadd.f32 %v3226, %v3366
      %s3374 = scalar_lea.vmem %s2, 38
      %v3375 = vld [vmem:[%s3374] sm:$0x3]
      %v3376 = vmul.bf16 %v3375, %v631
      %v3377 = vld [vmem:[#allocation2 + $0x6] sm:$0xff]
      %v3378 = vld [vmem:[#allocation2 + $0xe] sm:$0x3]
      %v3381 = vcombine.high %v3377, %v3377
      %v3383 = vunpack.c.l.s4 1983009808
      %v3384 = vunpack.c.0.s8 %v3383
      %v3385 = vlaneseq
      %v3386 = vshrl.u32 %v3385, 7
      %v3387 = vsub.s32 %v3384, %v3386
      %v3388 = vrot.slane %v3377, %v3387
      %v3390 = vunpack.c.l.s4 1983009808
      %v3391 = vunpack.c.0.s8 %v3390
      %v3392 = vlaneseq
      %v3393 = vshrl.u32 %v3392, 7
      %v3394 = vsub.s32 %v3391, %v3393
      %v3395 = vrot.slane %v3381, %v3394
      %v3396 = vcombine.high %v3388, %v3388
      %v3397 = vcombine.high %v3395, %v3395
      %v3399 = vunpack.c.l.s4 1983009808
      %v3400 = vunpack.c.0.s8 %v3399
      %v3401 = vlaneseq
      %v3402 = vshrl.u32 %v3401, 7
      %v3403 = vsub.s32 %v3400, %v3402
      %v3404 = vrot.slane %v3378, %v3403
      %3405 = vrot.lane.b32.xlu0 %v3388, 119
      %v3406 = vpop.permute.xlu0 %3405
      %3407 = vrot.lane.b32.xlu0 %v3396, 119
      %v3408 = vpop.permute.xlu0 %3407
      %3409 = vrot.lane.b32.xlu0 %v3395, 119
      %v3410 = vpop.permute.xlu0 %3409
      %3411 = vrot.lane.b32.xlu0 %v3397, 119
      %v3412 = vpop.permute.xlu0 %3411
      %3413 = vrot.lane.b32.xlu0 %v3404, 119
      %v3414 = vpop.permute.xlu0 %3413
      %vm3415 = vcmask 973824
      %v3416 = vsel %vm3415, %v3406, %v3408
      %v3417 = vsel %vm3415, %v3408, %v3410
      %v3418 = vsel %vm3415, %v3410, %v3412
      %v3419 = vsel %vm3415, %v3412, %v3414
      %v3421 = vsel %vm679, %v3376, 0
      %v3424 = vsel %vm683, %v3416, 0
      %v3427 = vsel %vm683, %v3417, 0
      %v3430 = vsel %vm683, %v3418, 0
      %v3433 = vsel %vm683, %v3419, 0
      %3435 = vmatprep.subr.bf16.mxu0 %v3427
      %3436 = vmatpush1.bf16.msra.mxu0 %v3424
      %3437 = vmatprep.subr.bf16.mxu0 0
      %3438 = vmatpush1.bf16.msra.mxu0 0
      %3439 = vmatprep.subr.bf16.mxu0 0
      %3440 = vmatpush1.bf16.msra.mxu0 0
      %3441 = vmatprep.subr.bf16.mxu0 0
      %3442 = vmatpush1.bf16.msra.mxu0 0
      %3443 = vmatprep.subr.bf16.mxu0 0
      %3444 = vmatpush1.bf16.msra.mxu0 0
      %3445 = vmatprep.subr.bf16.mxu0 0
      %3446 = vmatpush1.bf16.msra.mxu0 0
      %3447 = vmatprep.subr.bf16.mxu0 0
      %3448 = vmatpush1.bf16.msra.mxu0 0
      %3449 = vmatprep.subr.bf16.mxu0 0
      %3450 = vmatpush1.bf16.msra.mxu0 0
      %3451 = vmatprep.subr.bf16.mxu0 0
      %3452 = vmatpush1.bf16.msra.mxu0 0
      %3453 = vmatprep.subr.bf16.mxu0 0
      %3454 = vmatpush1.bf16.msra.mxu0 0
      %3455 = vmatprep.subr.bf16.mxu0 0
      %3456 = vmatpush1.bf16.msra.mxu0 0
      %3457 = vmatprep.subr.bf16.mxu0 0
      %3458 = vmatpush1.bf16.msra.mxu0 0
      %3459 = vmatprep.subr.bf16.mxu0 0
      %3460 = vmatpush1.bf16.msra.mxu0 0
      %3461 = vmatprep.subr.bf16.mxu0 0
      %3462 = vmatpush1.bf16.msra.mxu0 0
      %3463 = vmatprep.subr.bf16.mxu0 0
      %3464 = vmatpush1.bf16.msra.mxu0 0
      %3465 = vmatprep.subr.bf16.mxu0 0
      %3466 = vmatpush1.bf16.msra.mxu0 0
      %3467 = vmatprep.mubr.bf16.mxu0 0
      %3468 = vmatmul.mubr.bf16.gmra.mrb[0].mxu0 %v3421
      %v3469 = vpop.f32.mrb[0].mxu0
      %v3470 = vadd.f32 0.0, %v3469
      %v3471 = vpop.f32.mrb[0].mxu0
      %v3472 = vadd.f32 0.0, %v3471
      %v3473 = vpop.f32.mrb[0].mxu0
      %v3474 = vpop.f32.mrb[0].mxu0
      %3475 = vdwg.mxu0
      %3476 = vmatprep.subr.bf16.mxu0 %v3433
      %3477 = vmatpush1.bf16.msra.mxu0 %v3430
      %3478 = vmatprep.subr.bf16.mxu0 0
      %3479 = vmatpush1.bf16.msra.mxu0 0
      %3480 = vmatprep.subr.bf16.mxu0 0
      %3481 = vmatpush1.bf16.msra.mxu0 0
      %3482 = vmatprep.subr.bf16.mxu0 0
      %3483 = vmatpush1.bf16.msra.mxu0 0
      %3484 = vmatprep.subr.bf16.mxu0 0
      %3485 = vmatpush1.bf16.msra.mxu0 0
      %3486 = vmatprep.subr.bf16.mxu0 0
      %3487 = vmatpush1.bf16.msra.mxu0 0
      %3488 = vmatprep.subr.bf16.mxu0 0
      %3489 = vmatpush1.bf16.msra.mxu0 0
      %3490 = vmatprep.subr.bf16.mxu0 0
      %3491 = vmatpush1.bf16.msra.mxu0 0
      %3492 = vmatprep.subr.bf16.mxu0 0
      %3493 = vmatpush1.bf16.msra.mxu0 0
      %3494 = vmatprep.subr.bf16.mxu0 0
      %3495 = vmatpush1.bf16.msra.mxu0 0
      %3496 = vmatprep.subr.bf16.mxu0 0
      %3497 = vmatpush1.bf16.msra.mxu0 0
      %3498 = vmatprep.subr.bf16.mxu0 0
      %3499 = vmatpush1.bf16.msra.mxu0 0
      %3500 = vmatprep.subr.bf16.mxu0 0
      %3501 = vmatpush1.bf16.msra.mxu0 0
      %3502 = vmatprep.subr.bf16.mxu0 0
      %3503 = vmatpush1.bf16.msra.mxu0 0
      %3504 = vmatprep.subr.bf16.mxu0 0
      %3505 = vmatpush1.bf16.msra.mxu0 0
      %3506 = vmatprep.subr.bf16.mxu0 0
      %3507 = vmatpush1.bf16.msra.mxu0 0
      %3508 = vmatprep.mubr.bf16.mxu0 0
      %3509 = vmatmul.mubr.bf16.gmra.mrb[0].mxu0 %v3421
      %v3510 = vpop.f32.mrb[0].mxu0
      %v3511 = vadd.f32 0.0, %v3510
      %v3512 = vpop.f32.mrb[0].mxu0
      %v3513 = vadd.f32 0.0, %v3512
      %v3514 = vpop.f32.mrb[0].mxu0
      %v3515 = vpop.f32.mrb[0].mxu0
      %3516 = vdwg.mxu0
      %v3517 = vadd.f32 %v3370, %v3470
      %v3518 = vadd.f32 %v3371, %v3472
      %v3519 = vadd.f32 %v3372, %v3511
      %v3520 = vadd.f32 %v3373, %v3513
      %s3521 = scalar_lea.vmem %s2, 40
      %v3522 = vld [vmem:[%s3521] sm:$0x3]
      %v3523 = vmul.bf16 %v3522, %v631
      %v3524 = vld [vmem:[#allocation2 + $0x6] sm:$0xff]
      %v3525 = vld [vmem:[#allocation2 + $0xe] sm:$0x3]
      %v3528 = vcombine.high %v3524, %v3524
      %v3530 = vunpack.c.l.s4 1983009808
      %v3531 = vunpack.c.0.s8 %v3530
      %v3532 = vlaneseq
      %v3533 = vshrl.u32 %v3532, 7
      %v3534 = vsub.s32 %v3531, %v3533
      %v3535 = vrot.slane %v3524, %v3534
      %v3537 = vunpack.c.l.s4 1983009808
      %v3538 = vunpack.c.0.s8 %v3537
      %v3539 = vlaneseq
      %v3540 = vshrl.u32 %v3539, 7
      %v3541 = vsub.s32 %v3538, %v3540
      %v3542 = vrot.slane %v3528, %v3541
      %v3543 = vcombine.high %v3535, %v3535
      %v3544 = vcombine.high %v3542, %v3542
      %v3546 = vunpack.c.l.s4 1983009808
      %v3547 = vunpack.c.0.s8 %v3546
      %v3548 = vlaneseq
      %v3549 = vshrl.u32 %v3548, 7
      %v3550 = vsub.s32 %v3547, %v3549
      %v3551 = vrot.slane %v3525, %v3550
      %3552 = vrot.lane.b32.xlu0 %v3535, 118
      %v3553 = vpop.permute.xlu0 %3552
      %3554 = vrot.lane.b32.xlu0 %v3543, 118
      %v3555 = vpop.permute.xlu0 %3554
      %3556 = vrot.lane.b32.xlu0 %v3542, 118
      %v3557 = vpop.permute.xlu0 %3556
      %3558 = vrot.lane.b32.xlu0 %v3544, 118
      %v3559 = vpop.permute.xlu0 %3558
      %3560 = vrot.lane.b32.xlu0 %v3551, 118
      %v3561 = vpop.permute.xlu0 %3560
      %vm3562 = vcmask 965632
      %v3563 = vsel %vm3562, %v3553, %v3555
      %v3564 = vsel %vm3562, %v3555, %v3557
      %v3565 = vsel %vm3562, %v3557, %v3559
      %v3566 = vsel %vm3562, %v3559, %v3561
      %v3568 = vsel %vm679, %v3523, 0
      %v3571 = vsel %vm683, %v3563, 0
      %v3574 = vsel %vm683, %v3564, 0
      %v3577 = vsel %vm683, %v3565, 0
      %v3580 = vsel %vm683, %v3566, 0
      %3582 = vmatprep.subr.bf16.mxu0 %v3574
      %3583 = vmatpush1.bf16.msra.mxu0 %v3571
      %3584 = vmatprep.subr.bf16.mxu0 0
      %3585 = vmatpush1.bf16.msra.mxu0 0
      %3586 = vmatprep.subr.bf16.mxu0 0
      %3587 = vmatpush1.bf16.msra.mxu0 0
      %3588 = vmatprep.subr.bf16.mxu0 0
      %3589 = vmatpush1.bf16.msra.mxu0 0
      %3590 = vmatprep.subr.bf16.mxu0 0
      %3591 = vmatpush1.bf16.msra.mxu0 0
      %3592 = vmatprep.subr.bf16.mxu0 0
      %3593 = vmatpush1.bf16.msra.mxu0 0
      %3594 = vmatprep.subr.bf16.mxu0 0
      %3595 = vmatpush1.bf16.msra.mxu0 0
      %3596 = vmatprep.subr.bf16.mxu0 0
      %3597 = vmatpush1.bf16.msra.mxu0 0
      %3598 = vmatprep.subr.bf16.mxu0 0
      %3599 = vmatpush1.bf16.msra.mxu0 0
      %3600 = vmatprep.subr.bf16.mxu0 0
      %3601 = vmatpush1.bf16.msra.mxu0 0
      %3602 = vmatprep.subr.bf16.mxu0 0
      %3603 = vmatpush1.bf16.msra.mxu0 0
      %3604 = vmatprep.subr.bf16.mxu0 0
      %3605 = vmatpush1.bf16.msra.mxu0 0
      %3606 = vmatprep.subr.bf16.mxu0 0
      %3607 = vmatpush1.bf16.msra.mxu0 0
      %3608 = vmatprep.subr.bf16.mxu0 0
      %3609 = vmatpush1.bf16.msra.mxu0 0
      %3610 = vmatprep.subr.bf16.mxu0 0
      %3611 = vmatpush1.bf16.msra.mxu0 0
      %3612 = vmatprep.subr.bf16.mxu0 0
      %3613 = vmatpush1.bf16.msra.mxu0 0
      %3614 = vmatprep.mubr.bf16.mxu0 0
      %3615 = vmatmul.mubr.bf16.gmra.mrb[0].mxu0 %v3568
      %v3616 = vpop.f32.mrb[0].mxu0
      %v3617 = vadd.f32 0.0, %v3616
      %v3618 = vpop.f32.mrb[0].mxu0
      %v3619 = vadd.f32 0.0, %v3618
      %v3620 = vpop.f32.mrb[0].mxu0
      %v3621 = vpop.f32.mrb[0].mxu0
      %3622 = vdwg.mxu0
      %3623 = vmatprep.subr.bf16.mxu0 %v3580
      %3624 = vmatpush1.bf16.msra.mxu0 %v3577
      %3625 = vmatprep.subr.bf16.mxu0 0
      %3626 = vmatpush1.bf16.msra.mxu0 0
      %3627 = vmatprep.subr.bf16.mxu0 0
      %3628 = vmatpush1.bf16.msra.mxu0 0
      %3629 = vmatprep.subr.bf16.mxu0 0
      %3630 = vmatpush1.bf16.msra.mxu0 0
      %3631 = vmatprep.subr.bf16.mxu0 0
      %3632 = vmatpush1.bf16.msra.mxu0 0
      %3633 = vmatprep.subr.bf16.mxu0 0
      %3634 = vmatpush1.bf16.msra.mxu0 0
      %3635 = vmatprep.subr.bf16.mxu0 0
      %3636 = vmatpush1.bf16.msra.mxu0 0
      %3637 = vmatprep.subr.bf16.mxu0 0
      %3638 = vmatpush1.bf16.msra.mxu0 0
      %3639 = vmatprep.subr.bf16.mxu0 0
      %3640 = vmatpush1.bf16.msra.mxu0 0
      %3641 = vmatprep.subr.bf16.mxu0 0
      %3642 = vmatpush1.bf16.msra.mxu0 0
      %3643 = vmatprep.subr.bf16.mxu0 0
      %3644 = vmatpush1.bf16.msra.mxu0 0
      %3645 = vmatprep.subr.bf16.mxu0 0
      %3646 = vmatpush1.bf16.msra.mxu0 0
      %3647 = vmatprep.subr.bf16.mxu0 0
      %3648 = vmatpush1.bf16.msra.mxu0 0
      %3649 = vmatprep.subr.bf16.mxu0 0
      %3650 = vmatpush1.bf16.msra.mxu0 0
      %3651 = vmatprep.subr.bf16.mxu0 0
      %3652 = vmatpush1.bf16.msra.mxu0 0
      %3653 = vmatprep.subr.bf16.mxu0 0
      %3654 = vmatpush1.bf16.msra.mxu0 0
      %3655 = vmatprep.mubr.bf16.mxu0 0
      %3656 = vmatmul.mubr.bf16.gmra.mrb[0].mxu0 %v3568
      %v3657 = vpop.f32.mrb[0].mxu0
      %v3658 = vadd.f32 0.0, %v3657
      %v3659 = vpop.f32.mrb[0].mxu0
      %v3660 = vadd.f32 0.0, %v3659
      %v3661 = vpop.f32.mrb[0].mxu0
      %v3662 = vpop.f32.mrb[0].mxu0
      %3663 = vdwg.mxu0
      %v3664 = vadd.f32 %v3517, %v3617
      %v3665 = vadd.f32 %v3518, %v3619
      %v3666 = vadd.f32 %v3519, %v3658
      %v3667 = vadd.f32 %v3520, %v3660
      %s3668 = scalar_lea.vmem %s2, 42
      %v3669 = vld [vmem:[%s3668] sm:$0x3]
      %v3670 = vmul.bf16 %v3669, %v631
      %v3671 = vld [vmem:[#allocation2 + $0x6] sm:$0xff]
      %v3672 = vld [vmem:[#allocation2 + $0xe] sm:$0x3]
      %v3675 = vcombine.high %v3671, %v3671
      %v3677 = vunpack.c.l.s4 1983009808
      %v3678 = vunpack.c.0.s8 %v3677
      %v3679 = vlaneseq
      %v3680 = vshrl.u32 %v3679, 7
      %v3681 = vsub.s32 %v3678, %v3680
      %v3682 = vrot.slane %v3671, %v3681
      %v3684 = vunpack.c.l.s4 1983009808
      %v3685 = vunpack.c.0.s8 %v3684
      %v3686 = vlaneseq
      %v3687 = vshrl.u32 %v3686, 7
      %v3688 = vsub.s32 %v3685, %v3687
      %v3689 = vrot.slane %v3675, %v3688
      %v3690 = vcombine.high %v3682, %v3682
      %v3691 = vcombine.high %v3689, %v3689
      %v3693 = vunpack.c.l.s4 1983009808
      %v3694 = vunpack.c.0.s8 %v3693
      %v3695 = vlaneseq
      %v3696 = vshrl.u32 %v3695, 7
      %v3697 = vsub.s32 %v3694, %v3696
      %v3698 = vrot.slane %v3672, %v3697
      %3699 = vrot.lane.b32.xlu0 %v3682, 106
      %v3700 = vpop.permute.xlu0 %3699
      %3701 = vrot.lane.b32.xlu0 %v3690, 106
      %v3702 = vpop.permute.xlu0 %3701
      %3703 = vrot.lane.b32.xlu0 %v3689, 106
      %v3704 = vpop.permute.xlu0 %3703
      %3705 = vrot.lane.b32.xlu0 %v3691, 106
      %v3706 = vpop.permute.xlu0 %3705
      %3707 = vrot.lane.b32.xlu0 %v3698, 106
      %v3708 = vpop.permute.xlu0 %3707
      %vm3709 = vcmask 867328
      %v3710 = vsel %vm3709, %v3700, %v3702
      %v3711 = vsel %vm3709, %v3702, %v3704
      %v3712 = vsel %vm3709, %v3704, %v3706
      %v3713 = vsel %vm3709, %v3706, %v3708
      %v3715 = vsel %vm679, %v3670, 0
      %v3718 = vsel %vm683, %v3710, 0
      %v3721 = vsel %vm683, %v3711, 0
      %v3724 = vsel %vm683, %v3712, 0
      %v3727 = vsel %vm683, %v3713, 0
      %3729 = vmatprep.subr.bf16.mxu0 %v3721
      %3730 = vmatpush1.bf16.msra.mxu0 %v3718
      %3731 = vmatprep.subr.bf16.mxu0 0
      %3732 = vmatpush1.bf16.msra.mxu0 0
      %3733 = vmatprep.subr.bf16.mxu0 0
      %3734 = vmatpush1.bf16.msra.mxu0 0
      %3735 = vmatprep.subr.bf16.mxu0 0
      %3736 = vmatpush1.bf16.msra.mxu0 0
      %3737 = vmatprep.subr.bf16.mxu0 0
      %3738 = vmatpush1.bf16.msra.mxu0 0
      %3739 = vmatprep.subr.bf16.mxu0 0
      %3740 = vmatpush1.bf16.msra.mxu0 0
      %3741 = vmatprep.subr.bf16.mxu0 0
      %3742 = vmatpush1.bf16.msra.mxu0 0
      %3743 = vmatprep.subr.bf16.mxu0 0
      %3744 = vmatpush1.bf16.msra.mxu0 0
      %3745 = vmatprep.subr.bf16.mxu0 0
      %3746 = vmatpush1.bf16.msra.mxu0 0
      %3747 = vmatprep.subr.bf16.mxu0 0
      %3748 = vmatpush1.bf16.msra.mxu0 0
      %3749 = vmatprep.subr.bf16.mxu0 0
      %3750 = vmatpush1.bf16.msra.mxu0 0
      %3751 = vmatprep.subr.bf16.mxu0 0
      %3752 = vmatpush1.bf16.msra.mxu0 0
      %3753 = vmatprep.subr.bf16.mxu0 0
      %3754 = vmatpush1.bf16.msra.mxu0 0
      %3755 = vmatprep.subr.bf16.mxu0 0
      %3756 = vmatpush1.bf16.msra.mxu0 0
      %3757 = vmatprep.subr.bf16.mxu0 0
      %3758 = vmatpush1.bf16.msra.mxu0 0
      %3759 = vmatprep.subr.bf16.mxu0 0
      %3760 = vmatpush1.bf16.msra.mxu0 0
      %3761 = vmatprep.mubr.bf16.mxu0 0
      %3762 = vmatmul.mubr.bf16.gmra.mrb[0].mxu0 %v3715
      %v3763 = vpop.f32.mrb[0].mxu0
      %v3764 = vadd.f32 0.0, %v3763
      %v3765 = vpop.f32.mrb[0].mxu0
      %v3766 = vadd.f32 0.0, %v3765
      %v3767 = vpop.f32.mrb[0].mxu0
      %v3768 = vpop.f32.mrb[0].mxu0
      %3769 = vdwg.mxu0
      %3770 = vmatprep.subr.bf16.mxu0 %v3727
      %3771 = vmatpush1.bf16.msra.mxu0 %v3724
      %3772 = vmatprep.subr.bf16.mxu0 0
      %3773 = vmatpush1.bf16.msra.mxu0 0
      %3774 = vmatprep.subr.bf16.mxu0 0
      %3775 = vmatpush1.bf16.msra.mxu0 0
      %3776 = vmatprep.subr.bf16.mxu0 0
      %3777 = vmatpush1.bf16.msra.mxu0 0
      %3778 = vmatprep.subr.bf16.mxu0 0
      %3779 = vmatpush1.bf16.msra.mxu0 0
      %3780 = vmatprep.subr.bf16.mxu0 0
      %3781 = vmatpush1.bf16.msra.mxu0 0
      %3782 = vmatprep.subr.bf16.mxu0 0
      %3783 = vmatpush1.bf16.msra.mxu0 0
      %3784 = vmatprep.subr.bf16.mxu0 0
      %3785 = vmatpush1.bf16.msra.mxu0 0
      %3786 = vmatprep.subr.bf16.mxu0 0
      %3787 = vmatpush1.bf16.msra.mxu0 0
      %3788 = vmatprep.subr.bf16.mxu0 0
      %3789 = vmatpush1.bf16.msra.mxu0 0
      %3790 = vmatprep.subr.bf16.mxu0 0
      %3791 = vmatpush1.bf16.msra.mxu0 0
      %3792 = vmatprep.subr.bf16.mxu0 0
      %3793 = vmatpush1.bf16.msra.mxu0 0
      %3794 = vmatprep.subr.bf16.mxu0 0
      %3795 = vmatpush1.bf16.msra.mxu0 0
      %3796 = vmatprep.subr.bf16.mxu0 0
      %3797 = vmatpush1.bf16.msra.mxu0 0
      %3798 = vmatprep.subr.bf16.mxu0 0
      %3799 = vmatpush1.bf16.msra.mxu0 0
      %3800 = vmatprep.subr.bf16.mxu0 0
      %3801 = vmatpush1.bf16.msra.mxu0 0
      %3802 = vmatprep.mubr.bf16.mxu0 0
      %3803 = vmatmul.mubr.bf16.gmra.mrb[0].mxu0 %v3715
      %v3804 = vpop.f32.mrb[0].mxu0
      %v3805 = vadd.f32 0.0, %v3804
      %v3806 = vpop.f32.mrb[0].mxu0
      %v3807 = vadd.f32 0.0, %v3806
      %v3808 = vpop.f32.mrb[0].mxu0
      %v3809 = vpop.f32.mrb[0].mxu0
      %3810 = vdwg.mxu0
      %v3811 = vadd.f32 %v3664, %v3764
      %v3812 = vadd.f32 %v3665, %v3766
      %v3813 = vadd.f32 %v3666, %v3805
      %v3814 = vadd.f32 %v3667, %v3807
      %s3815 = scalar_lea.vmem %s2, 44
      %v3816 = vld [vmem:[%s3815] sm:$0x3]
      %v3817 = vmul.bf16 %v3816, %v631
      %v3818 = vld [vmem:[#allocation2 + $0x6] sm:$0xff]
      %v3819 = vld [vmem:[#allocation2 + $0xe] sm:$0x3]
      %v3822 = vcombine.high %v3818, %v3818
      %v3824 = vunpack.c.l.s4 1983009808
      %v3825 = vunpack.c.0.s8 %v3824
      %v3826 = vlaneseq
      %v3827 = vshrl.u32 %v3826, 7
      %v3828 = vsub.s32 %v3825, %v3827
      %v3829 = vrot.slane %v3818, %v3828
      %v3831 = vunpack.c.l.s4 1983009808
      %v3832 = vunpack.c.0.s8 %v3831
      %v3833 = vlaneseq
      %v3834 = vshrl.u32 %v3833, 7
      %v3835 = vsub.s32 %v3832, %v3834
      %v3836 = vrot.slane %v3822, %v3835
      %v3837 = vcombine.high %v3829, %v3829
      %v3838 = vcombine.high %v3836, %v3836
      %v3840 = vunpack.c.l.s4 1983009808
      %v3841 = vunpack.c.0.s8 %v3840
      %v3842 = vlaneseq
      %v3843 = vshrl.u32 %v3842, 7
      %v3844 = vsub.s32 %v3841, %v3843
      %v3845 = vrot.slane %v3819, %v3844
      %3846 = vrot.lane.b32.xlu0 %v3829, 105
      %v3847 = vpop.permute.xlu0 %3846
      %3848 = vrot.lane.b32.xlu0 %v3837, 105
      %v3849 = vpop.permute.xlu0 %3848
      %3850 = vrot.lane.b32.xlu0 %v3836, 105
      %v3851 = vpop.permute.xlu0 %3850
      %3852 = vrot.lane.b32.xlu0 %v3838, 105
      %v3853 = vpop.permute.xlu0 %3852
      %3854 = vrot.lane.b32.xlu0 %v3845, 105
      %v3855 = vpop.permute.xlu0 %3854
      %vm3856 = vcmask 859136
      %v3857 = vsel %vm3856, %v3847, %v3849
      %v3858 = vsel %vm3856, %v3849, %v3851
      %v3859 = vsel %vm3856, %v3851, %v3853
      %v3860 = vsel %vm3856, %v3853, %v3855
      %v3862 = vsel %vm679, %v3817, 0
      %v3865 = vsel %vm683, %v3857, 0
      %v3868 = vsel %vm683, %v3858, 0
      %v3871 = vsel %vm683, %v3859, 0
      %v3874 = vsel %vm683, %v3860, 0
      %3876 = vmatprep.subr.bf16.mxu0 %v3868
      %3877 = vmatpush1.bf16.msra.mxu0 %v3865
      %3878 = vmatprep.subr.bf16.mxu0 0
      %3879 = vmatpush1.bf16.msra.mxu0 0
      %3880 = vmatprep.subr.bf16.mxu0 0
      %3881 = vmatpush1.bf16.msra.mxu0 0
      %3882 = vmatprep.subr.bf16.mxu0 0
      %3883 = vmatpush1.bf16.msra.mxu0 0
      %3884 = vmatprep.subr.bf16.mxu0 0
      %3885 = vmatpush1.bf16.msra.mxu0 0
      %3886 = vmatprep.subr.bf16.mxu0 0
      %3887 = vmatpush1.bf16.msra.mxu0 0
      %3888 = vmatprep.subr.bf16.mxu0 0
      %3889 = vmatpush1.bf16.msra.mxu0 0
      %3890 = vmatprep.subr.bf16.mxu0 0
      %3891 = vmatpush1.bf16.msra.mxu0 0
      %3892 = vmatprep.subr.bf16.mxu0 0
      %3893 = vmatpush1.bf16.msra.mxu0 0
      %3894 = vmatprep.subr.bf16.mxu0 0
      %3895 = vmatpush1.bf16.msra.mxu0 0
      %3896 = vmatprep.subr.bf16.mxu0 0
      %3897 = vmatpush1.bf16.msra.mxu0 0
      %3898 = vmatprep.subr.bf16.mxu0 0
      %3899 = vmatpush1.bf16.msra.mxu0 0
      %3900 = vmatprep.subr.bf16.mxu0 0
      %3901 = vmatpush1.bf16.msra.mxu0 0
      %3902 = vmatprep.subr.bf16.mxu0 0
      %3903 = vmatpush1.bf16.msra.mxu0 0
      %3904 = vmatprep.subr.bf16.mxu0 0
      %3905 = vmatpush1.bf16.msra.mxu0 0
      %3906 = vmatprep.subr.bf16.mxu0 0
      %3907 = vmatpush1.bf16.msra.mxu0 0
      %3908 = vmatprep.mubr.bf16.mxu0 0
      %3909 = vmatmul.mubr.bf16.gmra.mrb[0].mxu0 %v3862
      %v3910 = vpop.f32.mrb[0].mxu0
      %v3911 = vadd.f32 0.0, %v3910
      %v3912 = vpop.f32.mrb[0].mxu0
      %v3913 = vadd.f32 0.0, %v3912
      %v3914 = vpop.f32.mrb[0].mxu0
      %v3915 = vpop.f32.mrb[0].mxu0
      %3916 = vdwg.mxu0
      %3917 = vmatprep.subr.bf16.mxu0 %v3874
      %3918 = vmatpush1.bf16.msra.mxu0 %v3871
      %3919 = vmatprep.subr.bf16.mxu0 0
      %3920 = vmatpush1.bf16.msra.mxu0 0
      %3921 = vmatprep.subr.bf16.mxu0 0
      %3922 = vmatpush1.bf16.msra.mxu0 0
      %3923 = vmatprep.subr.bf16.mxu0 0
      %3924 = vmatpush1.bf16.msra.mxu0 0
      %3925 = vmatprep.subr.bf16.mxu0 0
      %3926 = vmatpush1.bf16.msra.mxu0 0
      %3927 = vmatprep.subr.bf16.mxu0 0
      %3928 = vmatpush1.bf16.msra.mxu0 0
      %3929 = vmatprep.subr.bf16.mxu0 0
      %3930 = vmatpush1.bf16.msra.mxu0 0
      %3931 = vmatprep.subr.bf16.mxu0 0
      %3932 = vmatpush1.bf16.msra.mxu0 0
      %3933 = vmatprep.subr.bf16.mxu0 0
      %3934 = vmatpush1.bf16.msra.mxu0 0
      %3935 = vmatprep.subr.bf16.mxu0 0
      %3936 = vmatpush1.bf16.msra.mxu0 0
      %3937 = vmatprep.subr.bf16.mxu0 0
      %3938 = vmatpush1.bf16.msra.mxu0 0
      %3939 = vmatprep.subr.bf16.mxu0 0
      %3940 = vmatpush1.bf16.msra.mxu0 0
      %3941 = vmatprep.subr.bf16.mxu0 0
      %3942 = vmatpush1.bf16.msra.mxu0 0
      %3943 = vmatprep.subr.bf16.mxu0 0
      %3944 = vmatpush1.bf16.msra.mxu0 0
      %3945 = vmatprep.subr.bf16.mxu0 0
      %3946 = vmatpush1.bf16.msra.mxu0 0
      %3947 = vmatprep.subr.bf16.mxu0 0
      %3948 = vmatpush1.bf16.msra.mxu0 0
      %3949 = vmatprep.mubr.bf16.mxu0 0
      %3950 = vmatmul.mubr.bf16.gmra.mrb[0].mxu0 %v3862
      %v3951 = vpop.f32.mrb[0].mxu0
      %v3952 = vadd.f32 0.0, %v3951
      %v3953 = vpop.f32.mrb[0].mxu0
      %v3954 = vadd.f32 0.0, %v3953
      %v3955 = vpop.f32.mrb[0].mxu0
      %v3956 = vpop.f32.mrb[0].mxu0
      %3957 = vdwg.mxu0
      %v3958 = vadd.f32 %v3811, %v3911
      %v3959 = vadd.f32 %v3812, %v3913
      %v3960 = vadd.f32 %v3813, %v3952
      %v3961 = vadd.f32 %v3814, %v3954
      %s3962 = scalar_lea.vmem %s2, 46
      %v3963 = vld [vmem:[%s3962] sm:$0x3]
      %v3964 = vmul.bf16 %v3963, %v631
      %v3965 = vld [vmem:[#allocation2 + $0x6] sm:$0xff]
      %v3966 = vld [vmem:[#allocation2 + $0xe] sm:$0x3]
      %v3969 = vcombine.high %v3965, %v3965
      %v3971 = vunpack.c.l.s4 1983009808
      %v3972 = vunpack.c.0.s8 %v3971
      %v3973 = vlaneseq
      %v3974 = vshrl.u32 %v3973, 7
      %v3975 = vsub.s32 %v3972, %v3974
      %v3976 = vrot.slane %v3965, %v3975
      %v3978 = vunpack.c.l.s4 1983009808
      %v3979 = vunpack.c.0.s8 %v3978
      %v3980 = vlaneseq
      %v3981 = vshrl.u32 %v3980, 7
      %v3982 = vsub.s32 %v3979, %v3981
      %v3983 = vrot.slane %v3969, %v3982
      %v3984 = vcombine.high %v3976, %v3976
      %v3985 = vcombine.high %v3983, %v3983
      %v3987 = vunpack.c.l.s4 1983009808
      %v3988 = vunpack.c.0.s8 %v3987
      %v3989 = vlaneseq
      %v3990 = vshrl.u32 %v3989, 7
      %v3991 = vsub.s32 %v3988, %v3990
      %v3992 = vrot.slane %v3966, %v3991
      %3993 = vrot.lane.b32.xlu0 %v3976, 104
      %v3994 = vpop.permute.xlu0 %3993
      %3995 = vrot.lane.b32.xlu0 %v3984, 104
      %v3996 = vpop.permute.xlu0 %3995
      %3997 = vrot.lane.b32.xlu0 %v3983, 104
      %v3998 = vpop.permute.xlu0 %3997
      %3999 = vrot.lane.b32.xlu0 %v3985, 104
      %v4000 = vpop.permute.xlu0 %3999
      %4001 = vrot.lane.b32.xlu0 %v3992, 104
      %v4002 = vpop.permute.xlu0 %4001
      %vm4003 = vcmask 850944
      %v4004 = vsel %vm4003, %v3994, %v3996
      %v4005 = vsel %vm4003, %v3996, %v3998
      %v4006 = vsel %vm4003, %v3998, %v4000
      %v4007 = vsel %vm4003, %v4000, %v4002
      %v4009 = vsel %vm679, %v3964, 0
      %v4012 = vsel %vm683, %v4004, 0
      %v4015 = vsel %vm683, %v4005, 0
      %v4018 = vsel %vm683, %v4006, 0
      %v4021 = vsel %vm683, %v4007, 0
      %4023 = vmatprep.subr.bf16.mxu0 %v4015
      %4024 = vmatpush1.bf16.msra.mxu0 %v4012
      %4025 = vmatprep.subr.bf16.mxu0 0
      %4026 = vmatpush1.bf16.msra.mxu0 0
      %4027 = vmatprep.subr.bf16.mxu0 0
      %4028 = vmatpush1.bf16.msra.mxu0 0
      %4029 = vmatprep.subr.bf16.mxu0 0
      %4030 = vmatpush1.bf16.msra.mxu0 0
      %4031 = vmatprep.subr.bf16.mxu0 0
      %4032 = vmatpush1.bf16.msra.mxu0 0
      %4033 = vmatprep.subr.bf16.mxu0 0
      %4034 = vmatpush1.bf16.msra.mxu0 0
      %4035 = vmatprep.subr.bf16.mxu0 0
      %4036 = vmatpush1.bf16.msra.mxu0 0
      %4037 = vmatprep.subr.bf16.mxu0 0
      %4038 = vmatpush1.bf16.msra.mxu0 0
      %4039 = vmatprep.subr.bf16.mxu0 0
      %4040 = vmatpush1.bf16.msra.mxu0 0
      %4041 = vmatprep.subr.bf16.mxu0 0
      %4042 = vmatpush1.bf16.msra.mxu0 0
      %4043 = vmatprep.subr.bf16.mxu0 0
      %4044 = vmatpush1.bf16.msra.mxu0 0
      %4045 = vmatprep.subr.bf16.mxu0 0
      %4046 = vmatpush1.bf16.msra.mxu0 0
      %4047 = vmatprep.subr.bf16.mxu0 0
      %4048 = vmatpush1.bf16.msra.mxu0 0
      %4049 = vmatprep.subr.bf16.mxu0 0
      %4050 = vmatpush1.bf16.msra.mxu0 0
      %4051 = vmatprep.subr.bf16.mxu0 0
      %4052 = vmatpush1.bf16.msra.mxu0 0
      %4053 = vmatprep.subr.bf16.mxu0 0
      %4054 = vmatpush1.bf16.msra.mxu0 0
      %4055 = vmatprep.mubr.bf16.mxu0 0
      %4056 = vmatmul.mubr.bf16.gmra.mrb[0].mxu0 %v4009
      %v4057 = vpop.f32.mrb[0].mxu0
      %v4058 = vadd.f32 0.0, %v4057
      %v4059 = vpop.f32.mrb[0].mxu0
      %v4060 = vadd.f32 0.0, %v4059
      %v4061 = vpop.f32.mrb[0].mxu0
      %v4062 = vpop.f32.mrb[0].mxu0
      %4063 = vdwg.mxu0
      %4064 = vmatprep.subr.bf16.mxu0 %v4021
      %4065 = vmatpush1.bf16.msra.mxu0 %v4018
      %4066 = vmatprep.subr.bf16.mxu0 0
      %4067 = vmatpush1.bf16.msra.mxu0 0
      %4068 = vmatprep.subr.bf16.mxu0 0
      %4069 = vmatpush1.bf16.msra.mxu0 0
      %4070 = vmatprep.subr.bf16.mxu0 0
      %4071 = vmatpush1.bf16.msra.mxu0 0
      %4072 = vmatprep.subr.bf16.mxu0 0
      %4073 = vmatpush1.bf16.msra.mxu0 0
      %4074 = vmatprep.subr.bf16.mxu0 0
      %4075 = vmatpush1.bf16.msra.mxu0 0
      %4076 = vmatprep.subr.bf16.mxu0 0
      %4077 = vmatpush1.bf16.msra.mxu0 0
      %4078 = vmatprep.subr.bf16.mxu0 0
      %4079 = vmatpush1.bf16.msra.mxu0 0
      %4080 = vmatprep.subr.bf16.mxu0 0
      %4081 = vmatpush1.bf16.msra.mxu0 0
      %4082 = vmatprep.subr.bf16.mxu0 0
      %4083 = vmatpush1.bf16.msra.mxu0 0
      %4084 = vmatprep.subr.bf16.mxu0 0
      %4085 = vmatpush1.bf16.msra.mxu0 0
      %4086 = vmatprep.subr.bf16.mxu0 0
      %4087 = vmatpush1.bf16.msra.mxu0 0
      %4088 = vmatprep.subr.bf16.mxu0 0
      %4089 = vmatpush1.bf16.msra.mxu0 0
      %4090 = vmatprep.subr.bf16.mxu0 0
      %4091 = vmatpush1.bf16.msra.mxu0 0
      %4092 = vmatprep.subr.bf16.mxu0 0
      %4093 = vmatpush1.bf16.msra.mxu0 0
      %4094 = vmatprep.subr.bf16.mxu0 0
      %4095 = vmatpush1.bf16.msra.mxu0 0
      %4096 = vmatprep.mubr.bf16.mxu0 0
      %4097 = vmatmul.mubr.bf16.gmra.mrb[0].mxu0 %v4009
      %v4098 = vpop.f32.mrb[0].mxu0
      %v4099 = vadd.f32 0.0, %v4098
      %v4100 = vpop.f32.mrb[0].mxu0
      %v4101 = vadd.f32 0.0, %v4100
      %v4102 = vpop.f32.mrb[0].mxu0
      %v4103 = vpop.f32.mrb[0].mxu0
      %4104 = vdwg.mxu0
      %v4105 = vadd.f32 %v3958, %v4058
      %v4106 = vadd.f32 %v3959, %v4060
      %v4107 = vadd.f32 %v3960, %v4099
      %v4108 = vadd.f32 %v3961, %v4101
      %s4109 = scalar_lea.vmem %s2, 48
      %v4110 = vld [vmem:[%s4109] sm:$0x3]
      %v4111 = vmul.bf16 %v4110, %v631
      %v4112 = vld [vmem:[#allocation2 + $0x6] sm:$0xff]
      %v4113 = vld [vmem:[#allocation2 + $0xe] sm:$0x3]
      %v4116 = vcombine.high %v4112, %v4112
      %v4118 = vunpack.c.l.s4 1983009808
      %v4119 = vunpack.c.0.s8 %v4118
      %v4120 = vlaneseq
      %v4121 = vshrl.u32 %v4120, 7
      %v4122 = vsub.s32 %v4119, %v4121
      %v4123 = vrot.slane %v4112, %v4122
      %v4125 = vunpack.c.l.s4 1983009808
      %v4126 = vunpack.c.0.s8 %v4125
      %v4127 = vlaneseq
      %v4128 = vshrl.u32 %v4127, 7
      %v4129 = vsub.s32 %v4126, %v4128
      %v4130 = vrot.slane %v4116, %v4129
      %v4131 = vcombine.high %v4123, %v4123
      %v4132 = vcombine.high %v4130, %v4130
      %v4134 = vunpack.c.l.s4 1983009808
      %v4135 = vunpack.c.0.s8 %v4134
      %v4136 = vlaneseq
      %v4137 = vshrl.u32 %v4136, 7
      %v4138 = vsub.s32 %v4135, %v4137
      %v4139 = vrot.slane %v4113, %v4138
      %4140 = vrot.lane.b32.xlu0 %v4123, 92
      %v4141 = vpop.permute.xlu0 %4140
      %4142 = vrot.lane.b32.xlu0 %v4131, 92
      %v4143 = vpop.permute.xlu0 %4142
      %4144 = vrot.lane.b32.xlu0 %v4130, 92
      %v4145 = vpop.permute.xlu0 %4144
      %4146 = vrot.lane.b32.xlu0 %v4132, 92
      %v4147 = vpop.permute.xlu0 %4146
      %4148 = vrot.lane.b32.xlu0 %v4139, 92
      %v4149 = vpop.permute.xlu0 %4148
      %vm4150 = vcmask 752640
      %v4151 = vsel %vm4150, %v4141, %v4143
      %v4152 = vsel %vm4150, %v4143, %v4145
      %v4153 = vsel %vm4150, %v4145, %v4147
      %v4154 = vsel %vm4150, %v4147, %v4149
      %v4156 = vsel %vm679, %v4111, 0
      %v4159 = vsel %vm683, %v4151, 0
      %v4162 = vsel %vm683, %v4152, 0
      %v4165 = vsel %vm683, %v4153, 0
      %v4168 = vsel %vm683, %v4154, 0
      %4170 = vmatprep.subr.bf16.mxu0 %v4162
      %4171 = vmatpush1.bf16.msra.mxu0 %v4159
      %4172 = vmatprep.subr.bf16.mxu0 0
      %4173 = vmatpush1.bf16.msra.mxu0 0
      %4174 = vmatprep.subr.bf16.mxu0 0
      %4175 = vmatpush1.bf16.msra.mxu0 0
      %4176 = vmatprep.subr.bf16.mxu0 0
      %4177 = vmatpush1.bf16.msra.mxu0 0
      %4178 = vmatprep.subr.bf16.mxu0 0
      %4179 = vmatpush1.bf16.msra.mxu0 0
      %4180 = vmatprep.subr.bf16.mxu0 0
      %4181 = vmatpush1.bf16.msra.mxu0 0
      %4182 = vmatprep.subr.bf16.mxu0 0
      %4183 = vmatpush1.bf16.msra.mxu0 0
      %4184 = vmatprep.subr.bf16.mxu0 0
      %4185 = vmatpush1.bf16.msra.mxu0 0
      %4186 = vmatprep.subr.bf16.mxu0 0
      %4187 = vmatpush1.bf16.msra.mxu0 0
      %4188 = vmatprep.subr.bf16.mxu0 0
      %4189 = vmatpush1.bf16.msra.mxu0 0
      %4190 = vmatprep.subr.bf16.mxu0 0
      %4191 = vmatpush1.bf16.msra.mxu0 0
      %4192 = vmatprep.subr.bf16.mxu0 0
      %4193 = vmatpush1.bf16.msra.mxu0 0
      %4194 = vmatprep.subr.bf16.mxu0 0
      %4195 = vmatpush1.bf16.msra.mxu0 0
      %4196 = vmatprep.subr.bf16.mxu0 0
      %4197 = vmatpush1.bf16.msra.mxu0 0
      %4198 = vmatprep.subr.bf16.mxu0 0
      %4199 = vmatpush1.bf16.msra.mxu0 0
      %4200 = vmatprep.subr.bf16.mxu0 0
      %4201 = vmatpush1.bf16.msra.mxu0 0
      %4202 = vmatprep.mubr.bf16.mxu0 0
      %4203 = vmatmul.mubr.bf16.gmra.mrb[0].mxu0 %v4156
      %v4204 = vpop.f32.mrb[0].mxu0
      %v4205 = vadd.f32 0.0, %v4204
      %v4206 = vpop.f32.mrb[0].mxu0
      %v4207 = vadd.f32 0.0, %v4206
      %v4208 = vpop.f32.mrb[0].mxu0
      %v4209 = vpop.f32.mrb[0].mxu0
      %4210 = vdwg.mxu0
      %4211 = vmatprep.subr.bf16.mxu0 %v4168
      %4212 = vmatpush1.bf16.msra.mxu0 %v4165
      %4213 = vmatprep.subr.bf16.mxu0 0
      %4214 = vmatpush1.bf16.msra.mxu0 0
      %4215 = vmatprep.subr.bf16.mxu0 0
      %4216 = vmatpush1.bf16.msra.mxu0 0
      %4217 = vmatprep.subr.bf16.mxu0 0
      %4218 = vmatpush1.bf16.msra.mxu0 0
      %4219 = vmatprep.subr.bf16.mxu0 0
      %4220 = vmatpush1.bf16.msra.mxu0 0
      %4221 = vmatprep.subr.bf16.mxu0 0
      %4222 = vmatpush1.bf16.msra.mxu0 0
      %4223 = vmatprep.subr.bf16.mxu0 0
      %4224 = vmatpush1.bf16.msra.mxu0 0
      %4225 = vmatprep.subr.bf16.mxu0 0
      %4226 = vmatpush1.bf16.msra.mxu0 0
      %4227 = vmatprep.subr.bf16.mxu0 0
      %4228 = vmatpush1.bf16.msra.mxu0 0
      %4229 = vmatprep.subr.bf16.mxu0 0
      %4230 = vmatpush1.bf16.msra.mxu0 0
      %4231 = vmatprep.subr.bf16.mxu0 0
      %4232 = vmatpush1.bf16.msra.mxu0 0
      %4233 = vmatprep.subr.bf16.mxu0 0
      %4234 = vmatpush1.bf16.msra.mxu0 0
      %4235 = vmatprep.subr.bf16.mxu0 0
      %4236 = vmatpush1.bf16.msra.mxu0 0
      %4237 = vmatprep.subr.bf16.mxu0 0
      %4238 = vmatpush1.bf16.msra.mxu0 0
      %4239 = vmatprep.subr.bf16.mxu0 0
      %4240 = vmatpush1.bf16.msra.mxu0 0
      %4241 = vmatprep.subr.bf16.mxu0 0
      %4242 = vmatpush1.bf16.msra.mxu0 0
      %4243 = vmatprep.mubr.bf16.mxu0 0
      %4244 = vmatmul.mubr.bf16.gmra.mrb[0].mxu0 %v4156
      %v4245 = vpop.f32.mrb[0].mxu0
      %v4246 = vadd.f32 0.0, %v4245
      %v4247 = vpop.f32.mrb[0].mxu0
      %v4248 = vadd.f32 0.0, %v4247
      %v4249 = vpop.f32.mrb[0].mxu0
      %v4250 = vpop.f32.mrb[0].mxu0
      %4251 = vdwg.mxu0
      %v4252 = vadd.f32 %v4105, %v4205
      %v4253 = vadd.f32 %v4106, %v4207
      %v4254 = vadd.f32 %v4107, %v4246
      %v4255 = vadd.f32 %v4108, %v4248
      %s4256 = scalar_lea.vmem %s2, 50
      %v4257 = vld [vmem:[%s4256] sm:$0x3]
      %v4258 = vmul.bf16 %v4257, %v631
      %v4259 = vld [vmem:[#allocation2 + $0x6] sm:$0xff]
      %v4260 = vld [vmem:[#allocation2 + $0xe] sm:$0x3]
      %v4263 = vcombine.high %v4259, %v4259
      %v4265 = vunpack.c.l.s4 1983009808
      %v4266 = vunpack.c.0.s8 %v4265
      %v4267 = vlaneseq
      %v4268 = vshrl.u32 %v4267, 7
      %v4269 = vsub.s32 %v4266, %v4268
      %v4270 = vrot.slane %v4259, %v4269
      %v4272 = vunpack.c.l.s4 1983009808
      %v4273 = vunpack.c.0.s8 %v4272
      %v4274 = vlaneseq
      %v4275 = vshrl.u32 %v4274, 7
      %v4276 = vsub.s32 %v4273, %v4275
      %v4277 = vrot.slane %v4263, %v4276
      %v4278 = vcombine.high %v4270, %v4270
      %v4279 = vcombine.high %v4277, %v4277
      %v4281 = vunpack.c.l.s4 1983009808
      %v4282 = vunpack.c.0.s8 %v4281
      %v4283 = vlaneseq
      %v4284 = vshrl.u32 %v4283, 7
      %v4285 = vsub.s32 %v4282, %v4284
      %v4286 = vrot.slane %v4260, %v4285
      %4287 = vrot.lane.b32.xlu0 %v4270, 91
      %v4288 = vpop.permute.xlu0 %4287
      %4289 = vrot.lane.b32.xlu0 %v4278, 91
      %v4290 = vpop.permute.xlu0 %4289
      %4291 = vrot.lane.b32.xlu0 %v4277, 91
      %v4292 = vpop.permute.xlu0 %4291
      %4293 = vrot.lane.b32.xlu0 %v4279, 91
      %v4294 = vpop.permute.xlu0 %4293
      %4295 = vrot.lane.b32.xlu0 %v4286, 91
      %v4296 = vpop.permute.xlu0 %4295
      %vm4297 = vcmask 744448
      %v4298 = vsel %vm4297, %v4288, %v4290
      %v4299 = vsel %vm4297, %v4290, %v4292
      %v4300 = vsel %vm4297, %v4292, %v4294
      %v4301 = vsel %vm4297, %v4294, %v4296
      %v4303 = vsel %vm679, %v4258, 0
      %v4306 = vsel %vm683, %v4298, 0
      %v4309 = vsel %vm683, %v4299, 0
      %v4312 = vsel %vm683, %v4300, 0
      %v4315 = vsel %vm683, %v4301, 0
      %4317 = vmatprep.subr.bf16.mxu0 %v4309
      %4318 = vmatpush1.bf16.msra.mxu0 %v4306
      %4319 = vmatprep.subr.bf16.mxu0 0
      %4320 = vmatpush1.bf16.msra.mxu0 0
      %4321 = vmatprep.subr.bf16.mxu0 0
      %4322 = vmatpush1.bf16.msra.mxu0 0
      %4323 = vmatprep.subr.bf16.mxu0 0
      %4324 = vmatpush1.bf16.msra.mxu0 0
      %4325 = vmatprep.subr.bf16.mxu0 0
      %4326 = vmatpush1.bf16.msra.mxu0 0
      %4327 = vmatprep.subr.bf16.mxu0 0
      %4328 = vmatpush1.bf16.msra.mxu0 0
      %4329 = vmatprep.subr.bf16.mxu0 0
      %4330 = vmatpush1.bf16.msra.mxu0 0
      %4331 = vmatprep.subr.bf16.mxu0 0
      %4332 = vmatpush1.bf16.msra.mxu0 0
      %4333 = vmatprep.subr.bf16.mxu0 0
      %4334 = vmatpush1.bf16.msra.mxu0 0
      %4335 = vmatprep.subr.bf16.mxu0 0
      %4336 = vmatpush1.bf16.msra.mxu0 0
      %4337 = vmatprep.subr.bf16.mxu0 0
      %4338 = vmatpush1.bf16.msra.mxu0 0
      %4339 = vmatprep.subr.bf16.mxu0 0
      %4340 = vmatpush1.bf16.msra.mxu0 0
      %4341 = vmatprep.subr.bf16.mxu0 0
      %4342 = vmatpush1.bf16.msra.mxu0 0
      %4343 = vmatprep.subr.bf16.mxu0 0
      %4344 = vmatpush1.bf16.msra.mxu0 0
      %4345 = vmatprep.subr.bf16.mxu0 0
      %4346 = vmatpush1.bf16.msra.mxu0 0
      %4347 = vmatprep.subr.bf16.mxu0 0
      %4348 = vmatpush1.bf16.msra.mxu0 0
      %4349 = vmatprep.mubr.bf16.mxu0 0
      %4350 = vmatmul.mubr.bf16.gmra.mrb[0].mxu0 %v4303
      %v4351 = vpop.f32.mrb[0].mxu0
      %v4352 = vadd.f32 0.0, %v4351
      %v4353 = vpop.f32.mrb[0].mxu0
      %v4354 = vadd.f32 0.0, %v4353
      %v4355 = vpop.f32.mrb[0].mxu0
      %v4356 = vpop.f32.mrb[0].mxu0
      %4357 = vdwg.mxu0
      %4358 = vmatprep.subr.bf16.mxu0 %v4315
      %4359 = vmatpush1.bf16.msra.mxu0 %v4312
      %4360 = vmatprep.subr.bf16.mxu0 0
      %4361 = vmatpush1.bf16.msra.mxu0 0
      %4362 = vmatprep.subr.bf16.mxu0 0
      %4363 = vmatpush1.bf16.msra.mxu0 0
      %4364 = vmatprep.subr.bf16.mxu0 0
      %4365 = vmatpush1.bf16.msra.mxu0 0
      %4366 = vmatprep.subr.bf16.mxu0 0
      %4367 = vmatpush1.bf16.msra.mxu0 0
      %4368 = vmatprep.subr.bf16.mxu0 0
      %4369 = vmatpush1.bf16.msra.mxu0 0
      %4370 = vmatprep.subr.bf16.mxu0 0
      %4371 = vmatpush1.bf16.msra.mxu0 0
      %4372 = vmatprep.subr.bf16.mxu0 0
      %4373 = vmatpush1.bf16.msra.mxu0 0
      %4374 = vmatprep.subr.bf16.mxu0 0
      %4375 = vmatpush1.bf16.msra.mxu0 0
      %4376 = vmatprep.subr.bf16.mxu0 0
      %4377 = vmatpush1.bf16.msra.mxu0 0
      %4378 = vmatprep.subr.bf16.mxu0 0
      %4379 = vmatpush1.bf16.msra.mxu0 0
      %4380 = vmatprep.subr.bf16.mxu0 0
      %4381 = vmatpush1.bf16.msra.mxu0 0
      %4382 = vmatprep.subr.bf16.mxu0 0
      %4383 = vmatpush1.bf16.msra.mxu0 0
      %4384 = vmatprep.subr.bf16.mxu0 0
      %4385 = vmatpush1.bf16.msra.mxu0 0
      %4386 = vmatprep.subr.bf16.mxu0 0
      %4387 = vmatpush1.bf16.msra.mxu0 0
      %4388 = vmatprep.subr.bf16.mxu0 0
      %4389 = vmatpush1.bf16.msra.mxu0 0
      %4390 = vmatprep.mubr.bf16.mxu0 0
      %4391 = vmatmul.mubr.bf16.gmra.mrb[0].mxu0 %v4303
      %v4392 = vpop.f32.mrb[0].mxu0
      %v4393 = vadd.f32 0.0, %v4392
      %v4394 = vpop.f32.mrb[0].mxu0
      %v4395 = vadd.f32 0.0, %v4394
      %v4396 = vpop.f32.mrb[0].mxu0
      %v4397 = vpop.f32.mrb[0].mxu0
      %4398 = vdwg.mxu0
      %v4399 = vadd.f32 %v4252, %v4352
      %v4400 = vadd.f32 %v4253, %v4354
      %v4401 = vadd.f32 %v4254, %v4393
      %v4402 = vadd.f32 %v4255, %v4395
      %s4403 = scalar_lea.vmem %s2, 52
      %v4404 = vld [vmem:[%s4403] sm:$0x3]
      %v4405 = vmul.bf16 %v4404, %v631
      %v4406 = vld [vmem:[#allocation2 + $0x6] sm:$0xff]
      %v4407 = vld [vmem:[#allocation2 + $0xe] sm:$0x3]
      %v4410 = vcombine.high %v4406, %v4406
      %v4412 = vunpack.c.l.s4 1983009808
      %v4413 = vunpack.c.0.s8 %v4412
      %v4414 = vlaneseq
      %v4415 = vshrl.u32 %v4414, 7
      %v4416 = vsub.s32 %v4413, %v4415
      %v4417 = vrot.slane %v4406, %v4416
      %v4419 = vunpack.c.l.s4 1983009808
      %v4420 = vunpack.c.0.s8 %v4419
      %v4421 = vlaneseq
      %v4422 = vshrl.u32 %v4421, 7
      %v4423 = vsub.s32 %v4420, %v4422
      %v4424 = vrot.slane %v4410, %v4423
      %v4425 = vcombine.high %v4417, %v4417
      %v4426 = vcombine.high %v4424, %v4424
      %v4428 = vunpack.c.l.s4 1983009808
      %v4429 = vunpack.c.0.s8 %v4428
      %v4430 = vlaneseq
      %v4431 = vshrl.u32 %v4430, 7
      %v4432 = vsub.s32 %v4429, %v4431
      %v4433 = vrot.slane %v4407, %v4432
      %4434 = vrot.lane.b32.xlu0 %v4417, 90
      %v4435 = vpop.permute.xlu0 %4434
      %4436 = vrot.lane.b32.xlu0 %v4425, 90
      %v4437 = vpop.permute.xlu0 %4436
      %4438 = vrot.lane.b32.xlu0 %v4424, 90
      %v4439 = vpop.permute.xlu0 %4438
      %4440 = vrot.lane.b32.xlu0 %v4426, 90
      %v4441 = vpop.permute.xlu0 %4440
      %4442 = vrot.lane.b32.xlu0 %v4433, 90
      %v4443 = vpop.permute.xlu0 %4442
      %vm4444 = vcmask 736256
      %v4445 = vsel %vm4444, %v4435, %v4437
      %v4446 = vsel %vm4444, %v4437, %v4439
      %v4447 = vsel %vm4444, %v4439, %v4441
      %v4448 = vsel %vm4444, %v4441, %v4443
      %v4450 = vsel %vm679, %v4405, 0
      %v4453 = vsel %vm683, %v4445, 0
      %v4456 = vsel %vm683, %v4446, 0
      %v4459 = vsel %vm683, %v4447, 0
      %v4462 = vsel %vm683, %v4448, 0
      %4464 = vmatprep.subr.bf16.mxu0 %v4456
      %4465 = vmatpush1.bf16.msra.mxu0 %v4453
      %4466 = vmatprep.subr.bf16.mxu0 0
      %4467 = vmatpush1.bf16.msra.mxu0 0
      %4468 = vmatprep.subr.bf16.mxu0 0
      %4469 = vmatpush1.bf16.msra.mxu0 0
      %4470 = vmatprep.subr.bf16.mxu0 0
      %4471 = vmatpush1.bf16.msra.mxu0 0
      %4472 = vmatprep.subr.bf16.mxu0 0
      %4473 = vmatpush1.bf16.msra.mxu0 0
      %4474 = vmatprep.subr.bf16.mxu0 0
      %4475 = vmatpush1.bf16.msra.mxu0 0
      %4476 = vmatprep.subr.bf16.mxu0 0
      %4477 = vmatpush1.bf16.msra.mxu0 0
      %4478 = vmatprep.subr.bf16.mxu0 0
      %4479 = vmatpush1.bf16.msra.mxu0 0
      %4480 = vmatprep.subr.bf16.mxu0 0
      %4481 = vmatpush1.bf16.msra.mxu0 0
      %4482 = vmatprep.subr.bf16.mxu0 0
      %4483 = vmatpush1.bf16.msra.mxu0 0
      %4484 = vmatprep.subr.bf16.mxu0 0
      %4485 = vmatpush1.bf16.msra.mxu0 0
      %4486 = vmatprep.subr.bf16.mxu0 0
      %4487 = vmatpush1.bf16.msra.mxu0 0
      %4488 = vmatprep.subr.bf16.mxu0 0
      %4489 = vmatpush1.bf16.msra.mxu0 0
      %4490 = vmatprep.subr.bf16.mxu0 0
      %4491 = vmatpush1.bf16.msra.mxu0 0
      %4492 = vmatprep.subr.bf16.mxu0 0
      %4493 = vmatpush1.bf16.msra.mxu0 0
      %4494 = vmatprep.subr.bf16.mxu0 0
      %4495 = vmatpush1.bf16.msra.mxu0 0
      %4496 = vmatprep.mubr.bf16.mxu0 0
      %4497 = vmatmul.mubr.bf16.gmra.mrb[0].mxu0 %v4450
      %v4498 = vpop.f32.mrb[0].mxu0
      %v4499 = vadd.f32 0.0, %v4498
      %v4500 = vpop.f32.mrb[0].mxu0
      %v4501 = vadd.f32 0.0, %v4500
      %v4502 = vpop.f32.mrb[0].mxu0
      %v4503 = vpop.f32.mrb[0].mxu0
      %4504 = vdwg.mxu0
      %4505 = vmatprep.subr.bf16.mxu0 %v4462
      %4506 = vmatpush1.bf16.msra.mxu0 %v4459
      %4507 = vmatprep.subr.bf16.mxu0 0
      %4508 = vmatpush1.bf16.msra.mxu0 0
      %4509 = vmatprep.subr.bf16.mxu0 0
      %4510 = vmatpush1.bf16.msra.mxu0 0
      %4511 = vmatprep.subr.bf16.mxu0 0
      %4512 = vmatpush1.bf16.msra.mxu0 0
      %4513 = vmatprep.subr.bf16.mxu0 0
      %4514 = vmatpush1.bf16.msra.mxu0 0
      %4515 = vmatprep.subr.bf16.mxu0 0
      %4516 = vmatpush1.bf16.msra.mxu0 0
      %4517 = vmatprep.subr.bf16.mxu0 0
      %4518 = vmatpush1.bf16.msra.mxu0 0
      %4519 = vmatprep.subr.bf16.mxu0 0
      %4520 = vmatpush1.bf16.msra.mxu0 0
      %4521 = vmatprep.subr.bf16.mxu0 0
      %4522 = vmatpush1.bf16.msra.mxu0 0
      %4523 = vmatprep.subr.bf16.mxu0 0
      %4524 = vmatpush1.bf16.msra.mxu0 0
      %4525 = vmatprep.subr.bf16.mxu0 0
      %4526 = vmatpush1.bf16.msra.mxu0 0
      %4527 = vmatprep.subr.bf16.mxu0 0
      %4528 = vmatpush1.bf16.msra.mxu0 0
      %4529 = vmatprep.subr.bf16.mxu0 0
      %4530 = vmatpush1.bf16.msra.mxu0 0
      %4531 = vmatprep.subr.bf16.mxu0 0
      %4532 = vmatpush1.bf16.msra.mxu0 0
      %4533 = vmatprep.subr.bf16.mxu0 0
      %4534 = vmatpush1.bf16.msra.mxu0 0
      %4535 = vmatprep.subr.bf16.mxu0 0
      %4536 = vmatpush1.bf16.msra.mxu0 0
      %4537 = vmatprep.mubr.bf16.mxu0 0
      %4538 = vmatmul.mubr.bf16.gmra.mrb[0].mxu0 %v4450
      %v4539 = vpop.f32.mrb[0].mxu0
      %v4540 = vadd.f32 0.0, %v4539
      %v4541 = vpop.f32.mrb[0].mxu0
      %v4542 = vadd.f32 0.0, %v4541
      %v4543 = vpop.f32.mrb[0].mxu0
      %v4544 = vpop.f32.mrb[0].mxu0
      %4545 = vdwg.mxu0
      %v4546 = vadd.f32 %v4399, %v4499
      %v4547 = vadd.f32 %v4400, %v4501
      %v4548 = vadd.f32 %v4401, %v4540
      %v4549 = vadd.f32 %v4402, %v4542
      %v4550 = vld [vmem:[%s580] sm:$0xf]
      %4552 = vset.pattern.permute.xlu0 0
      %4553 = vperm.xlu0 %4552, %v4550
      %v4554 = vpop.permute.xlu0 %4553
      %v4556 = vmul.f32 %v4546, %v4554
      %v4557 = vmul.f32 %v4547, %v4554
      %v4558 = vmul.f32 %v4548, %v4554
      %v4559 = vmul.f32 %v4549, %v4554
      %v4560 = vld [vmem:[%s5] sm:$0xf]
      %4562 = vset.pattern.permute.xlu0 0
      %4563 = vperm.xlu0 %4562, %v4560
      %v4564 = vpop.permute.xlu0 %4563
      %v4566 = vadd.f32 %v4556, %v4564
      %v4567 = vadd.f32 %v4557, %v4564
      %v4568 = vadd.f32 %v4558, %v4564
      %v4569 = vadd.f32 %v4559, %v4564
      %vm4570 = vcmp.ge.f32.partialorder %v4566, 0.0
      %vm4571 = vcmp.ge.f32.partialorder %v4567, 0.0
      %vm4572 = vcmp.ge.f32.partialorder %v4568, 0.0
      %vm4573 = vcmp.ge.f32.partialorder %v4569, 0.0
      %v4574 = vmul.f32 %v4566, 0.2
      %v4575 = vmul.f32 %v4567, 0.2
      %v4576 = vmul.f32 %v4568, 0.2
      %v4577 = vmul.f32 %v4569, 0.2
      %v4578 = vsel %vm4570, %v4566, %v4574
      %v4579 = vsel %vm4571, %v4567, %v4575
      %v4580 = vsel %vm4572, %v4568, %v4576
      %v4581 = vsel %vm4573, %v4569, %v4577
      %v4586 = vcombine.low %v4578, %v4579
      %v4587 = vcombine.low %v4580, %v4581
      %4590 = vst [vmem:[%s606] sm:$0xff] %v4586
      %4591 = vst [vmem:[%s606 + $0x8] sm:$0xff] %v4587
      %v4592 = vld [vmem:[%s6] sm:$0x1]
      %v4593 = vld [vmem:[%s583] sm:$0x1]
      %v4595 = vpack.i.b16 %v4593, %v4593
      %v4597 = vlaneseq
      %v4598 = vshrl.u32 %v4597, 7
      %v4599 = vsub.s32 0, %v4598
      %v4600 = vrot.slane %v4595, %v4599
      %v4601 = vmul.bf16 %v4592, %v4600
      %v4602 = vpack.c.bf16 %v4578, %v4578
      %v4603 = vpack.c.bf16 %v4579, %v4579
      %v4604 = vpack.c.bf16 %v4580, %v4580
      %v4605 = vpack.c.bf16 %v4581, %v4581
      %v4607 = vsel %vm679, %v4601, 0
      %v4610 = vsel %vm683, %v4602, 0
      %v4613 = vsel %vm683, %v4603, 0
      %v4616 = vsel %vm683, %v4604, 0
      %v4619 = vsel %vm683, %v4605, 0
      %4621 = vmatprep.subr.bf16.mxu0 %v4613
      %4622 = vmatpush1.bf16.msra.mxu0 %v4610
      %4623 = vmatprep.subr.bf16.mxu0 0
      %4624 = vmatpush1.bf16.msra.mxu0 0
      %4625 = vmatprep.subr.bf16.mxu0 0
      %4626 = vmatpush1.bf16.msra.mxu0 0
      %4627 = vmatprep.subr.bf16.mxu0 0
      %4628 = vmatpush1.bf16.msra.mxu0 0
      %4629 = vmatprep.subr.bf16.mxu0 0
      %4630 = vmatpush1.bf16.msra.mxu0 0
      %4631 = vmatprep.subr.bf16.mxu0 0
      %4632 = vmatpush1.bf16.msra.mxu0 0
      %4633 = vmatprep.subr.bf16.mxu0 0
      %4634 = vmatpush1.bf16.msra.mxu0 0
      %4635 = vmatprep.subr.bf16.mxu0 0
      %4636 = vmatpush1.bf16.msra.mxu0 0
      %4637 = vmatprep.subr.bf16.mxu0 0
      %4638 = vmatpush1.bf16.msra.mxu0 0
      %4639 = vmatprep.subr.bf16.mxu0 0
      %4640 = vmatpush1.bf16.msra.mxu0 0
      %4641 = vmatprep.subr.bf16.mxu0 0
      %4642 = vmatpush1.bf16.msra.mxu0 0
      %4643 = vmatprep.subr.bf16.mxu0 0
      %4644 = vmatpush1.bf16.msra.mxu0 0
      %4645 = vmatprep.subr.bf16.mxu0 0
      %4646 = vmatpush1.bf16.msra.mxu0 0
      %4647 = vmatprep.subr.bf16.mxu0 0
      %4648 = vmatpush1.bf16.msra.mxu0 0
      %4649 = vmatprep.subr.bf16.mxu0 0
      %4650 = vmatpush1.bf16.msra.mxu0 0
      %4651 = vmatprep.subr.bf16.mxu0 0
      %4652 = vmatpush1.bf16.msra.mxu0 0
      %4653 = vmatprep.mubr.bf16.mxu0 0
      %4654 = vmatmul.mubr.bf16.gmra.mrb[0].mxu0 %v4607
      %v4655 = vpop.f32.mrb[0].mxu0
      %v4656 = vadd.f32 0.0, %v4655
      %v4657 = vpop.f32.mrb[0].mxu0
      %v4658 = vadd.f32 0.0, %v4657
      %v4659 = vpop.f32.mrb[0].mxu0
      %v4660 = vpop.f32.mrb[0].mxu0
      %4661 = vdwg.mxu0
      %4662 = vmatprep.subr.bf16.mxu0 %v4619
      %4663 = vmatpush1.bf16.msra.mxu0 %v4616
      %4664 = vmatprep.subr.bf16.mxu0 0
      %4665 = vmatpush1.bf16.msra.mxu0 0
      %4666 = vmatprep.subr.bf16.mxu0 0
      %4667 = vmatpush1.bf16.msra.mxu0 0
      %4668 = vmatprep.subr.bf16.mxu0 0
      %4669 = vmatpush1.bf16.msra.mxu0 0
      %4670 = vmatprep.subr.bf16.mxu0 0
      %4671 = vmatpush1.bf16.msra.mxu0 0
      %4672 = vmatprep.subr.bf16.mxu0 0
      %4673 = vmatpush1.bf16.msra.mxu0 0
      %4674 = vmatprep.subr.bf16.mxu0 0
      %4675 = vmatpush1.bf16.msra.mxu0 0
      %4676 = vmatprep.subr.bf16.mxu0 0
      %4677 = vmatpush1.bf16.msra.mxu0 0
      %4678 = vmatprep.subr.bf16.mxu0 0
      %4679 = vmatpush1.bf16.msra.mxu0 0
      %4680 = vmatprep.subr.bf16.mxu0 0
      %4681 = vmatpush1.bf16.msra.mxu0 0
      %4682 = vmatprep.subr.bf16.mxu0 0
      %4683 = vmatpush1.bf16.msra.mxu0 0
      %4684 = vmatprep.subr.bf16.mxu0 0
      %4685 = vmatpush1.bf16.msra.mxu0 0
      %4686 = vmatprep.subr.bf16.mxu0 0
      %4687 = vmatpush1.bf16.msra.mxu0 0
      %4688 = vmatprep.subr.bf16.mxu0 0
      %4689 = vmatpush1.bf16.msra.mxu0 0
      %4690 = vmatprep.subr.bf16.mxu0 0
      %4691 = vmatpush1.bf16.msra.mxu0 0
      %4692 = vmatprep.subr.bf16.mxu0 0
      %4693 = vmatpush1.bf16.msra.mxu0 0
      %4694 = vmatprep.mubr.bf16.mxu0 0
      %4695 = vmatmul.mubr.bf16.gmra.mrb[0].mxu0 %v4607
      %v4696 = vpop.f32.mrb[0].mxu0
      %v4697 = vadd.f32 0.0, %v4696
      %v4698 = vpop.f32.mrb[0].mxu0
      %v4699 = vadd.f32 0.0, %v4698
      %v4700 = vpop.f32.mrb[0].mxu0
      %v4701 = vpop.f32.mrb[0].mxu0
      %4702 = vdwg.mxu0
      %v4703 = vld [vmem:[%s587] sm:$0x3]
      %4705 = vset.pattern.permute.xlu0 0
      %4706 = vperm.xlu0 %4705, %v4703
      %v4707 = vpop.permute.xlu0 %4706
      %v4709 = vmul.f32 %v4656, %v4707
      %v4710 = vmul.f32 %v4658, %v4707
      %v4711 = vmul.f32 %v4697, %v4707
      %v4712 = vmul.f32 %v4699, %v4707
      %v4713 = vld [vmem:[%s9] sm:$0x3]
      %4715 = vset.pattern.permute.xlu0 0
      %4716 = vperm.xlu0 %4715, %v4713
      %v4717 = vpop.permute.xlu0 %4716
      %v4719 = vadd.f32 %v4709, %v4717
      %v4720 = vadd.f32 %v4710, %v4717
      %v4721 = vadd.f32 %v4711, %v4717
      %v4722 = vadd.f32 %v4712, %v4717
      %vm4723 = vcmp.ge.f32.partialorder %v4719, 0.0
      %vm4724 = vcmp.ge.f32.partialorder %v4720, 0.0
      %vm4725 = vcmp.ge.f32.partialorder %v4721, 0.0
      %vm4726 = vcmp.ge.f32.partialorder %v4722, 0.0
      %v4727 = vmul.f32 %v4719, 0.2
      %v4728 = vmul.f32 %v4720, 0.2
      %v4729 = vmul.f32 %v4721, 0.2
      %v4730 = vmul.f32 %v4722, 0.2
      %v4731 = vsel %vm4723, %v4719, %v4727
      %v4732 = vsel %vm4724, %v4720, %v4728
      %v4733 = vsel %vm4725, %v4721, %v4729
      %v4734 = vsel %vm4726, %v4722, %v4730
      %v4735 = vld [vmem:[%s596] sm:$0xff]
      %v4737 = vcombine.high %v4735, %v4735
      %v4739 = vunpack.c.l.s4 1983009808
      %v4740 = vunpack.c.0.s8 %v4739
      %v4741 = vlaneseq
      %v4742 = vshrl.u32 %v4741, 7
      %v4743 = vsub.s32 %v4740, %v4742
      %v4744 = vrot.slane %v4735, %v4743
      %v4746 = vunpack.c.l.s4 1983009808
      %v4747 = vunpack.c.0.s8 %v4746
      %v4748 = vlaneseq
      %v4749 = vshrl.u32 %v4748, 7
      %v4750 = vsub.s32 %v4747, %v4749
      %v4751 = vrot.slane %v4737, %v4750
      %v4752 = vcombine.high %v4744, %v4744
      %v4753 = vcombine.high %v4751, %v4751
      %v4758 = vadd.f32 %v4731, %v4744
      %v4759 = vadd.f32 %v4732, %v4752
      %v4760 = vadd.f32 %v4733, %v4751
      %v4761 = vadd.f32 %v4734, %v4753
      %v4766 = vcombine.low %v4758, %v4759
      %v4767 = vcombine.low %v4760, %v4761
      %v4769 = vunpack.c.l.s4 1983009808
      %v4770 = vunpack.c.0.s8 %v4769
      %v4771 = vlaneseq
      %v4772 = vshrl.u32 %v4771, 7
      %v4773 = vsub.s32 %v4770, %v4772
      %v4774 = vrot.slane %v4766, %v4773
      %v4776 = vunpack.c.l.s4 1983009808
      %v4777 = vunpack.c.0.s8 %v4776
      %v4778 = vlaneseq
      %v4779 = vshrl.u32 %v4778, 7
      %v4780 = vsub.s32 %v4777, %v4779
      %v4781 = vrot.slane %v4767, %v4780
      %v4782 = vcombine.low %v4774, %v4781
      %4784 = vst [vmem:[%s616] sm:$0xff] %v4782
      %s4785 = smul.u32 4, %s29
      %p4786 = scmp.lt.s32.totalorder %s28, 1
      %s4787 = scalar_select %p4786, %s28, 1
      %p4788 = scmp.lt.s32.totalorder %s4785, 23
      %s4789 = scalar_select %p4788, %s4785, 23
      %s4790 = smul.addr %s4787, 24
      %s4791 = sadd.s32 %s4789, %s4790
      %s4792 = smul.addr %s4791, 4
      %s4793 = scalar_lea.vmem %s11, %s4792
      %s4794 = smul.u32 4, %s29
      %p4795 = scmp.lt.s32.totalorder %s28, 1
      %s4796 = scalar_select %p4795, %s28, 1
      %p4797 = scmp.lt.s32.totalorder %s4794, 23
      %s4798 = scalar_select %p4797, %s4794, 23
      %s4799 = smul.addr %s4796, 24
      %s4800 = sadd.s32 %s4798, %s4799
      %s4801 = smul.addr %s4800, 2
      %s4802 = scalar_lea.vmem %s12, %s4801
      // Predicated region
      $region65: #{hblock_forward.3} parent=63 // pred_check
        %p4803 = pneg %p330
      $region66: #{hblock_forward.3} parent=63 // pred_check_branch
        %4805 = sbr.rel (%p4803) target = $region68
      $region67: #{hblock_forward.3} parent=63 // pred_region
        %s4806 = smul.u32 4, %s29
      $region68: #{hblock_forward.3} parent=63 // pred_fallthru
        _
      // Predicated region
      $region69: #{hblock_forward.3} parent=63 // pred_check
        %p4807 = pneg %p358
      $region70: #{hblock_forward.3} parent=63 // pred_check_branch
        %4809 = sbr.rel (%p4807) target = $region72
      $region71: #{hblock_forward.3} parent=63 // pred_region
        %s4810 = smul.u32 4, %s29
      $region72: #{hblock_forward.3} parent=63 // pred_fallthru
        _
    $region64: #{hblock_forward.3} parent=5 // pred_fallthru
      _
    %p4811 = scmp.le.s32.totalorder 2, %s19
    // Predicated region
    $region73: #{hblock_forward.3} parent=5 // pred_check
      %p4812 = pneg %p4811
    $region74: #{hblock_forward.3} parent=5 // pred_check_branch
      %4814 = sbr.rel (%p4812) target = $region76
    $region75: #{hblock_forward.3} parent=5 // pred_region
      %s4815 = ssub.s32 %s19, 2
      // Predicated region
      $region77: #{hblock_forward.3} parent=75 // pred_check
        %p4816 = pneg %p336
      $region78: #{hblock_forward.3} parent=75 // pred_check_branch
        %4818 = sbr.rel (%p4816) target = $region80
      $region79: #{hblock_forward.3} parent=75 // pred_region
        %s4819 = smul.u32 4, %s31
        %p4820 = scmp.lt.s32.totalorder %s30, 1
        %s4821 = scalar_select %p4820, %s30, 1
        %p4822 = scmp.lt.s32.totalorder %s4819, 23
        %s4823 = scalar_select %p4822, %s4819, 23
        %s4824 = smul.addr %s4821, 24
        %s4825 = sadd.s32 %s4823, %s4824
        %s4826 = smul.addr %s4825, 4
        %s4827 = scalar_lea.vmem %s11, %s4826
      $region80: #{hblock_forward.3} parent=75 // pred_fallthru
        _
      // Predicated region
      $region81: #{hblock_forward.3} parent=75 // pred_check
        %p4828 = pneg %p364
      $region82: #{hblock_forward.3} parent=75 // pred_check_branch
        %4830 = sbr.rel (%p4828) target = $region84
      $region83: #{hblock_forward.3} parent=75 // pred_region
        %s4831 = smul.u32 4, %s31
        %p4832 = scmp.lt.s32.totalorder %s30, 1
        %s4833 = scalar_select %p4832, %s30, 1
        %p4834 = scmp.lt.s32.totalorder %s4831, 23
        %s4835 = scalar_select %p4834, %s4831, 23
        %s4836 = smul.addr %s4833, 24
        %s4837 = sadd.s32 %s4835, %s4836
        %s4838 = smul.addr %s4837, 2
        %s4839 = scalar_lea.vmem %s12, %s4838
      $region84: #{hblock_forward.3} parent=75 // pred_fallthru
        _
    $region76: #{hblock_forward.3} parent=5 // pred_fallthru
      _
  $region6: #{hblock_forward.3} parent=0 // loop_footer
    %s23 = sadd.s32 1, %s19
  $region7: #{hblock_forward.3} parent=0 // loop_footer_branch
    %18 = sbr.rel target = $region3
  $region8: #{hblock_forward.3} parent=0 // loop_exit
    _

</llo_original>
